<compile_context>
chip_gen: v7x
topology: tpu7x:2x2x1
jax: 0.10.0
libtpu: 0.0.40
codegen_flags: <defaults>
</compile_context>

<pallas_src>
import math

import jax
import jax.numpy as jnp
from jax import lax
from jax.experimental import pallas as pl
from jax.experimental.pallas import tpu as pltpu

# ----------------------------- hyper-parameters (match the module defaults) ----------------------
D_MODEL   = 32            # d_model
SQUEEZE   = 8
NEIGHBORS = 9
D_STATE   = 16            # N
D_CONV    = 3
EXPAND    = 1

D_INNER = EXPAND * D_MODEL                                  # 32
D_CIN   = D_INNER // SQUEEZE                                # d_conv_input = 4   (no_squeeze=True)
D_SEQ   = D_CIN * NEIGHBORS                                 # d_sequence_model = 36
DT_RANK = math.ceil((D_MODEL // SQUEEZE * NEIGHBORS) / 16)  # ceil(36/16) = 3
LN_EPS  = 1e-5

# ----------------------------- tiling knobs ------------------------------------------------------
_PROJ_TM    = 1024                  # rows per in_proj grid step
_SCAN_TL    = 256                   # scan chunk length (sequential L axis blocked by this)
_VMEM_LIMIT = 32 * 1024 * 1024      # safe on v5e/v6e/v7x; actual footprints are a few MiB


def _round_up(x, m):
    return ((x + m - 1) // m) * m


def _softplus(x):
    # matches torch.nn.functional.softplus (beta=1, threshold=20)
    return jnp.where(x > 20.0, x, jnp.log1p(jnp.exp(x)))


# ============================== Pallas kernels ====================================================

def _in_proj_kernel(x_ref, wx_ref, wz_ref, xp_ref, z_ref):
    """in_proj for a (TM, D_MODEL) row slab; emits the conv branch and the gate branch
    separately so the wrapper never has to column-slice the (M, 8) activation."""
    x = x_ref[...]
    xp_ref[...] = jnp.dot(x, wx_ref[...], preferred_element_type=jnp.float32)
    z_ref[...]  = jnp.dot(x, wz_ref[...], preferred_element_type=jnp.float32)


def _dwconv_silu_kernel(xp_ref, w_ref, b_ref, o_ref):
    """Depthwise 3x3 conv + bias + SiLU on a lane-dense (H, W*C) layout, one batch per grid step.

    xp_ref : (H+2, (W+2)*C)  zero-padded image (x index = w*C + c on the lane axis)
    w_ref  : (9, W*C)        per-tap weights, channel pattern tiled W times along lanes
    b_ref  : (1, W*C)        bias, tiled the same way
    o_ref  : (H, W*C)
    """
    H, WC = o_ref.shape
    acc = jnp.zeros((H, WC), jnp.float32)
    for ky in range(D_CONV):
        for kx in range(D_CONV):
            idx = ky * D_CONV + kx
            tap = xp_ref[ky:ky + H, kx * D_CIN: kx * D_CIN + WC]      # (H, W*C)
            acc = acc + tap * w_ref[idx:idx + 1, :]                    # (1, W*C) broadcast
    acc = acc + b_ref[...]
    o_ref[...] = acc * jax.nn.sigmoid(acc)                             # SiLU


def _ssm_scan_fold_kernel(xs_ref, z_ref, wd_ref, wB_ref, wC_ref, dtb_ref,
                          A_ref, Ds_ref, wf_ref, g_ref, beta_ref, wo_ref,
                          o_ref, h_ref, dA_ref, hh_ref):
    """Fused SSM block for one (batch, L-chunk):

       x_proj (with dt_proj pre-folded) -> softplus(delta + bias)
       -> precompute dA = exp(delta*A), dBu = B*(delta*u) for the whole chunk (vectorized)
       -> serial recurrence  h = dA_l * h + dBu_l   (h carried across chunks in VMEM scratch)
       -> y = sum_n h*C + D*u   (batched reduction after the loop)
       -> fold linear -> LayerNorm -> * SiLU(z) -> out_proj

    Shapes: xs (TL, D_SEQ), z (TL, D_CIN), A (N, D_SEQ), scratches dA/hh (TL, N, D_SEQ),
    h (N, D_SEQ) persists across the sequential chunk axis (reset at chunk 0).
    """
    @pl.when(pl.program_id(1) == 0)
    def _():
        h_ref[...] = jnp.zeros_like(h_ref)

    xs = xs_ref[...]                                                       # (TL, D_SEQ)
    TL = xs.shape[0]

    # projections (dt_proj already folded into wd in the wrapper)
    delta = _softplus(
        jnp.dot(xs, wd_ref[...], preferred_element_type=jnp.float32) + dtb_ref[...])   # (TL, D_SEQ)
    Bs = jnp.dot(xs, wB_ref[...], preferred_element_type=jnp.float32)      # (TL, N)
    Cs = jnp.dot(xs, wC_ref[...], preferred_element_type=jnp.float32)      # (TL, N)

    # hoisted, chunk-vectorized terms (EUP / VPU work off the serial dependency chain)
    A = A_ref[...]                                                         # (N, D_SEQ)
    dA_ref[...] = jnp.exp(delta[:, None, :] * A[None, :, :])               # (TL, N, D_SEQ)
    hh_ref[...] = Bs[:, :, None] * (delta * xs)[:, None, :]                # dBu, overwritten by h

    def step(l, h):
        h = dA_ref[l] * h + hh_ref[l]                                      # (N, D_SEQ)
        hh_ref[l] = h                                                      # keep per-step state
        return h

    h_ref[...] = lax.fori_loop(0, TL, step, h_ref[...])

    # y_l = sum_n C_{l,n} h_{l,n,:} + D * u_l     (one batched reduction, off the serial chain)
    y = jnp.sum(hh_ref[...] * Cs[:, :, None], axis=1) + Ds_ref[...] * xs   # (TL, D_SEQ)

    # fold linear -> LayerNorm -> SiLU gate -> out_proj (fused epilogue)
    t = jnp.dot(y, wf_ref[...], preferred_element_type=jnp.float32)        # (TL, D_CIN)
    mu = jnp.mean(t, axis=-1, keepdims=True)
    var = jnp.mean(jnp.square(t - mu), axis=-1, keepdims=True)
    tn = (t - mu) * lax.rsqrt(var + LN_EPS) * g_ref[...] + beta_ref[...]
    z = z_ref[...]
    gated = tn * (z * jax.nn.sigmoid(z))
    o_ref[...] = jnp.dot(gated, wo_ref[...], preferred_element_type=jnp.float32)


# ============================== wrappers ==========================================================

def in_proj(x_flat, wx_T, wz_T):
    """(M, D_MODEL) @ W_in^T split into conv branch (M, D_CIN) and gate branch (M, D_CIN)."""
    M = x_flat.shape[0]
    TM = min(_PROJ_TM, _round_up(M, 8))
    M_pad = _round_up(M, TM)
    if M_pad != M:
        x_flat = jnp.pad(x_flat, ((0, M_pad - M), (0, 0)))

    xp, z = pl.pallas_call(
        _in_proj_kernel,
        out_shape=(jax.ShapeDtypeStruct((M_pad, D_CIN), jnp.float32),
                   jax.ShapeDtypeStruct((M_pad, D_CIN), jnp.float32)),
        grid=(M_pad // TM,),
        in_specs=[
            pl.BlockSpec((TM, D_MODEL), lambda i: (i, 0)),
            pl.BlockSpec((D_MODEL, D_CIN), lambda i: (0, 0)),
            pl.BlockSpec((D_MODEL, D_CIN), lambda i: (0, 0)),
        ],
        out_specs=[
            pl.BlockSpec((TM, D_CIN), lambda i: (i, 0)),
            pl.BlockSpec((TM, D_CIN), lambda i: (i, 0)),
        ],
        compiler_params=pltpu.CompilerParams(
            dimension_semantics=("parallel",),
            vmem_limit_bytes=_VMEM_LIMIT),
    )(x_flat, wx_T, wz_T)
    return xp[:M], z[:M]


def dwconv_silu(xp, w_tiled, b_tiled):
    """xp: (B, H+2, (W+2)*D_CIN) zero-padded, lane-dense.  Returns (B, H, W*D_CIN)."""
    B, Hp2, WCp2 = xp.shape
    H = Hp2 - 2
    WC = WCp2 - 2 * D_CIN
    return pl.pallas_call(
        _dwconv_silu_kernel,
        out_shape=jax.ShapeDtypeStruct((B, H, WC), jnp.float32),
        grid=(B,),
        in_specs=[
            pl.BlockSpec((None, Hp2, WCp2), lambda b: (b, 0, 0)),
            pl.BlockSpec((NEIGHBORS, WC), lambda b: (0, 0)),
            pl.BlockSpec((1, WC), lambda b: (0, 0)),
        ],
        out_specs=pl.BlockSpec((None, H, WC), lambda b: (b, 0, 0)),
        compiler_params=pltpu.CompilerParams(
            dimension_semantics=("parallel",),
            vmem_limit_bytes=_VMEM_LIMIT),
    )(xp, w_tiled, b_tiled)


def unfold3x3(x_nhwc):
    """Unfold(3): every channel expanded to its 9 (zero-padded) 3x3 neighbours.
    Output (B, L=H*W, D_SEQ) with feature index d = c * 9 + j, j row-major over the 3x3 window."""
    # TODO(synk): fuse this gather into the scan kernel (halo-tiled conv_out reads) to avoid the
    #             single materialized 9x activation; kept in plain JAX for now.
    B, H, W, C = x_nhwc.shape
    xp = jnp.pad(x_nhwc, ((0, 0), (1, 1), (1, 1), (0, 0)))
    patches = jnp.stack(
        [xp[:, dy:dy + H, dx:dx + W, :] for dy in range(3) for dx in range(3)],
        axis=-1)                                        # (B, H, W, C, 9)
    return patches.reshape(B, H * W, C * 9)


def ssm_scan_fold(xs, z, W_delta, W_B, W_C, dt_bias, A_T, Ds, w_fold_T, ln_g, ln_b, w_out_T):
    """Fused x_proj/dt_proj + selective scan + fold + LayerNorm + gate + out_proj.

    xs: (B, L, D_SEQ), z: (B, L, D_CIN)  ->  (B, L, D_MODEL)
    """
    B, L, _ = xs.shape
    TL = min(_SCAN_TL, _round_up(L, 8))
    L_pad = _round_up(L, TL)
    if L_pad != L:
        xs = jnp.pad(xs, ((0, 0), (0, L_pad - L), (0, 0)))
        z = jnp.pad(z, ((0, 0), (0, L_pad - L), (0, 0)))

    out = pl.pallas_call(
        _ssm_scan_fold_kernel,
        out_shape=jax.ShapeDtypeStruct((B, L_pad, D_MODEL), jnp.float32),
        grid=(B, L_pad // TL),
        in_specs=[
            pl.BlockSpec((None, TL, D_SEQ), lambda b, l: (b, l, 0)),    # xs chunk
            pl.BlockSpec((None, TL, D_CIN), lambda b, l: (b, l, 0)),    # z chunk
            pl.BlockSpec((D_SEQ, D_SEQ),   lambda b, l: (0, 0)),        # W_delta (x_proj∘dt_proj)
            pl.BlockSpec((D_SEQ, D_STATE), lambda b, l: (0, 0)),        # W_B
            pl.BlockSpec((D_SEQ, D_STATE), lambda b, l: (0, 0)),        # W_C
            pl.BlockSpec((1, D_SEQ),       lambda b, l: (0, 0)),        # dt bias
            pl.BlockSpec((D_STATE, D_SEQ), lambda b, l: (0, 0)),        # A^T
            pl.BlockSpec((1, D_SEQ),       lambda b, l: (0, 0)),        # Ds
            pl.BlockSpec((D_SEQ, D_CIN),   lambda b, l: (0, 0)),        # fold weight
            pl.BlockSpec((1, D_CIN),       lambda b, l: (0, 0)),        # LN gamma
            pl.BlockSpec((1, D_CIN),       lambda b, l: (0, 0)),        # LN beta
            pl.BlockSpec((D_CIN, D_MODEL), lambda b, l: (0, 0)),        # out_proj weight
        ],
        out_specs=pl.BlockSpec((None, TL, D_MODEL), lambda b, l: (b, l, 0)),
        scratch_shapes=[
            pltpu.VMEM((D_STATE, D_SEQ), jnp.float32),       # h carried across chunks
            pltpu.VMEM((TL, D_STATE, D_SEQ), jnp.float32),   # dA  = exp(delta*A)
            pltpu.VMEM((TL, D_STATE, D_SEQ), jnp.float32),   # dBu, then per-step h history
        ],
        compiler_params=pltpu.CompilerParams(
            dimension_semantics=("parallel", "arbitrary"),
            vmem_limit_bytes=_VMEM_LIMIT),
    )(xs, z, W_delta, W_B, W_C, dt_bias, A_T, Ds, w_fold_T, ln_g, ln_b, w_out_T)
    return out[:, :L, :]


# ============================== parameters ========================================================

def init_params(key):
    ks = jax.random.split(key, 8)
    sc_in = 1.0 / math.sqrt(D_MODEL)
    w_in = jax.random.uniform(ks[0], (2 * D_CIN, D_MODEL), jnp.float32, -sc_in, sc_in)

    # depthwise conv weight stored directly in (kh, kw, C) layout; bias (C,)
    w_conv = jax.random.uniform(ks[1], (D_CONV, D_CONV, D_CIN), jnp.float32, -1.0 / 3, 1.0 / 3)
    b_conv = jax.random.uniform(ks[2], (D_CIN,), jnp.float32, -1.0 / 3, 1.0 / 3)

    sc_x = 1.0 / math.sqrt(D_SEQ)
    w_xproj = jax.random.uniform(ks[3], (DT_RANK + 2 * D_STATE, D_SEQ), jnp.float32, -sc_x, sc_x)

    dt_std = DT_RANK ** -0.5
    w_dt = jax.random.uniform(ks[4], (D_SEQ, DT_RANK), jnp.float32, -dt_std, dt_std)
    dt = jnp.exp(jax.random.uniform(ks[5], (D_SEQ,), jnp.float32)
                 * (math.log(0.1) - math.log(0.001)) + math.log(0.001))
    dt = jnp.maximum(dt, 1e-4)
    dt_bias = dt + jnp.log(-jnp.expm1(-dt))                  # inverse softplus

    A_log = jnp.log(jnp.broadcast_to(
        jnp.arange(1, D_STATE + 1, dtype=jnp.float32), (D_SEQ, D_STATE)))
    Ds = jnp.ones((D_SEQ,), jnp.float32)

    w_fold = jax.random.uniform(ks[6], (D_CIN, D_SEQ), jnp.float32, -sc_x, sc_x)
    ln_g = jnp.ones((D_CIN,), jnp.float32)
    ln_b = jnp.zeros((D_CIN,), jnp.float32)
    sc_o = 1.0 / math.sqrt(D_CIN)
    w_out = jax.random.uniform(ks[7], (D_MODEL, D_CIN), jnp.float32, -sc_o, sc_o)

    return dict(w_in=w_in, w_conv=w_conv, b_conv=b_conv, w_xproj=w_xproj,
                w_dt=w_dt, dt_bias=dt_bias, A_log=A_log, Ds=Ds,
                w_fold=w_fold, ln_g=ln_g, ln_b=ln_b, w_out=w_out)


# ============================== forward ===========================================================

@jax.jit
def ss2dconv_k1_forward(x, params):
    B, H, W, C = x.shape
    L = H * W
    M = B * L

    # 1) in_proj, emitting the conv branch (x_part) and the gate branch (z) separately
    w_in = params['w_in']
    x_part, z = in_proj(x.reshape(M, C).astype(jnp.float32),
                        w_in[:D_CIN].T, w_in[D_CIN:].T)                    # (M,4), (M,4)

    # 2) depthwise 3x3 conv + bias + SiLU on a lane-dense (H, W*C) layout
    xp4 = jnp.pad(x_part.reshape(B, H, W, D_CIN), ((0, 0), (1, 1), (1, 1), (0, 0)))
    xp = xp4.reshape(B, H + 2, (W + 2) * D_CIN)                            # contiguous reshape
    w_tiled = jnp.tile(params['w_conv'].reshape(NEIGHBORS, D_CIN), (1, W))  # (9, W*C)
    b_tiled = jnp.tile(params['b_conv'], (W,)).reshape(1, W * D_CIN)        # (1, W*C)
    conv_out = dwconv_silu(xp, w_tiled, b_tiled)                            # (B, H, W*C)

    # 3) Unfold(3): (B, H, W, D_CIN) -> sequence (B, L, D_SEQ)
    xs = unfold3x3(conv_out.reshape(B, H, W, D_CIN))

    # 4+5) forward_core (K=1) + fold + LayerNorm + SiLU gate + out_proj, all fused.
    #      dt_proj is folded into x_proj:  W_delta = W_dt_in^T @ W_dt^T  (36x36).
    w_x = params['w_xproj']
    W_delta = w_x[:DT_RANK].T @ params['w_dt'].T                            # (36, 36)
    W_B = w_x[DT_RANK:DT_RANK + D_STATE].T                                  # (36, 16)
    W_C = w_x[DT_RANK + D_STATE:].T                                         # (36, 16)
    A_T = (-jnp.exp(params['A_log'])).T                                     # (16, 36)

    out_seq = ssm_scan_fold(
        xs, z.reshape(B, L, D_CIN),
        W_delta, W_B, W_C,
        params['dt_bias'].reshape(1, D_SEQ), A_T, params['Ds'].reshape(1, D_SEQ),
        params['w_fold'].T, params['ln_g'].reshape(1, D_CIN),
        params['ln_b'].reshape(1, D_CIN), params['w_out'].T)                # (B, L, D_MODEL)

    # dropout(p=0.5): identity at inference time
    return out_seq.reshape(B, H, W, D_MODEL)


# ============================== demo ==============================================================

if __name__ == "__main__":
    key = jax.random.PRNGKey(0)
    pkey, xkey = jax.random.split(key)
    params = init_params(pkey)

    B, H, W = 2, 8, 8
    x = jax.random.normal(xkey, (B, H, W, D_MODEL), jnp.float32)

    out = ss2dconv_k1_forward(x, params)
    out = jax.block_until_ready(out)

    assert out.shape == (B, H, W, D_MODEL), out.shape
    assert out.dtype == jnp.float32
    assert not bool(jnp.isnan(out).any())
    print("KERNEL_OK")
</pallas_src>

<mosaic_0001>
module attributes {stable_mosaic.version = 11 : i64} {
  func.func @_in_proj_kernel(%arg0: i32, %arg1: memref<128x32xf32, #tpu.memory_space<vmem>>, %arg2: memref<32x4xf32, #tpu.memory_space<vmem>>, %arg3: memref<32x4xf32, #tpu.memory_space<vmem>>, %arg4: memref<128x4xf32, #tpu.memory_space<vmem>>, %arg5: memref<128x4xf32, #tpu.memory_space<vmem>>) attributes {dimension_semantics = [#tpu.dimension_semantics<parallel>], iteration_bounds = array<i64: 1>, scalar_prefetch = 0 : i64, scratch_operands = 0 : i64, tpu.core_type = #tpu.core_type<tc>, window_params = [{transform_indices = @transform_0, window_bounds = array<i64: 128, 32>}, {pipeline_mode = #tpu.pipeline_mode<synchronous>, transform_indices = @transform_1, window_bounds = array<i64: 32, 4>}, {pipeline_mode = #tpu.pipeline_mode<synchronous>, transform_indices = @transform_2, window_bounds = array<i64: 32, 4>}, {transform_indices = @transform_3, window_bounds = array<i64: 128, 4>}, {transform_indices = @transform_4, window_bounds = array<i64: 128, 4>}]} {
    %c0 = arith.constant 0 : index
    %c0_0 = arith.constant 0 : index
    %0 = vector.load %arg1[%c0, %c0_0] : memref<128x32xf32, #tpu.memory_space<vmem>>, vector<128x32xf32>
    %c0_1 = arith.constant 0 : index
    %c0_2 = arith.constant 0 : index
    %1 = vector.load %arg2[%c0_1, %c0_2] : memref<32x4xf32, #tpu.memory_space<vmem>>, vector<32x4xf32>
    %cst = arith.constant dense<0.000000e+00> : vector<128x4xf32>
    %2 = tpu.matmul %0, %1, %cst {dimension_numbers = #tpu.dot_dimension_numbers<[1], [0], [0], [1], [0, 0, 1, 1], [], []>} : vector<128x32xf32>, vector<32x4xf32>, vector<128x4xf32> -> vector<128x4xf32>
    %c0_3 = arith.constant 0 : index
    %c0_4 = arith.constant 0 : index
    %3 = vector.load %arg4[%c0_3, %c0_4] : memref<128x4xf32, #tpu.memory_space<vmem>>, vector<128x4xf32>
    tpu.vector_store %arg4[%c0_3, %c0_4], %2 {strides = array<i32>} : memref<128x4xf32, #tpu.memory_space<vmem>>, vector<128x4xf32>,
    %c0_5 = arith.constant 0 : index
    %c0_6 = arith.constant 0 : index
    %4 = vector.load %arg3[%c0_5, %c0_6] : memref<32x4xf32, #tpu.memory_space<vmem>>, vector<32x4xf32>
    %cst_7 = arith.constant dense<0.000000e+00> : vector<128x4xf32>
    %5 = tpu.matmul %0, %4, %cst_7 {dimension_numbers = #tpu.dot_dimension_numbers<[1], [0], [0], [1], [0, 0, 1, 1], [], []>} : vector<128x32xf32>, vector<32x4xf32>, vector<128x4xf32> -> vector<128x4xf32>
    %c0_8 = arith.constant 0 : index
    %c0_9 = arith.constant 0 : index
    %6 = vector.load %arg5[%c0_8, %c0_9] : memref<128x4xf32, #tpu.memory_space<vmem>>, vector<128x4xf32>
    tpu.vector_store %arg5[%c0_8, %c0_9], %5 {strides = array<i32>} : memref<128x4xf32, #tpu.memory_space<vmem>>, vector<128x4xf32>,
    return
  }
  func.func @transform_0(%arg0: i32) -> (i32, i32) {
    %c0_i32 = arith.constant 0 : i32
    %c0_i32_0 = arith.constant 0 : i32
    return %arg0, %c0_i32 : i32, i32
  }
  func.func @transform_1(%arg0: i32) -> (i32, i32) {
    %c0_i32 = arith.constant 0 : i32
    %c0_i32_0 = arith.constant 0 : i32
    %c0_i32_1 = arith.constant 0 : i32
    return %c0_i32, %c0_i32_0 : i32, i32
  }
  func.func @transform_2(%arg0: i32) -> (i32, i32) {
    %c0_i32 = arith.constant 0 : i32
    %c0_i32_0 = arith.constant 0 : i32
    %c0_i32_1 = arith.constant 0 : i32
    return %c0_i32, %c0_i32_0 : i32, i32
  }
  func.func @transform_3(%arg0: i32) -> (i32, i32) {
    %c0_i32 = arith.constant 0 : i32
    %c0_i32_0 = arith.constant 0 : i32
    return %arg0, %c0_i32 : i32, i32
  }
  func.func @transform_4(%arg0: i32) -> (i32, i32) {
    %c0_i32 = arith.constant 0 : i32
    %c0_i32_0 = arith.constant 0 : i32
    return %arg0, %c0_i32 : i32, i32
  }
}

module attributes {stable_mosaic.version = 11 : i64} {
  func.func @_dwconv_silu_kernel(%arg0: i32, %arg1: memref<1x10x40xf32, #tpu.memory_space<vmem>>, %arg2: memref<9x32xf32, #tpu.memory_space<vmem>>, %arg3: memref<1x32xf32, #tpu.memory_space<vmem>>, %arg4: memref<1x8x32xf32, #tpu.memory_space<vmem>>) attributes {dimension_semantics = [#tpu.dimension_semantics<parallel>], iteration_bounds = array<i64: 2>, scalar_prefetch = 0 : i64, scratch_operands = 0 : i64, tpu.core_type = #tpu.core_type<tc>, window_params = [{transform_indices = @transform_0, window_bounds = array<i64: 1, 10, 40>}, {pipeline_mode = #tpu.pipeline_mode<synchronous>, transform_indices = @transform_1, window_bounds = array<i64: 9, 32>}, {pipeline_mode = #tpu.pipeline_mode<synchronous>, transform_indices = @transform_2, window_bounds = array<i64: 1, 32>}, {transform_indices = @transform_3, window_bounds = array<i64: 1, 8, 32>}]} {
    %cst = arith.constant 0.000000e+00 : f32
    %0 = vector.broadcast %cst : f32 to vector<8x32xf32>
    %c0 = arith.constant 0 : index
    %c0_0 = arith.constant 0 : index
    %c0_1 = arith.constant 0 : index
    %1 = vector.load %arg1[%c0, %c0_0, %c0_1] : memref<1x10x40xf32, #tpu.memory_space<vmem>>, vector<1x8x32xf32>
    %2 = vector.shape_cast %1 : vector<1x8x32xf32> to vector<8x32xf32>
    %c0_2 = arith.constant 0 : index
    %c0_3 = arith.constant 0 : index
    %3 = vector.load %arg2[%c0_2, %c0_3] : memref<9x32xf32, #tpu.memory_space<vmem>>, vector<1x32xf32>
    %4 = vector.broadcast %3 : vector<1x32xf32> to vector<8x32xf32>
    %5 = arith.mulf %2, %4 : vector<8x32xf32>
    %6 = arith.addf %0, %5 : vector<8x32xf32>
    %c0_4 = arith.constant 0 : index
    %c0_5 = arith.constant 0 : index
    %c4 = arith.constant 4 : index
    %7 = vector.load %arg1[%c0_4, %c0_5, %c4] : memref<1x10x40xf32, #tpu.memory_space<vmem>>, vector<1x8x32xf32>
    %8 = vector.shape_cast %7 : vector<1x8x32xf32> to vector<8x32xf32>
    %c1 = arith.constant 1 : index
    %c0_6 = arith.constant 0 : index
    %9 = vector.load %arg2[%c1, %c0_6] : memref<9x32xf32, #tpu.memory_space<vmem>>, vector<1x32xf32>
    %10 = vector.broadcast %9 : vector<1x32xf32> to vector<8x32xf32>
    %11 = arith.mulf %8, %10 : vector<8x32xf32>
    %12 = arith.addf %6, %11 : vector<8x32xf32>
    %c0_7 = arith.constant 0 : index
    %c0_8 = arith.constant 0 : index
    %c8 = arith.constant 8 : index
    %13 = vector.load %arg1[%c0_7, %c0_8, %c8] : memref<1x10x40xf32, #tpu.memory_space<vmem>>, vector<1x8x32xf32>
    %14 = vector.shape_cast %13 : vector<1x8x32xf32> to vector<8x32xf32>
    %c2 = arith.constant 2 : index
    %c0_9 = arith.constant 0 : index
    %15 = vector.load %arg2[%c2, %c0_9] : memref<9x32xf32, #tpu.memory_space<vmem>>, vector<1x32xf32>
    %16 = vector.broadcast %15 : vector<1x32xf32> to vector<8x32xf32>
    %17 = arith.mulf %14, %16 : vector<8x32xf32>
    %18 = arith.addf %12, %17 : vector<8x32xf32>
    %c0_10 = arith.constant 0 : index
    %c1_11 = arith.constant 1 : index
    %c0_12 = arith.constant 0 : index
    %19 = vector.load %arg1[%c0_10, %c1_11, %c0_12] : memref<1x10x40xf32, #tpu.memory_space<vmem>>, vector<1x8x32xf32>
    %20 = vector.shape_cast %19 : vector<1x8x32xf32> to vector<8x32xf32>
    %c3 = arith.constant 3 : index
    %c0_13 = arith.constant 0 : index
    %21 = vector.load %arg2[%c3, %c0_13] : memref<9x32xf32, #tpu.memory_space<vmem>>, vector<1x32xf32>
    %22 = vector.broadcast %21 : vector<1x32xf32> to vector<8x32xf32>
    %23 = arith.mulf %20, %22 : vector<8x32xf32>
    %24 = arith.addf %18, %23 : vector<8x32xf32>
    %c0_14 = arith.constant 0 : index
    %c1_15 = arith.constant 1 : index
    %c4_16 = arith.constant 4 : index
    %25 = vector.load %arg1[%c0_14, %c1_15, %c4_16] : memref<1x10x40xf32, #tpu.memory_space<vmem>>, vector<1x8x32xf32>
    %26 = vector.shape_cast %25 : vector<1x8x32xf32> to vector<8x32xf32>
    %c4_17 = arith.constant 4 : index
    %c0_18 = arith.constant 0 : index
    %27 = vector.load %arg2[%c4_17, %c0_18] : memref<9x32xf32, #tpu.memory_space<vmem>>, vector<1x32xf32>
    %28 = vector.broadcast %27 : vector<1x32xf32> to vector<8x32xf32>
    %29 = arith.mulf %26, %28 : vector<8x32xf32>
    %30 = arith.addf %24, %29 : vector<8x32xf32>
    %c0_19 = arith.constant 0 : index
    %c1_20 = arith.constant 1 : index
    %c8_21 = arith.constant 8 : index
    %31 = vector.load %arg1[%c0_19, %c1_20, %c8_21] : memref<1x10x40xf32, #tpu.memory_space<vmem>>, vector<1x8x32xf32>
    %32 = vector.shape_cast %31 : vector<1x8x32xf32> to vector<8x32xf32>
    %c5 = arith.constant 5 : index
    %c0_22 = arith.constant 0 : index
    %33 = vector.load %arg2[%c5, %c0_22] : memref<9x32xf32, #tpu.memory_space<vmem>>, vector<1x32xf32>
    %34 = vector.broadcast %33 : vector<1x32xf32> to vector<8x32xf32>
    %35 = arith.mulf %32, %34 : vector<8x32xf32>
    %36 = arith.addf %30, %35 : vector<8x32xf32>
    %c0_23 = arith.constant 0 : index
    %c2_24 = arith.constant 2 : index
    %c0_25 = arith.constant 0 : index
    %37 = vector.load %arg1[%c0_23, %c2_24, %c0_25] : memref<1x10x40xf32, #tpu.memory_space<vmem>>, vector<1x8x32xf32>
    %38 = vector.shape_cast %37 : vector<1x8x32xf32> to vector<8x32xf32>
    %c6 = arith.constant 6 : index
    %c0_26 = arith.constant 0 : index
    %39 = vector.load %arg2[%c6, %c0_26] : memref<9x32xf32, #tpu.memory_space<vmem>>, vector<1x32xf32>
    %40 = vector.broadcast %39 : vector<1x32xf32> to vector<8x32xf32>
    %41 = arith.mulf %38, %40 : vector<8x32xf32>
    %42 = arith.addf %36, %41 : vector<8x32xf32>
    %c0_27 = arith.constant 0 : index
    %c2_28 = arith.constant 2 : index
    %c4_29 = arith.constant 4 : index
    %43 = vector.load %arg1[%c0_27, %c2_28, %c4_29] : memref<1x10x40xf32, #tpu.memory_space<vmem>>, vector<1x8x32xf32>
    %44 = vector.shape_cast %43 : vector<1x8x32xf32> to vector<8x32xf32>
    %c7 = arith.constant 7 : index
    %c0_30 = arith.constant 0 : index
    %45 = vector.load %arg2[%c7, %c0_30] : memref<9x32xf32, #tpu.memory_space<vmem>>, vector<1x32xf32>
    %46 = vector.broadcast %45 : vector<1x32xf32> to vector<8x32xf32>
    %47 = arith.mulf %44, %46 : vector<8x32xf32>
    %48 = arith.addf %42, %47 : vector<8x32xf32>
    %c0_31 = arith.constant 0 : index
    %c2_32 = arith.constant 2 : index
    %c8_33 = arith.constant 8 : index
    %49 = vector.load %arg1[%c0_31, %c2_32, %c8_33] : memref<1x10x40xf32, #tpu.memory_space<vmem>>, vector<1x8x32xf32>
    %50 = vector.shape_cast %49 : vector<1x8x32xf32> to vector<8x32xf32>
    %c8_34 = arith.constant 8 : index
    %c0_35 = arith.constant 0 : index
    %51 = vector.load %arg2[%c8_34, %c0_35] : memref<9x32xf32, #tpu.memory_space<vmem>>, vector<1x32xf32>
    %52 = vector.broadcast %51 : vector<1x32xf32> to vector<8x32xf32>
    %53 = arith.mulf %50, %52 : vector<8x32xf32>
    %54 = arith.addf %48, %53 : vector<8x32xf32>
    %c0_36 = arith.constant 0 : index
    %c0_37 = arith.constant 0 : index
    %55 = vector.load %arg3[%c0_36, %c0_37] : memref<1x32xf32, #tpu.memory_space<vmem>>, vector<1x32xf32>
    %56 = vector.broadcast %55 : vector<1x32xf32> to vector<8x32xf32>
    %57 = arith.addf %54, %56 : vector<8x32xf32>
    %58 = arith.negf %57 : vector<8x32xf32>
    %59 = math.exp %58 : vector<8x32xf32>
    %cst_38 = arith.constant 1.000000e+00 : f32
    %60 = vector.broadcast %cst_38 : f32 to vector<8x32xf32>
    %61 = arith.addf %60, %59 : vector<8x32xf32>
    %62 = arith.divf %60, %61 : vector<8x32xf32>
    %63 = arith.mulf %57, %62 : vector<8x32xf32>
    %c0_39 = arith.constant 0 : index
    %c0_40 = arith.constant 0 : index
    %c0_41 = arith.constant 0 : index
    %64 = vector.load %arg4[%c0_39, %c0_40, %c0_41] : memref<1x8x32xf32, #tpu.memory_space<vmem>>, vector<1x8x32xf32>
    %65 = vector.shape_cast %64 : vector<1x8x32xf32> to vector<8x32xf32>
    %66 = vector.shape_cast %63 : vector<8x32xf32> to vector<1x8x32xf32>
    tpu.vector_store %arg4[%c0_39, %c0_40, %c0_41], %66 {strides = array<i32>} : memref<1x8x32xf32, #tpu.memory_space<vmem>>, vector<1x8x32xf32>,
    return
  }
  func.func @transform_0(%arg0: i32) -> (i32, i32, i32) {
    %c0_i32 = arith.constant 0 : i32
    %c0_i32_0 = arith.constant 0 : i32
    %c0_i32_1 = arith.constant 0 : i32
    return %arg0, %c0_i32, %c0_i32_0 : i32, i32, i32
  }
  func.func @transform_1(%arg0: i32) -> (i32, i32) {
    %c0_i32 = arith.constant 0 : i32
    %c0_i32_0 = arith.constant 0 : i32
    %c0_i32_1 = arith.constant 0 : i32
    return %c0_i32, %c0_i32_0 : i32, i32
  }
  func.func @transform_2(%arg0: i32) -> (i32, i32) {
    %c0_i32 = arith.constant 0 : i32
    %c0_i32_0 = arith.constant 0 : i32
    %c0_i32_1 = arith.constant 0 : i32
    return %c0_i32, %c0_i32_0 : i32, i32
  }
  func.func @transform_3(%arg0: i32) -> (i32, i32, i32) {
    %c0_i32 = arith.constant 0 : i32
    %c0_i32_0 = arith.constant 0 : i32
    %c0_i32_1 = arith.constant 0 : i32
    return %arg0, %c0_i32, %c0_i32_0 : i32, i32, i32
  }
}

module attributes {stable_mosaic.version = 11 : i64} {
  func.func @_ssm_scan_fold_kernel(%arg0: i32, %arg1: i32, %arg2: memref<1x64x36xf32, #tpu.memory_space<vmem>>, %arg3: memref<1x64x4xf32, #tpu.memory_space<vmem>>, %arg4: memref<36x36xf32, #tpu.memory_space<vmem>>, %arg5: memref<36x16xf32, #tpu.memory_space<vmem>>, %arg6: memref<36x16xf32, #tpu.memory_space<vmem>>, %arg7: memref<1x36xf32, #tpu.memory_space<vmem>>, %arg8: memref<16x36xf32, #tpu.memory_space<vmem>>, %arg9: memref<1x36xf32, #tpu.memory_space<vmem>>, %arg10: memref<36x4xf32, #tpu.memory_space<vmem>>, %arg11: memref<1x4xf32, #tpu.memory_space<vmem>>, %arg12: memref<1x4xf32, #tpu.memory_space<vmem>>, %arg13: memref<4x32xf32, #tpu.memory_space<vmem>>, %arg14: memref<1x64x32xf32, #tpu.memory_space<vmem>>, %arg15: memref<16x36xf32, #tpu.memory_space<vmem>>, %arg16: memref<64x16x36xf32, #tpu.memory_space<vmem>>, %arg17: memref<64x16x36xf32, #tpu.memory_space<vmem>>) attributes {dimension_semantics = [#tpu.dimension_semantics<parallel>, #tpu.dimension_semantics<arbitrary>], iteration_bounds = array<i64: 2, 1>, scalar_prefetch = 0 : i64, scratch_operands = 3 : i64, tpu.core_type = #tpu.core_type<tc>, window_params = [{transform_indices = @transform_0, window_bounds = array<i64: 1, 64, 36>}, {transform_indices = @transform_1, window_bounds = array<i64: 1, 64, 4>}, {pipeline_mode = #tpu.pipeline_mode<synchronous>, transform_indices = @transform_2, window_bounds = array<i64: 36, 36>}, {pipeline_mode = #tpu.pipeline_mode<synchronous>, transform_indices = @transform_3, window_bounds = array<i64: 36, 16>}, {pipeline_mode = #tpu.pipeline_mode<synchronous>, transform_indices = @transform_4, window_bounds = array<i64: 36, 16>}, {pipeline_mode = #tpu.pipeline_mode<synchronous>, transform_indices = @transform_5, window_bounds = array<i64: 1, 36>}, {pipeline_mode = #tpu.pipeline_mode<synchronous>, transform_indices = @transform_6, window_bounds = array<i64: 16, 36>}, {pipeline_mode = #tpu.pipeline_mode<synchronous>, transform_indices = @transform_7, window_bounds = array<i64: 1, 36>}, {pipeline_mode = #tpu.pipeline_mode<synchronous>, transform_indices = @transform_8, window_bounds = array<i64: 36, 4>}, {pipeline_mode = #tpu.pipeline_mode<synchronous>, transform_indices = @transform_9, window_bounds = array<i64: 1, 4>}, {pipeline_mode = #tpu.pipeline_mode<synchronous>, transform_indices = @transform_10, window_bounds = array<i64: 1, 4>}, {pipeline_mode = #tpu.pipeline_mode<synchronous>, transform_indices = @transform_11, window_bounds = array<i64: 4, 32>}, {transform_indices = @transform_12, window_bounds = array<i64: 1, 64, 32>}]} {
    %c0_i32 = arith.constant 0 : i32
    %0 = arith.cmpi eq, %arg1, %c0_i32 : i32
    %1 = arith.extui %0 : i1 to i32
    %c0_i32_0 = arith.constant 0 : i32
    %2 = arith.cmpi ne, %1, %c0_i32_0 : i32
    scf.if %2 {
      %cst_56 = arith.constant 0.000000e+00 : f32
      %87 = vector.broadcast %cst_56 : f32 to vector<16x36xf32>
      %c0_57 = arith.constant 0 : index
      %c0_58 = arith.constant 0 : index
      %88 = vector.load %arg15[%c0_57, %c0_58] : memref<16x36xf32, #tpu.memory_space<vmem>>, vector<16x36xf32>
      tpu.vector_store %arg15[%c0_57, %c0_58], %87 {strides = array<i32>} : memref<16x36xf32, #tpu.memory_space<vmem>>, vector<16x36xf32>,
    } else {
    }
    %c0 = arith.constant 0 : index
    %c0_1 = arith.constant 0 : index
    %c0_2 = arith.constant 0 : index
    %3 = vector.load %arg2[%c0, %c0_1, %c0_2] : memref<1x64x36xf32, #tpu.memory_space<vmem>>, vector<1x64x36xf32>
    %4 = vector.shape_cast %3 : vector<1x64x36xf32> to vector<64x36xf32>
    %c0_3 = arith.constant 0 : index
    %c0_4 = arith.constant 0 : index
    %5 = vector.load %arg4[%c0_3, %c0_4] : memref<36x36xf32, #tpu.memory_space<vmem>>, vector<36x36xf32>
    %cst = arith.constant dense<0.000000e+00> : vector<64x36xf32>
    %6 = tpu.matmul %4, %5, %cst {dimension_numbers = #tpu.dot_dimension_numbers<[1], [0], [0], [1], [0, 0, 1, 1], [], []>} : vector<64x36xf32>, vector<36x36xf32>, vector<64x36xf32> -> vector<64x36xf32>
    %c0_5 = arith.constant 0 : index
    %c0_6 = arith.constant 0 : index
    %7 = vector.load %arg7[%c0_5, %c0_6] : memref<1x36xf32, #tpu.memory_space<vmem>>, vector<1x36xf32>
    %8 = vector.broadcast %7 : vector<1x36xf32> to vector<64x36xf32>
    %9 = arith.addf %6, %8 : vector<64x36xf32>
    %cst_7 = arith.constant 2.000000e+01 : f32
    %10 = vector.broadcast %cst_7 : f32 to vector<64x36xf32>
    %11 = arith.cmpf ogt, %9, %10 : vector<64x36xf32>
    %12 = math.exp %9 : vector<64x36xf32>
    %13 = math.log1p %12 : vector<64x36xf32>
    %14 = arith.select %11, %9, %13 : vector<64x36xi1>, vector<64x36xf32>
    %c0_8 = arith.constant 0 : index
    %c0_9 = arith.constant 0 : index
    %15 = vector.load %arg5[%c0_8, %c0_9] : memref<36x16xf32, #tpu.memory_space<vmem>>, vector<36x16xf32>
    %cst_10 = arith.constant dense<0.000000e+00> : vector<64x16xf32>
    %16 = tpu.matmul %4, %15, %cst_10 {dimension_numbers = #tpu.dot_dimension_numbers<[1], [0], [0], [1], [0, 0, 1, 1], [], []>} : vector<64x36xf32>, vector<36x16xf32>, vector<64x16xf32> -> vector<64x16xf32>
    %c0_11 = arith.constant 0 : index
    %c0_12 = arith.constant 0 : index
    %17 = vector.load %arg6[%c0_11, %c0_12] : memref<36x16xf32, #tpu.memory_space<vmem>>, vector<36x16xf32>
    %cst_13 = arith.constant dense<0.000000e+00> : vector<64x16xf32>
    %18 = tpu.matmul %4, %17, %cst_13 {dimension_numbers = #tpu.dot_dimension_numbers<[1], [0], [0], [1], [0, 0, 1, 1], [], []>} : vector<64x36xf32>, vector<36x16xf32>, vector<64x16xf32> -> vector<64x16xf32>
    %c0_14 = arith.constant 0 : index
    %c0_15 = arith.constant 0 : index
    %19 = vector.load %arg8[%c0_14, %c0_15] : memref<16x36xf32, #tpu.memory_space<vmem>>, vector<16x36xf32>
    %20 = vector.shape_cast %14 : vector<64x36xf32> to vector<64x1x36xf32>
    %21 = vector.shape_cast %19 : vector<16x36xf32> to vector<1x16x36xf32>
    %22 = vector.broadcast %20 : vector<64x1x36xf32> to vector<64x16x36xf32>
    %23 = vector.broadcast %21 : vector<1x16x36xf32> to vector<64x16x36xf32>
    %24 = arith.mulf %22, %23 : vector<64x16x36xf32>
    %25 = math.exp %24 : vector<64x16x36xf32>
    %c0_16 = arith.constant 0 : index
    %c0_17 = arith.constant 0 : index
    %c0_18 = arith.constant 0 : index
    %26 = vector.load %arg16[%c0_16, %c0_17, %c0_18] : memref<64x16x36xf32, #tpu.memory_space<vmem>>, vector<64x16x36xf32>
    tpu.vector_store %arg16[%c0_16, %c0_17, %c0_18], %25 {strides = array<i32>} : memref<64x16x36xf32, #tpu.memory_space<vmem>>, vector<64x16x36xf32>,
    %27 = vector.shape_cast %16 : vector<64x16xf32> to vector<64x16x1xf32>
    %28 = arith.mulf %14, %4 : vector<64x36xf32>
    %29 = vector.shape_cast %28 : vector<64x36xf32> to vector<64x1x36xf32>
    %30 = vector.broadcast %27 : vector<64x16x1xf32> to vector<64x16x36xf32>
    %31 = vector.broadcast %29 : vector<64x1x36xf32> to vector<64x16x36xf32>
    %32 = arith.mulf %30, %31 : vector<64x16x36xf32>
    %c0_19 = arith.constant 0 : index
    %c0_20 = arith.constant 0 : index
    %c0_21 = arith.constant 0 : index
    %33 = vector.load %arg17[%c0_19, %c0_20, %c0_21] : memref<64x16x36xf32, #tpu.memory_space<vmem>>, vector<64x16x36xf32>
    tpu.vector_store %arg17[%c0_19, %c0_20, %c0_21], %32 {strides = array<i32>} : memref<64x16x36xf32, #tpu.memory_space<vmem>>, vector<64x16x36xf32>,
    %c0_22 = arith.constant 0 : index
    %c0_23 = arith.constant 0 : index
    %34 = vector.load %arg15[%c0_22, %c0_23] : memref<16x36xf32, #tpu.memory_space<vmem>>, vector<16x36xf32>
    %c0_i32_24 = arith.constant 0 : i32
    %c64_i32 = arith.constant 64 : i32
    %35 = arith.addi %c0_i32_24, %c64_i32 : i32
    %c1_i32 = arith.constant 1 : i32
    %36 = scf.for %arg18 = %c0_i32_24 to %35 step %c1_i32 iter_args(%arg19 = %34) -> (vector<16x36xf32>)  : i32 {
      %87 = arith.index_cast %arg18 : i32 to index
      %c0_56 = arith.constant 0 : index
      %c0_57 = arith.constant 0 : index
      %88 = vector.load %arg16[%87, %c0_56, %c0_57] : memref<64x16x36xf32, #tpu.memory_space<vmem>>, vector<1x16x36xf32>
      %89 = vector.shape_cast %88 : vector<1x16x36xf32> to vector<16x36xf32>
      %90 = arith.mulf %89, %arg19 : vector<16x36xf32>
      %91 = arith.index_cast %arg18 : i32 to index
      %c0_58 = arith.constant 0 : index
      %c0_59 = arith.constant 0 : index
      %92 = vector.load %arg17[%91, %c0_58, %c0_59] : memref<64x16x36xf32, #tpu.memory_space<vmem>>, vector<1x16x36xf32>
      %93 = vector.shape_cast %92 : vector<1x16x36xf32> to vector<16x36xf32>
      %94 = arith.addf %90, %93 : vector<16x36xf32>
      %95 = arith.index_cast %arg18 : i32 to index
      %c0_60 = arith.constant 0 : index
      %c0_61 = arith.constant 0 : index
      %96 = vector.load %arg17[%95, %c0_60, %c0_61] : memref<64x16x36xf32, #tpu.memory_space<vmem>>, vector<1x16x36xf32>
      %97 = vector.shape_cast %96 : vector<1x16x36xf32> to vector<16x36xf32>
      %98 = vector.shape_cast %94 : vector<16x36xf32> to vector<1x16x36xf32>
      tpu.vector_store %arg17[%95, %c0_60, %c0_61], %98 {strides = array<i32>} : memref<64x16x36xf32, #tpu.memory_space<vmem>>, vector<1x16x36xf32>,
      scf.yield %94 : vector<16x36xf32>
    }
    %c64_i32_25 = arith.constant 64 : i32
    %c0_26 = arith.constant 0 : index
    %c0_27 = arith.constant 0 : index
    %37 = vector.load %arg15[%c0_26, %c0_27] : memref<16x36xf32, #tpu.memory_space<vmem>>, vector<16x36xf32>
    tpu.vector_store %arg15[%c0_26, %c0_27], %36 {strides = array<i32>} : memref<16x36xf32, #tpu.memory_space<vmem>>, vector<16x36xf32>,
    %c0_28 = arith.constant 0 : index
    %c0_29 = arith.constant 0 : index
    %c0_30 = arith.constant 0 : index
    %38 = vector.load %arg17[%c0_28, %c0_29, %c0_30] : memref<64x16x36xf32, #tpu.memory_space<vmem>>, vector<64x16x36xf32>
    %39 = vector.shape_cast %18 : vector<64x16xf32> to vector<64x16x1xf32>
    %40 = vector.broadcast %39 : vector<64x16x1xf32> to vector<64x16x36xf32>
    %41 = arith.mulf %38, %40 : vector<64x16x36xf32>
    %cst_31 = arith.constant dense<0.000000e+00> : vector<64x36xf32>
    %42 = vector.multi_reduction <add>, %41, %cst_31 [1] : vector<64x16x36xf32> to vector<64x36xf32>
    %c0_32 = arith.constant 0 : index
    %c0_33 = arith.constant 0 : index
    %43 = vector.load %arg9[%c0_32, %c0_33] : memref<1x36xf32, #tpu.memory_space<vmem>>, vector<1x36xf32>
    %44 = vector.broadcast %43 : vector<1x36xf32> to vector<64x36xf32>
    %45 = arith.mulf %44, %4 : vector<64x36xf32>
    %46 = arith.addf %42, %45 : vector<64x36xf32>
    %c0_34 = arith.constant 0 : index
    %c0_35 = arith.constant 0 : index
    %47 = vector.load %arg10[%c0_34, %c0_35] : memref<36x4xf32, #tpu.memory_space<vmem>>, vector<36x4xf32>
    %cst_36 = arith.constant dense<0.000000e+00> : vector<64x4xf32>
    %48 = tpu.matmul %46, %47, %cst_36 {dimension_numbers = #tpu.dot_dimension_numbers<[1], [0], [0], [1], [0, 0, 1, 1], [], []>} : vector<64x36xf32>, vector<36x4xf32>, vector<64x4xf32> -> vector<64x4xf32>
    %cst_37 = arith.constant dense<0.000000e+00> : vector<64xf32>
    %49 = vector.multi_reduction <add>, %48, %cst_37 [1] : vector<64x4xf32> to vector<64xf32>
    %50 = vector.shape_cast %49 : vector<64xf32> to vector<64x1xf32>
    %cst_38 = arith.constant 4.000000e+00 : f32
    %51 = vector.broadcast %cst_38 : f32 to vector<64x1xf32>
    %52 = arith.divf %50, %51 : vector<64x1xf32>
    %53 = vector.broadcast %52 : vector<64x1xf32> to vector<64x4xf32>
    %54 = arith.subf %48, %53 : vector<64x4xf32>
    %55 = arith.mulf %54, %54 : vector<64x4xf32>
    %cst_39 = arith.constant dense<0.000000e+00> : vector<64xf32>
    %56 = vector.multi_reduction <add>, %55, %cst_39 [1] : vector<64x4xf32> to vector<64xf32>
    %57 = vector.shape_cast %56 : vector<64xf32> to vector<64x1xf32>
    %cst_40 = arith.constant 4.000000e+00 : f32
    %58 = vector.broadcast %cst_40 : f32 to vector<64x1xf32>
    %59 = arith.divf %57, %58 : vector<64x1xf32>
    %60 = vector.broadcast %52 : vector<64x1xf32> to vector<64x4xf32>
    %61 = arith.subf %48, %60 : vector<64x4xf32>
    %cst_41 = arith.constant 9.99999974E-6 : f32
    %62 = vector.broadcast %cst_41 : f32 to vector<64x1xf32>
    %63 = arith.addf %59, %62 : vector<64x1xf32>
    %64 = math.rsqrt %63 : vector<64x1xf32>
    %65 = vector.broadcast %64 : vector<64x1xf32> to vector<64x4xf32>
    %66 = arith.mulf %61, %65 : vector<64x4xf32>
    %c0_42 = arith.constant 0 : index
    %c0_43 = arith.constant 0 : index
    %67 = vector.load %arg11[%c0_42, %c0_43] : memref<1x4xf32, #tpu.memory_space<vmem>>, vector<1x4xf32>
    %68 = vector.broadcast %67 : vector<1x4xf32> to vector<64x4xf32>
    %69 = arith.mulf %66, %68 : vector<64x4xf32>
    %c0_44 = arith.constant 0 : index
    %c0_45 = arith.constant 0 : index
    %70 = vector.load %arg12[%c0_44, %c0_45] : memref<1x4xf32, #tpu.memory_space<vmem>>, vector<1x4xf32>
    %71 = vector.broadcast %70 : vector<1x4xf32> to vector<64x4xf32>
    %72 = arith.addf %69, %71 : vector<64x4xf32>
    %c0_46 = arith.constant 0 : index
    %c0_47 = arith.constant 0 : index
    %c0_48 = arith.constant 0 : index
    %73 = vector.load %arg3[%c0_46, %c0_47, %c0_48] : memref<1x64x4xf32, #tpu.memory_space<vmem>>, vector<1x64x4xf32>
    %74 = vector.shape_cast %73 : vector<1x64x4xf32> to vector<64x4xf32>
    %75 = arith.negf %74 : vector<64x4xf32>
    %76 = math.exp %75 : vector<64x4xf32>
    %cst_49 = arith.constant 1.000000e+00 : f32
    %77 = vector.broadcast %cst_49 : f32 to vector<64x4xf32>
    %78 = arith.addf %77, %76 : vector<64x4xf32>
    %79 = arith.divf %77, %78 : vector<64x4xf32>
    %80 = arith.mulf %74, %79 : vector<64x4xf32>
    %81 = arith.mulf %72, %80 : vector<64x4xf32>
    %c0_50 = arith.constant 0 : index
    %c0_51 = arith.constant 0 : index
    %82 = vector.load %arg13[%c0_50, %c0_51] : memref<4x32xf32, #tpu.memory_space<vmem>>, vector<4x32xf32>
    %cst_52 = arith.constant dense<0.000000e+00> : vector<64x32xf32>
    %83 = tpu.matmul %81, %82, %cst_52 {dimension_numbers = #tpu.dot_dimension_numbers<[1], [0], [0], [1], [0, 0, 1, 1], [], []>} : vector<64x4xf32>, vector<4x32xf32>, vector<64x32xf32> -> vector<64x32xf32>
    %c0_53 = arith.constant 0 : index
    %c0_54 = arith.constant 0 : index
    %c0_55 = arith.constant 0 : index
    %84 = vector.load %arg14[%c0_53, %c0_54, %c0_55] : memref<1x64x32xf32, #tpu.memory_space<vmem>>, vector<1x64x32xf32>
    %85 = vector.shape_cast %84 : vector<1x64x32xf32> to vector<64x32xf32>
    %86 = vector.shape_cast %83 : vector<64x32xf32> to vector<1x64x32xf32>
    tpu.vector_store %arg14[%c0_53, %c0_54, %c0_55], %86 {strides = array<i32>} : memref<1x64x32xf32, #tpu.memory_space<vmem>>, vector<1x64x32xf32>,
    return
  }
  func.func @transform_0(%arg0: i32, %arg1: i32) -> (i32, i32, i32) {
    %c0_i32 = arith.constant 0 : i32
    %c0_i32_0 = arith.constant 0 : i32
    return %arg0, %arg1, %c0_i32 : i32, i32, i32
  }
  func.func @transform_1(%arg0: i32, %arg1: i32) -> (i32, i32, i32) {
    %c0_i32 = arith.constant 0 : i32
    %c0_i32_0 = arith.constant 0 : i32
    return %arg0, %arg1, %c0_i32 : i32, i32, i32
  }
  func.func @transform_2(%arg0: i32, %arg1: i32) -> (i32, i32) {
    %c0_i32 = arith.constant 0 : i32
    %c0_i32_0 = arith.constant 0 : i32
    %c0_i32_1 = arith.constant 0 : i32
    return %c0_i32, %c0_i32_0 : i32, i32
  }
  func.func @transform_3(%arg0: i32, %arg1: i32) -> (i32, i32) {
    %c0_i32 = arith.constant 0 : i32
    %c0_i32_0 = arith.constant 0 : i32
    %c0_i32_1 = arith.constant 0 : i32
    return %c0_i32, %c0_i32_0 : i32, i32
  }
  func.func @transform_4(%arg0: i32, %arg1: i32) -> (i32, i32) {
    %c0_i32 = arith.constant 0 : i32
    %c0_i32_0 = arith.constant 0 : i32
    %c0_i32_1 = arith.constant 0 : i32
    return %c0_i32, %c0_i32_0 : i32, i32
  }
  func.func @transform_5(%arg0: i32, %arg1: i32) -> (i32, i32) {
    %c0_i32 = arith.constant 0 : i32
    %c0_i32_0 = arith.constant 0 : i32
    %c0_i32_1 = arith.constant 0 : i32
    return %c0_i32, %c0_i32_0 : i32, i32
  }
  func.func @transform_6(%arg0: i32, %arg1: i32) -> (i32, i32) {
    %c0_i32 = arith.constant 0 : i32
    %c0_i32_0 = arith.constant 0 : i32
    %c0_i32_1 = arith.constant 0 : i32
    return %c0_i32, %c0_i32_0 : i32, i32
  }
  func.func @transform_7(%arg0: i32, %arg1: i32) -> (i32, i32) {
    %c0_i32 = arith.constant 0 : i32
    %c0_i32_0 = arith.constant 0 : i32
    %c0_i32_1 = arith.constant 0 : i32
    return %c0_i32, %c0_i32_0 : i32, i32
  }
  func.func @transform_8(%arg0: i32, %arg1: i32) -> (i32, i32) {
    %c0_i32 = arith.constant 0 : i32
    %c0_i32_0 = arith.constant 0 : i32
    %c0_i32_1 = arith.constant 0 : i32
    return %c0_i32, %c0_i32_0 : i32, i32
  }
  func.func @transform_9(%arg0: i32, %arg1: i32) -> (i32, i32) {
    %c0_i32 = arith.constant 0 : i32
    %c0_i32_0 = arith.constant 0 : i32
    %c0_i32_1 = arith.constant 0 : i32
    return %c0_i32, %c0_i32_0 : i32, i32
  }
  func.func @transform_10(%arg0: i32, %arg1: i32) -> (i32, i32) {
    %c0_i32 = arith.constant 0 : i32
    %c0_i32_0 = arith.constant 0 : i32
    %c0_i32_1 = arith.constant 0 : i32
    return %c0_i32, %c0_i32_0 : i32, i32
  }
  func.func @transform_11(%arg0: i32, %arg1: i32) -> (i32, i32) {
    %c0_i32 = arith.constant 0 : i32
    %c0_i32_0 = arith.constant 0 : i32
    %c0_i32_1 = arith.constant 0 : i32
    return %c0_i32, %c0_i32_0 : i32, i32
  }
  func.func @transform_12(%arg0: i32, %arg1: i32) -> (i32, i32, i32) {
    %c0_i32 = arith.constant 0 : i32
    %c0_i32_0 = arith.constant 0 : i32
    return %arg0, %arg1, %c0_i32 : i32, i32, i32
  }
}

</mosaic_0001>

<llo_original>
// kernel: tile.16
$region0: #{tile.16}
  #allocation0 [shape = 's32[1]{0}', space=sflag, size = 0x4, scoped, tag = 'scoped memory for tile.16']
  %s0 = inlined_call_operand.vmem [shape: f32[4], index: 0, kind: input, shape index: {}]
  %s1 = inlined_call_operand.vmem [shape: f32[8,4], index: 1, kind: output, shape index: {}]
  // Predicated region
  $region2: #{tile.16} parent=0 // pred_check
    _
  $region3: #{tile.16} parent=0 // pred_check_branch
    %3 = sbr.rel (0) target = $region5
  $region4: #{tile.16} parent=0 // pred_region
    _
  $region5: #{tile.16} parent=0 // pred_fallthru
    _
  %v4 = vld [vmem:[%s0] ss:$0 sm:$0xff]
  %5 = vst [vmem:[%s1] sm:$0xff] %v4

// kernel: tile.17
$region0: #{tile.17}
  %s0 = inlined_call_operand.vmem [shape: f32[8,4], index: 0, kind: input, shape index: {}]
  %s1 = inlined_call_operand.vmem [shape: f32[1,32], index: 1, kind: output, shape index: {}]
  $region1: #{tile.17} parent=0
    #allocation0 [shape = 'u8[4096]{0}', space=vmem, size = 0x1000, scoped, tag = 'scoped mem for output reshape']
    %v2 = vld [vmem:[%s0] sm:$0x1]
    %vm3 = vcmask 31744
    %4 = vst.msk [vmem:[#allocation0] sm:$0x1] %vm3, %v2
    %s5 = scalar_lea.vmem %s0, 7
    %v6 = vld [vmem:[%s5] sm:$0x1]
    %7 = vrot.lane.b32.xlu0 %v6, 28
    %v8 = vpop.permute.xlu0 %7
    %vm9 = vcmask 261344
    %10 = vst.msk [vmem:[#allocation0] sm:$0x1] %vm9, %v8
    %s11 = scalar_lea.vmem %s0, 6
    %v12 = vld [vmem:[%s11] sm:$0x1]
    %13 = vrot.lane.b32.xlu0 %v12, 24
    %v14 = vpop.permute.xlu0 %13
    %vm15 = vcmask 228544
    %16 = vst.msk [vmem:[#allocation0] sm:$0x1] %vm15, %v14
    %s17 = scalar_lea.vmem %s0, 5
    %v18 = vld [vmem:[%s17] sm:$0x1]
    %19 = vrot.lane.b32.xlu0 %v18, 20
    %v20 = vpop.permute.xlu0 %19
    %vm21 = vcmask 195744
    %22 = vst.msk [vmem:[#allocation0] sm:$0x1] %vm21, %v20
    %s23 = scalar_lea.vmem %s0, 4
    %v24 = vld [vmem:[%s23] sm:$0x1]
    %25 = vrot.lane.b32.xlu0 %v24, 16
    %v26 = vpop.permute.xlu0 %25
    %vm27 = vcmask 162944
    %28 = vst.msk [vmem:[#allocation0] sm:$0x1] %vm27, %v26
    %s29 = scalar_lea.vmem %s0, 3
    %v30 = vld [vmem:[%s29] sm:$0x1]
    %31 = vrot.lane.b32.xlu0 %v30, 12
    %v32 = vpop.permute.xlu0 %31
    %vm33 = vcmask 130144
    %34 = vst.msk [vmem:[#allocation0] sm:$0x1] %vm33, %v32
    %s35 = scalar_lea.vmem %s0, 2
    %v36 = vld [vmem:[%s35] sm:$0x1]
    %37 = vrot.lane.b32.xlu0 %v36, 8
    %v38 = vpop.permute.xlu0 %37
    %vm39 = vcmask 97344
    %40 = vst.msk [vmem:[#allocation0] sm:$0x1] %vm39, %v38
    %s41 = scalar_lea.vmem %s0, 1
    %v42 = vld [vmem:[%s41] sm:$0x1]
    %43 = vrot.lane.b32.xlu0 %v42, 4
    %v44 = vpop.permute.xlu0 %43
    %vm45 = vcmask 64544
    %46 = vst.msk [vmem:[#allocation0] sm:$0x1] %vm45, %v44
    %s48 = sshllo.u32 0, 1
    %v50 = vld [vmem:[#allocation0] sm:%s48]
    %s51 = sshllo.u32 0, 1
    %52 = vst [vmem:[%s1] sm:%s51] %v50

// kernel: ss2dconv_k1_forward.3
$region0: #{ss2dconv_k1_forward.3}
  #allocation0 [shape = 'u32[]', space=smem, size = 0x4, offset = 0x4, fixed_abs, tag = 'smem constant byte address 0x4 - core index']
  #allocation1 [shape = 'u32[144,128]{1,0:T(1,128)}', space=vmem, size = 0x12000, scoped, tag = 'internal scratch']
  %s0 = inlined_call_operand.vmem [shape: f32[128,32], index: 0, kind: input, shape index: {}]
  %s1 = inlined_call_operand.vmem [shape: f32[32,4], index: 1, kind: input, shape index: {}]
  %s2 = inlined_call_operand.vmem [shape: f32[32,4], index: 2, kind: input, shape index: {}]
  %s3 = inlined_call_operand.vmem [shape: f32[128,4], index: 3, kind: output, shape index: {0}]
  %s4 = inlined_call_operand.vmem [shape: f32[128,4], index: 4, kind: output, shape index: {1}]
  %5 = xla_tuple %s3, %s4
  %s6 = sld [smem:[#allocation0]]
  $region30: #{ss2dconv_k1_forward.3} parent=0
    _
  %s8 = ssub.s32 1, %s6
  %s9 = scalar_select 0, %s8, %s6
  // Predicated region
  $region2: #{ss2dconv_k1_forward.3} parent=0 // pred_check
    _
  $region3: #{ss2dconv_k1_forward.3} parent=0 // pred_check_branch
    %11 = sbr.rel (0) target = $region5
  $region4: #{ss2dconv_k1_forward.3} parent=0 // pred_region
    _
  $region5: #{ss2dconv_k1_forward.3} parent=0 // pred_fallthru
    _
  // Predicated region
  $region6: #{ss2dconv_k1_forward.3} parent=0 // pred_check
    _
  $region7: #{ss2dconv_k1_forward.3} parent=0 // pred_check_branch
    %13 = sbr.rel (0) target = $region9
  $region8: #{ss2dconv_k1_forward.3} parent=0 // pred_region
    _
  $region9: #{ss2dconv_k1_forward.3} parent=0 // pred_fallthru
    _
  // Predicated region
  $region10: #{ss2dconv_k1_forward.3} parent=0 // pred_check
    _
  $region11: #{ss2dconv_k1_forward.3} parent=0 // pred_check_branch
    %15 = sbr.rel (0) target = $region13
  $region12: #{ss2dconv_k1_forward.3} parent=0 // pred_region
    _
  $region13: #{ss2dconv_k1_forward.3} parent=0 // pred_fallthru
    _
  %v16 = vld [vmem:[%s0] sm:$0xff]
  %v17 = vld [vmem:[%s0 + $0x8] sm:$0xff]
  %v18 = vld [vmem:[%s0 + $0x10] sm:$0xff]
  %v19 = vld [vmem:[%s0 + $0x18] sm:$0xff]
  %v20 = vld [vmem:[%s0 + $0x20] sm:$0xff]
  %v21 = vld [vmem:[%s0 + $0x28] sm:$0xff]
  %v22 = vld [vmem:[%s0 + $0x30] sm:$0xff]
  %v23 = vld [vmem:[%s0 + $0x38] sm:$0xff]
  %v24 = vld [vmem:[%s0 + $0x40] sm:$0xff]
  %v25 = vld [vmem:[%s0 + $0x48] sm:$0xff]
  %v26 = vld [vmem:[%s0 + $0x50] sm:$0xff]
  %v27 = vld [vmem:[%s0 + $0x58] sm:$0xff]
  %v28 = vld [vmem:[%s0 + $0x60] sm:$0xff]
  %v29 = vld [vmem:[%s0 + $0x68] sm:$0xff]
  %v30 = vld [vmem:[%s0 + $0x70] sm:$0xff]
  %v31 = vld [vmem:[%s0 + $0x78] sm:$0xff]
  %v32 = vld [vmem:[%s1] sm:$0xff]
  %v33 = vld [vmem:[%s1 + $0x8] sm:$0xff]
  %v34 = vld [vmem:[%s1 + $0x10] sm:$0xff]
  %v35 = vld [vmem:[%s1 + $0x18] sm:$0xff]
  %vm36 = vcmask 261120
  %v38 = vsel %vm36, %v16, 0
  %v41 = vsel %vm36, %v17, 0
  %v44 = vsel %vm36, %v18, 0
  %v47 = vsel %vm36, %v19, 0
  %v50 = vsel %vm36, %v20, 0
  %v53 = vsel %vm36, %v21, 0
  %v56 = vsel %vm36, %v22, 0
  %v59 = vsel %vm36, %v23, 0
  %v62 = vsel %vm36, %v24, 0
  %v65 = vsel %vm36, %v25, 0
  %v68 = vsel %vm36, %v26, 0
  %v71 = vsel %vm36, %v27, 0
  %v74 = vsel %vm36, %v28, 0
  %v77 = vsel %vm36, %v29, 0
  %v80 = vsel %vm36, %v30, 0
  %v83 = vsel %vm36, %v31, 0
  %85 = vmatprep.subr.mxu0 0.0
  %86 = vmatpush1.msra.mxu0 %v32
  %87 = vmatprep.subr.mxu0 0.0
  %88 = vmatpush1.msra.mxu0 %v33
  %89 = vmatprep.subr.mxu0 0.0
  %90 = vmatpush1.msra.mxu0 %v34
  %91 = vmatprep.subr.mxu0 0.0
  %92 = vmatpush1.msra.mxu0 %v35
  %93 = vmatprep.subr.mxu0 0.0
  %94 = vmatpush1.msra.mxu0 0.0
  %95 = vmatprep.subr.mxu0 0.0
  %96 = vmatpush1.msra.mxu0 0.0
  %97 = vmatprep.subr.mxu0 0.0
  %98 = vmatpush1.msra.mxu0 0.0
  %99 = vmatprep.subr.mxu0 0.0
  %100 = vmatpush1.msra.mxu0 0.0
  %101 = vmatprep.subr.mxu0 0.0
  %102 = vmatpush1.msra.mxu0 0.0
  %103 = vmatprep.subr.mxu0 0.0
  %104 = vmatpush1.msra.mxu0 0.0
  %105 = vmatprep.subr.mxu0 0.0
  %106 = vmatpush1.msra.mxu0 0.0
  %107 = vmatprep.subr.mxu0 0.0
  %108 = vmatpush1.msra.mxu0 0.0
  %109 = vmatprep.subr.mxu0 0.0
  %110 = vmatpush1.msra.mxu0 0.0
  %111 = vmatprep.subr.mxu0 0.0
  %112 = vmatpush1.msra.mxu0 0.0
  %113 = vmatprep.subr.mxu0 0.0
  %114 = vmatpush1.msra.mxu0 0.0
  %115 = vmatprep.subr.mxu0 0.0
  %116 = vmatpush1.msra.mxu0 0.0
  %117 = vmatprep.subr.mxu0 0.0
  %118 = vmatpush1.msra.mxu0 0.0
  %119 = vmatprep.subr.mxu0 0.0
  %120 = vmatpush1.msra.mxu0 0.0
  %121 = vmatprep.subr.mxu0 0.0
  %122 = vmatpush1.msra.mxu0 0.0
  %123 = vmatprep.subr.mxu0 0.0
  %124 = vmatpush1.msra.mxu0 0.0
  %125 = vmatprep.subr.mxu0 0.0
  %126 = vmatpush1.msra.mxu0 0.0
  %127 = vmatprep.subr.mxu0 0.0
  %128 = vmatpush1.msra.mxu0 0.0
  %129 = vmatprep.subr.mxu0 0.0
  %130 = vmatpush1.msra.mxu0 0.0
  %131 = vmatprep.subr.mxu0 0.0
  %132 = vmatpush1.msra.mxu0 0.0
  %133 = vmatprep.subr.mxu0 0.0
  %134 = vmatpush1.msra.mxu0 0.0
  %135 = vmatprep.subr.mxu0 0.0
  %136 = vmatpush1.msra.mxu0 0.0
  %137 = vmatprep.subr.mxu0 0.0
  %138 = vmatpush1.msra.mxu0 0.0
  %139 = vmatprep.subr.mxu0 0.0
  %140 = vmatpush1.msra.mxu0 0.0
  %141 = vmatprep.subr.mxu0 0.0
  %142 = vmatpush1.msra.mxu0 0.0
  %143 = vmatprep.subr.mxu0 0.0
  %144 = vmatpush1.msra.mxu0 0.0
  %145 = vmatprep.subr.mxu0 0.0
  %146 = vmatpush1.msra.mxu0 0.0
  %147 = vmatprep.subr.mxu0 0.0
  %148 = vmatpush1.msra.mxu0 0.0
  %149 = vmatprep.mubr.f32.mxu0 0.0
  %150 = vmatmul.mubr.f32.gmra.mrb[0].mxu0 %v38
  %v151 = vpop.f32.mrb[0].mxu0
  %v152 = vadd.f32 0.0, %v151
  %v153 = vpop.f32.mrb[0].mxu0
  %154 = vmatprep.mubr.f32.mxu0 0.0
  %155 = vmatmul.mubr.f32.gmra.mrb[0].mxu0 %v41
  %v156 = vpop.f32.mrb[0].mxu0
  %v157 = vadd.f32 0.0, %v156
  %v158 = vpop.f32.mrb[0].mxu0
  %159 = vmatprep.mubr.f32.mxu0 0.0
  %160 = vmatmul.mubr.f32.gmra.mrb[0].mxu0 %v44
  %v161 = vpop.f32.mrb[0].mxu0
  %v162 = vadd.f32 0.0, %v161
  %v163 = vpop.f32.mrb[0].mxu0
  %164 = vmatprep.mubr.f32.mxu0 0.0
  %165 = vmatmul.mubr.f32.gmra.mrb[0].mxu0 %v47
  %v166 = vpop.f32.mrb[0].mxu0
  %v167 = vadd.f32 0.0, %v166
  %v168 = vpop.f32.mrb[0].mxu0
  %169 = vmatprep.mubr.f32.mxu0 0.0
  %170 = vmatmul.mubr.f32.gmra.mrb[0].mxu0 %v50
  %v171 = vpop.f32.mrb[0].mxu0
  %v172 = vadd.f32 0.0, %v171
  %v173 = vpop.f32.mrb[0].mxu0
  %174 = vmatprep.mubr.f32.mxu0 0.0
  %175 = vmatmul.mubr.f32.gmra.mrb[0].mxu0 %v53
  %v176 = vpop.f32.mrb[0].mxu0
  %v177 = vadd.f32 0.0, %v176
  %v178 = vpop.f32.mrb[0].mxu0
  %179 = vmatprep.mubr.f32.mxu0 0.0
  %180 = vmatmul.mubr.f32.gmra.mrb[0].mxu0 %v56
  %v181 = vpop.f32.mrb[0].mxu0
  %v182 = vadd.f32 0.0, %v181
  %v183 = vpop.f32.mrb[0].mxu0
  %184 = vmatprep.mubr.f32.mxu0 0.0
  %185 = vmatmul.mubr.f32.gmra.mrb[0].mxu0 %v59
  %v186 = vpop.f32.mrb[0].mxu0
  %v187 = vadd.f32 0.0, %v186
  %v188 = vpop.f32.mrb[0].mxu0
  %189 = vmatprep.mubr.f32.mxu0 0.0
  %190 = vmatmul.mubr.f32.gmra.mrb[0].mxu0 %v62
  %v191 = vpop.f32.mrb[0].mxu0
  %v192 = vadd.f32 0.0, %v191
  %v193 = vpop.f32.mrb[0].mxu0
  %194 = vmatprep.mubr.f32.mxu0 0.0
  %195 = vmatmul.mubr.f32.gmra.mrb[0].mxu0 %v65
  %v196 = vpop.f32.mrb[0].mxu0
  %v197 = vadd.f32 0.0, %v196
  %v198 = vpop.f32.mrb[0].mxu0
  %199 = vmatprep.mubr.f32.mxu0 0.0
  %200 = vmatmul.mubr.f32.gmra.mrb[0].mxu0 %v68
  %v201 = vpop.f32.mrb[0].mxu0
  %v202 = vadd.f32 0.0, %v201
  %v203 = vpop.f32.mrb[0].mxu0
  %204 = vmatprep.mubr.f32.mxu0 0.0
  %205 = vmatmul.mubr.f32.gmra.mrb[0].mxu0 %v71
  %v206 = vpop.f32.mrb[0].mxu0
  %v207 = vadd.f32 0.0, %v206
  %v208 = vpop.f32.mrb[0].mxu0
  %209 = vmatprep.mubr.f32.mxu0 0.0
  %210 = vmatmul.mubr.f32.gmra.mrb[0].mxu0 %v74
  %v211 = vpop.f32.mrb[0].mxu0
  %v212 = vadd.f32 0.0, %v211
  %v213 = vpop.f32.mrb[0].mxu0
  %214 = vmatprep.mubr.f32.mxu0 0.0
  %215 = vmatmul.mubr.f32.gmra.mrb[0].mxu0 %v77
  %v216 = vpop.f32.mrb[0].mxu0
  %v217 = vadd.f32 0.0, %v216
  %v218 = vpop.f32.mrb[0].mxu0
  %219 = vmatprep.mubr.f32.mxu0 0.0
  %220 = vmatmul.mubr.f32.gmra.mrb[0].mxu0 %v80
  %v221 = vpop.f32.mrb[0].mxu0
  %v222 = vadd.f32 0.0, %v221
  %v223 = vpop.f32.mrb[0].mxu0
  %224 = vmatprep.mubr.f32.mxu0 0.0
  %225 = vmatmul.mubr.f32.gmra.mrb[0].mxu0 %v83
  %v226 = vpop.f32.mrb[0].mxu0
  %v227 = vadd.f32 0.0, %v226
  %v228 = vpop.f32.mrb[0].mxu0
  %229 = vdwg.mxu0
  %vm230 = vcmask 31744
  %231 = vst.msk [vmem:[%s3] sm:$0xff] %vm230, %v152
  %232 = vst.msk [vmem:[%s3 + $0x8] sm:$0xff] %vm230, %v157
  %233 = vst.msk [vmem:[%s3 + $0x10] sm:$0xff] %vm230, %v162
  %234 = vst.msk [vmem:[%s3 + $0x18] sm:$0xff] %vm230, %v167
  %235 = vst.msk [vmem:[%s3 + $0x20] sm:$0xff] %vm230, %v172
  %236 = vst.msk [vmem:[%s3 + $0x28] sm:$0xff] %vm230, %v177
  %237 = vst.msk [vmem:[%s3 + $0x30] sm:$0xff] %vm230, %v182
  %238 = vst.msk [vmem:[%s3 + $0x38] sm:$0xff] %vm230, %v187
  %239 = vst.msk [vmem:[%s3 + $0x40] sm:$0xff] %vm230, %v192
  %240 = vst.msk [vmem:[%s3 + $0x48] sm:$0xff] %vm230, %v197
  %241 = vst.msk [vmem:[%s3 + $0x50] sm:$0xff] %vm230, %v202
  %242 = vst.msk [vmem:[%s3 + $0x58] sm:$0xff] %vm230, %v207
  %243 = vst.msk [vmem:[%s3 + $0x60] sm:$0xff] %vm230, %v212
  %244 = vst.msk [vmem:[%s3 + $0x68] sm:$0xff] %vm230, %v217
  %245 = vst.msk [vmem:[%s3 + $0x70] sm:$0xff] %vm230, %v222
  %246 = vst.msk [vmem:[%s3 + $0x78] sm:$0xff] %vm230, %v227
  %v247 = vld [vmem:[%s2] sm:$0xff]
  %v248 = vld [vmem:[%s2 + $0x8] sm:$0xff]
  %v249 = vld [vmem:[%s2 + $0x10] sm:$0xff]
  %v250 = vld [vmem:[%s2 + $0x18] sm:$0xff]
  %251 = vmatprep.subr.mxu0 0.0
  %252 = vmatpush1.msra.mxu0 %v247
  %253 = vmatprep.subr.mxu0 0.0
  %254 = vmatpush1.msra.mxu0 %v248
  %255 = vmatprep.subr.mxu0 0.0
  %256 = vmatpush1.msra.mxu0 %v249
  %257 = vmatprep.subr.mxu0 0.0
  %258 = vmatpush1.msra.mxu0 %v250
  %259 = vmatprep.subr.mxu0 0.0
  %260 = vmatpush1.msra.mxu0 0.0
  %261 = vmatprep.subr.mxu0 0.0
  %262 = vmatpush1.msra.mxu0 0.0
  %263 = vmatprep.subr.mxu0 0.0
  %264 = vmatpush1.msra.mxu0 0.0
  %265 = vmatprep.subr.mxu0 0.0
  %266 = vmatpush1.msra.mxu0 0.0
  %267 = vmatprep.subr.mxu0 0.0
  %268 = vmatpush1.msra.mxu0 0.0
  %269 = vmatprep.subr.mxu0 0.0
  %270 = vmatpush1.msra.mxu0 0.0
  %271 = vmatprep.subr.mxu0 0.0
  %272 = vmatpush1.msra.mxu0 0.0
  %273 = vmatprep.subr.mxu0 0.0
  %274 = vmatpush1.msra.mxu0 0.0
  %275 = vmatprep.subr.mxu0 0.0
  %276 = vmatpush1.msra.mxu0 0.0
  %277 = vmatprep.subr.mxu0 0.0
  %278 = vmatpush1.msra.mxu0 0.0
  %279 = vmatprep.subr.mxu0 0.0
  %280 = vmatpush1.msra.mxu0 0.0
  %281 = vmatprep.subr.mxu0 0.0
  %282 = vmatpush1.msra.mxu0 0.0
  %283 = vmatprep.subr.mxu0 0.0
  %284 = vmatpush1.msra.mxu0 0.0
  %285 = vmatprep.subr.mxu0 0.0
  %286 = vmatpush1.msra.mxu0 0.0
  %287 = vmatprep.subr.mxu0 0.0
  %288 = vmatpush1.msra.mxu0 0.0
  %289 = vmatprep.subr.mxu0 0.0
  %290 = vmatpush1.msra.mxu0 0.0
  %291 = vmatprep.subr.mxu0 0.0
  %292 = vmatpush1.msra.mxu0 0.0
  %293 = vmatprep.subr.mxu0 0.0
  %294 = vmatpush1.msra.mxu0 0.0
  %295 = vmatprep.subr.mxu0 0.0
  %296 = vmatpush1.msra.mxu0 0.0
  %297 = vmatprep.subr.mxu0 0.0
  %298 = vmatpush1.msra.mxu0 0.0
  %299 = vmatprep.subr.mxu0 0.0
  %300 = vmatpush1.msra.mxu0 0.0
  %301 = vmatprep.subr.mxu0 0.0
  %302 = vmatpush1.msra.mxu0 0.0
  %303 = vmatprep.subr.mxu0 0.0
  %304 = vmatpush1.msra.mxu0 0.0
  %305 = vmatprep.subr.mxu0 0.0
  %306 = vmatpush1.msra.mxu0 0.0
  %307 = vmatprep.subr.mxu0 0.0
  %308 = vmatpush1.msra.mxu0 0.0
  %309 = vmatprep.subr.mxu0 0.0
  %310 = vmatpush1.msra.mxu0 0.0
  %311 = vmatprep.subr.mxu0 0.0
  %312 = vmatpush1.msra.mxu0 0.0
  %313 = vmatprep.subr.mxu0 0.0
  %314 = vmatpush1.msra.mxu0 0.0
  %315 = vmatprep.mubr.f32.mxu0 0.0
  %316 = vmatmul.mubr.f32.gmra.mrb[0].mxu0 %v38
  %v317 = vpop.f32.mrb[0].mxu0
  %v318 = vadd.f32 0.0, %v317
  %v319 = vpop.f32.mrb[0].mxu0
  %320 = vmatprep.mubr.f32.mxu0 0.0
  %321 = vmatmul.mubr.f32.gmra.mrb[0].mxu0 %v41
  %v322 = vpop.f32.mrb[0].mxu0
  %v323 = vadd.f32 0.0, %v322
  %v324 = vpop.f32.mrb[0].mxu0
  %325 = vmatprep.mubr.f32.mxu0 0.0
  %326 = vmatmul.mubr.f32.gmra.mrb[0].mxu0 %v44
  %v327 = vpop.f32.mrb[0].mxu0
  %v328 = vadd.f32 0.0, %v327
  %v329 = vpop.f32.mrb[0].mxu0
  %330 = vmatprep.mubr.f32.mxu0 0.0
  %331 = vmatmul.mubr.f32.gmra.mrb[0].mxu0 %v47
  %v332 = vpop.f32.mrb[0].mxu0
  %v333 = vadd.f32 0.0, %v332
  %v334 = vpop.f32.mrb[0].mxu0
  %335 = vmatprep.mubr.f32.mxu0 0.0
  %336 = vmatmul.mubr.f32.gmra.mrb[0].mxu0 %v50
  %v337 = vpop.f32.mrb[0].mxu0
  %v338 = vadd.f32 0.0, %v337
  %v339 = vpop.f32.mrb[0].mxu0
  %340 = vmatprep.mubr.f32.mxu0 0.0
  %341 = vmatmul.mubr.f32.gmra.mrb[0].mxu0 %v53
  %v342 = vpop.f32.mrb[0].mxu0
  %v343 = vadd.f32 0.0, %v342
  %v344 = vpop.f32.mrb[0].mxu0
  %345 = vmatprep.mubr.f32.mxu0 0.0
  %346 = vmatmul.mubr.f32.gmra.mrb[0].mxu0 %v56
  %v347 = vpop.f32.mrb[0].mxu0
  %v348 = vadd.f32 0.0, %v347
  %v349 = vpop.f32.mrb[0].mxu0
  %350 = vmatprep.mubr.f32.mxu0 0.0
  %351 = vmatmul.mubr.f32.gmra.mrb[0].mxu0 %v59
  %v352 = vpop.f32.mrb[0].mxu0
  %v353 = vadd.f32 0.0, %v352
  %v354 = vpop.f32.mrb[0].mxu0
  %355 = vmatprep.mubr.f32.mxu0 0.0
  %356 = vmatmul.mubr.f32.gmra.mrb[0].mxu0 %v62
  %v357 = vpop.f32.mrb[0].mxu0
  %v358 = vadd.f32 0.0, %v357
  %v359 = vpop.f32.mrb[0].mxu0
  %360 = vmatprep.mubr.f32.mxu0 0.0
  %361 = vmatmul.mubr.f32.gmra.mrb[0].mxu0 %v65
  %v362 = vpop.f32.mrb[0].mxu0
  %v363 = vadd.f32 0.0, %v362
  %v364 = vpop.f32.mrb[0].mxu0
  %365 = vmatprep.mubr.f32.mxu0 0.0
  %366 = vmatmul.mubr.f32.gmra.mrb[0].mxu0 %v68
  %v367 = vpop.f32.mrb[0].mxu0
  %v368 = vadd.f32 0.0, %v367
  %v369 = vpop.f32.mrb[0].mxu0
  %370 = vmatprep.mubr.f32.mxu0 0.0
  %371 = vmatmul.mubr.f32.gmra.mrb[0].mxu0 %v71
  %v372 = vpop.f32.mrb[0].mxu0
  %v373 = vadd.f32 0.0, %v372
  %v374 = vpop.f32.mrb[0].mxu0
  %375 = vmatprep.mubr.f32.mxu0 0.0
  %376 = vmatmul.mubr.f32.gmra.mrb[0].mxu0 %v74
  %v377 = vpop.f32.mrb[0].mxu0
  %v378 = vadd.f32 0.0, %v377
  %v379 = vpop.f32.mrb[0].mxu0
  %380 = vmatprep.mubr.f32.mxu0 0.0
  %381 = vmatmul.mubr.f32.gmra.mrb[0].mxu0 %v77
  %v382 = vpop.f32.mrb[0].mxu0
  %v383 = vadd.f32 0.0, %v382
  %v384 = vpop.f32.mrb[0].mxu0
  %385 = vmatprep.mubr.f32.mxu0 0.0
  %386 = vmatmul.mubr.f32.gmra.mrb[0].mxu0 %v80
  %v387 = vpop.f32.mrb[0].mxu0
  %v388 = vadd.f32 0.0, %v387
  %v389 = vpop.f32.mrb[0].mxu0
  %390 = vmatprep.mubr.f32.mxu0 0.0
  %391 = vmatmul.mubr.f32.gmra.mrb[0].mxu0 %v83
  %v392 = vpop.f32.mrb[0].mxu0
  %v393 = vadd.f32 0.0, %v392
  %v394 = vpop.f32.mrb[0].mxu0
  %395 = vdwg.mxu0
  %396 = vst.msk [vmem:[%s4] sm:$0xff] %vm230, %v318
  %397 = vst.msk [vmem:[%s4 + $0x8] sm:$0xff] %vm230, %v323
  %398 = vst.msk [vmem:[%s4 + $0x10] sm:$0xff] %vm230, %v328
  %399 = vst.msk [vmem:[%s4 + $0x18] sm:$0xff] %vm230, %v333
  %400 = vst.msk [vmem:[%s4 + $0x20] sm:$0xff] %vm230, %v338
  %401 = vst.msk [vmem:[%s4 + $0x28] sm:$0xff] %vm230, %v343
  %402 = vst.msk [vmem:[%s4 + $0x30] sm:$0xff] %vm230, %v348
  %403 = vst.msk [vmem:[%s4 + $0x38] sm:$0xff] %vm230, %v353
  %404 = vst.msk [vmem:[%s4 + $0x40] sm:$0xff] %vm230, %v358
  %405 = vst.msk [vmem:[%s4 + $0x48] sm:$0xff] %vm230, %v363
  %406 = vst.msk [vmem:[%s4 + $0x50] sm:$0xff] %vm230, %v368
  %407 = vst.msk [vmem:[%s4 + $0x58] sm:$0xff] %vm230, %v373
  %408 = vst.msk [vmem:[%s4 + $0x60] sm:$0xff] %vm230, %v378
  %409 = vst.msk [vmem:[%s4 + $0x68] sm:$0xff] %vm230, %v383
  %410 = vst.msk [vmem:[%s4 + $0x70] sm:$0xff] %vm230, %v388
  %411 = vst.msk [vmem:[%s4 + $0x78] sm:$0xff] %vm230, %v393
  // Predicated region
  $region14: #{ss2dconv_k1_forward.3} parent=0 // pred_check
    _
  $region15: #{ss2dconv_k1_forward.3} parent=0 // pred_check_branch
    %413 = sbr.rel (0) target = $region17
  $region16: #{ss2dconv_k1_forward.3} parent=0 // pred_region
    _
  $region17: #{ss2dconv_k1_forward.3} parent=0 // pred_fallthru
    _
  // Predicated region
  $region18: #{ss2dconv_k1_forward.3} parent=0 // pred_check
    _
  $region19: #{ss2dconv_k1_forward.3} parent=0 // pred_check_branch
    %415 = sbr.rel (0) target = $region21
  $region20: #{ss2dconv_k1_forward.3} parent=0 // pred_region
    _
  $region21: #{ss2dconv_k1_forward.3} parent=0 // pred_fallthru
    _
  // Predicated region
  $region22: #{ss2dconv_k1_forward.3} parent=0 // pred_check
    _
  $region23: #{ss2dconv_k1_forward.3} parent=0 // pred_check_branch
    %417 = sbr.rel (0) target = $region25
  $region24: #{ss2dconv_k1_forward.3} parent=0 // pred_region
    _
  $region25: #{ss2dconv_k1_forward.3} parent=0 // pred_fallthru
    _
  // Predicated region
  $region26: #{ss2dconv_k1_forward.3} parent=0 // pred_check
    _
  $region27: #{ss2dconv_k1_forward.3} parent=0 // pred_check_branch
    %419 = sbr.rel (0) target = $region29
  $region28: #{ss2dconv_k1_forward.3} parent=0 // pred_region
    _
  $region29: #{ss2dconv_k1_forward.3} parent=0 // pred_fallthru
    _

// kernel: ss2dconv_k1_forward.4
$region0: #{ss2dconv_k1_forward.4}
  #allocation0 [shape = 'u32[]', space=smem, size = 0x4, offset = 0x4, fixed_abs, tag = 'smem constant byte address 0x4 - core index']
  #allocation1 [shape = 'u32[144,128]{1,0:T(1,128)}', space=vmem, size = 0x12000, scoped, tag = 'internal scratch']
  %s0 = inlined_call_operand.vmem [shape: f32[2,10,40], index: 0, kind: input, shape index: {}]
  %s1 = inlined_call_operand.vmem [shape: f32[9,32], index: 1, kind: input, shape index: {}]
  %s2 = inlined_call_operand.vmem [shape: f32[1,32], index: 2, kind: input, shape index: {}]
  %s3 = inlined_call_operand.vmem [shape: f32[2,8,32], index: 3, kind: output, shape index: {}]
  %s4 = sld [smem:[#allocation0]]
  $region45: #{ss2dconv_k1_forward.4} parent=0
    _
  %s6 = ssub.s32 1, %s4
  %s7 = scalar_select 0, %s6, %s4
  loop: start=0, step=1, limit=4
  $region2: #{ss2dconv_k1_forward.4} parent=0 // loop_pre_header
    _
  $region3: #{ss2dconv_k1_forward.4} parent=0 // loop_header
    %s9 = sphi 0, %s13
    %p10 = scmp.ge.s32.totalorder %s9, 4
    %s19 = sphi 0, %s21
    %s22 = sphi 0, %s19
    %s23 = sphi 0, %s22
    %s39 = sphi 0, %s23
    %s43 = sphi 0, %s43
    %s45 = sphi 0, %s43
    %s46 = sphi 0, %s45
    %s60 = sphi 0, %s46
    %s64 = sphi 0, %s64
    %s66 = sphi 0, %s64
    %s67 = sphi 0, %s66
    %s81 = sphi 0, %s67
    %s87 = sphi 0, %s89
    %s90 = sphi 0, %s87
    %s91 = sphi 0, %s90
    %s107 = sphi 0, %s91
  $region4: #{ss2dconv_k1_forward.4} parent=0 // loop_header_branch
    %12 = sbr.rel (%p10) target = $region8
  $region5: #{ss2dconv_k1_forward.4} parent=0 // loop_body
    %s14 = ssub.s32 %s9, 1
    %s15 = ssub.s32 %s9, 2
    %s16 = sadd.s32 %s9, 1
    %s17 = ssub.s32 %s9, %s16
    %p18 = scmp.eq.s32.totalorder %s17, 0
    %s20 = sadd.s32 %s19, 1
    %s21 = scalar_select %p18, %s19, %s20
    %p24 = pneg %p18
    %p25 = scmp.eq.s32.totalorder %s9, 1
    %p26 = por %p24, %p25
    %p27 = scmp.ne.s32.totalorder %s19, %s22
    %p28 = scmp.eq.s32.totalorder %s9, 0
    %p29 = por %p27, %p28
    %p30 = scmp.ne.s32.totalorder %s19, %s22
    %p31 = scmp.eq.s32.totalorder %s14, 1
    %p32 = por %p30, %p31
    %p33 = scmp.ne.s32.totalorder %s22, %s23
    %p34 = scmp.eq.s32.totalorder %s14, 0
    %p35 = por %p33, %p34
    %p36 = scmp.ne.s32.totalorder %s22, %s23
    %p37 = scmp.eq.s32.totalorder %s15, 1
    %p38 = por %p36, %p37
    %p40 = scmp.ne.s32.totalorder %s23, %s39
    %p41 = scmp.eq.s32.totalorder %s15, 0
    %p42 = por %p40, %p41
    %s44 = sadd.s32 %s43, 1
    %p47 = scmp.eq.s32.totalorder %s9, 1
    %p48 = scmp.ne.s32.totalorder %s43, %s45
    %p49 = scmp.eq.s32.totalorder %s9, 0
    %p50 = por %p48, %p49
    %p51 = scmp.ne.s32.totalorder %s43, %s45
    %p52 = scmp.eq.s32.totalorder %s14, 1
    %p53 = por %p51, %p52
    %p54 = scmp.ne.s32.totalorder %s45, %s46
    %p55 = scmp.eq.s32.totalorder %s14, 0
    %p56 = por %p54, %p55
    %p57 = scmp.ne.s32.totalorder %s45, %s46
    %p58 = scmp.eq.s32.totalorder %s15, 1
    %p59 = por %p57, %p58
    %p61 = scmp.ne.s32.totalorder %s46, %s60
    %p62 = scmp.eq.s32.totalorder %s15, 0
    %p63 = por %p61, %p62
    %s65 = sadd.s32 %s64, 1
    %p68 = scmp.eq.s32.totalorder %s9, 1
    %p69 = scmp.ne.s32.totalorder %s64, %s66
    %p70 = scmp.eq.s32.totalorder %s9, 0
    %p71 = por %p69, %p70
    %p72 = scmp.ne.s32.totalorder %s64, %s66
    %p73 = scmp.eq.s32.totalorder %s14, 1
    %p74 = por %p72, %p73
    %p75 = scmp.ne.s32.totalorder %s66, %s67
    %p76 = scmp.eq.s32.totalorder %s14, 0
    %p77 = por %p75, %p76
    %p78 = scmp.ne.s32.totalorder %s66, %s67
    %p79 = scmp.eq.s32.totalorder %s15, 1
    %p80 = por %p78, %p79
    %p82 = scmp.ne.s32.totalorder %s67, %s81
    %p83 = scmp.eq.s32.totalorder %s15, 0
    %p84 = por %p82, %p83
    %s85 = ssub.s32 %s9, %s16
    %p86 = scmp.eq.s32.totalorder %s85, 0
    %s88 = sadd.s32 %s87, 1
    %s89 = scalar_select %p86, %s87, %s88
    %p92 = pneg %p86
    %p93 = scmp.eq.s32.totalorder %s9, 1
    %p94 = por %p92, %p93
    %p95 = scmp.ne.s32.totalorder %s87, %s90
    %p96 = scmp.eq.s32.totalorder %s9, 0
    %p97 = por %p95, %p96
    %p98 = scmp.ne.s32.totalorder %s87, %s90
    %p99 = scmp.eq.s32.totalorder %s14, 1
    %p100 = por %p98, %p99
    %p101 = scmp.ne.s32.totalorder %s90, %s91
    %p102 = scmp.eq.s32.totalorder %s14, 0
    %p103 = por %p101, %p102
    %p104 = scmp.ne.s32.totalorder %s90, %s91
    %p105 = scmp.eq.s32.totalorder %s15, 1
    %p106 = por %p104, %p105
    %p108 = scmp.ne.s32.totalorder %s91, %s107
    %p109 = scmp.eq.s32.totalorder %s15, 0
    %p110 = por %p108, %p109
    %p111 = scmp.le.s32.totalorder 1, %s9
    %p112 = scmp.lt.s32.totalorder %s9, 3
    %p113 = pnand %p111, %p112
    %p114 = pneg %p113
    // Predicated region
    $region9: #{ss2dconv_k1_forward.4} parent=5 // pred_check
      _
    $region10: #{ss2dconv_k1_forward.4} parent=5 // pred_check_branch
      %116 = sbr.rel (%p113) target = $region12
    $region11: #{ss2dconv_k1_forward.4} parent=5 // pred_region
      %s117 = ssub.s32 %s9, 1
      // Predicated region
      $region13: #{ss2dconv_k1_forward.4} parent=11 // pred_check
        %p118 = pneg %p56
      $region14: #{ss2dconv_k1_forward.4} parent=11 // pred_check_branch
        %120 = sbr.rel (%p118) target = $region16
      $region15: #{ss2dconv_k1_forward.4} parent=11 // pred_region
        _
      $region16: #{ss2dconv_k1_forward.4} parent=11 // pred_fallthru
        _
      // Predicated region
      $region17: #{ss2dconv_k1_forward.4} parent=11 // pred_check
        %p121 = pneg %p77
      $region18: #{ss2dconv_k1_forward.4} parent=11 // pred_check_branch
        %123 = sbr.rel (%p121) target = $region20
      $region19: #{ss2dconv_k1_forward.4} parent=11 // pred_region
        _
      $region20: #{ss2dconv_k1_forward.4} parent=11 // pred_fallthru
        _
    $region12: #{ss2dconv_k1_forward.4} parent=5 // pred_fallthru
      _
    %p124 = scmp.lt.s32.totalorder %s9, 2
    // Predicated region
    $region21: #{ss2dconv_k1_forward.4} parent=5 // pred_check
      %p125 = pneg %p124
    $region22: #{ss2dconv_k1_forward.4} parent=5 // pred_check_branch
      %127 = sbr.rel (%p125) target = $region24
    $region23: #{ss2dconv_k1_forward.4} parent=5 // pred_region
      // Predicated region
      $region25: #{ss2dconv_k1_forward.4} parent=23 // pred_check
        %p128 = pneg %p29
      $region26: #{ss2dconv_k1_forward.4} parent=23 // pred_check_branch
        %130 = sbr.rel (%p128) target = $region28
      $region27: #{ss2dconv_k1_forward.4} parent=23 // pred_region
        %p131 = scmp.lt.s32.totalorder %s9, 1
        %s132 = scalar_select %p131, %s9, 1
        %s133 = smul.addr %s132, 2
        %s134 = smul.addr %s133, 8
        %s135 = scalar_lea.vmem %s0, %s134
      $region28: #{ss2dconv_k1_forward.4} parent=23 // pred_fallthru
        _
    $region24: #{ss2dconv_k1_forward.4} parent=5 // pred_fallthru
      _
    %p136 = scmp.le.s32.totalorder 1, %s9
    %p137 = scmp.lt.s32.totalorder %s9, 3
    %p138 = pnand %p136, %p137
    %p139 = pneg %p138
    // Predicated region
    $region29: #{ss2dconv_k1_forward.4} parent=5 // pred_check
      _
    $region30: #{ss2dconv_k1_forward.4} parent=5 // pred_check_branch
      %141 = sbr.rel (%p138) target = $region32
    $region31: #{ss2dconv_k1_forward.4} parent=5 // pred_region
      %s142 = ssub.s32 %s9, 1
      %p143 = scmp.lt.s32.totalorder %s14, 1
      %s144 = scalar_select %p143, %s14, 1
      %s145 = smul.addr %s144, 2
      %s146 = smul.addr %s145, 8
      %s147 = scalar_lea.vmem %s0, %s146
      %p148 = pneg %p35
      %p149 = pneg %p32
      %p150 = pneg %p56
      %p151 = pneg %p53
      %p152 = pneg %p77
      %p153 = pneg %p74
      %p154 = pneg %p103
      %p155 = pneg %p100
      %p156 = scmp.lt.s32.totalorder %s14, 1
      %s157 = scalar_select %p156, %s14, 1
      %s158 = smul.addr %s157, 8
      %s159 = scalar_lea.vmem %s3, %s158
      %p160 = scmp.lt.s32.totalorder %s14, 1
      %s161 = scalar_select %p160, %s14, 1
      %s162 = smul.addr %s161, 2
      %s163 = smul.addr %s162, 8
      %s164 = scalar_lea.vmem %s0, %s163
      %p165 = scmp.lt.s32.totalorder %s14, 1
      %s166 = scalar_select %p165, %s14, 1
      %s167 = smul.addr %s166, 8
      %s168 = scalar_lea.vmem %s3, %s167
      %v169 = vld [vmem:[%s164] sm:$0xff]
      %v170 = vld [vmem:[%s1] sm:$0x1]
      %v171 = vlaneseq
      %v172 = vshrl.u32 %v171, 7
      %v173 = vsub.s32 0, %v172
      %v174 = vrot.slane %v170, %v173
      %v175 = vmul.f32 %v169, %v174
      %v176 = vadd.f32 %v175, 0.0
      %v177 = vld [vmem:[%s1 + $0x1] sm:$0x1]
      %v178 = vlaneseq
      %v179 = vshrl.u32 %v178, 7
      %v180 = vsub.s32 0, %v179
      %v181 = vrot.slane %v177, %v180
      %183 = vrot.lane.b32.xlu0 %v181, 4
      %v184 = vpop.permute.xlu0 %183
      %v186 = vmul.f32 %v169, %v184
      %188 = vrot.lane.b32.xlu0 %v186, 124
      %v189 = vpop.permute.xlu0 %188
      %v191 = vadd.f32 %v176, %v189
      %v192 = vld [vmem:[%s1 + $0x2] sm:$0x1]
      %v193 = vlaneseq
      %v194 = vshrl.u32 %v193, 7
      %v195 = vsub.s32 0, %v194
      %v196 = vrot.slane %v192, %v195
      %198 = vrot.lane.b32.xlu0 %v196, 8
      %v199 = vpop.permute.xlu0 %198
      %v201 = vmul.f32 %v169, %v199
      %203 = vrot.lane.b32.xlu0 %v201, 120
      %v204 = vpop.permute.xlu0 %203
      %v206 = vadd.f32 %v191, %v204
      %v207 = vld [vmem:[%s164 + $0x1] sm:$0xff]
      %v208 = vld [vmem:[%s1 + $0x3] sm:$0x1]
      %v209 = vlaneseq
      %v210 = vshrl.u32 %v209, 7
      %v211 = vsub.s32 0, %v210
      %v212 = vrot.slane %v208, %v211
      %v213 = vmul.f32 %v207, %v212
      %v214 = vadd.f32 %v206, %v213
      %v215 = vld [vmem:[%s1 + $0x4] sm:$0x1]
      %v216 = vlaneseq
      %v217 = vshrl.u32 %v216, 7
      %v218 = vsub.s32 0, %v217
      %v219 = vrot.slane %v215, %v218
      %221 = vrot.lane.b32.xlu0 %v219, 4
      %v222 = vpop.permute.xlu0 %221
      %v224 = vmul.f32 %v207, %v222
      %226 = vrot.lane.b32.xlu0 %v224, 124
      %v227 = vpop.permute.xlu0 %226
      %v229 = vadd.f32 %v214, %v227
      %v230 = vld [vmem:[%s1 + $0x5] sm:$0x1]
      %v231 = vlaneseq
      %v232 = vshrl.u32 %v231, 7
      %v233 = vsub.s32 0, %v232
      %v234 = vrot.slane %v230, %v233
      %236 = vrot.lane.b32.xlu0 %v234, 8
      %v237 = vpop.permute.xlu0 %236
      %v239 = vmul.f32 %v207, %v237
      %241 = vrot.lane.b32.xlu0 %v239, 120
      %v242 = vpop.permute.xlu0 %241
      %v244 = vadd.f32 %v229, %v242
      %v245 = vld [vmem:[%s164 + $0x2] sm:$0xff]
      %v246 = vld [vmem:[%s1 + $0x6] sm:$0x1]
      %v247 = vlaneseq
      %v248 = vshrl.u32 %v247, 7
      %v249 = vsub.s32 0, %v248
      %v250 = vrot.slane %v246, %v249
      %v251 = vmul.f32 %v245, %v250
      %v252 = vadd.f32 %v244, %v251
      %v253 = vld [vmem:[%s1 + $0x7] sm:$0x1]
      %v254 = vlaneseq
      %v255 = vshrl.u32 %v254, 7
      %v256 = vsub.s32 0, %v255
      %v257 = vrot.slane %v253, %v256
      %259 = vrot.lane.b32.xlu0 %v257, 4
      %v260 = vpop.permute.xlu0 %259
      %v262 = vmul.f32 %v245, %v260
      %264 = vrot.lane.b32.xlu0 %v262, 124
      %v265 = vpop.permute.xlu0 %264
      %v267 = vadd.f32 %v252, %v265
      %v268 = vld [vmem:[%s1 + $0x8] sm:$0x1]
      %v269 = vlaneseq
      %v270 = vshrl.u32 %v269, 7
      %v271 = vsub.s32 0, %v270
      %v272 = vrot.slane %v268, %v271
      %274 = vrot.lane.b32.xlu0 %v272, 8
      %v275 = vpop.permute.xlu0 %274
      %v277 = vmul.f32 %v245, %v275
      %279 = vrot.lane.b32.xlu0 %v277, 120
      %v280 = vpop.permute.xlu0 %279
      %v282 = vadd.f32 %v267, %v280
      %v283 = vld [vmem:[%s2] sm:$0x1]
      %v285 = vlaneseq
      %v286 = vshrl.u32 %v285, 7
      %v287 = vsub.s32 0, %v286
      %v288 = vrot.slane %v283, %v287
      %v290 = vadd.f32 %v282, %v288
      %v291 = vxor.u32 %v290, 2147483648
      %v292 = vmul.f32 %v291, 1.442695
      %v293 = vpow.pop %v292
      %v294 = vadd.f32 %v293, 1.0
      %v295 = vrcp.pop %v294
      %v296 = vmul.f32 1.0, %v295
      %v297 = vmul.f32 %v290, %v296
      %vm298 = vcmask 261120
      %299 = vst.msk [vmem:[%s168] sm:$0xff] %vm298, %v297
      %p300 = scmp.lt.s32.totalorder %s14, 1
      %s301 = scalar_select %p300, %s14, 1
      %s302 = smul.addr %s301, 8
      %s303 = scalar_lea.vmem %s3, %s302
      // Predicated region
      $region33: #{ss2dconv_k1_forward.4} parent=31 // pred_check
        %p304 = pneg %p100
      $region34: #{ss2dconv_k1_forward.4} parent=31 // pred_check_branch
        %306 = sbr.rel (%p304) target = $region36
      $region35: #{ss2dconv_k1_forward.4} parent=31 // pred_region
        _
      $region36: #{ss2dconv_k1_forward.4} parent=31 // pred_fallthru
        _
    $region32: #{ss2dconv_k1_forward.4} parent=5 // pred_fallthru
      _
    %p307 = scmp.le.s32.totalorder 2, %s9
    // Predicated region
    $region37: #{ss2dconv_k1_forward.4} parent=5 // pred_check
      %p308 = pneg %p307
    $region38: #{ss2dconv_k1_forward.4} parent=5 // pred_check_branch
      %310 = sbr.rel (%p308) target = $region40
    $region39: #{ss2dconv_k1_forward.4} parent=5 // pred_region
      %s311 = ssub.s32 %s9, 2
      // Predicated region
      $region41: #{ss2dconv_k1_forward.4} parent=39 // pred_check
        %p312 = pneg %p106
      $region42: #{ss2dconv_k1_forward.4} parent=39 // pred_check_branch
        %314 = sbr.rel (%p312) target = $region44
      $region43: #{ss2dconv_k1_forward.4} parent=39 // pred_region
        %p315 = scmp.lt.s32.totalorder %s15, 1
        %s316 = scalar_select %p315, %s15, 1
        %s317 = smul.addr %s316, 8
        %s318 = scalar_lea.vmem %s3, %s317
      $region44: #{ss2dconv_k1_forward.4} parent=39 // pred_fallthru
        _
    $region40: #{ss2dconv_k1_forward.4} parent=5 // pred_fallthru
      _
  $region6: #{ss2dconv_k1_forward.4} parent=0 // loop_footer
    %s13 = sadd.s32 1, %s9
  $region7: #{ss2dconv_k1_forward.4} parent=0 // loop_footer_branch
    %8 = sbr.rel target = $region3
  $region8: #{ss2dconv_k1_forward.4} parent=0 // loop_exit
    _

// kernel: ss2dconv_k1_forward.5
$region0: #{ss2dconv_k1_forward.5}
  #allocation0 [shape = 'u32[]', space=smem, size = 0x4, offset = 0x4, fixed_abs, tag = 'smem constant byte address 0x4 - core index']
  #allocation1 [shape = 'u32[144,128]{1,0:T(1,128)}', space=vmem, size = 0x12000, scoped, tag = 'internal scratch']
  #allocation2 [shape = 'f32[16,36]{1,0:T(8,128)}', space=vmem, size = 0x2000, scoped, tag = 'scratch operand']
  #allocation3 [shape = 'f32[64,16,36]{2,1,0:T(8,128)}', space=vmem, size = 0x80000, scoped, tag = 'scratch operand']
  #allocation4 [shape = 'f32[64,16,36]{2,1,0:T(8,128)}', space=vmem, size = 0x80000, scoped, tag = 'scratch operand']
  %s0 = inlined_call_operand.vmem [shape: f32[2,64,36], index: 0, kind: input, shape index: {}]
  %s1 = inlined_call_operand.vmem [shape: f32[2,64,4], index: 1, kind: input, shape index: {}]
  %s2 = inlined_call_operand.vmem [shape: f32[36,36], index: 2, kind: input, shape index: {}]
  %s3 = inlined_call_operand.vmem [shape: f32[36,16], index: 3, kind: input, shape index: {}]
  %s4 = inlined_call_operand.vmem [shape: f32[36,16], index: 4, kind: input, shape index: {}]
  %s5 = inlined_call_operand.vmem [shape: f32[1,36], index: 5, kind: input, shape index: {}]
  %s6 = inlined_call_operand.vmem [shape: f32[16,36], index: 6, kind: input, shape index: {}]
  %s7 = inlined_call_operand.vmem [shape: f32[1,36], index: 7, kind: input, shape index: {}]
  %s8 = inlined_call_operand.vmem [shape: f32[36,4], index: 8, kind: input, shape index: {}]
  %s9 = inlined_call_operand.vmem [shape: f32[1,4], index: 9, kind: input, shape index: {}]
  %s10 = inlined_call_operand.vmem [shape: f32[1,4], index: 10, kind: input, shape index: {}]
  %s11 = inlined_call_operand.vmem [shape: f32[4,32], index: 11, kind: input, shape index: {}]
  %s12 = inlined_call_operand.hbm [shape: f32[2,64,32], index: 12, kind: output, shape index: {}]
  %s13 = sld [smem:[#allocation0]]
  $region92: #{ss2dconv_k1_forward.5} parent=0
    _
  %s15 = ssub.s32 1, %s13
  %s16 = scalar_select 0, %s15, %s13
  $region1: #{ss2dconv_k1_forward.5} parent=0
    #allocation5 [shape = 'u8[65536]{0}', space=vmem, size = 0x10000, scoped, tag = 'output window, operand 0']
    #allocation6 [shape = 's32[2]{0}', space=sflag, size = 0x8, scoped, tag = 'scoped memory for ss2dconv_k1_forward.5']
    %17 = vsyncpa [#allocation6], 0
    %s18 = scalar_lea.sflag [#allocation6], 1
    %19 = vsyncpa %s18, 0
    loop: start=0, step=1, limit=4
    $region2: #{ss2dconv_k1_forward.5} parent=1 // loop_pre_header
      _
    $region3: #{ss2dconv_k1_forward.5} parent=1 // loop_header
      %s21 = sphi 0, %s25
      %p22 = scmp.ge.s32.totalorder %s21, 4
      %s28 = sphi 0, %s40
      %s29 = sphi 0, %s36
      %s30 = sphi 0, %s28
      %s31 = sphi 0, %s29
      %s32 = sphi 0, %s30
      %s33 = sphi 0, %s31
      %s45 = sphi 0, %s47
      %s48 = sphi 0, %s45
      %s49 = sphi 0, %s48
      %s65 = sphi 0, %s49
      %s73 = sphi 0, %s75
      %s76 = sphi 0, %s73
      %s77 = sphi 0, %s76
      %s93 = sphi 0, %s77
      %s97 = sphi 0, %s97
      %s99 = sphi 0, %s97
      %s100 = sphi 0, %s99
      %s114 = sphi 0, %s100
      %s118 = sphi 0, %s118
      %s120 = sphi 0, %s118
      %s121 = sphi 0, %s120
      %s135 = sphi 0, %s121
      %s139 = sphi 0, %s139
      %s141 = sphi 0, %s139
      %s142 = sphi 0, %s141
      %s156 = sphi 0, %s142
      %s160 = sphi 0, %s160
      %s162 = sphi 0, %s160
      %s163 = sphi 0, %s162
      %s177 = sphi 0, %s163
      %s181 = sphi 0, %s181
      %s183 = sphi 0, %s181
      %s184 = sphi 0, %s183
      %s198 = sphi 0, %s184
      %s202 = sphi 0, %s202
      %s204 = sphi 0, %s202
      %s205 = sphi 0, %s204
      %s219 = sphi 0, %s205
      %s223 = sphi 0, %s223
      %s225 = sphi 0, %s223
      %s226 = sphi 0, %s225
      %s240 = sphi 0, %s226
      %s244 = sphi 0, %s244
      %s246 = sphi 0, %s244
      %s247 = sphi 0, %s246
      %s261 = sphi 0, %s247
      %s265 = sphi 0, %s265
      %s267 = sphi 0, %s265
      %s268 = sphi 0, %s267
      %s282 = sphi 0, %s268
      %s286 = sphi 0, %s286
      %s288 = sphi 0, %s286
      %s289 = sphi 0, %s288
      %s303 = sphi 0, %s289
      %s311 = sphi 0, %s313
      %s314 = sphi 0, %s311
      %s315 = sphi 0, %s314
      %s331 = sphi 0, %s315
    $region4: #{ss2dconv_k1_forward.5} parent=1 // loop_header_branch
      %24 = sbr.rel (%p22) target = $region8
    $region5: #{ss2dconv_k1_forward.5} parent=1 // loop_body
      %s26 = ssub.s32 %s21, 1
      %s27 = ssub.s32 %s21, 2
      %s34 = sadd.s32 1, %s29
      %p35 = scmp.ge.s32.totalorder %s34, 1
      %s36 = scalar_select %p35, 0, %s34
      %s37 = sadd.s32 1, %s28
      %s38 = scalar_select %p35, %s37, %s28
      %p39 = scmp.ge.s32.totalorder %s38, 2
      %s40 = scalar_select %p39, 0, %s38
      %s41 = ssub.s32 %s28, %s40
      %s42 = ssub.s32 %s29, %s36
      %s43 = sor.u32 %s41, %s42
      %p44 = scmp.eq.s32.totalorder %s43, 0
      %s46 = sadd.s32 %s45, 1
      %s47 = scalar_select %p44, %s45, %s46
      %p50 = pneg %p44
      %p51 = scmp.eq.s32.totalorder %s21, 1
      %p52 = por %p50, %p51
      %p53 = scmp.ne.s32.totalorder %s45, %s48
      %p54 = scmp.eq.s32.totalorder %s21, 0
      %p55 = por %p53, %p54
      %p56 = scmp.ne.s32.totalorder %s45, %s48
      %p57 = scmp.eq.s32.totalorder %s26, 1
      %p58 = por %p56, %p57
      %p59 = scmp.ne.s32.totalorder %s48, %s49
      %p60 = scmp.eq.s32.totalorder %s26, 0
      %p61 = por %p59, %p60
      %p62 = scmp.ne.s32.totalorder %s48, %s49
      %p63 = scmp.eq.s32.totalorder %s27, 1
      %p64 = por %p62, %p63
      %p66 = scmp.ne.s32.totalorder %s49, %s65
      %p67 = scmp.eq.s32.totalorder %s27, 0
      %p68 = por %p66, %p67
      %s69 = ssub.s32 %s28, %s40
      %s70 = ssub.s32 %s29, %s36
      %s71 = sor.u32 %s69, %s70
      %p72 = scmp.eq.s32.totalorder %s71, 0
      %s74 = sadd.s32 %s73, 1
      %s75 = scalar_select %p72, %s73, %s74
      %p78 = pneg %p72
      %p79 = scmp.eq.s32.totalorder %s21, 1
      %p80 = por %p78, %p79
      %p81 = scmp.ne.s32.totalorder %s73, %s76
      %p82 = scmp.eq.s32.totalorder %s21, 0
      %p83 = por %p81, %p82
      %p84 = scmp.ne.s32.totalorder %s73, %s76
      %p85 = scmp.eq.s32.totalorder %s26, 1
      %p86 = por %p84, %p85
      %p87 = scmp.ne.s32.totalorder %s76, %s77
      %p88 = scmp.eq.s32.totalorder %s26, 0
      %p89 = por %p87, %p88
      %p90 = scmp.ne.s32.totalorder %s76, %s77
      %p91 = scmp.eq.s32.totalorder %s27, 1
      %p92 = por %p90, %p91
      %p94 = scmp.ne.s32.totalorder %s77, %s93
      %p95 = scmp.eq.s32.totalorder %s27, 0
      %p96 = por %p94, %p95
      %s98 = sadd.s32 %s97, 1
      %p101 = scmp.eq.s32.totalorder %s21, 1
      %p102 = scmp.ne.s32.totalorder %s97, %s99
      %p103 = scmp.eq.s32.totalorder %s21, 0
      %p104 = por %p102, %p103
      %p105 = scmp.ne.s32.totalorder %s97, %s99
      %p106 = scmp.eq.s32.totalorder %s26, 1
      %p107 = por %p105, %p106
      %p108 = scmp.ne.s32.totalorder %s99, %s100
      %p109 = scmp.eq.s32.totalorder %s26, 0
      %p110 = por %p108, %p109
      %p111 = scmp.ne.s32.totalorder %s99, %s100
      %p112 = scmp.eq.s32.totalorder %s27, 1
      %p113 = por %p111, %p112
      %p115 = scmp.ne.s32.totalorder %s100, %s114
      %p116 = scmp.eq.s32.totalorder %s27, 0
      %p117 = por %p115, %p116
      %s119 = sadd.s32 %s118, 1
      %p122 = scmp.eq.s32.totalorder %s21, 1
      %p123 = scmp.ne.s32.totalorder %s118, %s120
      %p124 = scmp.eq.s32.totalorder %s21, 0
      %p125 = por %p123, %p124
      %p126 = scmp.ne.s32.totalorder %s118, %s120
      %p127 = scmp.eq.s32.totalorder %s26, 1
      %p128 = por %p126, %p127
      %p129 = scmp.ne.s32.totalorder %s120, %s121
      %p130 = scmp.eq.s32.totalorder %s26, 0
      %p131 = por %p129, %p130
      %p132 = scmp.ne.s32.totalorder %s120, %s121
      %p133 = scmp.eq.s32.totalorder %s27, 1
      %p134 = por %p132, %p133
      %p136 = scmp.ne.s32.totalorder %s121, %s135
      %p137 = scmp.eq.s32.totalorder %s27, 0
      %p138 = por %p136, %p137
      %s140 = sadd.s32 %s139, 1
      %p143 = scmp.eq.s32.totalorder %s21, 1
      %p144 = scmp.ne.s32.totalorder %s139, %s141
      %p145 = scmp.eq.s32.totalorder %s21, 0
      %p146 = por %p144, %p145
      %p147 = scmp.ne.s32.totalorder %s139, %s141
      %p148 = scmp.eq.s32.totalorder %s26, 1
      %p149 = por %p147, %p148
      %p150 = scmp.ne.s32.totalorder %s141, %s142
      %p151 = scmp.eq.s32.totalorder %s26, 0
      %p152 = por %p150, %p151
      %p153 = scmp.ne.s32.totalorder %s141, %s142
      %p154 = scmp.eq.s32.totalorder %s27, 1
      %p155 = por %p153, %p154
      %p157 = scmp.ne.s32.totalorder %s142, %s156
      %p158 = scmp.eq.s32.totalorder %s27, 0
      %p159 = por %p157, %p158
      %s161 = sadd.s32 %s160, 1
      %p164 = scmp.eq.s32.totalorder %s21, 1
      %p165 = scmp.ne.s32.totalorder %s160, %s162
      %p166 = scmp.eq.s32.totalorder %s21, 0
      %p167 = por %p165, %p166
      %p168 = scmp.ne.s32.totalorder %s160, %s162
      %p169 = scmp.eq.s32.totalorder %s26, 1
      %p170 = por %p168, %p169
      %p171 = scmp.ne.s32.totalorder %s162, %s163
      %p172 = scmp.eq.s32.totalorder %s26, 0
      %p173 = por %p171, %p172
      %p174 = scmp.ne.s32.totalorder %s162, %s163
      %p175 = scmp.eq.s32.totalorder %s27, 1
      %p176 = por %p174, %p175
      %p178 = scmp.ne.s32.totalorder %s163, %s177
      %p179 = scmp.eq.s32.totalorder %s27, 0
      %p180 = por %p178, %p179
      %s182 = sadd.s32 %s181, 1
      %p185 = scmp.eq.s32.totalorder %s21, 1
      %p186 = scmp.ne.s32.totalorder %s181, %s183
      %p187 = scmp.eq.s32.totalorder %s21, 0
      %p188 = por %p186, %p187
      %p189 = scmp.ne.s32.totalorder %s181, %s183
      %p190 = scmp.eq.s32.totalorder %s26, 1
      %p191 = por %p189, %p190
      %p192 = scmp.ne.s32.totalorder %s183, %s184
      %p193 = scmp.eq.s32.totalorder %s26, 0
      %p194 = por %p192, %p193
      %p195 = scmp.ne.s32.totalorder %s183, %s184
      %p196 = scmp.eq.s32.totalorder %s27, 1
      %p197 = por %p195, %p196
      %p199 = scmp.ne.s32.totalorder %s184, %s198
      %p200 = scmp.eq.s32.totalorder %s27, 0
      %p201 = por %p199, %p200
      %s203 = sadd.s32 %s202, 1
      %p206 = scmp.eq.s32.totalorder %s21, 1
      %p207 = scmp.ne.s32.totalorder %s202, %s204
      %p208 = scmp.eq.s32.totalorder %s21, 0
      %p209 = por %p207, %p208
      %p210 = scmp.ne.s32.totalorder %s202, %s204
      %p211 = scmp.eq.s32.totalorder %s26, 1
      %p212 = por %p210, %p211
      %p213 = scmp.ne.s32.totalorder %s204, %s205
      %p214 = scmp.eq.s32.totalorder %s26, 0
      %p215 = por %p213, %p214
      %p216 = scmp.ne.s32.totalorder %s204, %s205
      %p217 = scmp.eq.s32.totalorder %s27, 1
      %p218 = por %p216, %p217
      %p220 = scmp.ne.s32.totalorder %s205, %s219
      %p221 = scmp.eq.s32.totalorder %s27, 0
      %p222 = por %p220, %p221
      %s224 = sadd.s32 %s223, 1
      %p227 = scmp.eq.s32.totalorder %s21, 1
      %p228 = scmp.ne.s32.totalorder %s223, %s225
      %p229 = scmp.eq.s32.totalorder %s21, 0
      %p230 = por %p228, %p229
      %p231 = scmp.ne.s32.totalorder %s223, %s225
      %p232 = scmp.eq.s32.totalorder %s26, 1
      %p233 = por %p231, %p232
      %p234 = scmp.ne.s32.totalorder %s225, %s226
      %p235 = scmp.eq.s32.totalorder %s26, 0
      %p236 = por %p234, %p235
      %p237 = scmp.ne.s32.totalorder %s225, %s226
      %p238 = scmp.eq.s32.totalorder %s27, 1
      %p239 = por %p237, %p238
      %p241 = scmp.ne.s32.totalorder %s226, %s240
      %p242 = scmp.eq.s32.totalorder %s27, 0
      %p243 = por %p241, %p242
      %s245 = sadd.s32 %s244, 1
      %p248 = scmp.eq.s32.totalorder %s21, 1
      %p249 = scmp.ne.s32.totalorder %s244, %s246
      %p250 = scmp.eq.s32.totalorder %s21, 0
      %p251 = por %p249, %p250
      %p252 = scmp.ne.s32.totalorder %s244, %s246
      %p253 = scmp.eq.s32.totalorder %s26, 1
      %p254 = por %p252, %p253
      %p255 = scmp.ne.s32.totalorder %s246, %s247
      %p256 = scmp.eq.s32.totalorder %s26, 0
      %p257 = por %p255, %p256
      %p258 = scmp.ne.s32.totalorder %s246, %s247
      %p259 = scmp.eq.s32.totalorder %s27, 1
      %p260 = por %p258, %p259
      %p262 = scmp.ne.s32.totalorder %s247, %s261
      %p263 = scmp.eq.s32.totalorder %s27, 0
      %p264 = por %p262, %p263
      %s266 = sadd.s32 %s265, 1
      %p269 = scmp.eq.s32.totalorder %s21, 1
      %p270 = scmp.ne.s32.totalorder %s265, %s267
      %p271 = scmp.eq.s32.totalorder %s21, 0
      %p272 = por %p270, %p271
      %p273 = scmp.ne.s32.totalorder %s265, %s267
      %p274 = scmp.eq.s32.totalorder %s26, 1
      %p275 = por %p273, %p274
      %p276 = scmp.ne.s32.totalorder %s267, %s268
      %p277 = scmp.eq.s32.totalorder %s26, 0
      %p278 = por %p276, %p277
      %p279 = scmp.ne.s32.totalorder %s267, %s268
      %p280 = scmp.eq.s32.totalorder %s27, 1
      %p281 = por %p279, %p280
      %p283 = scmp.ne.s32.totalorder %s268, %s282
      %p284 = scmp.eq.s32.totalorder %s27, 0
      %p285 = por %p283, %p284
      %s287 = sadd.s32 %s286, 1
      %p290 = scmp.eq.s32.totalorder %s21, 1
      %p291 = scmp.ne.s32.totalorder %s286, %s288
      %p292 = scmp.eq.s32.totalorder %s21, 0
      %p293 = por %p291, %p292
      %p294 = scmp.ne.s32.totalorder %s286, %s288
      %p295 = scmp.eq.s32.totalorder %s26, 1
      %p296 = por %p294, %p295
      %p297 = scmp.ne.s32.totalorder %s288, %s289
      %p298 = scmp.eq.s32.totalorder %s26, 0
      %p299 = por %p297, %p298
      %p300 = scmp.ne.s32.totalorder %s288, %s289
      %p301 = scmp.eq.s32.totalorder %s27, 1
      %p302 = por %p300, %p301
      %p304 = scmp.ne.s32.totalorder %s289, %s303
      %p305 = scmp.eq.s32.totalorder %s27, 0
      %p306 = por %p304, %p305
      %s307 = ssub.s32 %s28, %s40
      %s308 = ssub.s32 %s29, %s36
      %s309 = sor.u32 %s307, %s308
      %p310 = scmp.eq.s32.totalorder %s309, 0
      %s312 = sadd.s32 %s311, 1
      %s313 = scalar_select %p310, %s311, %s312
      %p316 = pneg %p310
      %p317 = scmp.eq.s32.totalorder %s21, 1
      %p318 = por %p316, %p317
      %p319 = scmp.ne.s32.totalorder %s311, %s314
      %p320 = scmp.eq.s32.totalorder %s21, 0
      %p321 = por %p319, %p320
      %p322 = scmp.ne.s32.totalorder %s311, %s314
      %p323 = scmp.eq.s32.totalorder %s26, 1
      %p324 = por %p322, %p323
      %p325 = scmp.ne.s32.totalorder %s314, %s315
      %p326 = scmp.eq.s32.totalorder %s26, 0
      %p327 = por %p325, %p326
      %p328 = scmp.ne.s32.totalorder %s314, %s315
      %p329 = scmp.eq.s32.totalorder %s27, 1
      %p330 = por %p328, %p329
      %p332 = scmp.ne.s32.totalorder %s315, %s331
      %p333 = scmp.eq.s32.totalorder %s27, 0
      %p334 = por %p332, %p333
      %p335 = scmp.le.s32.totalorder 1, %s21
      %p336 = scmp.lt.s32.totalorder %s21, 3
      %p337 = pnand %p335, %p336
      %p338 = pneg %p337
      // Predicated region
      $region9: #{ss2dconv_k1_forward.5} parent=5 // pred_check
        _
      $region10: #{ss2dconv_k1_forward.5} parent=5 // pred_check_branch
        %340 = sbr.rel (%p337) target = $region12
      $region11: #{ss2dconv_k1_forward.5} parent=5 // pred_region
        %s341 = ssub.s32 %s21, 1
        // Predicated region
        $region13: #{ss2dconv_k1_forward.5} parent=11 // pred_check
          %p342 = pneg %p110
        $region14: #{ss2dconv_k1_forward.5} parent=11 // pred_check_branch
          %344 = sbr.rel (%p342) target = $region16
        $region15: #{ss2dconv_k1_forward.5} parent=11 // pred_region
          _
        $region16: #{ss2dconv_k1_forward.5} parent=11 // pred_fallthru
          _
        // Predicated region
        $region17: #{ss2dconv_k1_forward.5} parent=11 // pred_check
          %p345 = pneg %p131
        $region18: #{ss2dconv_k1_forward.5} parent=11 // pred_check_branch
          %347 = sbr.rel (%p345) target = $region20
        $region19: #{ss2dconv_k1_forward.5} parent=11 // pred_region
          _
        $region20: #{ss2dconv_k1_forward.5} parent=11 // pred_fallthru
          _
        // Predicated region
        $region21: #{ss2dconv_k1_forward.5} parent=11 // pred_check
          %p348 = pneg %p152
        $region22: #{ss2dconv_k1_forward.5} parent=11 // pred_check_branch
          %350 = sbr.rel (%p348) target = $region24
        $region23: #{ss2dconv_k1_forward.5} parent=11 // pred_region
          _
        $region24: #{ss2dconv_k1_forward.5} parent=11 // pred_fallthru
          _
        // Predicated region
        $region25: #{ss2dconv_k1_forward.5} parent=11 // pred_check
          %p351 = pneg %p173
        $region26: #{ss2dconv_k1_forward.5} parent=11 // pred_check_branch
          %353 = sbr.rel (%p351) target = $region28
        $region27: #{ss2dconv_k1_forward.5} parent=11 // pred_region
          _
        $region28: #{ss2dconv_k1_forward.5} parent=11 // pred_fallthru
          _
        // Predicated region
        $region29: #{ss2dconv_k1_forward.5} parent=11 // pred_check
          %p354 = pneg %p194
        $region30: #{ss2dconv_k1_forward.5} parent=11 // pred_check_branch
          %356 = sbr.rel (%p354) target = $region32
        $region31: #{ss2dconv_k1_forward.5} parent=11 // pred_region
          _
        $region32: #{ss2dconv_k1_forward.5} parent=11 // pred_fallthru
          _
        // Predicated region
        $region33: #{ss2dconv_k1_forward.5} parent=11 // pred_check
          %p357 = pneg %p215
        $region34: #{ss2dconv_k1_forward.5} parent=11 // pred_check_branch
          %359 = sbr.rel (%p357) target = $region36
        $region35: #{ss2dconv_k1_forward.5} parent=11 // pred_region
          _
        $region36: #{ss2dconv_k1_forward.5} parent=11 // pred_fallthru
          _
        // Predicated region
        $region37: #{ss2dconv_k1_forward.5} parent=11 // pred_check
          %p360 = pneg %p236
        $region38: #{ss2dconv_k1_forward.5} parent=11 // pred_check_branch
          %362 = sbr.rel (%p360) target = $region40
        $region39: #{ss2dconv_k1_forward.5} parent=11 // pred_region
          _
        $region40: #{ss2dconv_k1_forward.5} parent=11 // pred_fallthru
          _
        // Predicated region
        $region41: #{ss2dconv_k1_forward.5} parent=11 // pred_check
          %p363 = pneg %p257
        $region42: #{ss2dconv_k1_forward.5} parent=11 // pred_check_branch
          %365 = sbr.rel (%p363) target = $region44
        $region43: #{ss2dconv_k1_forward.5} parent=11 // pred_region
          _
        $region44: #{ss2dconv_k1_forward.5} parent=11 // pred_fallthru
          _
        // Predicated region
        $region45: #{ss2dconv_k1_forward.5} parent=11 // pred_check
          %p366 = pneg %p278
        $region46: #{ss2dconv_k1_forward.5} parent=11 // pred_check_branch
          %368 = sbr.rel (%p366) target = $region48
        $region47: #{ss2dconv_k1_forward.5} parent=11 // pred_region
          _
        $region48: #{ss2dconv_k1_forward.5} parent=11 // pred_fallthru
          _
        // Predicated region
        $region49: #{ss2dconv_k1_forward.5} parent=11 // pred_check
          %p369 = pneg %p299
        $region50: #{ss2dconv_k1_forward.5} parent=11 // pred_check_branch
          %371 = sbr.rel (%p369) target = $region52
        $region51: #{ss2dconv_k1_forward.5} parent=11 // pred_region
          _
        $region52: #{ss2dconv_k1_forward.5} parent=11 // pred_fallthru
          _
      $region12: #{ss2dconv_k1_forward.5} parent=5 // pred_fallthru
        _
      %p372 = scmp.lt.s32.totalorder %s21, 2
      // Predicated region
      $region53: #{ss2dconv_k1_forward.5} parent=5 // pred_check
        %p373 = pneg %p372
      $region54: #{ss2dconv_k1_forward.5} parent=5 // pred_check_branch
        %375 = sbr.rel (%p373) target = $region56
      $region55: #{ss2dconv_k1_forward.5} parent=5 // pred_region
        // Predicated region
        $region57: #{ss2dconv_k1_forward.5} parent=55 // pred_check
          %p376 = pneg %p55
        $region58: #{ss2dconv_k1_forward.5} parent=55 // pred_check_branch
          %378 = sbr.rel (%p376) target = $region60
        $region59: #{ss2dconv_k1_forward.5} parent=55 // pred_region
          %s379 = smul.u32 8, %s29
          %p380 = scmp.lt.s32.totalorder %s28, 1
          %s381 = scalar_select %p380, %s28, 1
          %p382 = scmp.lt.s32.totalorder %s379, 7
          %s383 = scalar_select %p382, %s379, 7
          %s384 = smul.addr %s381, 8
          %s385 = sadd.s32 %s383, %s384
          %s386 = smul.addr %s385, 8
          %s387 = scalar_lea.vmem %s0, %s386
          %s388 = smul.u32 8, %s29
        $region60: #{ss2dconv_k1_forward.5} parent=55 // pred_fallthru
          _
        // Predicated region
        $region61: #{ss2dconv_k1_forward.5} parent=55 // pred_check
          %p389 = pneg %p83
        $region62: #{ss2dconv_k1_forward.5} parent=55 // pred_check_branch
          %391 = sbr.rel (%p389) target = $region64
        $region63: #{ss2dconv_k1_forward.5} parent=55 // pred_region
          %s392 = smul.u32 8, %s29
          %p393 = scmp.lt.s32.totalorder %s28, 1
          %s394 = scalar_select %p393, %s28, 1
          %p395 = scmp.lt.s32.totalorder %s392, 7
          %s396 = scalar_select %p395, %s392, 7
          %s397 = smul.addr %s394, 8
          %s398 = sadd.s32 %s396, %s397
          %s399 = smul.addr %s398, 8
          %s400 = scalar_lea.vmem %s1, %s399
          %s401 = smul.u32 8, %s29
        $region64: #{ss2dconv_k1_forward.5} parent=55 // pred_fallthru
          _
      $region56: #{ss2dconv_k1_forward.5} parent=5 // pred_fallthru
        _
      %p402 = scmp.le.s32.totalorder 1, %s21
      %p403 = scmp.lt.s32.totalorder %s21, 3
      %p404 = pnand %p402, %p403
      %p405 = pneg %p404
      // Predicated region
      $region65: #{ss2dconv_k1_forward.5} parent=5 // pred_check
        _
      $region66: #{ss2dconv_k1_forward.5} parent=5 // pred_check_branch
        %407 = sbr.rel (%p404) target = $region68
      $region67: #{ss2dconv_k1_forward.5} parent=5 // pred_region
        %s408 = ssub.s32 %s21, 1
        %s409 = smul.u32 8, %s31
        %p410 = scmp.lt.s32.totalorder %s30, 1
        %s411 = scalar_select %p410, %s30, 1
        %p412 = scmp.lt.s32.totalorder %s409, 7
        %s413 = scalar_select %p412, %s409, 7
        %s414 = smul.addr %s411, 8
        %s415 = sadd.s32 %s413, %s414
        %s416 = smul.addr %s415, 8
        %s417 = scalar_lea.vmem %s0, %s416
        %p418 = pneg %p61
        %p419 = pneg %p58
        %s420 = smul.u32 8, %s31
        %p421 = scmp.lt.s32.totalorder %s30, 1
        %s422 = scalar_select %p421, %s30, 1
        %p423 = scmp.lt.s32.totalorder %s420, 7
        %s424 = scalar_select %p423, %s420, 7
        %s425 = smul.addr %s422, 8
        %s426 = sadd.s32 %s424, %s425
        %s427 = smul.addr %s426, 8
        %s428 = scalar_lea.vmem %s1, %s427
        %p429 = pneg %p89
        %p430 = pneg %p86
        %p431 = pneg %p110
        %p432 = pneg %p107
        %p433 = pneg %p131
        %p434 = pneg %p128
        %p435 = pneg %p152
        %p436 = pneg %p149
        %p437 = pneg %p173
        %p438 = pneg %p170
        %p439 = pneg %p194
        %p440 = pneg %p191
        %p441 = pneg %p215
        %p442 = pneg %p212
        %p443 = pneg %p236
        %p444 = pneg %p233
        %p445 = pneg %p257
        %p446 = pneg %p254
        %p447 = pneg %p278
        %p448 = pneg %p275
        %p449 = pneg %p299
        %p450 = pneg %p296
        %p451 = pneg %p327
        %p452 = pneg %p324
        %s453 = sand.u32 %s314, 1
        %s454 = scalar_lea.sflag [#allocation6], %s453
        %s455 = sand.u32 %s314, 1
        %s456 = smul.addr %s455, 64
        %s457 = scalar_lea.vmem [#allocation5], %s456
        %s458 = smul.u32 8, %s31
        %p459 = scmp.lt.s32.totalorder %s30, 1
        %s460 = scalar_select %p459, %s30, 1
        %p461 = scmp.lt.s32.totalorder %s458, 7
        %s462 = scalar_select %p461, %s458, 7
        %s463 = smul.addr %s460, 8
        %s464 = sadd.s32 %s462, %s463
        %s465 = smul.addr %s464, 8
        %s466 = scalar_lea.vmem %s0, %s465
        %s467 = smul.u32 8, %s31
        %s468 = smul.u32 8, %s31
        %p469 = scmp.lt.s32.totalorder %s30, 1
        %s470 = scalar_select %p469, %s30, 1
        %p471 = scmp.lt.s32.totalorder %s468, 7
        %s472 = scalar_select %p471, %s468, 7
        %s473 = smul.addr %s470, 8
        %s474 = sadd.s32 %s472, %s473
        %s475 = smul.addr %s474, 8
        %s476 = scalar_lea.vmem %s1, %s475
        %s477 = smul.u32 8, %s31
        %s478 = smul.u32 8, %s31
        %p479 = scmp.eq.s32.totalorder %s31, 0
        // Predicated region
        $region69: #{ss2dconv_k1_forward.5} parent=67 // pred_check
          %p480 = pneg %p479
        $region70: #{ss2dconv_k1_forward.5} parent=67 // pred_check_branch
          %482 = sbr.rel (%p480) target = $region72
        $region71: #{ss2dconv_k1_forward.5} parent=67 // pred_region
          %vm483 = vcmask 293888
          %484 = vst.msk [vmem:[#allocation2] sm:$0xff] %vm483, 0.0
          %485 = vst.msk [vmem:[#allocation2 + $0x8] sm:$0xff] %vm483, 0.0
        $region72: #{ss2dconv_k1_forward.5} parent=67 // pred_fallthru
          _
        %v486 = vld [vmem:[%s466] sm:$0xff]
        %v487 = vld [vmem:[%s466 + $0x8] sm:$0xff]
        %v488 = vld [vmem:[%s466 + $0x10] sm:$0xff]
        %v489 = vld [vmem:[%s466 + $0x18] sm:$0xff]
        %v490 = vld [vmem:[%s466 + $0x20] sm:$0xff]
        %v491 = vld [vmem:[%s466 + $0x28] sm:$0xff]
        %v492 = vld [vmem:[%s466 + $0x30] sm:$0xff]
        %v493 = vld [vmem:[%s466 + $0x38] sm:$0xff]
        %v494 = vld [vmem:[%s2] sm:$0xff]
        %v495 = vld [vmem:[%s2 + $0x8] sm:$0xff]
        %v496 = vld [vmem:[%s2 + $0x10] sm:$0xff]
        %v497 = vld [vmem:[%s2 + $0x18] sm:$0xff]
        %v498 = vld [vmem:[%s2 + $0x20] sm:$0xf]
        %v499 = vld [vmem:[%s5] sm:$0x1]
        %v501 = vlaneseq
        %v502 = vshrl.u32 %v501, 7
        %v503 = vsub.s32 0, %v502
        %v504 = vrot.slane %v499, %v503
        %vm506 = vcmask 293888
        %v508 = vsel %vm506, %v486, 0
        %v511 = vsel %vm506, %v487, 0
        %v514 = vsel %vm506, %v488, 0
        %v517 = vsel %vm506, %v489, 0
        %v520 = vsel %vm506, %v490, 0
        %v523 = vsel %vm506, %v491, 0
        %v526 = vsel %vm506, %v492, 0
        %v529 = vsel %vm506, %v493, 0
        %vm531 = vcmask 1043456
        %v533 = vsel %vm531, %v498, 0
        %535 = vmatprep.subr.mxu0 0.0
        %536 = vmatpush1.msra.mxu0 %v494
        %537 = vmatprep.subr.mxu0 0.0
        %538 = vmatpush1.msra.mxu0 %v495
        %539 = vmatprep.subr.mxu0 0.0
        %540 = vmatpush1.msra.mxu0 %v496
        %541 = vmatprep.subr.mxu0 0.0
        %542 = vmatpush1.msra.mxu0 %v497
        %543 = vmatprep.subr.mxu0 0.0
        %544 = vmatpush1.msra.mxu0 %v533
        %545 = vmatprep.subr.mxu0 0.0
        %546 = vmatpush1.msra.mxu0 0.0
        %547 = vmatprep.subr.mxu0 0.0
        %548 = vmatpush1.msra.mxu0 0.0
        %549 = vmatprep.subr.mxu0 0.0
        %550 = vmatpush1.msra.mxu0 0.0
        %551 = vmatprep.subr.mxu0 0.0
        %552 = vmatpush1.msra.mxu0 0.0
        %553 = vmatprep.subr.mxu0 0.0
        %554 = vmatpush1.msra.mxu0 0.0
        %555 = vmatprep.subr.mxu0 0.0
        %556 = vmatpush1.msra.mxu0 0.0
        %557 = vmatprep.subr.mxu0 0.0
        %558 = vmatpush1.msra.mxu0 0.0
        %559 = vmatprep.subr.mxu0 0.0
        %560 = vmatpush1.msra.mxu0 0.0
        %561 = vmatprep.subr.mxu0 0.0
        %562 = vmatpush1.msra.mxu0 0.0
        %563 = vmatprep.subr.mxu0 0.0
        %564 = vmatpush1.msra.mxu0 0.0
        %565 = vmatprep.subr.mxu0 0.0
        %566 = vmatpush1.msra.mxu0 0.0
        %567 = vmatprep.subr.mxu0 0.0
        %568 = vmatpush1.msra.mxu0 0.0
        %569 = vmatprep.subr.mxu0 0.0
        %570 = vmatpush1.msra.mxu0 0.0
        %571 = vmatprep.subr.mxu0 0.0
        %572 = vmatpush1.msra.mxu0 0.0
        %573 = vmatprep.subr.mxu0 0.0
        %574 = vmatpush1.msra.mxu0 0.0
        %575 = vmatprep.subr.mxu0 0.0
        %576 = vmatpush1.msra.mxu0 0.0
        %577 = vmatprep.subr.mxu0 0.0
        %578 = vmatpush1.msra.mxu0 0.0
        %579 = vmatprep.subr.mxu0 0.0
        %580 = vmatpush1.msra.mxu0 0.0
        %581 = vmatprep.subr.mxu0 0.0
        %582 = vmatpush1.msra.mxu0 0.0
        %583 = vmatprep.subr.mxu0 0.0
        %584 = vmatpush1.msra.mxu0 0.0
        %585 = vmatprep.subr.mxu0 0.0
        %586 = vmatpush1.msra.mxu0 0.0
        %587 = vmatprep.subr.mxu0 0.0
        %588 = vmatpush1.msra.mxu0 0.0
        %589 = vmatprep.subr.mxu0 0.0
        %590 = vmatpush1.msra.mxu0 0.0
        %591 = vmatprep.subr.mxu0 0.0
        %592 = vmatpush1.msra.mxu0 0.0
        %593 = vmatprep.subr.mxu0 0.0
        %594 = vmatpush1.msra.mxu0 0.0
        %595 = vmatprep.subr.mxu0 0.0
        %596 = vmatpush1.msra.mxu0 0.0
        %597 = vmatprep.subr.mxu0 0.0
        %598 = vmatpush1.msra.mxu0 0.0
        %599 = vmatprep.mubr.f32.mxu0 0.0
        %600 = vmatmul.mubr.f32.gmra.mrb[0].mxu0 %v508
        %v601 = vpop.f32.mrb[0].mxu0
        %v602 = vadd.f32 %v504, %v601
        %v603 = vpop.f32.mrb[0].mxu0
        %604 = vmatprep.mubr.f32.mxu0 0.0
        %605 = vmatmul.mubr.f32.gmra.mrb[0].mxu0 %v511
        %v606 = vpop.f32.mrb[0].mxu0
        %v607 = vadd.f32 %v504, %v606
        %v608 = vpop.f32.mrb[0].mxu0
        %609 = vmatprep.mubr.f32.mxu0 0.0
        %610 = vmatmul.mubr.f32.gmra.mrb[0].mxu0 %v514
        %v611 = vpop.f32.mrb[0].mxu0
        %v612 = vadd.f32 %v504, %v611
        %v613 = vpop.f32.mrb[0].mxu0
        %614 = vmatprep.mubr.f32.mxu0 0.0
        %615 = vmatmul.mubr.f32.gmra.mrb[0].mxu0 %v517
        %v616 = vpop.f32.mrb[0].mxu0
        %v617 = vadd.f32 %v504, %v616
        %v618 = vpop.f32.mrb[0].mxu0
        %619 = vmatprep.mubr.f32.mxu0 0.0
        %620 = vmatmul.mubr.f32.gmra.mrb[0].mxu0 %v520
        %v621 = vpop.f32.mrb[0].mxu0
        %v622 = vadd.f32 %v504, %v621
        %v623 = vpop.f32.mrb[0].mxu0
        %624 = vmatprep.mubr.f32.mxu0 0.0
        %625 = vmatmul.mubr.f32.gmra.mrb[0].mxu0 %v523
        %v626 = vpop.f32.mrb[0].mxu0
        %v627 = vadd.f32 %v504, %v626
        %v628 = vpop.f32.mrb[0].mxu0
        %629 = vmatprep.mubr.f32.mxu0 0.0
        %630 = vmatmul.mubr.f32.gmra.mrb[0].mxu0 %v526
        %v631 = vpop.f32.mrb[0].mxu0
        %v632 = vadd.f32 %v504, %v631
        %v633 = vpop.f32.mrb[0].mxu0
        %634 = vmatprep.mubr.f32.mxu0 0.0
        %635 = vmatmul.mubr.f32.gmra.mrb[0].mxu0 %v529
        %v636 = vpop.f32.mrb[0].mxu0
        %v637 = vadd.f32 %v504, %v636
        %v638 = vpop.f32.mrb[0].mxu0
        %639 = vdwg.mxu0
        %vm640 = vcmp.gt.f32.partialorder %v602, 20.0
        %vm641 = vcmp.gt.f32.partialorder %v607, 20.0
        %vm642 = vcmp.gt.f32.partialorder %v612, 20.0
        %vm643 = vcmp.gt.f32.partialorder %v617, 20.0
        %vm644 = vcmp.gt.f32.partialorder %v622, 20.0
        %vm645 = vcmp.gt.f32.partialorder %v627, 20.0
        %vm646 = vcmp.gt.f32.partialorder %v632, 20.0
        %vm647 = vcmp.gt.f32.partialorder %v637, 20.0
        %v648 = vmul.f32 %v602, 1.442695
        %v649 = vpow.pop %v648
        %v650 = vmul.f32 %v607, 1.442695
        %v651 = vpow.pop %v650
        %v652 = vmul.f32 %v612, 1.442695
        %v653 = vpow.pop %v652
        %v654 = vmul.f32 %v617, 1.442695
        %v655 = vpow.pop %v654
        %v656 = vmul.f32 %v622, 1.442695
        %v657 = vpow.pop %v656
        %v658 = vmul.f32 %v627, 1.442695
        %v659 = vpow.pop %v658
        %v660 = vmul.f32 %v632, 1.442695
        %v661 = vpow.pop %v660
        %v662 = vmul.f32 %v637, 1.442695
        %v663 = vpow.pop %v662
        %v664 = vadd.f32 %v649, 1.0
        %v665 = vlog2.pop %v664
        %v666 = vmul.f32 %v665, 0.6931472
        %v667 = vmul.f32 -0.5, %v649
        %v668 = vadd.f32 %v667, 1.0
        %v669 = vmul.f32 %v668, %v649
        %v670 = vand.u32 2147483647, %v649
        %vm671 = vcmp.lt.f32.partialorder %v670, 0.0004427343
        %v672 = vsel %vm671, %v669, %v666
        %v673 = vadd.f32 %v651, 1.0
        %v674 = vlog2.pop %v673
        %v675 = vmul.f32 %v674, 0.6931472
        %v676 = vmul.f32 -0.5, %v651
        %v677 = vadd.f32 %v676, 1.0
        %v678 = vmul.f32 %v677, %v651
        %v679 = vand.u32 2147483647, %v651
        %vm680 = vcmp.lt.f32.partialorder %v679, 0.0004427343
        %v681 = vsel %vm680, %v678, %v675
        %v682 = vadd.f32 %v653, 1.0
        %v683 = vlog2.pop %v682
        %v684 = vmul.f32 %v683, 0.6931472
        %v685 = vmul.f32 -0.5, %v653
        %v686 = vadd.f32 %v685, 1.0
        %v687 = vmul.f32 %v686, %v653
        %v688 = vand.u32 2147483647, %v653
        %vm689 = vcmp.lt.f32.partialorder %v688, 0.0004427343
        %v690 = vsel %vm689, %v687, %v684
        %v691 = vadd.f32 %v655, 1.0
        %v692 = vlog2.pop %v691
        %v693 = vmul.f32 %v692, 0.6931472
        %v694 = vmul.f32 -0.5, %v655
        %v695 = vadd.f32 %v694, 1.0
        %v696 = vmul.f32 %v695, %v655
        %v697 = vand.u32 2147483647, %v655
        %vm698 = vcmp.lt.f32.partialorder %v697, 0.0004427343
        %v699 = vsel %vm698, %v696, %v693
        %v700 = vadd.f32 %v657, 1.0
        %v701 = vlog2.pop %v700
        %v702 = vmul.f32 %v701, 0.6931472
        %v703 = vmul.f32 -0.5, %v657
        %v704 = vadd.f32 %v703, 1.0
        %v705 = vmul.f32 %v704, %v657
        %v706 = vand.u32 2147483647, %v657
        %vm707 = vcmp.lt.f32.partialorder %v706, 0.0004427343
        %v708 = vsel %vm707, %v705, %v702
        %v709 = vadd.f32 %v659, 1.0
        %v710 = vlog2.pop %v709
        %v711 = vmul.f32 %v710, 0.6931472
        %v712 = vmul.f32 -0.5, %v659
        %v713 = vadd.f32 %v712, 1.0
        %v714 = vmul.f32 %v713, %v659
        %v715 = vand.u32 2147483647, %v659
        %vm716 = vcmp.lt.f32.partialorder %v715, 0.0004427343
        %v717 = vsel %vm716, %v714, %v711
        %v718 = vadd.f32 %v661, 1.0
        %v719 = vlog2.pop %v718
        %v720 = vmul.f32 %v719, 0.6931472
        %v721 = vmul.f32 -0.5, %v661
        %v722 = vadd.f32 %v721, 1.0
        %v723 = vmul.f32 %v722, %v661
        %v724 = vand.u32 2147483647, %v661
        %vm725 = vcmp.lt.f32.partialorder %v724, 0.0004427343
        %v726 = vsel %vm725, %v723, %v720
        %v727 = vadd.f32 %v663, 1.0
        %v728 = vlog2.pop %v727
        %v729 = vmul.f32 %v728, 0.6931472
        %v730 = vmul.f32 -0.5, %v663
        %v731 = vadd.f32 %v730, 1.0
        %v732 = vmul.f32 %v731, %v663
        %v733 = vand.u32 2147483647, %v663
        %vm734 = vcmp.lt.f32.partialorder %v733, 0.0004427343
        %v735 = vsel %vm734, %v732, %v729
        %v736 = vsel %vm640, %v602, %v672
        %v737 = vsel %vm641, %v607, %v681
        %v738 = vsel %vm642, %v612, %v690
        %v739 = vsel %vm643, %v617, %v699
        %v740 = vsel %vm644, %v622, %v708
        %v741 = vsel %vm645, %v627, %v717
        %v742 = vsel %vm646, %v632, %v726
        %v743 = vsel %vm647, %v637, %v735
        %v744 = vld [vmem:[%s3] sm:$0xff]
        %v745 = vld [vmem:[%s3 + $0x8] sm:$0xff]
        %v746 = vld [vmem:[%s3 + $0x10] sm:$0xff]
        %v747 = vld [vmem:[%s3 + $0x18] sm:$0xff]
        %v748 = vld [vmem:[%s3 + $0x20] sm:$0xf]
        %v750 = vsel %vm531, %v748, 0
        %752 = vmatprep.subr.mxu0 0.0
        %753 = vmatpush1.msra.mxu0 %v744
        %754 = vmatprep.subr.mxu0 0.0
        %755 = vmatpush1.msra.mxu0 %v745
        %756 = vmatprep.subr.mxu0 0.0
        %757 = vmatpush1.msra.mxu0 %v746
        %758 = vmatprep.subr.mxu0 0.0
        %759 = vmatpush1.msra.mxu0 %v747
        %760 = vmatprep.subr.mxu0 0.0
        %761 = vmatpush1.msra.mxu0 %v750
        %762 = vmatprep.subr.mxu0 0.0
        %763 = vmatpush1.msra.mxu0 0.0
        %764 = vmatprep.subr.mxu0 0.0
        %765 = vmatpush1.msra.mxu0 0.0
        %766 = vmatprep.subr.mxu0 0.0
        %767 = vmatpush1.msra.mxu0 0.0
        %768 = vmatprep.subr.mxu0 0.0
        %769 = vmatpush1.msra.mxu0 0.0
        %770 = vmatprep.subr.mxu0 0.0
        %771 = vmatpush1.msra.mxu0 0.0
        %772 = vmatprep.subr.mxu0 0.0
        %773 = vmatpush1.msra.mxu0 0.0
        %774 = vmatprep.subr.mxu0 0.0
        %775 = vmatpush1.msra.mxu0 0.0
        %776 = vmatprep.subr.mxu0 0.0
        %777 = vmatpush1.msra.mxu0 0.0
        %778 = vmatprep.subr.mxu0 0.0
        %779 = vmatpush1.msra.mxu0 0.0
        %780 = vmatprep.subr.mxu0 0.0
        %781 = vmatpush1.msra.mxu0 0.0
        %782 = vmatprep.subr.mxu0 0.0
        %783 = vmatpush1.msra.mxu0 0.0
        %784 = vmatprep.subr.mxu0 0.0
        %785 = vmatpush1.msra.mxu0 0.0
        %786 = vmatprep.subr.mxu0 0.0
        %787 = vmatpush1.msra.mxu0 0.0
        %788 = vmatprep.subr.mxu0 0.0
        %789 = vmatpush1.msra.mxu0 0.0
        %790 = vmatprep.subr.mxu0 0.0
        %791 = vmatpush1.msra.mxu0 0.0
        %792 = vmatprep.subr.mxu0 0.0
        %793 = vmatpush1.msra.mxu0 0.0
        %794 = vmatprep.subr.mxu0 0.0
        %795 = vmatpush1.msra.mxu0 0.0
        %796 = vmatprep.subr.mxu0 0.0
        %797 = vmatpush1.msra.mxu0 0.0
        %798 = vmatprep.subr.mxu0 0.0
        %799 = vmatpush1.msra.mxu0 0.0
        %800 = vmatprep.subr.mxu0 0.0
        %801 = vmatpush1.msra.mxu0 0.0
        %802 = vmatprep.subr.mxu0 0.0
        %803 = vmatpush1.msra.mxu0 0.0
        %804 = vmatprep.subr.mxu0 0.0
        %805 = vmatpush1.msra.mxu0 0.0
        %806 = vmatprep.subr.mxu0 0.0
        %807 = vmatpush1.msra.mxu0 0.0
        %808 = vmatprep.subr.mxu0 0.0
        %809 = vmatpush1.msra.mxu0 0.0
        %810 = vmatprep.subr.mxu0 0.0
        %811 = vmatpush1.msra.mxu0 0.0
        %812 = vmatprep.subr.mxu0 0.0
        %813 = vmatpush1.msra.mxu0 0.0
        %814 = vmatprep.subr.mxu0 0.0
        %815 = vmatpush1.msra.mxu0 0.0
        %816 = vmatprep.mubr.f32.mxu0 0.0
        %817 = vmatmul.mubr.f32.gmra.mrb[0].mxu0 %v508
        %v818 = vpop.f32.mrb[0].mxu0
        %v819 = vadd.f32 0.0, %v818
        %v820 = vpop.f32.mrb[0].mxu0
        %821 = vmatprep.mubr.f32.mxu0 0.0
        %822 = vmatmul.mubr.f32.gmra.mrb[0].mxu0 %v511
        %v823 = vpop.f32.mrb[0].mxu0
        %v824 = vadd.f32 0.0, %v823
        %v825 = vpop.f32.mrb[0].mxu0
        %826 = vmatprep.mubr.f32.mxu0 0.0
        %827 = vmatmul.mubr.f32.gmra.mrb[0].mxu0 %v514
        %v828 = vpop.f32.mrb[0].mxu0
        %v829 = vadd.f32 0.0, %v828
        %v830 = vpop.f32.mrb[0].mxu0
        %831 = vmatprep.mubr.f32.mxu0 0.0
        %832 = vmatmul.mubr.f32.gmra.mrb[0].mxu0 %v517
        %v833 = vpop.f32.mrb[0].mxu0
        %v834 = vadd.f32 0.0, %v833
        %v835 = vpop.f32.mrb[0].mxu0
        %836 = vmatprep.mubr.f32.mxu0 0.0
        %837 = vmatmul.mubr.f32.gmra.mrb[0].mxu0 %v520
        %v838 = vpop.f32.mrb[0].mxu0
        %v839 = vadd.f32 0.0, %v838
        %v840 = vpop.f32.mrb[0].mxu0
        %841 = vmatprep.mubr.f32.mxu0 0.0
        %842 = vmatmul.mubr.f32.gmra.mrb[0].mxu0 %v523
        %v843 = vpop.f32.mrb[0].mxu0
        %v844 = vadd.f32 0.0, %v843
        %v845 = vpop.f32.mrb[0].mxu0
        %846 = vmatprep.mubr.f32.mxu0 0.0
        %847 = vmatmul.mubr.f32.gmra.mrb[0].mxu0 %v526
        %v848 = vpop.f32.mrb[0].mxu0
        %v849 = vadd.f32 0.0, %v848
        %v850 = vpop.f32.mrb[0].mxu0
        %851 = vmatprep.mubr.f32.mxu0 0.0
        %852 = vmatmul.mubr.f32.gmra.mrb[0].mxu0 %v529
        %v853 = vpop.f32.mrb[0].mxu0
        %v854 = vadd.f32 0.0, %v853
        %v855 = vpop.f32.mrb[0].mxu0
        %856 = vdwg.mxu0
        %v857 = vld [vmem:[%s4] sm:$0xff]
        %v858 = vld [vmem:[%s4 + $0x8] sm:$0xff]
        %v859 = vld [vmem:[%s4 + $0x10] sm:$0xff]
        %v860 = vld [vmem:[%s4 + $0x18] sm:$0xff]
        %v861 = vld [vmem:[%s4 + $0x20] sm:$0xf]
        %v863 = vsel %vm531, %v861, 0
        %865 = vmatprep.subr.mxu0 0.0
        %866 = vmatpush1.msra.mxu0 %v857
        %867 = vmatprep.subr.mxu0 0.0
        %868 = vmatpush1.msra.mxu0 %v858
        %869 = vmatprep.subr.mxu0 0.0
        %870 = vmatpush1.msra.mxu0 %v859
        %871 = vmatprep.subr.mxu0 0.0
        %872 = vmatpush1.msra.mxu0 %v860
        %873 = vmatprep.subr.mxu0 0.0
        %874 = vmatpush1.msra.mxu0 %v863
        %875 = vmatprep.subr.mxu0 0.0
        %876 = vmatpush1.msra.mxu0 0.0
        %877 = vmatprep.subr.mxu0 0.0
        %878 = vmatpush1.msra.mxu0 0.0
        %879 = vmatprep.subr.mxu0 0.0
        %880 = vmatpush1.msra.mxu0 0.0
        %881 = vmatprep.subr.mxu0 0.0
        %882 = vmatpush1.msra.mxu0 0.0
        %883 = vmatprep.subr.mxu0 0.0
        %884 = vmatpush1.msra.mxu0 0.0
        %885 = vmatprep.subr.mxu0 0.0
        %886 = vmatpush1.msra.mxu0 0.0
        %887 = vmatprep.subr.mxu0 0.0
        %888 = vmatpush1.msra.mxu0 0.0
        %889 = vmatprep.subr.mxu0 0.0
        %890 = vmatpush1.msra.mxu0 0.0
        %891 = vmatprep.subr.mxu0 0.0
        %892 = vmatpush1.msra.mxu0 0.0
        %893 = vmatprep.subr.mxu0 0.0
        %894 = vmatpush1.msra.mxu0 0.0
        %895 = vmatprep.subr.mxu0 0.0
        %896 = vmatpush1.msra.mxu0 0.0
        %897 = vmatprep.subr.mxu0 0.0
        %898 = vmatpush1.msra.mxu0 0.0
        %899 = vmatprep.subr.mxu0 0.0
        %900 = vmatpush1.msra.mxu0 0.0
        %901 = vmatprep.subr.mxu0 0.0
        %902 = vmatpush1.msra.mxu0 0.0
        %903 = vmatprep.subr.mxu0 0.0
        %904 = vmatpush1.msra.mxu0 0.0
        %905 = vmatprep.subr.mxu0 0.0
        %906 = vmatpush1.msra.mxu0 0.0
        %907 = vmatprep.subr.mxu0 0.0
        %908 = vmatpush1.msra.mxu0 0.0
        %909 = vmatprep.subr.mxu0 0.0
        %910 = vmatpush1.msra.mxu0 0.0
        %911 = vmatprep.subr.mxu0 0.0
        %912 = vmatpush1.msra.mxu0 0.0
        %913 = vmatprep.subr.mxu0 0.0
        %914 = vmatpush1.msra.mxu0 0.0
        %915 = vmatprep.subr.mxu0 0.0
        %916 = vmatpush1.msra.mxu0 0.0
        %917 = vmatprep.subr.mxu0 0.0
        %918 = vmatpush1.msra.mxu0 0.0
        %919 = vmatprep.subr.mxu0 0.0
        %920 = vmatpush1.msra.mxu0 0.0
        %921 = vmatprep.subr.mxu0 0.0
        %922 = vmatpush1.msra.mxu0 0.0
        %923 = vmatprep.subr.mxu0 0.0
        %924 = vmatpush1.msra.mxu0 0.0
        %925 = vmatprep.subr.mxu0 0.0
        %926 = vmatpush1.msra.mxu0 0.0
        %927 = vmatprep.subr.mxu0 0.0
        %928 = vmatpush1.msra.mxu0 0.0
        %929 = vmatprep.mubr.f32.mxu0 0.0
        %930 = vmatmul.mubr.f32.gmra.mrb[0].mxu0 %v508
        %v931 = vpop.f32.mrb[0].mxu0
        %v932 = vadd.f32 0.0, %v931
        %v933 = vpop.f32.mrb[0].mxu0
        %934 = vmatprep.mubr.f32.mxu0 0.0
        %935 = vmatmul.mubr.f32.gmra.mrb[0].mxu0 %v511
        %v936 = vpop.f32.mrb[0].mxu0
        %v937 = vadd.f32 0.0, %v936
        %v938 = vpop.f32.mrb[0].mxu0
        %939 = vmatprep.mubr.f32.mxu0 0.0
        %940 = vmatmul.mubr.f32.gmra.mrb[0].mxu0 %v514
        %v941 = vpop.f32.mrb[0].mxu0
        %v942 = vadd.f32 0.0, %v941
        %v943 = vpop.f32.mrb[0].mxu0
        %944 = vmatprep.mubr.f32.mxu0 0.0
        %945 = vmatmul.mubr.f32.gmra.mrb[0].mxu0 %v517
        %v946 = vpop.f32.mrb[0].mxu0
        %v947 = vadd.f32 0.0, %v946
        %v948 = vpop.f32.mrb[0].mxu0
        %949 = vmatprep.mubr.f32.mxu0 0.0
        %950 = vmatmul.mubr.f32.gmra.mrb[0].mxu0 %v520
        %v951 = vpop.f32.mrb[0].mxu0
        %v952 = vadd.f32 0.0, %v951
        %v953 = vpop.f32.mrb[0].mxu0
        %954 = vmatprep.mubr.f32.mxu0 0.0
        %955 = vmatmul.mubr.f32.gmra.mrb[0].mxu0 %v523
        %v956 = vpop.f32.mrb[0].mxu0
        %v957 = vadd.f32 0.0, %v956
        %v958 = vpop.f32.mrb[0].mxu0
        %959 = vmatprep.mubr.f32.mxu0 0.0
        %960 = vmatmul.mubr.f32.gmra.mrb[0].mxu0 %v526
        %v961 = vpop.f32.mrb[0].mxu0
        %v962 = vadd.f32 0.0, %v961
        %v963 = vpop.f32.mrb[0].mxu0
        %964 = vmatprep.mubr.f32.mxu0 0.0
        %965 = vmatmul.mubr.f32.gmra.mrb[0].mxu0 %v529
        %v966 = vpop.f32.mrb[0].mxu0
        %v967 = vadd.f32 0.0, %v966
        %v968 = vpop.f32.mrb[0].mxu0
        %969 = vdwg.mxu0
        %v970 = vld [vmem:[%s6] sm:$0xff]
        %v971 = vld [vmem:[%s6 + $0x8] sm:$0xff]
        %v980 = vcombine.high %v736, %v736
        %v982 = vunpack.c.l.s4 1966171168
        %v983 = vunpack.c.0.s8 %v982
        %v984 = vlaneseq
        %v985 = vshrl.u32 %v984, 7
        %v986 = vsub.s32 %v983, %v985
        %v987 = vrot.slane %v736, %v986
        %v989 = vunpack.c.l.s4 1966171168
        %v990 = vunpack.c.0.s8 %v989
        %v991 = vlaneseq
        %v992 = vshrl.u32 %v991, 7
        %v993 = vsub.s32 %v990, %v992
        %v994 = vrot.slane %v980, %v993
        %v995 = vcombine.high %v987, %v987
        %v996 = vcombine.high %v994, %v994
        %v998 = vunpack.c.l.s4 1966171168
        %v999 = vunpack.c.0.s8 %v998
        %v1000 = vlaneseq
        %v1001 = vshrl.u32 %v1000, 7
        %v1002 = vsub.s32 %v999, %v1001
        %v1003 = vrot.slane %v987, %v1002
        %v1005 = vunpack.c.l.s4 1966171168
        %v1006 = vunpack.c.0.s8 %v1005
        %v1007 = vlaneseq
        %v1008 = vshrl.u32 %v1007, 7
        %v1009 = vsub.s32 %v1006, %v1008
        %v1010 = vrot.slane %v994, %v1009
        %v1012 = vunpack.c.l.s4 1966171168
        %v1013 = vunpack.c.0.s8 %v1012
        %v1014 = vlaneseq
        %v1015 = vshrl.u32 %v1014, 7
        %v1016 = vsub.s32 %v1013, %v1015
        %v1017 = vrot.slane %v995, %v1016
        %v1019 = vunpack.c.l.s4 1966171168
        %v1020 = vunpack.c.0.s8 %v1019
        %v1021 = vlaneseq
        %v1022 = vshrl.u32 %v1021, 7
        %v1023 = vsub.s32 %v1020, %v1022
        %v1024 = vrot.slane %v996, %v1023
        %v1025 = vcombine.high %v1003, %v1003
        %v1026 = vcombine.high %v1010, %v1010
        %v1027 = vcombine.high %v1017, %v1017
        %v1028 = vcombine.high %v1024, %v1024
        %v1029 = vcombine.high %v737, %v737
        %v1031 = vunpack.c.l.s4 1966171168
        %v1032 = vunpack.c.0.s8 %v1031
        %v1033 = vlaneseq
        %v1034 = vshrl.u32 %v1033, 7
        %v1035 = vsub.s32 %v1032, %v1034
        %v1036 = vrot.slane %v737, %v1035
        %v1038 = vunpack.c.l.s4 1966171168
        %v1039 = vunpack.c.0.s8 %v1038
        %v1040 = vlaneseq
        %v1041 = vshrl.u32 %v1040, 7
        %v1042 = vsub.s32 %v1039, %v1041
        %v1043 = vrot.slane %v1029, %v1042
        %v1044 = vcombine.high %v1036, %v1036
        %v1045 = vcombine.high %v1043, %v1043
        %v1047 = vunpack.c.l.s4 1966171168
        %v1048 = vunpack.c.0.s8 %v1047
        %v1049 = vlaneseq
        %v1050 = vshrl.u32 %v1049, 7
        %v1051 = vsub.s32 %v1048, %v1050
        %v1052 = vrot.slane %v1036, %v1051
        %v1054 = vunpack.c.l.s4 1966171168
        %v1055 = vunpack.c.0.s8 %v1054
        %v1056 = vlaneseq
        %v1057 = vshrl.u32 %v1056, 7
        %v1058 = vsub.s32 %v1055, %v1057
        %v1059 = vrot.slane %v1043, %v1058
        %v1061 = vunpack.c.l.s4 1966171168
        %v1062 = vunpack.c.0.s8 %v1061
        %v1063 = vlaneseq
        %v1064 = vshrl.u32 %v1063, 7
        %v1065 = vsub.s32 %v1062, %v1064
        %v1066 = vrot.slane %v1044, %v1065
        %v1068 = vunpack.c.l.s4 1966171168
        %v1069 = vunpack.c.0.s8 %v1068
        %v1070 = vlaneseq
        %v1071 = vshrl.u32 %v1070, 7
        %v1072 = vsub.s32 %v1069, %v1071
        %v1073 = vrot.slane %v1045, %v1072
        %v1074 = vcombine.high %v1052, %v1052
        %v1075 = vcombine.high %v1059, %v1059
        %v1076 = vcombine.high %v1066, %v1066
        %v1077 = vcombine.high %v1073, %v1073
        %v1078 = vcombine.high %v738, %v738
        %v1080 = vunpack.c.l.s4 1966171168
        %v1081 = vunpack.c.0.s8 %v1080
        %v1082 = vlaneseq
        %v1083 = vshrl.u32 %v1082, 7
        %v1084 = vsub.s32 %v1081, %v1083
        %v1085 = vrot.slane %v738, %v1084
        %v1087 = vunpack.c.l.s4 1966171168
        %v1088 = vunpack.c.0.s8 %v1087
        %v1089 = vlaneseq
        %v1090 = vshrl.u32 %v1089, 7
        %v1091 = vsub.s32 %v1088, %v1090
        %v1092 = vrot.slane %v1078, %v1091
        %v1093 = vcombine.high %v1085, %v1085
        %v1094 = vcombine.high %v1092, %v1092
        %v1096 = vunpack.c.l.s4 1966171168
        %v1097 = vunpack.c.0.s8 %v1096
        %v1098 = vlaneseq
        %v1099 = vshrl.u32 %v1098, 7
        %v1100 = vsub.s32 %v1097, %v1099
        %v1101 = vrot.slane %v1085, %v1100
        %v1103 = vunpack.c.l.s4 1966171168
        %v1104 = vunpack.c.0.s8 %v1103
        %v1105 = vlaneseq
        %v1106 = vshrl.u32 %v1105, 7
        %v1107 = vsub.s32 %v1104, %v1106
        %v1108 = vrot.slane %v1092, %v1107
        %v1110 = vunpack.c.l.s4 1966171168
        %v1111 = vunpack.c.0.s8 %v1110
        %v1112 = vlaneseq
        %v1113 = vshrl.u32 %v1112, 7
        %v1114 = vsub.s32 %v1111, %v1113
        %v1115 = vrot.slane %v1093, %v1114
        %v1117 = vunpack.c.l.s4 1966171168
        %v1118 = vunpack.c.0.s8 %v1117
        %v1119 = vlaneseq
        %v1120 = vshrl.u32 %v1119, 7
        %v1121 = vsub.s32 %v1118, %v1120
        %v1122 = vrot.slane %v1094, %v1121
        %v1123 = vcombine.high %v1101, %v1101
        %v1124 = vcombine.high %v1108, %v1108
        %v1125 = vcombine.high %v1115, %v1115
        %v1126 = vcombine.high %v1122, %v1122
        %v1127 = vcombine.high %v739, %v739
        %v1129 = vunpack.c.l.s4 1966171168
        %v1130 = vunpack.c.0.s8 %v1129
        %v1131 = vlaneseq
        %v1132 = vshrl.u32 %v1131, 7
        %v1133 = vsub.s32 %v1130, %v1132
        %v1134 = vrot.slane %v739, %v1133
        %v1136 = vunpack.c.l.s4 1966171168
        %v1137 = vunpack.c.0.s8 %v1136
        %v1138 = vlaneseq
        %v1139 = vshrl.u32 %v1138, 7
        %v1140 = vsub.s32 %v1137, %v1139
        %v1141 = vrot.slane %v1127, %v1140
        %v1142 = vcombine.high %v1134, %v1134
        %v1143 = vcombine.high %v1141, %v1141
        %v1145 = vunpack.c.l.s4 1966171168
        %v1146 = vunpack.c.0.s8 %v1145
        %v1147 = vlaneseq
        %v1148 = vshrl.u32 %v1147, 7
        %v1149 = vsub.s32 %v1146, %v1148
        %v1150 = vrot.slane %v1134, %v1149
        %v1152 = vunpack.c.l.s4 1966171168
        %v1153 = vunpack.c.0.s8 %v1152
        %v1154 = vlaneseq
        %v1155 = vshrl.u32 %v1154, 7
        %v1156 = vsub.s32 %v1153, %v1155
        %v1157 = vrot.slane %v1141, %v1156
        %v1159 = vunpack.c.l.s4 1966171168
        %v1160 = vunpack.c.0.s8 %v1159
        %v1161 = vlaneseq
        %v1162 = vshrl.u32 %v1161, 7
        %v1163 = vsub.s32 %v1160, %v1162
        %v1164 = vrot.slane %v1142, %v1163
        %v1166 = vunpack.c.l.s4 1966171168
        %v1167 = vunpack.c.0.s8 %v1166
        %v1168 = vlaneseq
        %v1169 = vshrl.u32 %v1168, 7
        %v1170 = vsub.s32 %v1167, %v1169
        %v1171 = vrot.slane %v1143, %v1170
        %v1172 = vcombine.high %v1150, %v1150
        %v1173 = vcombine.high %v1157, %v1157
        %v1174 = vcombine.high %v1164, %v1164
        %v1175 = vcombine.high %v1171, %v1171
        %v1176 = vcombine.high %v740, %v740
        %v1178 = vunpack.c.l.s4 1966171168
        %v1179 = vunpack.c.0.s8 %v1178
        %v1180 = vlaneseq
        %v1181 = vshrl.u32 %v1180, 7
        %v1182 = vsub.s32 %v1179, %v1181
        %v1183 = vrot.slane %v740, %v1182
        %v1185 = vunpack.c.l.s4 1966171168
        %v1186 = vunpack.c.0.s8 %v1185
        %v1187 = vlaneseq
        %v1188 = vshrl.u32 %v1187, 7
        %v1189 = vsub.s32 %v1186, %v1188
        %v1190 = vrot.slane %v1176, %v1189
        %v1191 = vcombine.high %v1183, %v1183
        %v1192 = vcombine.high %v1190, %v1190
        %v1194 = vunpack.c.l.s4 1966171168
        %v1195 = vunpack.c.0.s8 %v1194
        %v1196 = vlaneseq
        %v1197 = vshrl.u32 %v1196, 7
        %v1198 = vsub.s32 %v1195, %v1197
        %v1199 = vrot.slane %v1183, %v1198
        %v1201 = vunpack.c.l.s4 1966171168
        %v1202 = vunpack.c.0.s8 %v1201
        %v1203 = vlaneseq
        %v1204 = vshrl.u32 %v1203, 7
        %v1205 = vsub.s32 %v1202, %v1204
        %v1206 = vrot.slane %v1190, %v1205
        %v1208 = vunpack.c.l.s4 1966171168
        %v1209 = vunpack.c.0.s8 %v1208
        %v1210 = vlaneseq
        %v1211 = vshrl.u32 %v1210, 7
        %v1212 = vsub.s32 %v1209, %v1211
        %v1213 = vrot.slane %v1191, %v1212
        %v1215 = vunpack.c.l.s4 1966171168
        %v1216 = vunpack.c.0.s8 %v1215
        %v1217 = vlaneseq
        %v1218 = vshrl.u32 %v1217, 7
        %v1219 = vsub.s32 %v1216, %v1218
        %v1220 = vrot.slane %v1192, %v1219
        %v1221 = vcombine.high %v1199, %v1199
        %v1222 = vcombine.high %v1206, %v1206
        %v1223 = vcombine.high %v1213, %v1213
        %v1224 = vcombine.high %v1220, %v1220
        %v1225 = vcombine.high %v741, %v741
        %v1227 = vunpack.c.l.s4 1966171168
        %v1228 = vunpack.c.0.s8 %v1227
        %v1229 = vlaneseq
        %v1230 = vshrl.u32 %v1229, 7
        %v1231 = vsub.s32 %v1228, %v1230
        %v1232 = vrot.slane %v741, %v1231
        %v1234 = vunpack.c.l.s4 1966171168
        %v1235 = vunpack.c.0.s8 %v1234
        %v1236 = vlaneseq
        %v1237 = vshrl.u32 %v1236, 7
        %v1238 = vsub.s32 %v1235, %v1237
        %v1239 = vrot.slane %v1225, %v1238
        %v1240 = vcombine.high %v1232, %v1232
        %v1241 = vcombine.high %v1239, %v1239
        %v1243 = vunpack.c.l.s4 1966171168
        %v1244 = vunpack.c.0.s8 %v1243
        %v1245 = vlaneseq
        %v1246 = vshrl.u32 %v1245, 7
        %v1247 = vsub.s32 %v1244, %v1246
        %v1248 = vrot.slane %v1232, %v1247
        %v1250 = vunpack.c.l.s4 1966171168
        %v1251 = vunpack.c.0.s8 %v1250
        %v1252 = vlaneseq
        %v1253 = vshrl.u32 %v1252, 7
        %v1254 = vsub.s32 %v1251, %v1253
        %v1255 = vrot.slane %v1239, %v1254
        %v1257 = vunpack.c.l.s4 1966171168
        %v1258 = vunpack.c.0.s8 %v1257
        %v1259 = vlaneseq
        %v1260 = vshrl.u32 %v1259, 7
        %v1261 = vsub.s32 %v1258, %v1260
        %v1262 = vrot.slane %v1240, %v1261
        %v1264 = vunpack.c.l.s4 1966171168
        %v1265 = vunpack.c.0.s8 %v1264
        %v1266 = vlaneseq
        %v1267 = vshrl.u32 %v1266, 7
        %v1268 = vsub.s32 %v1265, %v1267
        %v1269 = vrot.slane %v1241, %v1268
        %v1270 = vcombine.high %v1248, %v1248
        %v1271 = vcombine.high %v1255, %v1255
        %v1272 = vcombine.high %v1262, %v1262
        %v1273 = vcombine.high %v1269, %v1269
        %v1274 = vcombine.high %v742, %v742
        %v1276 = vunpack.c.l.s4 1966171168
        %v1277 = vunpack.c.0.s8 %v1276
        %v1278 = vlaneseq
        %v1279 = vshrl.u32 %v1278, 7
        %v1280 = vsub.s32 %v1277, %v1279
        %v1281 = vrot.slane %v742, %v1280
        %v1283 = vunpack.c.l.s4 1966171168
        %v1284 = vunpack.c.0.s8 %v1283
        %v1285 = vlaneseq
        %v1286 = vshrl.u32 %v1285, 7
        %v1287 = vsub.s32 %v1284, %v1286
        %v1288 = vrot.slane %v1274, %v1287
        %v1289 = vcombine.high %v1281, %v1281
        %v1290 = vcombine.high %v1288, %v1288
        %v1292 = vunpack.c.l.s4 1966171168
        %v1293 = vunpack.c.0.s8 %v1292
        %v1294 = vlaneseq
        %v1295 = vshrl.u32 %v1294, 7
        %v1296 = vsub.s32 %v1293, %v1295
        %v1297 = vrot.slane %v1281, %v1296
        %v1299 = vunpack.c.l.s4 1966171168
        %v1300 = vunpack.c.0.s8 %v1299
        %v1301 = vlaneseq
        %v1302 = vshrl.u32 %v1301, 7
        %v1303 = vsub.s32 %v1300, %v1302
        %v1304 = vrot.slane %v1288, %v1303
        %v1306 = vunpack.c.l.s4 1966171168
        %v1307 = vunpack.c.0.s8 %v1306
        %v1308 = vlaneseq
        %v1309 = vshrl.u32 %v1308, 7
        %v1310 = vsub.s32 %v1307, %v1309
        %v1311 = vrot.slane %v1289, %v1310
        %v1313 = vunpack.c.l.s4 1966171168
        %v1314 = vunpack.c.0.s8 %v1313
        %v1315 = vlaneseq
        %v1316 = vshrl.u32 %v1315, 7
        %v1317 = vsub.s32 %v1314, %v1316
        %v1318 = vrot.slane %v1290, %v1317
        %v1319 = vcombine.high %v1297, %v1297
        %v1320 = vcombine.high %v1304, %v1304
        %v1321 = vcombine.high %v1311, %v1311
        %v1322 = vcombine.high %v1318, %v1318
        %v1323 = vcombine.high %v743, %v743
        %v1325 = vunpack.c.l.s4 1966171168
        %v1326 = vunpack.c.0.s8 %v1325
        %v1327 = vlaneseq
        %v1328 = vshrl.u32 %v1327, 7
        %v1329 = vsub.s32 %v1326, %v1328
        %v1330 = vrot.slane %v743, %v1329
        %v1332 = vunpack.c.l.s4 1966171168
        %v1333 = vunpack.c.0.s8 %v1332
        %v1334 = vlaneseq
        %v1335 = vshrl.u32 %v1334, 7
        %v1336 = vsub.s32 %v1333, %v1335
        %v1337 = vrot.slane %v1323, %v1336
        %v1338 = vcombine.high %v1330, %v1330
        %v1339 = vcombine.high %v1337, %v1337
        %v1341 = vunpack.c.l.s4 1966171168
        %v1342 = vunpack.c.0.s8 %v1341
        %v1343 = vlaneseq
        %v1344 = vshrl.u32 %v1343, 7
        %v1345 = vsub.s32 %v1342, %v1344
        %v1346 = vrot.slane %v1330, %v1345
        %v1348 = vunpack.c.l.s4 1966171168
        %v1349 = vunpack.c.0.s8 %v1348
        %v1350 = vlaneseq
        %v1351 = vshrl.u32 %v1350, 7
        %v1352 = vsub.s32 %v1349, %v1351
        %v1353 = vrot.slane %v1337, %v1352
        %v1355 = vunpack.c.l.s4 1966171168
        %v1356 = vunpack.c.0.s8 %v1355
        %v1357 = vlaneseq
        %v1358 = vshrl.u32 %v1357, 7
        %v1359 = vsub.s32 %v1356, %v1358
        %v1360 = vrot.slane %v1338, %v1359
        %v1362 = vunpack.c.l.s4 1966171168
        %v1363 = vunpack.c.0.s8 %v1362
        %v1364 = vlaneseq
        %v1365 = vshrl.u32 %v1364, 7
        %v1366 = vsub.s32 %v1363, %v1365
        %v1367 = vrot.slane %v1339, %v1366
        %v1368 = vcombine.high %v1346, %v1346
        %v1369 = vcombine.high %v1353, %v1353
        %v1370 = vcombine.high %v1360, %v1360
        %v1371 = vcombine.high %v1367, %v1367
        %v1372 = vlaneseq
        %v1373 = vshrl.u32 %v1372, 7
        %v1374 = vsub.s32 0, %v1373
        %v1375 = vrot.slane %v1003, %v1374
        %v1376 = vlaneseq
        %v1377 = vshrl.u32 %v1376, 7
        %v1378 = vsub.s32 0, %v1377
        %v1379 = vrot.slane %v1017, %v1378
        %v1380 = vlaneseq
        %v1381 = vshrl.u32 %v1380, 7
        %v1382 = vsub.s32 0, %v1381
        %v1383 = vrot.slane %v1025, %v1382
        %v1384 = vlaneseq
        %v1385 = vshrl.u32 %v1384, 7
        %v1386 = vsub.s32 0, %v1385
        %v1387 = vrot.slane %v1027, %v1386
        %v1388 = vlaneseq
        %v1389 = vshrl.u32 %v1388, 7
        %v1390 = vsub.s32 0, %v1389
        %v1391 = vrot.slane %v1010, %v1390
        %v1392 = vlaneseq
        %v1393 = vshrl.u32 %v1392, 7
        %v1394 = vsub.s32 0, %v1393
        %v1395 = vrot.slane %v1024, %v1394
        %v1396 = vlaneseq
        %v1397 = vshrl.u32 %v1396, 7
        %v1398 = vsub.s32 0, %v1397
        %v1399 = vrot.slane %v1026, %v1398
        %v1400 = vlaneseq
        %v1401 = vshrl.u32 %v1400, 7
        %v1402 = vsub.s32 0, %v1401
        %v1403 = vrot.slane %v1028, %v1402
        %v1404 = vlaneseq
        %v1405 = vshrl.u32 %v1404, 7
        %v1406 = vsub.s32 0, %v1405
        %v1407 = vrot.slane %v1052, %v1406
        %v1408 = vlaneseq
        %v1409 = vshrl.u32 %v1408, 7
        %v1410 = vsub.s32 0, %v1409
        %v1411 = vrot.slane %v1066, %v1410
        %v1412 = vlaneseq
        %v1413 = vshrl.u32 %v1412, 7
        %v1414 = vsub.s32 0, %v1413
        %v1415 = vrot.slane %v1074, %v1414
        %v1416 = vlaneseq
        %v1417 = vshrl.u32 %v1416, 7
        %v1418 = vsub.s32 0, %v1417
        %v1419 = vrot.slane %v1076, %v1418
        %v1420 = vlaneseq
        %v1421 = vshrl.u32 %v1420, 7
        %v1422 = vsub.s32 0, %v1421
        %v1423 = vrot.slane %v1059, %v1422
        %v1424 = vlaneseq
        %v1425 = vshrl.u32 %v1424, 7
        %v1426 = vsub.s32 0, %v1425
        %v1427 = vrot.slane %v1073, %v1426
        %v1428 = vlaneseq
        %v1429 = vshrl.u32 %v1428, 7
        %v1430 = vsub.s32 0, %v1429
        %v1431 = vrot.slane %v1075, %v1430
        %v1432 = vlaneseq
        %v1433 = vshrl.u32 %v1432, 7
        %v1434 = vsub.s32 0, %v1433
        %v1435 = vrot.slane %v1077, %v1434
        %v1436 = vlaneseq
        %v1437 = vshrl.u32 %v1436, 7
        %v1438 = vsub.s32 0, %v1437
        %v1439 = vrot.slane %v1101, %v1438
        %v1440 = vlaneseq
        %v1441 = vshrl.u32 %v1440, 7
        %v1442 = vsub.s32 0, %v1441
        %v1443 = vrot.slane %v1115, %v1442
        %v1444 = vlaneseq
        %v1445 = vshrl.u32 %v1444, 7
        %v1446 = vsub.s32 0, %v1445
        %v1447 = vrot.slane %v1123, %v1446
        %v1448 = vlaneseq
        %v1449 = vshrl.u32 %v1448, 7
        %v1450 = vsub.s32 0, %v1449
        %v1451 = vrot.slane %v1125, %v1450
        %v1452 = vlaneseq
        %v1453 = vshrl.u32 %v1452, 7
        %v1454 = vsub.s32 0, %v1453
        %v1455 = vrot.slane %v1108, %v1454
        %v1456 = vlaneseq
        %v1457 = vshrl.u32 %v1456, 7
        %v1458 = vsub.s32 0, %v1457
        %v1459 = vrot.slane %v1122, %v1458
        %v1460 = vlaneseq
        %v1461 = vshrl.u32 %v1460, 7
        %v1462 = vsub.s32 0, %v1461
        %v1463 = vrot.slane %v1124, %v1462
        %v1464 = vlaneseq
        %v1465 = vshrl.u32 %v1464, 7
        %v1466 = vsub.s32 0, %v1465
        %v1467 = vrot.slane %v1126, %v1466
        %v1468 = vlaneseq
        %v1469 = vshrl.u32 %v1468, 7
        %v1470 = vsub.s32 0, %v1469
        %v1471 = vrot.slane %v1150, %v1470
        %v1472 = vlaneseq
        %v1473 = vshrl.u32 %v1472, 7
        %v1474 = vsub.s32 0, %v1473
        %v1475 = vrot.slane %v1164, %v1474
        %v1476 = vlaneseq
        %v1477 = vshrl.u32 %v1476, 7
        %v1478 = vsub.s32 0, %v1477
        %v1479 = vrot.slane %v1172, %v1478
        %v1480 = vlaneseq
        %v1481 = vshrl.u32 %v1480, 7
        %v1482 = vsub.s32 0, %v1481
        %v1483 = vrot.slane %v1174, %v1482
        %v1484 = vlaneseq
        %v1485 = vshrl.u32 %v1484, 7
        %v1486 = vsub.s32 0, %v1485
        %v1487 = vrot.slane %v1157, %v1486
        %v1488 = vlaneseq
        %v1489 = vshrl.u32 %v1488, 7
        %v1490 = vsub.s32 0, %v1489
        %v1491 = vrot.slane %v1171, %v1490
        %v1492 = vlaneseq
        %v1493 = vshrl.u32 %v1492, 7
        %v1494 = vsub.s32 0, %v1493
        %v1495 = vrot.slane %v1173, %v1494
        %v1496 = vlaneseq
        %v1497 = vshrl.u32 %v1496, 7
        %v1498 = vsub.s32 0, %v1497
        %v1499 = vrot.slane %v1175, %v1498
        %v1500 = vlaneseq
        %v1501 = vshrl.u32 %v1500, 7
        %v1502 = vsub.s32 0, %v1501
        %v1503 = vrot.slane %v1199, %v1502
        %v1504 = vlaneseq
        %v1505 = vshrl.u32 %v1504, 7
        %v1506 = vsub.s32 0, %v1505
        %v1507 = vrot.slane %v1213, %v1506
        %v1508 = vlaneseq
        %v1509 = vshrl.u32 %v1508, 7
        %v1510 = vsub.s32 0, %v1509
        %v1511 = vrot.slane %v1221, %v1510
        %v1512 = vlaneseq
        %v1513 = vshrl.u32 %v1512, 7
        %v1514 = vsub.s32 0, %v1513
        %v1515 = vrot.slane %v1223, %v1514
        %v1516 = vlaneseq
        %v1517 = vshrl.u32 %v1516, 7
        %v1518 = vsub.s32 0, %v1517
        %v1519 = vrot.slane %v1206, %v1518
        %v1520 = vlaneseq
        %v1521 = vshrl.u32 %v1520, 7
        %v1522 = vsub.s32 0, %v1521
        %v1523 = vrot.slane %v1220, %v1522
        %v1524 = vlaneseq
        %v1525 = vshrl.u32 %v1524, 7
        %v1526 = vsub.s32 0, %v1525
        %v1527 = vrot.slane %v1222, %v1526
        %v1528 = vlaneseq
        %v1529 = vshrl.u32 %v1528, 7
        %v1530 = vsub.s32 0, %v1529
        %v1531 = vrot.slane %v1224, %v1530
        %v1532 = vlaneseq
        %v1533 = vshrl.u32 %v1532, 7
        %v1534 = vsub.s32 0, %v1533
        %v1535 = vrot.slane %v1248, %v1534
        %v1536 = vlaneseq
        %v1537 = vshrl.u32 %v1536, 7
        %v1538 = vsub.s32 0, %v1537
        %v1539 = vrot.slane %v1262, %v1538
        %v1540 = vlaneseq
        %v1541 = vshrl.u32 %v1540, 7
        %v1542 = vsub.s32 0, %v1541
        %v1543 = vrot.slane %v1270, %v1542
        %v1544 = vlaneseq
        %v1545 = vshrl.u32 %v1544, 7
        %v1546 = vsub.s32 0, %v1545
        %v1547 = vrot.slane %v1272, %v1546
        %v1548 = vlaneseq
        %v1549 = vshrl.u32 %v1548, 7
        %v1550 = vsub.s32 0, %v1549
        %v1551 = vrot.slane %v1255, %v1550
        %v1552 = vlaneseq
        %v1553 = vshrl.u32 %v1552, 7
        %v1554 = vsub.s32 0, %v1553
        %v1555 = vrot.slane %v1269, %v1554
        %v1556 = vlaneseq
        %v1557 = vshrl.u32 %v1556, 7
        %v1558 = vsub.s32 0, %v1557
        %v1559 = vrot.slane %v1271, %v1558
        %v1560 = vlaneseq
        %v1561 = vshrl.u32 %v1560, 7
        %v1562 = vsub.s32 0, %v1561
        %v1563 = vrot.slane %v1273, %v1562
        %v1564 = vlaneseq
        %v1565 = vshrl.u32 %v1564, 7
        %v1566 = vsub.s32 0, %v1565
        %v1567 = vrot.slane %v1297, %v1566
        %v1568 = vlaneseq
        %v1569 = vshrl.u32 %v1568, 7
        %v1570 = vsub.s32 0, %v1569
        %v1571 = vrot.slane %v1311, %v1570
        %v1572 = vlaneseq
        %v1573 = vshrl.u32 %v1572, 7
        %v1574 = vsub.s32 0, %v1573
        %v1575 = vrot.slane %v1319, %v1574
        %v1576 = vlaneseq
        %v1577 = vshrl.u32 %v1576, 7
        %v1578 = vsub.s32 0, %v1577
        %v1579 = vrot.slane %v1321, %v1578
        %v1580 = vlaneseq
        %v1581 = vshrl.u32 %v1580, 7
        %v1582 = vsub.s32 0, %v1581
        %v1583 = vrot.slane %v1304, %v1582
        %v1584 = vlaneseq
        %v1585 = vshrl.u32 %v1584, 7
        %v1586 = vsub.s32 0, %v1585
        %v1587 = vrot.slane %v1318, %v1586
        %v1588 = vlaneseq
        %v1589 = vshrl.u32 %v1588, 7
        %v1590 = vsub.s32 0, %v1589
        %v1591 = vrot.slane %v1320, %v1590
        %v1592 = vlaneseq
        %v1593 = vshrl.u32 %v1592, 7
        %v1594 = vsub.s32 0, %v1593
        %v1595 = vrot.slane %v1322, %v1594
        %v1596 = vlaneseq
        %v1597 = vshrl.u32 %v1596, 7
        %v1598 = vsub.s32 0, %v1597
        %v1599 = vrot.slane %v1346, %v1598
        %v1600 = vlaneseq
        %v1601 = vshrl.u32 %v1600, 7
        %v1602 = vsub.s32 0, %v1601
        %v1603 = vrot.slane %v1360, %v1602
        %v1604 = vlaneseq
        %v1605 = vshrl.u32 %v1604, 7
        %v1606 = vsub.s32 0, %v1605
        %v1607 = vrot.slane %v1368, %v1606
        %v1608 = vlaneseq
        %v1609 = vshrl.u32 %v1608, 7
        %v1610 = vsub.s32 0, %v1609
        %v1611 = vrot.slane %v1370, %v1610
        %v1612 = vlaneseq
        %v1613 = vshrl.u32 %v1612, 7
        %v1614 = vsub.s32 0, %v1613
        %v1615 = vrot.slane %v1353, %v1614
        %v1616 = vlaneseq
        %v1617 = vshrl.u32 %v1616, 7
        %v1618 = vsub.s32 0, %v1617
        %v1619 = vrot.slane %v1367, %v1618
        %v1620 = vlaneseq
        %v1621 = vshrl.u32 %v1620, 7
        %v1622 = vsub.s32 0, %v1621
        %v1623 = vrot.slane %v1369, %v1622
        %v1624 = vlaneseq
        %v1625 = vshrl.u32 %v1624, 7
        %v1626 = vsub.s32 0, %v1625
        %v1627 = vrot.slane %v1371, %v1626
        %v1692 = vmul.f32 %v1375, %v970
        %v1693 = vmul.f32 %v1375, %v971
        %v1694 = vmul.f32 %v1379, %v970
        %v1695 = vmul.f32 %v1379, %v971
        %v1696 = vmul.f32 %v1383, %v970
        %v1697 = vmul.f32 %v1383, %v971
        %v1698 = vmul.f32 %v1387, %v970
        %v1699 = vmul.f32 %v1387, %v971
        %v1700 = vmul.f32 %v1391, %v970
        %v1701 = vmul.f32 %v1391, %v971
        %v1702 = vmul.f32 %v1395, %v970
        %v1703 = vmul.f32 %v1395, %v971
        %v1704 = vmul.f32 %v1399, %v970
        %v1705 = vmul.f32 %v1399, %v971
        %v1706 = vmul.f32 %v1403, %v970
        %v1707 = vmul.f32 %v1403, %v971
        %v1708 = vmul.f32 %v1407, %v970
        %v1709 = vmul.f32 %v1407, %v971
        %v1710 = vmul.f32 %v1411, %v970
        %v1711 = vmul.f32 %v1411, %v971
        %v1712 = vmul.f32 %v1415, %v970
        %v1713 = vmul.f32 %v1415, %v971
        %v1714 = vmul.f32 %v1419, %v970
        %v1715 = vmul.f32 %v1419, %v971
        %v1716 = vmul.f32 %v1423, %v970
        %v1717 = vmul.f32 %v1423, %v971
        %v1718 = vmul.f32 %v1427, %v970
        %v1719 = vmul.f32 %v1427, %v971
        %v1720 = vmul.f32 %v1431, %v970
        %v1721 = vmul.f32 %v1431, %v971
        %v1722 = vmul.f32 %v1435, %v970
        %v1723 = vmul.f32 %v1435, %v971
        %v1724 = vmul.f32 %v1439, %v970
        %v1725 = vmul.f32 %v1439, %v971
        %v1726 = vmul.f32 %v1443, %v970
        %v1727 = vmul.f32 %v1443, %v971
        %v1728 = vmul.f32 %v1447, %v970
        %v1729 = vmul.f32 %v1447, %v971
        %v1730 = vmul.f32 %v1451, %v970
        %v1731 = vmul.f32 %v1451, %v971
        %v1732 = vmul.f32 %v1455, %v970
        %v1733 = vmul.f32 %v1455, %v971
        %v1734 = vmul.f32 %v1459, %v970
        %v1735 = vmul.f32 %v1459, %v971
        %v1736 = vmul.f32 %v1463, %v970
        %v1737 = vmul.f32 %v1463, %v971
        %v1738 = vmul.f32 %v1467, %v970
        %v1739 = vmul.f32 %v1467, %v971
        %v1740 = vmul.f32 %v1471, %v970
        %v1741 = vmul.f32 %v1471, %v971
        %v1742 = vmul.f32 %v1475, %v970
        %v1743 = vmul.f32 %v1475, %v971
        %v1744 = vmul.f32 %v1479, %v970
        %v1745 = vmul.f32 %v1479, %v971
        %v1746 = vmul.f32 %v1483, %v970
        %v1747 = vmul.f32 %v1483, %v971
        %v1748 = vmul.f32 %v1487, %v970
        %v1749 = vmul.f32 %v1487, %v971
        %v1750 = vmul.f32 %v1491, %v970
        %v1751 = vmul.f32 %v1491, %v971
        %v1752 = vmul.f32 %v1495, %v970
        %v1753 = vmul.f32 %v1495, %v971
        %v1754 = vmul.f32 %v1499, %v970
        %v1755 = vmul.f32 %v1499, %v971
        %v1756 = vmul.f32 %v1503, %v970
        %v1757 = vmul.f32 %v1503, %v971
        %v1758 = vmul.f32 %v1507, %v970
        %v1759 = vmul.f32 %v1507, %v971
        %v1760 = vmul.f32 %v1511, %v970
        %v1761 = vmul.f32 %v1511, %v971
        %v1762 = vmul.f32 %v1515, %v970
        %v1763 = vmul.f32 %v1515, %v971
        %v1764 = vmul.f32 %v1519, %v970
        %v1765 = vmul.f32 %v1519, %v971
        %v1766 = vmul.f32 %v1523, %v970
        %v1767 = vmul.f32 %v1523, %v971
        %v1768 = vmul.f32 %v1527, %v970
        %v1769 = vmul.f32 %v1527, %v971
        %v1770 = vmul.f32 %v1531, %v970
        %v1771 = vmul.f32 %v1531, %v971
        %v1772 = vmul.f32 %v1535, %v970
        %v1773 = vmul.f32 %v1535, %v971
        %v1774 = vmul.f32 %v1539, %v970
        %v1775 = vmul.f32 %v1539, %v971
        %v1776 = vmul.f32 %v1543, %v970
        %v1777 = vmul.f32 %v1543, %v971
        %v1778 = vmul.f32 %v1547, %v970
        %v1779 = vmul.f32 %v1547, %v971
        %v1780 = vmul.f32 %v1551, %v970
        %v1781 = vmul.f32 %v1551, %v971
        %v1782 = vmul.f32 %v1555, %v970
        %v1783 = vmul.f32 %v1555, %v971
        %v1784 = vmul.f32 %v1559, %v970
        %v1785 = vmul.f32 %v1559, %v971
        %v1786 = vmul.f32 %v1563, %v970
        %v1787 = vmul.f32 %v1563, %v971
        %v1788 = vmul.f32 %v1567, %v970
        %v1789 = vmul.f32 %v1567, %v971
        %v1790 = vmul.f32 %v1571, %v970
        %v1791 = vmul.f32 %v1571, %v971
        %v1792 = vmul.f32 %v1575, %v970
        %v1793 = vmul.f32 %v1575, %v971
        %v1794 = vmul.f32 %v1579, %v970
        %v1795 = vmul.f32 %v1579, %v971
        %v1796 = vmul.f32 %v1583, %v970
        %v1797 = vmul.f32 %v1583, %v971
        %v1798 = vmul.f32 %v1587, %v970
        %v1799 = vmul.f32 %v1587, %v971
        %v1800 = vmul.f32 %v1591, %v970
        %v1801 = vmul.f32 %v1591, %v971
        %v1802 = vmul.f32 %v1595, %v970
        %v1803 = vmul.f32 %v1595, %v971
        %v1804 = vmul.f32 %v1599, %v970
        %v1805 = vmul.f32 %v1599, %v971
        %v1806 = vmul.f32 %v1603, %v970
        %v1807 = vmul.f32 %v1603, %v971
        %v1808 = vmul.f32 %v1607, %v970
        %v1809 = vmul.f32 %v1607, %v971
        %v1810 = vmul.f32 %v1611, %v970
        %v1811 = vmul.f32 %v1611, %v971
        %v1812 = vmul.f32 %v1615, %v970
        %v1813 = vmul.f32 %v1615, %v971
        %v1814 = vmul.f32 %v1619, %v970
        %v1815 = vmul.f32 %v1619, %v971
        %v1816 = vmul.f32 %v1623, %v970
        %v1817 = vmul.f32 %v1623, %v971
        %v1818 = vmul.f32 %v1627, %v970
        %v1819 = vmul.f32 %v1627, %v971
        %v1820 = vmul.f32 %v1692, 1.442695
        %v1821 = vpow.pop %v1820
        %v1822 = vmul.f32 %v1693, 1.442695
        %v1823 = vpow.pop %v1822
        %v1824 = vmul.f32 %v1694, 1.442695
        %v1825 = vpow.pop %v1824
        %v1826 = vmul.f32 %v1695, 1.442695
        %v1827 = vpow.pop %v1826
        %v1828 = vmul.f32 %v1696, 1.442695
        %v1829 = vpow.pop %v1828
        %v1830 = vmul.f32 %v1697, 1.442695
        %v1831 = vpow.pop %v1830
        %v1832 = vmul.f32 %v1698, 1.442695
        %v1833 = vpow.pop %v1832
        %v1834 = vmul.f32 %v1699, 1.442695
        %v1835 = vpow.pop %v1834
        %v1836 = vmul.f32 %v1700, 1.442695
        %v1837 = vpow.pop %v1836
        %v1838 = vmul.f32 %v1701, 1.442695
        %v1839 = vpow.pop %v1838
        %v1840 = vmul.f32 %v1702, 1.442695
        %v1841 = vpow.pop %v1840
        %v1842 = vmul.f32 %v1703, 1.442695
        %v1843 = vpow.pop %v1842
        %v1844 = vmul.f32 %v1704, 1.442695
        %v1845 = vpow.pop %v1844
        %v1846 = vmul.f32 %v1705, 1.442695
        %v1847 = vpow.pop %v1846
        %v1848 = vmul.f32 %v1706, 1.442695
        %v1849 = vpow.pop %v1848
        %v1850 = vmul.f32 %v1707, 1.442695
        %v1851 = vpow.pop %v1850
        %v1852 = vmul.f32 %v1708, 1.442695
        %v1853 = vpow.pop %v1852
        %v1854 = vmul.f32 %v1709, 1.442695
        %v1855 = vpow.pop %v1854
        %v1856 = vmul.f32 %v1710, 1.442695
        %v1857 = vpow.pop %v1856
        %v1858 = vmul.f32 %v1711, 1.442695
        %v1859 = vpow.pop %v1858
        %v1860 = vmul.f32 %v1712, 1.442695
        %v1861 = vpow.pop %v1860
        %v1862 = vmul.f32 %v1713, 1.442695
        %v1863 = vpow.pop %v1862
        %v1864 = vmul.f32 %v1714, 1.442695
        %v1865 = vpow.pop %v1864
        %v1866 = vmul.f32 %v1715, 1.442695
        %v1867 = vpow.pop %v1866
        %v1868 = vmul.f32 %v1716, 1.442695
        %v1869 = vpow.pop %v1868
        %v1870 = vmul.f32 %v1717, 1.442695
        %v1871 = vpow.pop %v1870
        %v1872 = vmul.f32 %v1718, 1.442695
        %v1873 = vpow.pop %v1872
        %v1874 = vmul.f32 %v1719, 1.442695
        %v1875 = vpow.pop %v1874
        %v1876 = vmul.f32 %v1720, 1.442695
        %v1877 = vpow.pop %v1876
        %v1878 = vmul.f32 %v1721, 1.442695
        %v1879 = vpow.pop %v1878
        %v1880 = vmul.f32 %v1722, 1.442695
        %v1881 = vpow.pop %v1880
        %v1882 = vmul.f32 %v1723, 1.442695
        %v1883 = vpow.pop %v1882
        %v1884 = vmul.f32 %v1724, 1.442695
        %v1885 = vpow.pop %v1884
        %v1886 = vmul.f32 %v1725, 1.442695
        %v1887 = vpow.pop %v1886
        %v1888 = vmul.f32 %v1726, 1.442695
        %v1889 = vpow.pop %v1888
        %v1890 = vmul.f32 %v1727, 1.442695
        %v1891 = vpow.pop %v1890
        %v1892 = vmul.f32 %v1728, 1.442695
        %v1893 = vpow.pop %v1892
        %v1894 = vmul.f32 %v1729, 1.442695
        %v1895 = vpow.pop %v1894
        %v1896 = vmul.f32 %v1730, 1.442695
        %v1897 = vpow.pop %v1896
        %v1898 = vmul.f32 %v1731, 1.442695
        %v1899 = vpow.pop %v1898
        %v1900 = vmul.f32 %v1732, 1.442695
        %v1901 = vpow.pop %v1900
        %v1902 = vmul.f32 %v1733, 1.442695
        %v1903 = vpow.pop %v1902
        %v1904 = vmul.f32 %v1734, 1.442695
        %v1905 = vpow.pop %v1904
        %v1906 = vmul.f32 %v1735, 1.442695
        %v1907 = vpow.pop %v1906
        %v1908 = vmul.f32 %v1736, 1.442695
        %v1909 = vpow.pop %v1908
        %v1910 = vmul.f32 %v1737, 1.442695
        %v1911 = vpow.pop %v1910
        %v1912 = vmul.f32 %v1738, 1.442695
        %v1913 = vpow.pop %v1912
        %v1914 = vmul.f32 %v1739, 1.442695
        %v1915 = vpow.pop %v1914
        %v1916 = vmul.f32 %v1740, 1.442695
        %v1917 = vpow.pop %v1916
        %v1918 = vmul.f32 %v1741, 1.442695
        %v1919 = vpow.pop %v1918
        %v1920 = vmul.f32 %v1742, 1.442695
        %v1921 = vpow.pop %v1920
        %v1922 = vmul.f32 %v1743, 1.442695
        %v1923 = vpow.pop %v1922
        %v1924 = vmul.f32 %v1744, 1.442695
        %v1925 = vpow.pop %v1924
        %v1926 = vmul.f32 %v1745, 1.442695
        %v1927 = vpow.pop %v1926
        %v1928 = vmul.f32 %v1746, 1.442695
        %v1929 = vpow.pop %v1928
        %v1930 = vmul.f32 %v1747, 1.442695
        %v1931 = vpow.pop %v1930
        %v1932 = vmul.f32 %v1748, 1.442695
        %v1933 = vpow.pop %v1932
        %v1934 = vmul.f32 %v1749, 1.442695
        %v1935 = vpow.pop %v1934
        %v1936 = vmul.f32 %v1750, 1.442695
        %v1937 = vpow.pop %v1936
        %v1938 = vmul.f32 %v1751, 1.442695
        %v1939 = vpow.pop %v1938
        %v1940 = vmul.f32 %v1752, 1.442695
        %v1941 = vpow.pop %v1940
        %v1942 = vmul.f32 %v1753, 1.442695
        %v1943 = vpow.pop %v1942
        %v1944 = vmul.f32 %v1754, 1.442695
        %v1945 = vpow.pop %v1944
        %v1946 = vmul.f32 %v1755, 1.442695
        %v1947 = vpow.pop %v1946
        %v1948 = vmul.f32 %v1756, 1.442695
        %v1949 = vpow.pop %v1948
        %v1950 = vmul.f32 %v1757, 1.442695
        %v1951 = vpow.pop %v1950
        %v1952 = vmul.f32 %v1758, 1.442695
        %v1953 = vpow.pop %v1952
        %v1954 = vmul.f32 %v1759, 1.442695
        %v1955 = vpow.pop %v1954
        %v1956 = vmul.f32 %v1760, 1.442695
        %v1957 = vpow.pop %v1956
        %v1958 = vmul.f32 %v1761, 1.442695
        %v1959 = vpow.pop %v1958
        %v1960 = vmul.f32 %v1762, 1.442695
        %v1961 = vpow.pop %v1960
        %v1962 = vmul.f32 %v1763, 1.442695
        %v1963 = vpow.pop %v1962
        %v1964 = vmul.f32 %v1764, 1.442695
        %v1965 = vpow.pop %v1964
        %v1966 = vmul.f32 %v1765, 1.442695
        %v1967 = vpow.pop %v1966
        %v1968 = vmul.f32 %v1766, 1.442695
        %v1969 = vpow.pop %v1968
        %v1970 = vmul.f32 %v1767, 1.442695
        %v1971 = vpow.pop %v1970
        %v1972 = vmul.f32 %v1768, 1.442695
        %v1973 = vpow.pop %v1972
        %v1974 = vmul.f32 %v1769, 1.442695
        %v1975 = vpow.pop %v1974
        %v1976 = vmul.f32 %v1770, 1.442695
        %v1977 = vpow.pop %v1976
        %v1978 = vmul.f32 %v1771, 1.442695
        %v1979 = vpow.pop %v1978
        %v1980 = vmul.f32 %v1772, 1.442695
        %v1981 = vpow.pop %v1980
        %v1982 = vmul.f32 %v1773, 1.442695
        %v1983 = vpow.pop %v1982
        %v1984 = vmul.f32 %v1774, 1.442695
        %v1985 = vpow.pop %v1984
        %v1986 = vmul.f32 %v1775, 1.442695
        %v1987 = vpow.pop %v1986
        %v1988 = vmul.f32 %v1776, 1.442695
        %v1989 = vpow.pop %v1988
        %v1990 = vmul.f32 %v1777, 1.442695
        %v1991 = vpow.pop %v1990
        %v1992 = vmul.f32 %v1778, 1.442695
        %v1993 = vpow.pop %v1992
        %v1994 = vmul.f32 %v1779, 1.442695
        %v1995 = vpow.pop %v1994
        %v1996 = vmul.f32 %v1780, 1.442695
        %v1997 = vpow.pop %v1996
        %v1998 = vmul.f32 %v1781, 1.442695
        %v1999 = vpow.pop %v1998
        %v2000 = vmul.f32 %v1782, 1.442695
        %v2001 = vpow.pop %v2000
        %v2002 = vmul.f32 %v1783, 1.442695
        %v2003 = vpow.pop %v2002
        %v2004 = vmul.f32 %v1784, 1.442695
        %v2005 = vpow.pop %v2004
        %v2006 = vmul.f32 %v1785, 1.442695
        %v2007 = vpow.pop %v2006
        %v2008 = vmul.f32 %v1786, 1.442695
        %v2009 = vpow.pop %v2008
        %v2010 = vmul.f32 %v1787, 1.442695
        %v2011 = vpow.pop %v2010
        %v2012 = vmul.f32 %v1788, 1.442695
        %v2013 = vpow.pop %v2012
        %v2014 = vmul.f32 %v1789, 1.442695
        %v2015 = vpow.pop %v2014
        %v2016 = vmul.f32 %v1790, 1.442695
        %v2017 = vpow.pop %v2016
        %v2018 = vmul.f32 %v1791, 1.442695
        %v2019 = vpow.pop %v2018
        %v2020 = vmul.f32 %v1792, 1.442695
        %v2021 = vpow.pop %v2020
        %v2022 = vmul.f32 %v1793, 1.442695
        %v2023 = vpow.pop %v2022
        %v2024 = vmul.f32 %v1794, 1.442695
        %v2025 = vpow.pop %v2024
        %v2026 = vmul.f32 %v1795, 1.442695
        %v2027 = vpow.pop %v2026
        %v2028 = vmul.f32 %v1796, 1.442695
        %v2029 = vpow.pop %v2028
        %v2030 = vmul.f32 %v1797, 1.442695
        %v2031 = vpow.pop %v2030
        %v2032 = vmul.f32 %v1798, 1.442695
        %v2033 = vpow.pop %v2032
        %v2034 = vmul.f32 %v1799, 1.442695
        %v2035 = vpow.pop %v2034
        %v2036 = vmul.f32 %v1800, 1.442695
        %v2037 = vpow.pop %v2036
        %v2038 = vmul.f32 %v1801, 1.442695
        %v2039 = vpow.pop %v2038
        %v2040 = vmul.f32 %v1802, 1.442695
        %v2041 = vpow.pop %v2040
        %v2042 = vmul.f32 %v1803, 1.442695
        %v2043 = vpow.pop %v2042
        %v2044 = vmul.f32 %v1804, 1.442695
        %v2045 = vpow.pop %v2044
        %v2046 = vmul.f32 %v1805, 1.442695
        %v2047 = vpow.pop %v2046
        %v2048 = vmul.f32 %v1806, 1.442695
        %v2049 = vpow.pop %v2048
        %v2050 = vmul.f32 %v1807, 1.442695
        %v2051 = vpow.pop %v2050
        %v2052 = vmul.f32 %v1808, 1.442695
        %v2053 = vpow.pop %v2052
        %v2054 = vmul.f32 %v1809, 1.442695
        %v2055 = vpow.pop %v2054
        %v2056 = vmul.f32 %v1810, 1.442695
        %v2057 = vpow.pop %v2056
        %v2058 = vmul.f32 %v1811, 1.442695
        %v2059 = vpow.pop %v2058
        %v2060 = vmul.f32 %v1812, 1.442695
        %v2061 = vpow.pop %v2060
        %v2062 = vmul.f32 %v1813, 1.442695
        %v2063 = vpow.pop %v2062
        %v2064 = vmul.f32 %v1814, 1.442695
        %v2065 = vpow.pop %v2064
        %v2066 = vmul.f32 %v1815, 1.442695
        %v2067 = vpow.pop %v2066
        %v2068 = vmul.f32 %v1816, 1.442695
        %v2069 = vpow.pop %v2068
        %v2070 = vmul.f32 %v1817, 1.442695
        %v2071 = vpow.pop %v2070
        %v2072 = vmul.f32 %v1818, 1.442695
        %v2073 = vpow.pop %v2072
        %v2074 = vmul.f32 %v1819, 1.442695
        %v2075 = vpow.pop %v2074
        %2076 = vst.msk [vmem:[#allocation3] sm:$0xff] %vm506, %v1821
        %2077 = vst.msk [vmem:[#allocation3 + $0x8] sm:$0xff] %vm506, %v1823
        %2078 = vst.msk [vmem:[#allocation3 + $0x10] sm:$0xff] %vm506, %v1825
        %2079 = vst.msk [vmem:[#allocation3 + $0x18] sm:$0xff] %vm506, %v1827
        %2080 = vst.msk [vmem:[#allocation3 + $0x20] sm:$0xff] %vm506, %v1829
        %2081 = vst.msk [vmem:[#allocation3 + $0x28] sm:$0xff] %vm506, %v1831
        %2082 = vst.msk [vmem:[#allocation3 + $0x30] sm:$0xff] %vm506, %v1833
        %2083 = vst.msk [vmem:[#allocation3 + $0x38] sm:$0xff] %vm506, %v1835
        %2084 = vst.msk [vmem:[#allocation3 + $0x40] sm:$0xff] %vm506, %v1837
        %2085 = vst.msk [vmem:[#allocation3 + $0x48] sm:$0xff] %vm506, %v1839
        %2086 = vst.msk [vmem:[#allocation3 + $0x50] sm:$0xff] %vm506, %v1841
        %2087 = vst.msk [vmem:[#allocation3 + $0x58] sm:$0xff] %vm506, %v1843
        %2088 = vst.msk [vmem:[#allocation3 + $0x60] sm:$0xff] %vm506, %v1845
        %2089 = vst.msk [vmem:[#allocation3 + $0x68] sm:$0xff] %vm506, %v1847
        %2090 = vst.msk [vmem:[#allocation3 + $0x70] sm:$0xff] %vm506, %v1849
        %2091 = vst.msk [vmem:[#allocation3 + $0x78] sm:$0xff] %vm506, %v1851
        %2092 = vst.msk [vmem:[#allocation3 + $0x80] sm:$0xff] %vm506, %v1853
        %2093 = vst.msk [vmem:[#allocation3 + $0x88] sm:$0xff] %vm506, %v1855
        %2094 = vst.msk [vmem:[#allocation3 + $0x90] sm:$0xff] %vm506, %v1857
        %2095 = vst.msk [vmem:[#allocation3 + $0x98] sm:$0xff] %vm506, %v1859
        %2096 = vst.msk [vmem:[#allocation3 + $0xa0] sm:$0xff] %vm506, %v1861
        %2097 = vst.msk [vmem:[#allocation3 + $0xa8] sm:$0xff] %vm506, %v1863
        %2098 = vst.msk [vmem:[#allocation3 + $0xb0] sm:$0xff] %vm506, %v1865
        %2099 = vst.msk [vmem:[#allocation3 + $0xb8] sm:$0xff] %vm506, %v1867
        %2100 = vst.msk [vmem:[#allocation3 + $0xc0] sm:$0xff] %vm506, %v1869
        %2101 = vst.msk [vmem:[#allocation3 + $0xc8] sm:$0xff] %vm506, %v1871
        %2102 = vst.msk [vmem:[#allocation3 + $0xd0] sm:$0xff] %vm506, %v1873
        %2103 = vst.msk [vmem:[#allocation3 + $0xd8] sm:$0xff] %vm506, %v1875
        %2104 = vst.msk [vmem:[#allocation3 + $0xe0] sm:$0xff] %vm506, %v1877
        %2105 = vst.msk [vmem:[#allocation3 + $0xe8] sm:$0xff] %vm506, %v1879
        %2106 = vst.msk [vmem:[#allocation3 + $0xf0] sm:$0xff] %vm506, %v1881
        %2107 = vst.msk [vmem:[#allocation3 + $0xf8] sm:$0xff] %vm506, %v1883
        %2108 = vst.msk [vmem:[#allocation3 + $0x100] sm:$0xff] %vm506, %v1885
        %2109 = vst.msk [vmem:[#allocation3 + $0x108] sm:$0xff] %vm506, %v1887
        %2110 = vst.msk [vmem:[#allocation3 + $0x110] sm:$0xff] %vm506, %v1889
        %2111 = vst.msk [vmem:[#allocation3 + $0x118] sm:$0xff] %vm506, %v1891
        %2112 = vst.msk [vmem:[#allocation3 + $0x120] sm:$0xff] %vm506, %v1893
        %2113 = vst.msk [vmem:[#allocation3 + $0x128] sm:$0xff] %vm506, %v1895
        %2114 = vst.msk [vmem:[#allocation3 + $0x130] sm:$0xff] %vm506, %v1897
        %2115 = vst.msk [vmem:[#allocation3 + $0x138] sm:$0xff] %vm506, %v1899
        %2116 = vst.msk [vmem:[#allocation3 + $0x140] sm:$0xff] %vm506, %v1901
        %2117 = vst.msk [vmem:[#allocation3 + $0x148] sm:$0xff] %vm506, %v1903
        %2118 = vst.msk [vmem:[#allocation3 + $0x150] sm:$0xff] %vm506, %v1905
        %2119 = vst.msk [vmem:[#allocation3 + $0x158] sm:$0xff] %vm506, %v1907
        %2120 = vst.msk [vmem:[#allocation3 + $0x160] sm:$0xff] %vm506, %v1909
        %2121 = vst.msk [vmem:[#allocation3 + $0x168] sm:$0xff] %vm506, %v1911
        %2122 = vst.msk [vmem:[#allocation3 + $0x170] sm:$0xff] %vm506, %v1913
        %2123 = vst.msk [vmem:[#allocation3 + $0x178] sm:$0xff] %vm506, %v1915
        %2124 = vst.msk [vmem:[#allocation3 + $0x180] sm:$0xff] %vm506, %v1917
        %2125 = vst.msk [vmem:[#allocation3 + $0x188] sm:$0xff] %vm506, %v1919
        %2126 = vst.msk [vmem:[#allocation3 + $0x190] sm:$0xff] %vm506, %v1921
        %2127 = vst.msk [vmem:[#allocation3 + $0x198] sm:$0xff] %vm506, %v1923
        %2128 = vst.msk [vmem:[#allocation3 + $0x1a0] sm:$0xff] %vm506, %v1925
        %2129 = vst.msk [vmem:[#allocation3 + $0x1a8] sm:$0xff] %vm506, %v1927
        %2130 = vst.msk [vmem:[#allocation3 + $0x1b0] sm:$0xff] %vm506, %v1929
        %2131 = vst.msk [vmem:[#allocation3 + $0x1b8] sm:$0xff] %vm506, %v1931
        %2132 = vst.msk [vmem:[#allocation3 + $0x1c0] sm:$0xff] %vm506, %v1933
        %2133 = vst.msk [vmem:[#allocation3 + $0x1c8] sm:$0xff] %vm506, %v1935
        %2134 = vst.msk [vmem:[#allocation3 + $0x1d0] sm:$0xff] %vm506, %v1937
        %2135 = vst.msk [vmem:[#allocation3 + $0x1d8] sm:$0xff] %vm506, %v1939
        %2136 = vst.msk [vmem:[#allocation3 + $0x1e0] sm:$0xff] %vm506, %v1941
        %2137 = vst.msk [vmem:[#allocation3 + $0x1e8] sm:$0xff] %vm506, %v1943
        %2138 = vst.msk [vmem:[#allocation3 + $0x1f0] sm:$0xff] %vm506, %v1945
        %2139 = vst.msk [vmem:[#allocation3 + $0x1f8] sm:$0xff] %vm506, %v1947
        %2140 = vst.msk [vmem:[#allocation3 + $0x200] sm:$0xff] %vm506, %v1949
        %2141 = vst.msk [vmem:[#allocation3 + $0x208] sm:$0xff] %vm506, %v1951
        %2142 = vst.msk [vmem:[#allocation3 + $0x210] sm:$0xff] %vm506, %v1953
        %2143 = vst.msk [vmem:[#allocation3 + $0x218] sm:$0xff] %vm506, %v1955
        %2144 = vst.msk [vmem:[#allocation3 + $0x220] sm:$0xff] %vm506, %v1957
        %2145 = vst.msk [vmem:[#allocation3 + $0x228] sm:$0xff] %vm506, %v1959
        %2146 = vst.msk [vmem:[#allocation3 + $0x230] sm:$0xff] %vm506, %v1961
        %2147 = vst.msk [vmem:[#allocation3 + $0x238] sm:$0xff] %vm506, %v1963
        %2148 = vst.msk [vmem:[#allocation3 + $0x240] sm:$0xff] %vm506, %v1965
        %2149 = vst.msk [vmem:[#allocation3 + $0x248] sm:$0xff] %vm506, %v1967
        %2150 = vst.msk [vmem:[#allocation3 + $0x250] sm:$0xff] %vm506, %v1969
        %2151 = vst.msk [vmem:[#allocation3 + $0x258] sm:$0xff] %vm506, %v1971
        %2152 = vst.msk [vmem:[#allocation3 + $0x260] sm:$0xff] %vm506, %v1973
        %2153 = vst.msk [vmem:[#allocation3 + $0x268] sm:$0xff] %vm506, %v1975
        %2154 = vst.msk [vmem:[#allocation3 + $0x270] sm:$0xff] %vm506, %v1977
        %2155 = vst.msk [vmem:[#allocation3 + $0x278] sm:$0xff] %vm506, %v1979
        %2156 = vst.msk [vmem:[#allocation3 + $0x280] sm:$0xff] %vm506, %v1981
        %2157 = vst.msk [vmem:[#allocation3 + $0x288] sm:$0xff] %vm506, %v1983
        %2158 = vst.msk [vmem:[#allocation3 + $0x290] sm:$0xff] %vm506, %v1985
        %2159 = vst.msk [vmem:[#allocation3 + $0x298] sm:$0xff] %vm506, %v1987
        %2160 = vst.msk [vmem:[#allocation3 + $0x2a0] sm:$0xff] %vm506, %v1989
        %2161 = vst.msk [vmem:[#allocation3 + $0x2a8] sm:$0xff] %vm506, %v1991
        %2162 = vst.msk [vmem:[#allocation3 + $0x2b0] sm:$0xff] %vm506, %v1993
        %2163 = vst.msk [vmem:[#allocation3 + $0x2b8] sm:$0xff] %vm506, %v1995
        %2164 = vst.msk [vmem:[#allocation3 + $0x2c0] sm:$0xff] %vm506, %v1997
        %2165 = vst.msk [vmem:[#allocation3 + $0x2c8] sm:$0xff] %vm506, %v1999
        %2166 = vst.msk [vmem:[#allocation3 + $0x2d0] sm:$0xff] %vm506, %v2001
        %2167 = vst.msk [vmem:[#allocation3 + $0x2d8] sm:$0xff] %vm506, %v2003
        %2168 = vst.msk [vmem:[#allocation3 + $0x2e0] sm:$0xff] %vm506, %v2005
        %2169 = vst.msk [vmem:[#allocation3 + $0x2e8] sm:$0xff] %vm506, %v2007
        %2170 = vst.msk [vmem:[#allocation3 + $0x2f0] sm:$0xff] %vm506, %v2009
        %2171 = vst.msk [vmem:[#allocation3 + $0x2f8] sm:$0xff] %vm506, %v2011
        %2172 = vst.msk [vmem:[#allocation3 + $0x300] sm:$0xff] %vm506, %v2013
        %2173 = vst.msk [vmem:[#allocation3 + $0x308] sm:$0xff] %vm506, %v2015
        %2174 = vst.msk [vmem:[#allocation3 + $0x310] sm:$0xff] %vm506, %v2017
        %2175 = vst.msk [vmem:[#allocation3 + $0x318] sm:$0xff] %vm506, %v2019
        %2176 = vst.msk [vmem:[#allocation3 + $0x320] sm:$0xff] %vm506, %v2021
        %2177 = vst.msk [vmem:[#allocation3 + $0x328] sm:$0xff] %vm506, %v2023
        %2178 = vst.msk [vmem:[#allocation3 + $0x330] sm:$0xff] %vm506, %v2025
        %2179 = vst.msk [vmem:[#allocation3 + $0x338] sm:$0xff] %vm506, %v2027
        %2180 = vst.msk [vmem:[#allocation3 + $0x340] sm:$0xff] %vm506, %v2029
        %2181 = vst.msk [vmem:[#allocation3 + $0x348] sm:$0xff] %vm506, %v2031
        %2182 = vst.msk [vmem:[#allocation3 + $0x350] sm:$0xff] %vm506, %v2033
        %2183 = vst.msk [vmem:[#allocation3 + $0x358] sm:$0xff] %vm506, %v2035
        %2184 = vst.msk [vmem:[#allocation3 + $0x360] sm:$0xff] %vm506, %v2037
        %2185 = vst.msk [vmem:[#allocation3 + $0x368] sm:$0xff] %vm506, %v2039
        %2186 = vst.msk [vmem:[#allocation3 + $0x370] sm:$0xff] %vm506, %v2041
        %2187 = vst.msk [vmem:[#allocation3 + $0x378] sm:$0xff] %vm506, %v2043
        %2188 = vst.msk [vmem:[#allocation3 + $0x380] sm:$0xff] %vm506, %v2045
        %2189 = vst.msk [vmem:[#allocation3 + $0x388] sm:$0xff] %vm506, %v2047
        %2190 = vst.msk [vmem:[#allocation3 + $0x390] sm:$0xff] %vm506, %v2049
        %2191 = vst.msk [vmem:[#allocation3 + $0x398] sm:$0xff] %vm506, %v2051
        %2192 = vst.msk [vmem:[#allocation3 + $0x3a0] sm:$0xff] %vm506, %v2053
        %2193 = vst.msk [vmem:[#allocation3 + $0x3a8] sm:$0xff] %vm506, %v2055
        %2194 = vst.msk [vmem:[#allocation3 + $0x3b0] sm:$0xff] %vm506, %v2057
        %2195 = vst.msk [vmem:[#allocation3 + $0x3b8] sm:$0xff] %vm506, %v2059
        %2196 = vst.msk [vmem:[#allocation3 + $0x3c0] sm:$0xff] %vm506, %v2061
        %2197 = vst.msk [vmem:[#allocation3 + $0x3c8] sm:$0xff] %vm506, %v2063
        %2198 = vst.msk [vmem:[#allocation3 + $0x3d0] sm:$0xff] %vm506, %v2065
        %2199 = vst.msk [vmem:[#allocation3 + $0x3d8] sm:$0xff] %vm506, %v2067
        %2200 = vst.msk [vmem:[#allocation3 + $0x3e0] sm:$0xff] %vm506, %v2069
        %2201 = vst.msk [vmem:[#allocation3 + $0x3e8] sm:$0xff] %vm506, %v2071
        %2202 = vst.msk [vmem:[#allocation3 + $0x3f0] sm:$0xff] %vm506, %v2073
        %2203 = vst.msk [vmem:[#allocation3 + $0x3f8] sm:$0xff] %vm506, %v2075
        %v2204 = vlaneseq
        %v2205 = vshrl.u32 %v2204, 7
        %v2206 = vsub.s32 0, %v2205
        %v2207 = vrot.slane %v819, %v2206
        %2209 = vbcast.lane.b32.xlu0 %v2207, 256
        %v2210 = vpop.permute.xlu0 %2209
        %s2212 = sor.u32 256, 8
        %2213 = vbcast.lane.b32.xlu0 %v2207, %s2212
        %v2214 = vpop.permute.xlu0 %2213
        %v2215 = vlaneseq
        %v2216 = vshrl.u32 %v2215, 7
        %v2217 = vsub.s32 1, %v2216
        %v2218 = vrot.slane %v819, %v2217
        %2220 = vbcast.lane.b32.xlu0 %v2218, 256
        %v2221 = vpop.permute.xlu0 %2220
        %s2223 = sor.u32 256, 8
        %2224 = vbcast.lane.b32.xlu0 %v2218, %s2223
        %v2225 = vpop.permute.xlu0 %2224
        %v2226 = vlaneseq
        %v2227 = vshrl.u32 %v2226, 7
        %v2228 = vsub.s32 2, %v2227
        %v2229 = vrot.slane %v819, %v2228
        %2231 = vbcast.lane.b32.xlu0 %v2229, 256
        %v2232 = vpop.permute.xlu0 %2231
        %s2234 = sor.u32 256, 8
        %2235 = vbcast.lane.b32.xlu0 %v2229, %s2234
        %v2236 = vpop.permute.xlu0 %2235
        %v2237 = vlaneseq
        %v2238 = vshrl.u32 %v2237, 7
        %v2239 = vsub.s32 3, %v2238
        %v2240 = vrot.slane %v819, %v2239
        %2242 = vbcast.lane.b32.xlu0 %v2240, 256
        %v2243 = vpop.permute.xlu0 %2242
        %s2245 = sor.u32 256, 8
        %2246 = vbcast.lane.b32.xlu0 %v2240, %s2245
        %v2247 = vpop.permute.xlu0 %2246
        %v2248 = vlaneseq
        %v2249 = vshrl.u32 %v2248, 7
        %v2250 = vsub.s32 4, %v2249
        %v2251 = vrot.slane %v819, %v2250
        %2253 = vbcast.lane.b32.xlu0 %v2251, 256
        %v2254 = vpop.permute.xlu0 %2253
        %s2256 = sor.u32 256, 8
        %2257 = vbcast.lane.b32.xlu0 %v2251, %s2256
        %v2258 = vpop.permute.xlu0 %2257
        %v2259 = vlaneseq
        %v2260 = vshrl.u32 %v2259, 7
        %v2261 = vsub.s32 5, %v2260
        %v2262 = vrot.slane %v819, %v2261
        %2264 = vbcast.lane.b32.xlu0 %v2262, 256
        %v2265 = vpop.permute.xlu0 %2264
        %s2267 = sor.u32 256, 8
        %2268 = vbcast.lane.b32.xlu0 %v2262, %s2267
        %v2269 = vpop.permute.xlu0 %2268
        %v2270 = vlaneseq
        %v2271 = vshrl.u32 %v2270, 7
        %v2272 = vsub.s32 6, %v2271
        %v2273 = vrot.slane %v819, %v2272
        %2275 = vbcast.lane.b32.xlu0 %v2273, 256
        %v2276 = vpop.permute.xlu0 %2275
        %s2278 = sor.u32 256, 8
        %2279 = vbcast.lane.b32.xlu0 %v2273, %s2278
        %v2280 = vpop.permute.xlu0 %2279
        %v2281 = vlaneseq
        %v2282 = vshrl.u32 %v2281, 7
        %v2283 = vsub.s32 7, %v2282
        %v2284 = vrot.slane %v819, %v2283
        %2286 = vbcast.lane.b32.xlu0 %v2284, 256
        %v2287 = vpop.permute.xlu0 %2286
        %s2289 = sor.u32 256, 8
        %2290 = vbcast.lane.b32.xlu0 %v2284, %s2289
        %v2291 = vpop.permute.xlu0 %2290
        %v2292 = vlaneseq
        %v2293 = vshrl.u32 %v2292, 7
        %v2294 = vsub.s32 0, %v2293
        %v2295 = vrot.slane %v824, %v2294
        %2297 = vbcast.lane.b32.xlu0 %v2295, 256
        %v2298 = vpop.permute.xlu0 %2297
        %s2300 = sor.u32 256, 8
        %2301 = vbcast.lane.b32.xlu0 %v2295, %s2300
        %v2302 = vpop.permute.xlu0 %2301
        %v2303 = vlaneseq
        %v2304 = vshrl.u32 %v2303, 7
        %v2305 = vsub.s32 1, %v2304
        %v2306 = vrot.slane %v824, %v2305
        %2308 = vbcast.lane.b32.xlu0 %v2306, 256
        %v2309 = vpop.permute.xlu0 %2308
        %s2311 = sor.u32 256, 8
        %2312 = vbcast.lane.b32.xlu0 %v2306, %s2311
        %v2313 = vpop.permute.xlu0 %2312
        %v2314 = vlaneseq
        %v2315 = vshrl.u32 %v2314, 7
        %v2316 = vsub.s32 2, %v2315
        %v2317 = vrot.slane %v824, %v2316
        %2319 = vbcast.lane.b32.xlu0 %v2317, 256
        %v2320 = vpop.permute.xlu0 %2319
        %s2322 = sor.u32 256, 8
        %2323 = vbcast.lane.b32.xlu0 %v2317, %s2322
        %v2324 = vpop.permute.xlu0 %2323
        %v2325 = vlaneseq
        %v2326 = vshrl.u32 %v2325, 7
        %v2327 = vsub.s32 3, %v2326
        %v2328 = vrot.slane %v824, %v2327
        %2330 = vbcast.lane.b32.xlu0 %v2328, 256
        %v2331 = vpop.permute.xlu0 %2330
        %s2333 = sor.u32 256, 8
        %2334 = vbcast.lane.b32.xlu0 %v2328, %s2333
        %v2335 = vpop.permute.xlu0 %2334
        %v2336 = vlaneseq
        %v2337 = vshrl.u32 %v2336, 7
        %v2338 = vsub.s32 4, %v2337
        %v2339 = vrot.slane %v824, %v2338
        %2341 = vbcast.lane.b32.xlu0 %v2339, 256
        %v2342 = vpop.permute.xlu0 %2341
        %s2344 = sor.u32 256, 8
        %2345 = vbcast.lane.b32.xlu0 %v2339, %s2344
        %v2346 = vpop.permute.xlu0 %2345
        %v2347 = vlaneseq
        %v2348 = vshrl.u32 %v2347, 7
        %v2349 = vsub.s32 5, %v2348
        %v2350 = vrot.slane %v824, %v2349
        %2352 = vbcast.lane.b32.xlu0 %v2350, 256
        %v2353 = vpop.permute.xlu0 %2352
        %s2355 = sor.u32 256, 8
        %2356 = vbcast.lane.b32.xlu0 %v2350, %s2355
        %v2357 = vpop.permute.xlu0 %2356
        %v2358 = vlaneseq
        %v2359 = vshrl.u32 %v2358, 7
        %v2360 = vsub.s32 6, %v2359
        %v2361 = vrot.slane %v824, %v2360
        %2363 = vbcast.lane.b32.xlu0 %v2361, 256
        %v2364 = vpop.permute.xlu0 %2363
        %s2366 = sor.u32 256, 8
        %2367 = vbcast.lane.b32.xlu0 %v2361, %s2366
        %v2368 = vpop.permute.xlu0 %2367
        %v2369 = vlaneseq
        %v2370 = vshrl.u32 %v2369, 7
        %v2371 = vsub.s32 7, %v2370
        %v2372 = vrot.slane %v824, %v2371
        %2374 = vbcast.lane.b32.xlu0 %v2372, 256
        %v2375 = vpop.permute.xlu0 %2374
        %s2377 = sor.u32 256, 8
        %2378 = vbcast.lane.b32.xlu0 %v2372, %s2377
        %v2379 = vpop.permute.xlu0 %2378
        %v2380 = vlaneseq
        %v2381 = vshrl.u32 %v2380, 7
        %v2382 = vsub.s32 0, %v2381
        %v2383 = vrot.slane %v829, %v2382
        %2385 = vbcast.lane.b32.xlu0 %v2383, 256
        %v2386 = vpop.permute.xlu0 %2385
        %s2388 = sor.u32 256, 8
        %2389 = vbcast.lane.b32.xlu0 %v2383, %s2388
        %v2390 = vpop.permute.xlu0 %2389
        %v2391 = vlaneseq
        %v2392 = vshrl.u32 %v2391, 7
        %v2393 = vsub.s32 1, %v2392
        %v2394 = vrot.slane %v829, %v2393
        %2396 = vbcast.lane.b32.xlu0 %v2394, 256
        %v2397 = vpop.permute.xlu0 %2396
        %s2399 = sor.u32 256, 8
        %2400 = vbcast.lane.b32.xlu0 %v2394, %s2399
        %v2401 = vpop.permute.xlu0 %2400
        %v2402 = vlaneseq
        %v2403 = vshrl.u32 %v2402, 7
        %v2404 = vsub.s32 2, %v2403
        %v2405 = vrot.slane %v829, %v2404
        %2407 = vbcast.lane.b32.xlu0 %v2405, 256
        %v2408 = vpop.permute.xlu0 %2407
        %s2410 = sor.u32 256, 8
        %2411 = vbcast.lane.b32.xlu0 %v2405, %s2410
        %v2412 = vpop.permute.xlu0 %2411
        %v2413 = vlaneseq
        %v2414 = vshrl.u32 %v2413, 7
        %v2415 = vsub.s32 3, %v2414
        %v2416 = vrot.slane %v829, %v2415
        %2418 = vbcast.lane.b32.xlu0 %v2416, 256
        %v2419 = vpop.permute.xlu0 %2418
        %s2421 = sor.u32 256, 8
        %2422 = vbcast.lane.b32.xlu0 %v2416, %s2421
        %v2423 = vpop.permute.xlu0 %2422
        %v2424 = vlaneseq
        %v2425 = vshrl.u32 %v2424, 7
        %v2426 = vsub.s32 4, %v2425
        %v2427 = vrot.slane %v829, %v2426
        %2429 = vbcast.lane.b32.xlu0 %v2427, 256
        %v2430 = vpop.permute.xlu0 %2429
        %s2432 = sor.u32 256, 8
        %2433 = vbcast.lane.b32.xlu0 %v2427, %s2432
        %v2434 = vpop.permute.xlu0 %2433
        %v2435 = vlaneseq
        %v2436 = vshrl.u32 %v2435, 7
        %v2437 = vsub.s32 5, %v2436
        %v2438 = vrot.slane %v829, %v2437
        %2440 = vbcast.lane.b32.xlu0 %v2438, 256
        %v2441 = vpop.permute.xlu0 %2440
        %s2443 = sor.u32 256, 8
        %2444 = vbcast.lane.b32.xlu0 %v2438, %s2443
        %v2445 = vpop.permute.xlu0 %2444
        %v2446 = vlaneseq
        %v2447 = vshrl.u32 %v2446, 7
        %v2448 = vsub.s32 6, %v2447
        %v2449 = vrot.slane %v829, %v2448
        %2451 = vbcast.lane.b32.xlu0 %v2449, 256
        %v2452 = vpop.permute.xlu0 %2451
        %s2454 = sor.u32 256, 8
        %2455 = vbcast.lane.b32.xlu0 %v2449, %s2454
        %v2456 = vpop.permute.xlu0 %2455
        %v2457 = vlaneseq
        %v2458 = vshrl.u32 %v2457, 7
        %v2459 = vsub.s32 7, %v2458
        %v2460 = vrot.slane %v829, %v2459
        %2462 = vbcast.lane.b32.xlu0 %v2460, 256
        %v2463 = vpop.permute.xlu0 %2462
        %s2465 = sor.u32 256, 8
        %2466 = vbcast.lane.b32.xlu0 %v2460, %s2465
        %v2467 = vpop.permute.xlu0 %2466
        %v2468 = vlaneseq
        %v2469 = vshrl.u32 %v2468, 7
        %v2470 = vsub.s32 0, %v2469
        %v2471 = vrot.slane %v834, %v2470
        %2473 = vbcast.lane.b32.xlu0 %v2471, 256
        %v2474 = vpop.permute.xlu0 %2473
        %s2476 = sor.u32 256, 8
        %2477 = vbcast.lane.b32.xlu0 %v2471, %s2476
        %v2478 = vpop.permute.xlu0 %2477
        %v2479 = vlaneseq
        %v2480 = vshrl.u32 %v2479, 7
        %v2481 = vsub.s32 1, %v2480
        %v2482 = vrot.slane %v834, %v2481
        %2484 = vbcast.lane.b32.xlu0 %v2482, 256
        %v2485 = vpop.permute.xlu0 %2484
        %s2487 = sor.u32 256, 8
        %2488 = vbcast.lane.b32.xlu0 %v2482, %s2487
        %v2489 = vpop.permute.xlu0 %2488
        %v2490 = vlaneseq
        %v2491 = vshrl.u32 %v2490, 7
        %v2492 = vsub.s32 2, %v2491
        %v2493 = vrot.slane %v834, %v2492
        %2495 = vbcast.lane.b32.xlu0 %v2493, 256
        %v2496 = vpop.permute.xlu0 %2495
        %s2498 = sor.u32 256, 8
        %2499 = vbcast.lane.b32.xlu0 %v2493, %s2498
        %v2500 = vpop.permute.xlu0 %2499
        %v2501 = vlaneseq
        %v2502 = vshrl.u32 %v2501, 7
        %v2503 = vsub.s32 3, %v2502
        %v2504 = vrot.slane %v834, %v2503
        %2506 = vbcast.lane.b32.xlu0 %v2504, 256
        %v2507 = vpop.permute.xlu0 %2506
        %s2509 = sor.u32 256, 8
        %2510 = vbcast.lane.b32.xlu0 %v2504, %s2509
        %v2511 = vpop.permute.xlu0 %2510
        %v2512 = vlaneseq
        %v2513 = vshrl.u32 %v2512, 7
        %v2514 = vsub.s32 4, %v2513
        %v2515 = vrot.slane %v834, %v2514
        %2517 = vbcast.lane.b32.xlu0 %v2515, 256
        %v2518 = vpop.permute.xlu0 %2517
        %s2520 = sor.u32 256, 8
        %2521 = vbcast.lane.b32.xlu0 %v2515, %s2520
        %v2522 = vpop.permute.xlu0 %2521
        %v2523 = vlaneseq
        %v2524 = vshrl.u32 %v2523, 7
        %v2525 = vsub.s32 5, %v2524
        %v2526 = vrot.slane %v834, %v2525
        %2528 = vbcast.lane.b32.xlu0 %v2526, 256
        %v2529 = vpop.permute.xlu0 %2528
        %s2531 = sor.u32 256, 8
        %2532 = vbcast.lane.b32.xlu0 %v2526, %s2531
        %v2533 = vpop.permute.xlu0 %2532
        %v2534 = vlaneseq
        %v2535 = vshrl.u32 %v2534, 7
        %v2536 = vsub.s32 6, %v2535
        %v2537 = vrot.slane %v834, %v2536
        %2539 = vbcast.lane.b32.xlu0 %v2537, 256
        %v2540 = vpop.permute.xlu0 %2539
        %s2542 = sor.u32 256, 8
        %2543 = vbcast.lane.b32.xlu0 %v2537, %s2542
        %v2544 = vpop.permute.xlu0 %2543
        %v2545 = vlaneseq
        %v2546 = vshrl.u32 %v2545, 7
        %v2547 = vsub.s32 7, %v2546
        %v2548 = vrot.slane %v834, %v2547
        %2550 = vbcast.lane.b32.xlu0 %v2548, 256
        %v2551 = vpop.permute.xlu0 %2550
        %s2553 = sor.u32 256, 8
        %2554 = vbcast.lane.b32.xlu0 %v2548, %s2553
        %v2555 = vpop.permute.xlu0 %2554
        %v2556 = vlaneseq
        %v2557 = vshrl.u32 %v2556, 7
        %v2558 = vsub.s32 0, %v2557
        %v2559 = vrot.slane %v839, %v2558
        %2561 = vbcast.lane.b32.xlu0 %v2559, 256
        %v2562 = vpop.permute.xlu0 %2561
        %s2564 = sor.u32 256, 8
        %2565 = vbcast.lane.b32.xlu0 %v2559, %s2564
        %v2566 = vpop.permute.xlu0 %2565
        %v2567 = vlaneseq
        %v2568 = vshrl.u32 %v2567, 7
        %v2569 = vsub.s32 1, %v2568
        %v2570 = vrot.slane %v839, %v2569
        %2572 = vbcast.lane.b32.xlu0 %v2570, 256
        %v2573 = vpop.permute.xlu0 %2572
        %s2575 = sor.u32 256, 8
        %2576 = vbcast.lane.b32.xlu0 %v2570, %s2575
        %v2577 = vpop.permute.xlu0 %2576
        %v2578 = vlaneseq
        %v2579 = vshrl.u32 %v2578, 7
        %v2580 = vsub.s32 2, %v2579
        %v2581 = vrot.slane %v839, %v2580
        %2583 = vbcast.lane.b32.xlu0 %v2581, 256
        %v2584 = vpop.permute.xlu0 %2583
        %s2586 = sor.u32 256, 8
        %2587 = vbcast.lane.b32.xlu0 %v2581, %s2586
        %v2588 = vpop.permute.xlu0 %2587
        %v2589 = vlaneseq
        %v2590 = vshrl.u32 %v2589, 7
        %v2591 = vsub.s32 3, %v2590
        %v2592 = vrot.slane %v839, %v2591
        %2594 = vbcast.lane.b32.xlu0 %v2592, 256
        %v2595 = vpop.permute.xlu0 %2594
        %s2597 = sor.u32 256, 8
        %2598 = vbcast.lane.b32.xlu0 %v2592, %s2597
        %v2599 = vpop.permute.xlu0 %2598
        %v2600 = vlaneseq
        %v2601 = vshrl.u32 %v2600, 7
        %v2602 = vsub.s32 4, %v2601
        %v2603 = vrot.slane %v839, %v2602
        %2605 = vbcast.lane.b32.xlu0 %v2603, 256
        %v2606 = vpop.permute.xlu0 %2605
        %s2608 = sor.u32 256, 8
        %2609 = vbcast.lane.b32.xlu0 %v2603, %s2608
        %v2610 = vpop.permute.xlu0 %2609
        %v2611 = vlaneseq
        %v2612 = vshrl.u32 %v2611, 7
        %v2613 = vsub.s32 5, %v2612
        %v2614 = vrot.slane %v839, %v2613
        %2616 = vbcast.lane.b32.xlu0 %v2614, 256
        %v2617 = vpop.permute.xlu0 %2616
        %s2619 = sor.u32 256, 8
        %2620 = vbcast.lane.b32.xlu0 %v2614, %s2619
        %v2621 = vpop.permute.xlu0 %2620
        %v2622 = vlaneseq
        %v2623 = vshrl.u32 %v2622, 7
        %v2624 = vsub.s32 6, %v2623
        %v2625 = vrot.slane %v839, %v2624
        %2627 = vbcast.lane.b32.xlu0 %v2625, 256
        %v2628 = vpop.permute.xlu0 %2627
        %s2630 = sor.u32 256, 8
        %2631 = vbcast.lane.b32.xlu0 %v2625, %s2630
        %v2632 = vpop.permute.xlu0 %2631
        %v2633 = vlaneseq
        %v2634 = vshrl.u32 %v2633, 7
        %v2635 = vsub.s32 7, %v2634
        %v2636 = vrot.slane %v839, %v2635
        %2638 = vbcast.lane.b32.xlu0 %v2636, 256
        %v2639 = vpop.permute.xlu0 %2638
        %s2641 = sor.u32 256, 8
        %2642 = vbcast.lane.b32.xlu0 %v2636, %s2641
        %v2643 = vpop.permute.xlu0 %2642
        %v2644 = vlaneseq
        %v2645 = vshrl.u32 %v2644, 7
        %v2646 = vsub.s32 0, %v2645
        %v2647 = vrot.slane %v844, %v2646
        %2649 = vbcast.lane.b32.xlu0 %v2647, 256
        %v2650 = vpop.permute.xlu0 %2649
        %s2652 = sor.u32 256, 8
        %2653 = vbcast.lane.b32.xlu0 %v2647, %s2652
        %v2654 = vpop.permute.xlu0 %2653
        %v2655 = vlaneseq
        %v2656 = vshrl.u32 %v2655, 7
        %v2657 = vsub.s32 1, %v2656
        %v2658 = vrot.slane %v844, %v2657
        %2660 = vbcast.lane.b32.xlu0 %v2658, 256
        %v2661 = vpop.permute.xlu0 %2660
        %s2663 = sor.u32 256, 8
        %2664 = vbcast.lane.b32.xlu0 %v2658, %s2663
        %v2665 = vpop.permute.xlu0 %2664
        %v2666 = vlaneseq
        %v2667 = vshrl.u32 %v2666, 7
        %v2668 = vsub.s32 2, %v2667
        %v2669 = vrot.slane %v844, %v2668
        %2671 = vbcast.lane.b32.xlu0 %v2669, 256
        %v2672 = vpop.permute.xlu0 %2671
        %s2674 = sor.u32 256, 8
        %2675 = vbcast.lane.b32.xlu0 %v2669, %s2674
        %v2676 = vpop.permute.xlu0 %2675
        %v2677 = vlaneseq
        %v2678 = vshrl.u32 %v2677, 7
        %v2679 = vsub.s32 3, %v2678
        %v2680 = vrot.slane %v844, %v2679
        %2682 = vbcast.lane.b32.xlu0 %v2680, 256
        %v2683 = vpop.permute.xlu0 %2682
        %s2685 = sor.u32 256, 8
        %2686 = vbcast.lane.b32.xlu0 %v2680, %s2685
        %v2687 = vpop.permute.xlu0 %2686
        %v2688 = vlaneseq
        %v2689 = vshrl.u32 %v2688, 7
        %v2690 = vsub.s32 4, %v2689
        %v2691 = vrot.slane %v844, %v2690
        %2693 = vbcast.lane.b32.xlu0 %v2691, 256
        %v2694 = vpop.permute.xlu0 %2693
        %s2696 = sor.u32 256, 8
        %2697 = vbcast.lane.b32.xlu0 %v2691, %s2696
        %v2698 = vpop.permute.xlu0 %2697
        %v2699 = vlaneseq
        %v2700 = vshrl.u32 %v2699, 7
        %v2701 = vsub.s32 5, %v2700
        %v2702 = vrot.slane %v844, %v2701
        %2704 = vbcast.lane.b32.xlu0 %v2702, 256
        %v2705 = vpop.permute.xlu0 %2704
        %s2707 = sor.u32 256, 8
        %2708 = vbcast.lane.b32.xlu0 %v2702, %s2707
        %v2709 = vpop.permute.xlu0 %2708
        %v2710 = vlaneseq
        %v2711 = vshrl.u32 %v2710, 7
        %v2712 = vsub.s32 6, %v2711
        %v2713 = vrot.slane %v844, %v2712
        %2715 = vbcast.lane.b32.xlu0 %v2713, 256
        %v2716 = vpop.permute.xlu0 %2715
        %s2718 = sor.u32 256, 8
        %2719 = vbcast.lane.b32.xlu0 %v2713, %s2718
        %v2720 = vpop.permute.xlu0 %2719
        %v2721 = vlaneseq
        %v2722 = vshrl.u32 %v2721, 7
        %v2723 = vsub.s32 7, %v2722
        %v2724 = vrot.slane %v844, %v2723
        %2726 = vbcast.lane.b32.xlu0 %v2724, 256
        %v2727 = vpop.permute.xlu0 %2726
        %s2729 = sor.u32 256, 8
        %2730 = vbcast.lane.b32.xlu0 %v2724, %s2729
        %v2731 = vpop.permute.xlu0 %2730
        %v2732 = vlaneseq
        %v2733 = vshrl.u32 %v2732, 7
        %v2734 = vsub.s32 0, %v2733
        %v2735 = vrot.slane %v849, %v2734
        %2737 = vbcast.lane.b32.xlu0 %v2735, 256
        %v2738 = vpop.permute.xlu0 %2737
        %s2740 = sor.u32 256, 8
        %2741 = vbcast.lane.b32.xlu0 %v2735, %s2740
        %v2742 = vpop.permute.xlu0 %2741
        %v2743 = vlaneseq
        %v2744 = vshrl.u32 %v2743, 7
        %v2745 = vsub.s32 1, %v2744
        %v2746 = vrot.slane %v849, %v2745
        %2748 = vbcast.lane.b32.xlu0 %v2746, 256
        %v2749 = vpop.permute.xlu0 %2748
        %s2751 = sor.u32 256, 8
        %2752 = vbcast.lane.b32.xlu0 %v2746, %s2751
        %v2753 = vpop.permute.xlu0 %2752
        %v2754 = vlaneseq
        %v2755 = vshrl.u32 %v2754, 7
        %v2756 = vsub.s32 2, %v2755
        %v2757 = vrot.slane %v849, %v2756
        %2759 = vbcast.lane.b32.xlu0 %v2757, 256
        %v2760 = vpop.permute.xlu0 %2759
        %s2762 = sor.u32 256, 8
        %2763 = vbcast.lane.b32.xlu0 %v2757, %s2762
        %v2764 = vpop.permute.xlu0 %2763
        %v2765 = vlaneseq
        %v2766 = vshrl.u32 %v2765, 7
        %v2767 = vsub.s32 3, %v2766
        %v2768 = vrot.slane %v849, %v2767
        %2770 = vbcast.lane.b32.xlu0 %v2768, 256
        %v2771 = vpop.permute.xlu0 %2770
        %s2773 = sor.u32 256, 8
        %2774 = vbcast.lane.b32.xlu0 %v2768, %s2773
        %v2775 = vpop.permute.xlu0 %2774
        %v2776 = vlaneseq
        %v2777 = vshrl.u32 %v2776, 7
        %v2778 = vsub.s32 4, %v2777
        %v2779 = vrot.slane %v849, %v2778
        %2781 = vbcast.lane.b32.xlu0 %v2779, 256
        %v2782 = vpop.permute.xlu0 %2781
        %s2784 = sor.u32 256, 8
        %2785 = vbcast.lane.b32.xlu0 %v2779, %s2784
        %v2786 = vpop.permute.xlu0 %2785
        %v2787 = vlaneseq
        %v2788 = vshrl.u32 %v2787, 7
        %v2789 = vsub.s32 5, %v2788
        %v2790 = vrot.slane %v849, %v2789
        %2792 = vbcast.lane.b32.xlu0 %v2790, 256
        %v2793 = vpop.permute.xlu0 %2792
        %s2795 = sor.u32 256, 8
        %2796 = vbcast.lane.b32.xlu0 %v2790, %s2795
        %v2797 = vpop.permute.xlu0 %2796
        %v2798 = vlaneseq
        %v2799 = vshrl.u32 %v2798, 7
        %v2800 = vsub.s32 6, %v2799
        %v2801 = vrot.slane %v849, %v2800
        %2803 = vbcast.lane.b32.xlu0 %v2801, 256
        %v2804 = vpop.permute.xlu0 %2803
        %s2806 = sor.u32 256, 8
        %2807 = vbcast.lane.b32.xlu0 %v2801, %s2806
        %v2808 = vpop.permute.xlu0 %2807
        %v2809 = vlaneseq
        %v2810 = vshrl.u32 %v2809, 7
        %v2811 = vsub.s32 7, %v2810
        %v2812 = vrot.slane %v849, %v2811
        %2814 = vbcast.lane.b32.xlu0 %v2812, 256
        %v2815 = vpop.permute.xlu0 %2814
        %s2817 = sor.u32 256, 8
        %2818 = vbcast.lane.b32.xlu0 %v2812, %s2817
        %v2819 = vpop.permute.xlu0 %2818
        %v2820 = vlaneseq
        %v2821 = vshrl.u32 %v2820, 7
        %v2822 = vsub.s32 0, %v2821
        %v2823 = vrot.slane %v854, %v2822
        %2825 = vbcast.lane.b32.xlu0 %v2823, 256
        %v2826 = vpop.permute.xlu0 %2825
        %s2828 = sor.u32 256, 8
        %2829 = vbcast.lane.b32.xlu0 %v2823, %s2828
        %v2830 = vpop.permute.xlu0 %2829
        %v2831 = vlaneseq
        %v2832 = vshrl.u32 %v2831, 7
        %v2833 = vsub.s32 1, %v2832
        %v2834 = vrot.slane %v854, %v2833
        %2836 = vbcast.lane.b32.xlu0 %v2834, 256
        %v2837 = vpop.permute.xlu0 %2836
        %s2839 = sor.u32 256, 8
        %2840 = vbcast.lane.b32.xlu0 %v2834, %s2839
        %v2841 = vpop.permute.xlu0 %2840
        %v2842 = vlaneseq
        %v2843 = vshrl.u32 %v2842, 7
        %v2844 = vsub.s32 2, %v2843
        %v2845 = vrot.slane %v854, %v2844
        %2847 = vbcast.lane.b32.xlu0 %v2845, 256
        %v2848 = vpop.permute.xlu0 %2847
        %s2850 = sor.u32 256, 8
        %2851 = vbcast.lane.b32.xlu0 %v2845, %s2850
        %v2852 = vpop.permute.xlu0 %2851
        %v2853 = vlaneseq
        %v2854 = vshrl.u32 %v2853, 7
        %v2855 = vsub.s32 3, %v2854
        %v2856 = vrot.slane %v854, %v2855
        %2858 = vbcast.lane.b32.xlu0 %v2856, 256
        %v2859 = vpop.permute.xlu0 %2858
        %s2861 = sor.u32 256, 8
        %2862 = vbcast.lane.b32.xlu0 %v2856, %s2861
        %v2863 = vpop.permute.xlu0 %2862
        %v2864 = vlaneseq
        %v2865 = vshrl.u32 %v2864, 7
        %v2866 = vsub.s32 4, %v2865
        %v2867 = vrot.slane %v854, %v2866
        %2869 = vbcast.lane.b32.xlu0 %v2867, 256
        %v2870 = vpop.permute.xlu0 %2869
        %s2872 = sor.u32 256, 8
        %2873 = vbcast.lane.b32.xlu0 %v2867, %s2872
        %v2874 = vpop.permute.xlu0 %2873
        %v2875 = vlaneseq
        %v2876 = vshrl.u32 %v2875, 7
        %v2877 = vsub.s32 5, %v2876
        %v2878 = vrot.slane %v854, %v2877
        %2880 = vbcast.lane.b32.xlu0 %v2878, 256
        %v2881 = vpop.permute.xlu0 %2880
        %s2883 = sor.u32 256, 8
        %2884 = vbcast.lane.b32.xlu0 %v2878, %s2883
        %v2885 = vpop.permute.xlu0 %2884
        %v2886 = vlaneseq
        %v2887 = vshrl.u32 %v2886, 7
        %v2888 = vsub.s32 6, %v2887
        %v2889 = vrot.slane %v854, %v2888
        %2891 = vbcast.lane.b32.xlu0 %v2889, 256
        %v2892 = vpop.permute.xlu0 %2891
        %s2894 = sor.u32 256, 8
        %2895 = vbcast.lane.b32.xlu0 %v2889, %s2894
        %v2896 = vpop.permute.xlu0 %2895
        %v2897 = vlaneseq
        %v2898 = vshrl.u32 %v2897, 7
        %v2899 = vsub.s32 7, %v2898
        %v2900 = vrot.slane %v854, %v2899
        %2902 = vbcast.lane.b32.xlu0 %v2900, 256
        %v2903 = vpop.permute.xlu0 %2902
        %s2905 = sor.u32 256, 8
        %2906 = vbcast.lane.b32.xlu0 %v2900, %s2905
        %v2907 = vpop.permute.xlu0 %2906
        %v2908 = vmul.f32 %v736, %v486
        %v2909 = vmul.f32 %v737, %v487
        %v2910 = vmul.f32 %v738, %v488
        %v2911 = vmul.f32 %v739, %v489
        %v2912 = vmul.f32 %v740, %v490
        %v2913 = vmul.f32 %v741, %v491
        %v2914 = vmul.f32 %v742, %v492
        %v2915 = vmul.f32 %v743, %v493
        %v2924 = vcombine.high %v2908, %v2908
        %v2926 = vunpack.c.l.s4 1966171168
        %v2927 = vunpack.c.0.s8 %v2926
        %v2928 = vlaneseq
        %v2929 = vshrl.u32 %v2928, 7
        %v2930 = vsub.s32 %v2927, %v2929
        %v2931 = vrot.slane %v2908, %v2930
        %v2933 = vunpack.c.l.s4 1966171168
        %v2934 = vunpack.c.0.s8 %v2933
        %v2935 = vlaneseq
        %v2936 = vshrl.u32 %v2935, 7
        %v2937 = vsub.s32 %v2934, %v2936
        %v2938 = vrot.slane %v2924, %v2937
        %v2939 = vcombine.high %v2931, %v2931
        %v2940 = vcombine.high %v2938, %v2938
        %v2942 = vunpack.c.l.s4 1966171168
        %v2943 = vunpack.c.0.s8 %v2942
        %v2944 = vlaneseq
        %v2945 = vshrl.u32 %v2944, 7
        %v2946 = vsub.s32 %v2943, %v2945
        %v2947 = vrot.slane %v2931, %v2946
        %v2949 = vunpack.c.l.s4 1966171168
        %v2950 = vunpack.c.0.s8 %v2949
        %v2951 = vlaneseq
        %v2952 = vshrl.u32 %v2951, 7
        %v2953 = vsub.s32 %v2950, %v2952
        %v2954 = vrot.slane %v2938, %v2953
        %v2956 = vunpack.c.l.s4 1966171168
        %v2957 = vunpack.c.0.s8 %v2956
        %v2958 = vlaneseq
        %v2959 = vshrl.u32 %v2958, 7
        %v2960 = vsub.s32 %v2957, %v2959
        %v2961 = vrot.slane %v2939, %v2960
        %v2963 = vunpack.c.l.s4 1966171168
        %v2964 = vunpack.c.0.s8 %v2963
        %v2965 = vlaneseq
        %v2966 = vshrl.u32 %v2965, 7
        %v2967 = vsub.s32 %v2964, %v2966
        %v2968 = vrot.slane %v2940, %v2967
        %v2969 = vcombine.high %v2947, %v2947
        %v2970 = vcombine.high %v2954, %v2954
        %v2971 = vcombine.high %v2961, %v2961
        %v2972 = vcombine.high %v2968, %v2968
        %v2973 = vcombine.high %v2909, %v2909
        %v2975 = vunpack.c.l.s4 1966171168
        %v2976 = vunpack.c.0.s8 %v2975
        %v2977 = vlaneseq
        %v2978 = vshrl.u32 %v2977, 7
        %v2979 = vsub.s32 %v2976, %v2978
        %v2980 = vrot.slane %v2909, %v2979
        %v2982 = vunpack.c.l.s4 1966171168
        %v2983 = vunpack.c.0.s8 %v2982
        %v2984 = vlaneseq
        %v2985 = vshrl.u32 %v2984, 7
        %v2986 = vsub.s32 %v2983, %v2985
        %v2987 = vrot.slane %v2973, %v2986
        %v2988 = vcombine.high %v2980, %v2980
        %v2989 = vcombine.high %v2987, %v2987
        %v2991 = vunpack.c.l.s4 1966171168
        %v2992 = vunpack.c.0.s8 %v2991
        %v2993 = vlaneseq
        %v2994 = vshrl.u32 %v2993, 7
        %v2995 = vsub.s32 %v2992, %v2994
        %v2996 = vrot.slane %v2980, %v2995
        %v2998 = vunpack.c.l.s4 1966171168
        %v2999 = vunpack.c.0.s8 %v2998
        %v3000 = vlaneseq
        %v3001 = vshrl.u32 %v3000, 7
        %v3002 = vsub.s32 %v2999, %v3001
        %v3003 = vrot.slane %v2987, %v3002
        %v3005 = vunpack.c.l.s4 1966171168
        %v3006 = vunpack.c.0.s8 %v3005
        %v3007 = vlaneseq
        %v3008 = vshrl.u32 %v3007, 7
        %v3009 = vsub.s32 %v3006, %v3008
        %v3010 = vrot.slane %v2988, %v3009
        %v3012 = vunpack.c.l.s4 1966171168
        %v3013 = vunpack.c.0.s8 %v3012
        %v3014 = vlaneseq
        %v3015 = vshrl.u32 %v3014, 7
        %v3016 = vsub.s32 %v3013, %v3015
        %v3017 = vrot.slane %v2989, %v3016
        %v3018 = vcombine.high %v2996, %v2996
        %v3019 = vcombine.high %v3003, %v3003
        %v3020 = vcombine.high %v3010, %v3010
        %v3021 = vcombine.high %v3017, %v3017
        %v3022 = vcombine.high %v2910, %v2910
        %v3024 = vunpack.c.l.s4 1966171168
        %v3025 = vunpack.c.0.s8 %v3024
        %v3026 = vlaneseq
        %v3027 = vshrl.u32 %v3026, 7
        %v3028 = vsub.s32 %v3025, %v3027
        %v3029 = vrot.slane %v2910, %v3028
        %v3031 = vunpack.c.l.s4 1966171168
        %v3032 = vunpack.c.0.s8 %v3031
        %v3033 = vlaneseq
        %v3034 = vshrl.u32 %v3033, 7
        %v3035 = vsub.s32 %v3032, %v3034
        %v3036 = vrot.slane %v3022, %v3035
        %v3037 = vcombine.high %v3029, %v3029
        %v3038 = vcombine.high %v3036, %v3036
        %v3040 = vunpack.c.l.s4 1966171168
        %v3041 = vunpack.c.0.s8 %v3040
        %v3042 = vlaneseq
        %v3043 = vshrl.u32 %v3042, 7
        %v3044 = vsub.s32 %v3041, %v3043
        %v3045 = vrot.slane %v3029, %v3044
        %v3047 = vunpack.c.l.s4 1966171168
        %v3048 = vunpack.c.0.s8 %v3047
        %v3049 = vlaneseq
        %v3050 = vshrl.u32 %v3049, 7
        %v3051 = vsub.s32 %v3048, %v3050
        %v3052 = vrot.slane %v3036, %v3051
        %v3054 = vunpack.c.l.s4 1966171168
        %v3055 = vunpack.c.0.s8 %v3054
        %v3056 = vlaneseq
        %v3057 = vshrl.u32 %v3056, 7
        %v3058 = vsub.s32 %v3055, %v3057
        %v3059 = vrot.slane %v3037, %v3058
        %v3061 = vunpack.c.l.s4 1966171168
        %v3062 = vunpack.c.0.s8 %v3061
        %v3063 = vlaneseq
        %v3064 = vshrl.u32 %v3063, 7
        %v3065 = vsub.s32 %v3062, %v3064
        %v3066 = vrot.slane %v3038, %v3065
        %v3067 = vcombine.high %v3045, %v3045
        %v3068 = vcombine.high %v3052, %v3052
        %v3069 = vcombine.high %v3059, %v3059
        %v3070 = vcombine.high %v3066, %v3066
        %v3071 = vcombine.high %v2911, %v2911
        %v3073 = vunpack.c.l.s4 1966171168
        %v3074 = vunpack.c.0.s8 %v3073
        %v3075 = vlaneseq
        %v3076 = vshrl.u32 %v3075, 7
        %v3077 = vsub.s32 %v3074, %v3076
        %v3078 = vrot.slane %v2911, %v3077
        %v3080 = vunpack.c.l.s4 1966171168
        %v3081 = vunpack.c.0.s8 %v3080
        %v3082 = vlaneseq
        %v3083 = vshrl.u32 %v3082, 7
        %v3084 = vsub.s32 %v3081, %v3083
        %v3085 = vrot.slane %v3071, %v3084
        %v3086 = vcombine.high %v3078, %v3078
        %v3087 = vcombine.high %v3085, %v3085
        %v3089 = vunpack.c.l.s4 1966171168
        %v3090 = vunpack.c.0.s8 %v3089
        %v3091 = vlaneseq
        %v3092 = vshrl.u32 %v3091, 7
        %v3093 = vsub.s32 %v3090, %v3092
        %v3094 = vrot.slane %v3078, %v3093
        %v3096 = vunpack.c.l.s4 1966171168
        %v3097 = vunpack.c.0.s8 %v3096
        %v3098 = vlaneseq
        %v3099 = vshrl.u32 %v3098, 7
        %v3100 = vsub.s32 %v3097, %v3099
        %v3101 = vrot.slane %v3085, %v3100
        %v3103 = vunpack.c.l.s4 1966171168
        %v3104 = vunpack.c.0.s8 %v3103
        %v3105 = vlaneseq
        %v3106 = vshrl.u32 %v3105, 7
        %v3107 = vsub.s32 %v3104, %v3106
        %v3108 = vrot.slane %v3086, %v3107
        %v3110 = vunpack.c.l.s4 1966171168
        %v3111 = vunpack.c.0.s8 %v3110
        %v3112 = vlaneseq
        %v3113 = vshrl.u32 %v3112, 7
        %v3114 = vsub.s32 %v3111, %v3113
        %v3115 = vrot.slane %v3087, %v3114
        %v3116 = vcombine.high %v3094, %v3094
        %v3117 = vcombine.high %v3101, %v3101
        %v3118 = vcombine.high %v3108, %v3108
        %v3119 = vcombine.high %v3115, %v3115
        %v3120 = vcombine.high %v2912, %v2912
        %v3122 = vunpack.c.l.s4 1966171168
        %v3123 = vunpack.c.0.s8 %v3122
        %v3124 = vlaneseq
        %v3125 = vshrl.u32 %v3124, 7
        %v3126 = vsub.s32 %v3123, %v3125
        %v3127 = vrot.slane %v2912, %v3126
        %v3129 = vunpack.c.l.s4 1966171168
        %v3130 = vunpack.c.0.s8 %v3129
        %v3131 = vlaneseq
        %v3132 = vshrl.u32 %v3131, 7
        %v3133 = vsub.s32 %v3130, %v3132
        %v3134 = vrot.slane %v3120, %v3133
        %v3135 = vcombine.high %v3127, %v3127
        %v3136 = vcombine.high %v3134, %v3134
        %v3138 = vunpack.c.l.s4 1966171168
        %v3139 = vunpack.c.0.s8 %v3138
        %v3140 = vlaneseq
        %v3141 = vshrl.u32 %v3140, 7
        %v3142 = vsub.s32 %v3139, %v3141
        %v3143 = vrot.slane %v3127, %v3142
        %v3145 = vunpack.c.l.s4 1966171168
        %v3146 = vunpack.c.0.s8 %v3145
        %v3147 = vlaneseq
        %v3148 = vshrl.u32 %v3147, 7
        %v3149 = vsub.s32 %v3146, %v3148
        %v3150 = vrot.slane %v3134, %v3149
        %v3152 = vunpack.c.l.s4 1966171168
        %v3153 = vunpack.c.0.s8 %v3152
        %v3154 = vlaneseq
        %v3155 = vshrl.u32 %v3154, 7
        %v3156 = vsub.s32 %v3153, %v3155
        %v3157 = vrot.slane %v3135, %v3156
        %v3159 = vunpack.c.l.s4 1966171168
        %v3160 = vunpack.c.0.s8 %v3159
        %v3161 = vlaneseq
        %v3162 = vshrl.u32 %v3161, 7
        %v3163 = vsub.s32 %v3160, %v3162
        %v3164 = vrot.slane %v3136, %v3163
        %v3165 = vcombine.high %v3143, %v3143
        %v3166 = vcombine.high %v3150, %v3150
        %v3167 = vcombine.high %v3157, %v3157
        %v3168 = vcombine.high %v3164, %v3164
        %v3169 = vcombine.high %v2913, %v2913
        %v3171 = vunpack.c.l.s4 1966171168
        %v3172 = vunpack.c.0.s8 %v3171
        %v3173 = vlaneseq
        %v3174 = vshrl.u32 %v3173, 7
        %v3175 = vsub.s32 %v3172, %v3174
        %v3176 = vrot.slane %v2913, %v3175
        %v3178 = vunpack.c.l.s4 1966171168
        %v3179 = vunpack.c.0.s8 %v3178
        %v3180 = vlaneseq
        %v3181 = vshrl.u32 %v3180, 7
        %v3182 = vsub.s32 %v3179, %v3181
        %v3183 = vrot.slane %v3169, %v3182
        %v3184 = vcombine.high %v3176, %v3176
        %v3185 = vcombine.high %v3183, %v3183
        %v3187 = vunpack.c.l.s4 1966171168
        %v3188 = vunpack.c.0.s8 %v3187
        %v3189 = vlaneseq
        %v3190 = vshrl.u32 %v3189, 7
        %v3191 = vsub.s32 %v3188, %v3190
        %v3192 = vrot.slane %v3176, %v3191
        %v3194 = vunpack.c.l.s4 1966171168
        %v3195 = vunpack.c.0.s8 %v3194
        %v3196 = vlaneseq
        %v3197 = vshrl.u32 %v3196, 7
        %v3198 = vsub.s32 %v3195, %v3197
        %v3199 = vrot.slane %v3183, %v3198
        %v3201 = vunpack.c.l.s4 1966171168
        %v3202 = vunpack.c.0.s8 %v3201
        %v3203 = vlaneseq
        %v3204 = vshrl.u32 %v3203, 7
        %v3205 = vsub.s32 %v3202, %v3204
        %v3206 = vrot.slane %v3184, %v3205
        %v3208 = vunpack.c.l.s4 1966171168
        %v3209 = vunpack.c.0.s8 %v3208
        %v3210 = vlaneseq
        %v3211 = vshrl.u32 %v3210, 7
        %v3212 = vsub.s32 %v3209, %v3211
        %v3213 = vrot.slane %v3185, %v3212
        %v3214 = vcombine.high %v3192, %v3192
        %v3215 = vcombine.high %v3199, %v3199
        %v3216 = vcombine.high %v3206, %v3206
        %v3217 = vcombine.high %v3213, %v3213
        %v3218 = vcombine.high %v2914, %v2914
        %v3220 = vunpack.c.l.s4 1966171168
        %v3221 = vunpack.c.0.s8 %v3220
        %v3222 = vlaneseq
        %v3223 = vshrl.u32 %v3222, 7
        %v3224 = vsub.s32 %v3221, %v3223
        %v3225 = vrot.slane %v2914, %v3224
        %v3227 = vunpack.c.l.s4 1966171168
        %v3228 = vunpack.c.0.s8 %v3227
        %v3229 = vlaneseq
        %v3230 = vshrl.u32 %v3229, 7
        %v3231 = vsub.s32 %v3228, %v3230
        %v3232 = vrot.slane %v3218, %v3231
        %v3233 = vcombine.high %v3225, %v3225
        %v3234 = vcombine.high %v3232, %v3232
        %v3236 = vunpack.c.l.s4 1966171168
        %v3237 = vunpack.c.0.s8 %v3236
        %v3238 = vlaneseq
        %v3239 = vshrl.u32 %v3238, 7
        %v3240 = vsub.s32 %v3237, %v3239
        %v3241 = vrot.slane %v3225, %v3240
        %v3243 = vunpack.c.l.s4 1966171168
        %v3244 = vunpack.c.0.s8 %v3243
        %v3245 = vlaneseq
        %v3246 = vshrl.u32 %v3245, 7
        %v3247 = vsub.s32 %v3244, %v3246
        %v3248 = vrot.slane %v3232, %v3247
        %v3250 = vunpack.c.l.s4 1966171168
        %v3251 = vunpack.c.0.s8 %v3250
        %v3252 = vlaneseq
        %v3253 = vshrl.u32 %v3252, 7
        %v3254 = vsub.s32 %v3251, %v3253
        %v3255 = vrot.slane %v3233, %v3254
        %v3257 = vunpack.c.l.s4 1966171168
        %v3258 = vunpack.c.0.s8 %v3257
        %v3259 = vlaneseq
        %v3260 = vshrl.u32 %v3259, 7
        %v3261 = vsub.s32 %v3258, %v3260
        %v3262 = vrot.slane %v3234, %v3261
        %v3263 = vcombine.high %v3241, %v3241
        %v3264 = vcombine.high %v3248, %v3248
        %v3265 = vcombine.high %v3255, %v3255
        %v3266 = vcombine.high %v3262, %v3262
        %v3267 = vcombine.high %v2915, %v2915
        %v3269 = vunpack.c.l.s4 1966171168
        %v3270 = vunpack.c.0.s8 %v3269
        %v3271 = vlaneseq
        %v3272 = vshrl.u32 %v3271, 7
        %v3273 = vsub.s32 %v3270, %v3272
        %v3274 = vrot.slane %v2915, %v3273
        %v3276 = vunpack.c.l.s4 1966171168
        %v3277 = vunpack.c.0.s8 %v3276
        %v3278 = vlaneseq
        %v3279 = vshrl.u32 %v3278, 7
        %v3280 = vsub.s32 %v3277, %v3279
        %v3281 = vrot.slane %v3267, %v3280
        %v3282 = vcombine.high %v3274, %v3274
        %v3283 = vcombine.high %v3281, %v3281
        %v3285 = vunpack.c.l.s4 1966171168
        %v3286 = vunpack.c.0.s8 %v3285
        %v3287 = vlaneseq
        %v3288 = vshrl.u32 %v3287, 7
        %v3289 = vsub.s32 %v3286, %v3288
        %v3290 = vrot.slane %v3274, %v3289
        %v3292 = vunpack.c.l.s4 1966171168
        %v3293 = vunpack.c.0.s8 %v3292
        %v3294 = vlaneseq
        %v3295 = vshrl.u32 %v3294, 7
        %v3296 = vsub.s32 %v3293, %v3295
        %v3297 = vrot.slane %v3281, %v3296
        %v3299 = vunpack.c.l.s4 1966171168
        %v3300 = vunpack.c.0.s8 %v3299
        %v3301 = vlaneseq
        %v3302 = vshrl.u32 %v3301, 7
        %v3303 = vsub.s32 %v3300, %v3302
        %v3304 = vrot.slane %v3282, %v3303
        %v3306 = vunpack.c.l.s4 1966171168
        %v3307 = vunpack.c.0.s8 %v3306
        %v3308 = vlaneseq
        %v3309 = vshrl.u32 %v3308, 7
        %v3310 = vsub.s32 %v3307, %v3309
        %v3311 = vrot.slane %v3283, %v3310
        %v3312 = vcombine.high %v3290, %v3290
        %v3313 = vcombine.high %v3297, %v3297
        %v3314 = vcombine.high %v3304, %v3304
        %v3315 = vcombine.high %v3311, %v3311
        %v3316 = vlaneseq
        %v3317 = vshrl.u32 %v3316, 7
        %v3318 = vsub.s32 0, %v3317
        %v3319 = vrot.slane %v2947, %v3318
        %v3320 = vlaneseq
        %v3321 = vshrl.u32 %v3320, 7
        %v3322 = vsub.s32 0, %v3321
        %v3323 = vrot.slane %v2961, %v3322
        %v3324 = vlaneseq
        %v3325 = vshrl.u32 %v3324, 7
        %v3326 = vsub.s32 0, %v3325
        %v3327 = vrot.slane %v2969, %v3326
        %v3328 = vlaneseq
        %v3329 = vshrl.u32 %v3328, 7
        %v3330 = vsub.s32 0, %v3329
        %v3331 = vrot.slane %v2971, %v3330
        %v3332 = vlaneseq
        %v3333 = vshrl.u32 %v3332, 7
        %v3334 = vsub.s32 0, %v3333
        %v3335 = vrot.slane %v2954, %v3334
        %v3336 = vlaneseq
        %v3337 = vshrl.u32 %v3336, 7
        %v3338 = vsub.s32 0, %v3337
        %v3339 = vrot.slane %v2968, %v3338
        %v3340 = vlaneseq
        %v3341 = vshrl.u32 %v3340, 7
        %v3342 = vsub.s32 0, %v3341
        %v3343 = vrot.slane %v2970, %v3342
        %v3344 = vlaneseq
        %v3345 = vshrl.u32 %v3344, 7
        %v3346 = vsub.s32 0, %v3345
        %v3347 = vrot.slane %v2972, %v3346
        %v3348 = vlaneseq
        %v3349 = vshrl.u32 %v3348, 7
        %v3350 = vsub.s32 0, %v3349
        %v3351 = vrot.slane %v2996, %v3350
        %v3352 = vlaneseq
        %v3353 = vshrl.u32 %v3352, 7
        %v3354 = vsub.s32 0, %v3353
        %v3355 = vrot.slane %v3010, %v3354
        %v3356 = vlaneseq
        %v3357 = vshrl.u32 %v3356, 7
        %v3358 = vsub.s32 0, %v3357
        %v3359 = vrot.slane %v3018, %v3358
        %v3360 = vlaneseq
        %v3361 = vshrl.u32 %v3360, 7
        %v3362 = vsub.s32 0, %v3361
        %v3363 = vrot.slane %v3020, %v3362
        %v3364 = vlaneseq
        %v3365 = vshrl.u32 %v3364, 7
        %v3366 = vsub.s32 0, %v3365
        %v3367 = vrot.slane %v3003, %v3366
        %v3368 = vlaneseq
        %v3369 = vshrl.u32 %v3368, 7
        %v3370 = vsub.s32 0, %v3369
        %v3371 = vrot.slane %v3017, %v3370
        %v3372 = vlaneseq
        %v3373 = vshrl.u32 %v3372, 7
        %v3374 = vsub.s32 0, %v3373
        %v3375 = vrot.slane %v3019, %v3374
        %v3376 = vlaneseq
        %v3377 = vshrl.u32 %v3376, 7
        %v3378 = vsub.s32 0, %v3377
        %v3379 = vrot.slane %v3021, %v3378
        %v3380 = vlaneseq
        %v3381 = vshrl.u32 %v3380, 7
        %v3382 = vsub.s32 0, %v3381
        %v3383 = vrot.slane %v3045, %v3382
        %v3384 = vlaneseq
        %v3385 = vshrl.u32 %v3384, 7
        %v3386 = vsub.s32 0, %v3385
        %v3387 = vrot.slane %v3059, %v3386
        %v3388 = vlaneseq
        %v3389 = vshrl.u32 %v3388, 7
        %v3390 = vsub.s32 0, %v3389
        %v3391 = vrot.slane %v3067, %v3390
        %v3392 = vlaneseq
        %v3393 = vshrl.u32 %v3392, 7
        %v3394 = vsub.s32 0, %v3393
        %v3395 = vrot.slane %v3069, %v3394
        %v3396 = vlaneseq
        %v3397 = vshrl.u32 %v3396, 7
        %v3398 = vsub.s32 0, %v3397
        %v3399 = vrot.slane %v3052, %v3398
        %v3400 = vlaneseq
        %v3401 = vshrl.u32 %v3400, 7
        %v3402 = vsub.s32 0, %v3401
        %v3403 = vrot.slane %v3066, %v3402
        %v3404 = vlaneseq
        %v3405 = vshrl.u32 %v3404, 7
        %v3406 = vsub.s32 0, %v3405
        %v3407 = vrot.slane %v3068, %v3406
        %v3408 = vlaneseq
        %v3409 = vshrl.u32 %v3408, 7
        %v3410 = vsub.s32 0, %v3409
        %v3411 = vrot.slane %v3070, %v3410
        %v3412 = vlaneseq
        %v3413 = vshrl.u32 %v3412, 7
        %v3414 = vsub.s32 0, %v3413
        %v3415 = vrot.slane %v3094, %v3414
        %v3416 = vlaneseq
        %v3417 = vshrl.u32 %v3416, 7
        %v3418 = vsub.s32 0, %v3417
        %v3419 = vrot.slane %v3108, %v3418
        %v3420 = vlaneseq
        %v3421 = vshrl.u32 %v3420, 7
        %v3422 = vsub.s32 0, %v3421
        %v3423 = vrot.slane %v3116, %v3422
        %v3424 = vlaneseq
        %v3425 = vshrl.u32 %v3424, 7
        %v3426 = vsub.s32 0, %v3425
        %v3427 = vrot.slane %v3118, %v3426
        %v3428 = vlaneseq
        %v3429 = vshrl.u32 %v3428, 7
        %v3430 = vsub.s32 0, %v3429
        %v3431 = vrot.slane %v3101, %v3430
        %v3432 = vlaneseq
        %v3433 = vshrl.u32 %v3432, 7
        %v3434 = vsub.s32 0, %v3433
        %v3435 = vrot.slane %v3115, %v3434
        %v3436 = vlaneseq
        %v3437 = vshrl.u32 %v3436, 7
        %v3438 = vsub.s32 0, %v3437
        %v3439 = vrot.slane %v3117, %v3438
        %v3440 = vlaneseq
        %v3441 = vshrl.u32 %v3440, 7
        %v3442 = vsub.s32 0, %v3441
        %v3443 = vrot.slane %v3119, %v3442
        %v3444 = vlaneseq
        %v3445 = vshrl.u32 %v3444, 7
        %v3446 = vsub.s32 0, %v3445
        %v3447 = vrot.slane %v3143, %v3446
        %v3448 = vlaneseq
        %v3449 = vshrl.u32 %v3448, 7
        %v3450 = vsub.s32 0, %v3449
        %v3451 = vrot.slane %v3157, %v3450
        %v3452 = vlaneseq
        %v3453 = vshrl.u32 %v3452, 7
        %v3454 = vsub.s32 0, %v3453
        %v3455 = vrot.slane %v3165, %v3454
        %v3456 = vlaneseq
        %v3457 = vshrl.u32 %v3456, 7
        %v3458 = vsub.s32 0, %v3457
        %v3459 = vrot.slane %v3167, %v3458
        %v3460 = vlaneseq
        %v3461 = vshrl.u32 %v3460, 7
        %v3462 = vsub.s32 0, %v3461
        %v3463 = vrot.slane %v3150, %v3462
        %v3464 = vlaneseq
        %v3465 = vshrl.u32 %v3464, 7
        %v3466 = vsub.s32 0, %v3465
        %v3467 = vrot.slane %v3164, %v3466
        %v3468 = vlaneseq
        %v3469 = vshrl.u32 %v3468, 7
        %v3470 = vsub.s32 0, %v3469
        %v3471 = vrot.slane %v3166, %v3470
        %v3472 = vlaneseq
        %v3473 = vshrl.u32 %v3472, 7
        %v3474 = vsub.s32 0, %v3473
        %v3475 = vrot.slane %v3168, %v3474
        %v3476 = vlaneseq
        %v3477 = vshrl.u32 %v3476, 7
        %v3478 = vsub.s32 0, %v3477
        %v3479 = vrot.slane %v3192, %v3478
        %v3480 = vlaneseq
        %v3481 = vshrl.u32 %v3480, 7
        %v3482 = vsub.s32 0, %v3481
        %v3483 = vrot.slane %v3206, %v3482
        %v3484 = vlaneseq
        %v3485 = vshrl.u32 %v3484, 7
        %v3486 = vsub.s32 0, %v3485
        %v3487 = vrot.slane %v3214, %v3486
        %v3488 = vlaneseq
        %v3489 = vshrl.u32 %v3488, 7
        %v3490 = vsub.s32 0, %v3489
        %v3491 = vrot.slane %v3216, %v3490
        %v3492 = vlaneseq
        %v3493 = vshrl.u32 %v3492, 7
        %v3494 = vsub.s32 0, %v3493
        %v3495 = vrot.slane %v3199, %v3494
        %v3496 = vlaneseq
        %v3497 = vshrl.u32 %v3496, 7
        %v3498 = vsub.s32 0, %v3497
        %v3499 = vrot.slane %v3213, %v3498
        %v3500 = vlaneseq
        %v3501 = vshrl.u32 %v3500, 7
        %v3502 = vsub.s32 0, %v3501
        %v3503 = vrot.slane %v3215, %v3502
        %v3504 = vlaneseq
        %v3505 = vshrl.u32 %v3504, 7
        %v3506 = vsub.s32 0, %v3505
        %v3507 = vrot.slane %v3217, %v3506
        %v3508 = vlaneseq
        %v3509 = vshrl.u32 %v3508, 7
        %v3510 = vsub.s32 0, %v3509
        %v3511 = vrot.slane %v3241, %v3510
        %v3512 = vlaneseq
        %v3513 = vshrl.u32 %v3512, 7
        %v3514 = vsub.s32 0, %v3513
        %v3515 = vrot.slane %v3255, %v3514
        %v3516 = vlaneseq
        %v3517 = vshrl.u32 %v3516, 7
        %v3518 = vsub.s32 0, %v3517
        %v3519 = vrot.slane %v3263, %v3518
        %v3520 = vlaneseq
        %v3521 = vshrl.u32 %v3520, 7
        %v3522 = vsub.s32 0, %v3521
        %v3523 = vrot.slane %v3265, %v3522
        %v3524 = vlaneseq
        %v3525 = vshrl.u32 %v3524, 7
        %v3526 = vsub.s32 0, %v3525
        %v3527 = vrot.slane %v3248, %v3526
        %v3528 = vlaneseq
        %v3529 = vshrl.u32 %v3528, 7
        %v3530 = vsub.s32 0, %v3529
        %v3531 = vrot.slane %v3262, %v3530
        %v3532 = vlaneseq
        %v3533 = vshrl.u32 %v3532, 7
        %v3534 = vsub.s32 0, %v3533
        %v3535 = vrot.slane %v3264, %v3534
        %v3536 = vlaneseq
        %v3537 = vshrl.u32 %v3536, 7
        %v3538 = vsub.s32 0, %v3537
        %v3539 = vrot.slane %v3266, %v3538
        %v3540 = vlaneseq
        %v3541 = vshrl.u32 %v3540, 7
        %v3542 = vsub.s32 0, %v3541
        %v3543 = vrot.slane %v3290, %v3542
        %v3544 = vlaneseq
        %v3545 = vshrl.u32 %v3544, 7
        %v3546 = vsub.s32 0, %v3545
        %v3547 = vrot.slane %v3304, %v3546
        %v3548 = vlaneseq
        %v3549 = vshrl.u32 %v3548, 7
        %v3550 = vsub.s32 0, %v3549
        %v3551 = vrot.slane %v3312, %v3550
        %v3552 = vlaneseq
        %v3553 = vshrl.u32 %v3552, 7
        %v3554 = vsub.s32 0, %v3553
        %v3555 = vrot.slane %v3314, %v3554
        %v3556 = vlaneseq
        %v3557 = vshrl.u32 %v3556, 7
        %v3558 = vsub.s32 0, %v3557
        %v3559 = vrot.slane %v3297, %v3558
        %v3560 = vlaneseq
        %v3561 = vshrl.u32 %v3560, 7
        %v3562 = vsub.s32 0, %v3561
        %v3563 = vrot.slane %v3311, %v3562
        %v3564 = vlaneseq
        %v3565 = vshrl.u32 %v3564, 7
        %v3566 = vsub.s32 0, %v3565
        %v3567 = vrot.slane %v3313, %v3566
        %v3568 = vlaneseq
        %v3569 = vshrl.u32 %v3568, 7
        %v3570 = vsub.s32 0, %v3569
        %v3571 = vrot.slane %v3315, %v3570
        %v3636 = vmul.f32 %v2210, %v3319
        %v3637 = vmul.f32 %v2214, %v3319
        %v3638 = vmul.f32 %v2221, %v3323
        %v3639 = vmul.f32 %v2225, %v3323
        %v3640 = vmul.f32 %v2232, %v3327
        %v3641 = vmul.f32 %v2236, %v3327
        %v3642 = vmul.f32 %v2243, %v3331
        %v3643 = vmul.f32 %v2247, %v3331
        %v3644 = vmul.f32 %v2254, %v3335
        %v3645 = vmul.f32 %v2258, %v3335
        %v3646 = vmul.f32 %v2265, %v3339
        %v3647 = vmul.f32 %v2269, %v3339
        %v3648 = vmul.f32 %v2276, %v3343
        %v3649 = vmul.f32 %v2280, %v3343
        %v3650 = vmul.f32 %v2287, %v3347
        %v3651 = vmul.f32 %v2291, %v3347
        %v3652 = vmul.f32 %v2298, %v3351
        %v3653 = vmul.f32 %v2302, %v3351
        %v3654 = vmul.f32 %v2309, %v3355
        %v3655 = vmul.f32 %v2313, %v3355
        %v3656 = vmul.f32 %v2320, %v3359
        %v3657 = vmul.f32 %v2324, %v3359
        %v3658 = vmul.f32 %v2331, %v3363
        %v3659 = vmul.f32 %v2335, %v3363
        %v3660 = vmul.f32 %v2342, %v3367
        %v3661 = vmul.f32 %v2346, %v3367
        %v3662 = vmul.f32 %v2353, %v3371
        %v3663 = vmul.f32 %v2357, %v3371
        %v3664 = vmul.f32 %v2364, %v3375
        %v3665 = vmul.f32 %v2368, %v3375
        %v3666 = vmul.f32 %v2375, %v3379
        %v3667 = vmul.f32 %v2379, %v3379
        %v3668 = vmul.f32 %v2386, %v3383
        %v3669 = vmul.f32 %v2390, %v3383
        %v3670 = vmul.f32 %v2397, %v3387
        %v3671 = vmul.f32 %v2401, %v3387
        %v3672 = vmul.f32 %v2408, %v3391
        %v3673 = vmul.f32 %v2412, %v3391
        %v3674 = vmul.f32 %v2419, %v3395
        %v3675 = vmul.f32 %v2423, %v3395
        %v3676 = vmul.f32 %v2430, %v3399
        %v3677 = vmul.f32 %v2434, %v3399
        %v3678 = vmul.f32 %v2441, %v3403
        %v3679 = vmul.f32 %v2445, %v3403
        %v3680 = vmul.f32 %v2452, %v3407
        %v3681 = vmul.f32 %v2456, %v3407
        %v3682 = vmul.f32 %v2463, %v3411
        %v3683 = vmul.f32 %v2467, %v3411
        %v3684 = vmul.f32 %v2474, %v3415
        %v3685 = vmul.f32 %v2478, %v3415
        %v3686 = vmul.f32 %v2485, %v3419
        %v3687 = vmul.f32 %v2489, %v3419
        %v3688 = vmul.f32 %v2496, %v3423
        %v3689 = vmul.f32 %v2500, %v3423
        %v3690 = vmul.f32 %v2507, %v3427
        %v3691 = vmul.f32 %v2511, %v3427
        %v3692 = vmul.f32 %v2518, %v3431
        %v3693 = vmul.f32 %v2522, %v3431
        %v3694 = vmul.f32 %v2529, %v3435
        %v3695 = vmul.f32 %v2533, %v3435
        %v3696 = vmul.f32 %v2540, %v3439
        %v3697 = vmul.f32 %v2544, %v3439
        %v3698 = vmul.f32 %v2551, %v3443
        %v3699 = vmul.f32 %v2555, %v3443
        %v3700 = vmul.f32 %v2562, %v3447
        %v3701 = vmul.f32 %v2566, %v3447
        %v3702 = vmul.f32 %v2573, %v3451
        %v3703 = vmul.f32 %v2577, %v3451
        %v3704 = vmul.f32 %v2584, %v3455
        %v3705 = vmul.f32 %v2588, %v3455
        %v3706 = vmul.f32 %v2595, %v3459
        %v3707 = vmul.f32 %v2599, %v3459
        %v3708 = vmul.f32 %v2606, %v3463
        %v3709 = vmul.f32 %v2610, %v3463
        %v3710 = vmul.f32 %v2617, %v3467
        %v3711 = vmul.f32 %v2621, %v3467
        %v3712 = vmul.f32 %v2628, %v3471
        %v3713 = vmul.f32 %v2632, %v3471
        %v3714 = vmul.f32 %v2639, %v3475
        %v3715 = vmul.f32 %v2643, %v3475
        %v3716 = vmul.f32 %v2650, %v3479
        %v3717 = vmul.f32 %v2654, %v3479
        %v3718 = vmul.f32 %v2661, %v3483
        %v3719 = vmul.f32 %v2665, %v3483
        %v3720 = vmul.f32 %v2672, %v3487
        %v3721 = vmul.f32 %v2676, %v3487
        %v3722 = vmul.f32 %v2683, %v3491
        %v3723 = vmul.f32 %v2687, %v3491
        %v3724 = vmul.f32 %v2694, %v3495
        %v3725 = vmul.f32 %v2698, %v3495
        %v3726 = vmul.f32 %v2705, %v3499
        %v3727 = vmul.f32 %v2709, %v3499
        %v3728 = vmul.f32 %v2716, %v3503
        %v3729 = vmul.f32 %v2720, %v3503
        %v3730 = vmul.f32 %v2727, %v3507
        %v3731 = vmul.f32 %v2731, %v3507
        %v3732 = vmul.f32 %v2738, %v3511
        %v3733 = vmul.f32 %v2742, %v3511
        %v3734 = vmul.f32 %v2749, %v3515
        %v3735 = vmul.f32 %v2753, %v3515
        %v3736 = vmul.f32 %v2760, %v3519
        %v3737 = vmul.f32 %v2764, %v3519
        %v3738 = vmul.f32 %v2771, %v3523
        %v3739 = vmul.f32 %v2775, %v3523
        %v3740 = vmul.f32 %v2782, %v3527
        %v3741 = vmul.f32 %v2786, %v3527
        %v3742 = vmul.f32 %v2793, %v3531
        %v3743 = vmul.f32 %v2797, %v3531
        %v3744 = vmul.f32 %v2804, %v3535
        %v3745 = vmul.f32 %v2808, %v3535
        %v3746 = vmul.f32 %v2815, %v3539
        %v3747 = vmul.f32 %v2819, %v3539
        %v3748 = vmul.f32 %v2826, %v3543
        %v3749 = vmul.f32 %v2830, %v3543
        %v3750 = vmul.f32 %v2837, %v3547
        %v3751 = vmul.f32 %v2841, %v3547
        %v3752 = vmul.f32 %v2848, %v3551
        %v3753 = vmul.f32 %v2852, %v3551
        %v3754 = vmul.f32 %v2859, %v3555
        %v3755 = vmul.f32 %v2863, %v3555
        %v3756 = vmul.f32 %v2870, %v3559
        %v3757 = vmul.f32 %v2874, %v3559
        %v3758 = vmul.f32 %v2881, %v3563
        %v3759 = vmul.f32 %v2885, %v3563
        %v3760 = vmul.f32 %v2892, %v3567
        %v3761 = vmul.f32 %v2896, %v3567
        %v3762 = vmul.f32 %v2903, %v3571
        %v3763 = vmul.f32 %v2907, %v3571
        %3764 = vst.msk [vmem:[#allocation4] sm:$0xff] %vm506, %v3636
        %3765 = vst.msk [vmem:[#allocation4 + $0x8] sm:$0xff] %vm506, %v3637
        %3766 = vst.msk [vmem:[#allocation4 + $0x10] sm:$0xff] %vm506, %v3638
        %3767 = vst.msk [vmem:[#allocation4 + $0x18] sm:$0xff] %vm506, %v3639
        %3768 = vst.msk [vmem:[#allocation4 + $0x20] sm:$0xff] %vm506, %v3640
        %3769 = vst.msk [vmem:[#allocation4 + $0x28] sm:$0xff] %vm506, %v3641
        %3770 = vst.msk [vmem:[#allocation4 + $0x30] sm:$0xff] %vm506, %v3642
        %3771 = vst.msk [vmem:[#allocation4 + $0x38] sm:$0xff] %vm506, %v3643
        %3772 = vst.msk [vmem:[#allocation4 + $0x40] sm:$0xff] %vm506, %v3644
        %3773 = vst.msk [vmem:[#allocation4 + $0x48] sm:$0xff] %vm506, %v3645
        %3774 = vst.msk [vmem:[#allocation4 + $0x50] sm:$0xff] %vm506, %v3646
        %3775 = vst.msk [vmem:[#allocation4 + $0x58] sm:$0xff] %vm506, %v3647
        %3776 = vst.msk [vmem:[#allocation4 + $0x60] sm:$0xff] %vm506, %v3648
        %3777 = vst.msk [vmem:[#allocation4 + $0x68] sm:$0xff] %vm506, %v3649
        %3778 = vst.msk [vmem:[#allocation4 + $0x70] sm:$0xff] %vm506, %v3650
        %3779 = vst.msk [vmem:[#allocation4 + $0x78] sm:$0xff] %vm506, %v3651
        %3780 = vst.msk [vmem:[#allocation4 + $0x80] sm:$0xff] %vm506, %v3652
        %3781 = vst.msk [vmem:[#allocation4 + $0x88] sm:$0xff] %vm506, %v3653
        %3782 = vst.msk [vmem:[#allocation4 + $0x90] sm:$0xff] %vm506, %v3654
        %3783 = vst.msk [vmem:[#allocation4 + $0x98] sm:$0xff] %vm506, %v3655
        %3784 = vst.msk [vmem:[#allocation4 + $0xa0] sm:$0xff] %vm506, %v3656
        %3785 = vst.msk [vmem:[#allocation4 + $0xa8] sm:$0xff] %vm506, %v3657
        %3786 = vst.msk [vmem:[#allocation4 + $0xb0] sm:$0xff] %vm506, %v3658
        %3787 = vst.msk [vmem:[#allocation4 + $0xb8] sm:$0xff] %vm506, %v3659
        %3788 = vst.msk [vmem:[#allocation4 + $0xc0] sm:$0xff] %vm506, %v3660
        %3789 = vst.msk [vmem:[#allocation4 + $0xc8] sm:$0xff] %vm506, %v3661
        %3790 = vst.msk [vmem:[#allocation4 + $0xd0] sm:$0xff] %vm506, %v3662
        %3791 = vst.msk [vmem:[#allocation4 + $0xd8] sm:$0xff] %vm506, %v3663
        %3792 = vst.msk [vmem:[#allocation4 + $0xe0] sm:$0xff] %vm506, %v3664
        %3793 = vst.msk [vmem:[#allocation4 + $0xe8] sm:$0xff] %vm506, %v3665
        %3794 = vst.msk [vmem:[#allocation4 + $0xf0] sm:$0xff] %vm506, %v3666
        %3795 = vst.msk [vmem:[#allocation4 + $0xf8] sm:$0xff] %vm506, %v3667
        %3796 = vst.msk [vmem:[#allocation4 + $0x100] sm:$0xff] %vm506, %v3668
        %3797 = vst.msk [vmem:[#allocation4 + $0x108] sm:$0xff] %vm506, %v3669
        %3798 = vst.msk [vmem:[#allocation4 + $0x110] sm:$0xff] %vm506, %v3670
        %3799 = vst.msk [vmem:[#allocation4 + $0x118] sm:$0xff] %vm506, %v3671
        %3800 = vst.msk [vmem:[#allocation4 + $0x120] sm:$0xff] %vm506, %v3672
        %3801 = vst.msk [vmem:[#allocation4 + $0x128] sm:$0xff] %vm506, %v3673
        %3802 = vst.msk [vmem:[#allocation4 + $0x130] sm:$0xff] %vm506, %v3674
        %3803 = vst.msk [vmem:[#allocation4 + $0x138] sm:$0xff] %vm506, %v3675
        %3804 = vst.msk [vmem:[#allocation4 + $0x140] sm:$0xff] %vm506, %v3676
        %3805 = vst.msk [vmem:[#allocation4 + $0x148] sm:$0xff] %vm506, %v3677
        %3806 = vst.msk [vmem:[#allocation4 + $0x150] sm:$0xff] %vm506, %v3678
        %3807 = vst.msk [vmem:[#allocation4 + $0x158] sm:$0xff] %vm506, %v3679
        %3808 = vst.msk [vmem:[#allocation4 + $0x160] sm:$0xff] %vm506, %v3680
        %3809 = vst.msk [vmem:[#allocation4 + $0x168] sm:$0xff] %vm506, %v3681
        %3810 = vst.msk [vmem:[#allocation4 + $0x170] sm:$0xff] %vm506, %v3682
        %3811 = vst.msk [vmem:[#allocation4 + $0x178] sm:$0xff] %vm506, %v3683
        %3812 = vst.msk [vmem:[#allocation4 + $0x180] sm:$0xff] %vm506, %v3684
        %3813 = vst.msk [vmem:[#allocation4 + $0x188] sm:$0xff] %vm506, %v3685
        %3814 = vst.msk [vmem:[#allocation4 + $0x190] sm:$0xff] %vm506, %v3686
        %3815 = vst.msk [vmem:[#allocation4 + $0x198] sm:$0xff] %vm506, %v3687
        %3816 = vst.msk [vmem:[#allocation4 + $0x1a0] sm:$0xff] %vm506, %v3688
        %3817 = vst.msk [vmem:[#allocation4 + $0x1a8] sm:$0xff] %vm506, %v3689
        %3818 = vst.msk [vmem:[#allocation4 + $0x1b0] sm:$0xff] %vm506, %v3690
        %3819 = vst.msk [vmem:[#allocation4 + $0x1b8] sm:$0xff] %vm506, %v3691
        %3820 = vst.msk [vmem:[#allocation4 + $0x1c0] sm:$0xff] %vm506, %v3692
        %3821 = vst.msk [vmem:[#allocation4 + $0x1c8] sm:$0xff] %vm506, %v3693
        %3822 = vst.msk [vmem:[#allocation4 + $0x1d0] sm:$0xff] %vm506, %v3694
        %3823 = vst.msk [vmem:[#allocation4 + $0x1d8] sm:$0xff] %vm506, %v3695
        %3824 = vst.msk [vmem:[#allocation4 + $0x1e0] sm:$0xff] %vm506, %v3696
        %3825 = vst.msk [vmem:[#allocation4 + $0x1e8] sm:$0xff] %vm506, %v3697
        %3826 = vst.msk [vmem:[#allocation4 + $0x1f0] sm:$0xff] %vm506, %v3698
        %3827 = vst.msk [vmem:[#allocation4 + $0x1f8] sm:$0xff] %vm506, %v3699
        %3828 = vst.msk [vmem:[#allocation4 + $0x200] sm:$0xff] %vm506, %v3700
        %3829 = vst.msk [vmem:[#allocation4 + $0x208] sm:$0xff] %vm506, %v3701
        %3830 = vst.msk [vmem:[#allocation4 + $0x210] sm:$0xff] %vm506, %v3702
        %3831 = vst.msk [vmem:[#allocation4 + $0x218] sm:$0xff] %vm506, %v3703
        %3832 = vst.msk [vmem:[#allocation4 + $0x220] sm:$0xff] %vm506, %v3704
        %3833 = vst.msk [vmem:[#allocation4 + $0x228] sm:$0xff] %vm506, %v3705
        %3834 = vst.msk [vmem:[#allocation4 + $0x230] sm:$0xff] %vm506, %v3706
        %3835 = vst.msk [vmem:[#allocation4 + $0x238] sm:$0xff] %vm506, %v3707
        %3836 = vst.msk [vmem:[#allocation4 + $0x240] sm:$0xff] %vm506, %v3708
        %3837 = vst.msk [vmem:[#allocation4 + $0x248] sm:$0xff] %vm506, %v3709
        %3838 = vst.msk [vmem:[#allocation4 + $0x250] sm:$0xff] %vm506, %v3710
        %3839 = vst.msk [vmem:[#allocation4 + $0x258] sm:$0xff] %vm506, %v3711
        %3840 = vst.msk [vmem:[#allocation4 + $0x260] sm:$0xff] %vm506, %v3712
        %3841 = vst.msk [vmem:[#allocation4 + $0x268] sm:$0xff] %vm506, %v3713
        %3842 = vst.msk [vmem:[#allocation4 + $0x270] sm:$0xff] %vm506, %v3714
        %3843 = vst.msk [vmem:[#allocation4 + $0x278] sm:$0xff] %vm506, %v3715
        %3844 = vst.msk [vmem:[#allocation4 + $0x280] sm:$0xff] %vm506, %v3716
        %3845 = vst.msk [vmem:[#allocation4 + $0x288] sm:$0xff] %vm506, %v3717
        %3846 = vst.msk [vmem:[#allocation4 + $0x290] sm:$0xff] %vm506, %v3718
        %3847 = vst.msk [vmem:[#allocation4 + $0x298] sm:$0xff] %vm506, %v3719
        %3848 = vst.msk [vmem:[#allocation4 + $0x2a0] sm:$0xff] %vm506, %v3720
        %3849 = vst.msk [vmem:[#allocation4 + $0x2a8] sm:$0xff] %vm506, %v3721
        %3850 = vst.msk [vmem:[#allocation4 + $0x2b0] sm:$0xff] %vm506, %v3722
        %3851 = vst.msk [vmem:[#allocation4 + $0x2b8] sm:$0xff] %vm506, %v3723
        %3852 = vst.msk [vmem:[#allocation4 + $0x2c0] sm:$0xff] %vm506, %v3724
        %3853 = vst.msk [vmem:[#allocation4 + $0x2c8] sm:$0xff] %vm506, %v3725
        %3854 = vst.msk [vmem:[#allocation4 + $0x2d0] sm:$0xff] %vm506, %v3726
        %3855 = vst.msk [vmem:[#allocation4 + $0x2d8] sm:$0xff] %vm506, %v3727
        %3856 = vst.msk [vmem:[#allocation4 + $0x2e0] sm:$0xff] %vm506, %v3728
        %3857 = vst.msk [vmem:[#allocation4 + $0x2e8] sm:$0xff] %vm506, %v3729
        %3858 = vst.msk [vmem:[#allocation4 + $0x2f0] sm:$0xff] %vm506, %v3730
        %3859 = vst.msk [vmem:[#allocation4 + $0x2f8] sm:$0xff] %vm506, %v3731
        %3860 = vst.msk [vmem:[#allocation4 + $0x300] sm:$0xff] %vm506, %v3732
        %3861 = vst.msk [vmem:[#allocation4 + $0x308] sm:$0xff] %vm506, %v3733
        %3862 = vst.msk [vmem:[#allocation4 + $0x310] sm:$0xff] %vm506, %v3734
        %3863 = vst.msk [vmem:[#allocation4 + $0x318] sm:$0xff] %vm506, %v3735
        %3864 = vst.msk [vmem:[#allocation4 + $0x320] sm:$0xff] %vm506, %v3736
        %3865 = vst.msk [vmem:[#allocation4 + $0x328] sm:$0xff] %vm506, %v3737
        %3866 = vst.msk [vmem:[#allocation4 + $0x330] sm:$0xff] %vm506, %v3738
        %3867 = vst.msk [vmem:[#allocation4 + $0x338] sm:$0xff] %vm506, %v3739
        %3868 = vst.msk [vmem:[#allocation4 + $0x340] sm:$0xff] %vm506, %v3740
        %3869 = vst.msk [vmem:[#allocation4 + $0x348] sm:$0xff] %vm506, %v3741
        %3870 = vst.msk [vmem:[#allocation4 + $0x350] sm:$0xff] %vm506, %v3742
        %3871 = vst.msk [vmem:[#allocation4 + $0x358] sm:$0xff] %vm506, %v3743
        %3872 = vst.msk [vmem:[#allocation4 + $0x360] sm:$0xff] %vm506, %v3744
        %3873 = vst.msk [vmem:[#allocation4 + $0x368] sm:$0xff] %vm506, %v3745
        %3874 = vst.msk [vmem:[#allocation4 + $0x370] sm:$0xff] %vm506, %v3746
        %3875 = vst.msk [vmem:[#allocation4 + $0x378] sm:$0xff] %vm506, %v3747
        %3876 = vst.msk [vmem:[#allocation4 + $0x380] sm:$0xff] %vm506, %v3748
        %3877 = vst.msk [vmem:[#allocation4 + $0x388] sm:$0xff] %vm506, %v3749
        %3878 = vst.msk [vmem:[#allocation4 + $0x390] sm:$0xff] %vm506, %v3750
        %3879 = vst.msk [vmem:[#allocation4 + $0x398] sm:$0xff] %vm506, %v3751
        %3880 = vst.msk [vmem:[#allocation4 + $0x3a0] sm:$0xff] %vm506, %v3752
        %3881 = vst.msk [vmem:[#allocation4 + $0x3a8] sm:$0xff] %vm506, %v3753
        %3882 = vst.msk [vmem:[#allocation4 + $0x3b0] sm:$0xff] %vm506, %v3754
        %3883 = vst.msk [vmem:[#allocation4 + $0x3b8] sm:$0xff] %vm506, %v3755
        %3884 = vst.msk [vmem:[#allocation4 + $0x3c0] sm:$0xff] %vm506, %v3756
        %3885 = vst.msk [vmem:[#allocation4 + $0x3c8] sm:$0xff] %vm506, %v3757
        %3886 = vst.msk [vmem:[#allocation4 + $0x3d0] sm:$0xff] %vm506, %v3758
        %3887 = vst.msk [vmem:[#allocation4 + $0x3d8] sm:$0xff] %vm506, %v3759
        %3888 = vst.msk [vmem:[#allocation4 + $0x3e0] sm:$0xff] %vm506, %v3760
        %3889 = vst.msk [vmem:[#allocation4 + $0x3e8] sm:$0xff] %vm506, %v3761
        %3890 = vst.msk [vmem:[#allocation4 + $0x3f0] sm:$0xff] %vm506, %v3762
        %3891 = vst.msk [vmem:[#allocation4 + $0x3f8] sm:$0xff] %vm506, %v3763
        %v3892 = vld [vmem:[#allocation2] sm:$0xff]
        %v3893 = vld [vmem:[#allocation2 + $0x8] sm:$0xff]
        loop: start=0, step=1, limit=64
        $region73: #{ss2dconv_k1_forward.5} parent=67 // loop_pre_header
          _
        $region74: #{ss2dconv_k1_forward.5} parent=67 // loop_header
          %s3895 = sphi 0, %s3899
          %p3896 = scmp.ge.s32.totalorder %s3895, 64
          %v3900 = vphi %v3892, %v3911
          %v3901 = vphi %v3893, %v3912
        $region75: #{ss2dconv_k1_forward.5} parent=67 // loop_header_branch
          %3898 = sbr.rel (%p3896) target = $region79
        $region76: #{ss2dconv_k1_forward.5} parent=67 // loop_body
          %s3902 = smul.u32 %s3895, 16
          %s3903 = scalar_lea.vmem [#allocation3], %s3902
          %v3904 = vld [vmem:[%s3903] sm:$0xff]
          %v3905 = vld [vmem:[%s3903 + $0x8] sm:$0xff]
          %v3906 = vmul.f32 %v3904, %v3900
          %v3907 = vmul.f32 %v3905, %v3901
          %s3908 = scalar_lea.vmem [#allocation4], %s3902
          %v3909 = vld [vmem:[%s3908] sm:$0xff]
          %v3910 = vld [vmem:[%s3908 + $0x8] sm:$0xff]
          %v3911 = vadd.f32 %v3906, %v3909
          %v3912 = vadd.f32 %v3907, %v3910
          %3913 = vst.msk [vmem:[%s3908] sm:$0xff] %vm506, %v3911
          %3914 = vst.msk [vmem:[%s3908 + $0x8] sm:$0xff] %vm506, %v3912
        $region77: #{ss2dconv_k1_forward.5} parent=67 // loop_footer
          %s3899 = sadd.s32 1, %s3895
        $region78: #{ss2dconv_k1_forward.5} parent=67 // loop_footer_branch
          %3894 = sbr.rel target = $region74
        $region79: #{ss2dconv_k1_forward.5} parent=67 // loop_exit
          _
        %3915 = vst.msk [vmem:[#allocation2] sm:$0xff] %vm506, %v3900
        %3916 = vst.msk [vmem:[#allocation2 + $0x8] sm:$0xff] %vm506, %v3901
        %v3917 = vld [vmem:[#allocation4] sm:$0xff]
        %v3918 = vld [vmem:[#allocation4 + $0x8] sm:$0xff]
        %v3919 = vld [vmem:[#allocation4 + $0x10] sm:$0xff]
        %v3920 = vld [vmem:[#allocation4 + $0x18] sm:$0xff]
        %v3921 = vld [vmem:[#allocation4 + $0x20] sm:$0xff]
        %v3922 = vld [vmem:[#allocation4 + $0x28] sm:$0xff]
        %v3923 = vld [vmem:[#allocation4 + $0x30] sm:$0xff]
        %v3924 = vld [vmem:[#allocation4 + $0x38] sm:$0xff]
        %v3925 = vld [vmem:[#allocation4 + $0x40] sm:$0xff]
        %v3926 = vld [vmem:[#allocation4 + $0x48] sm:$0xff]
        %v3927 = vld [vmem:[#allocation4 + $0x50] sm:$0xff]
        %v3928 = vld [vmem:[#allocation4 + $0x58] sm:$0xff]
        %v3929 = vld [vmem:[#allocation4 + $0x60] sm:$0xff]
        %v3930 = vld [vmem:[#allocation4 + $0x68] sm:$0xff]
        %v3931 = vld [vmem:[#allocation4 + $0x70] sm:$0xff]
        %v3932 = vld [vmem:[#allocation4 + $0x78] sm:$0xff]
        %v3933 = vld [vmem:[#allocation4 + $0x80] sm:$0xff]
        %v3934 = vld [vmem:[#allocation4 + $0x88] sm:$0xff]
        %v3935 = vld [vmem:[#allocation4 + $0x90] sm:$0xff]
        %v3936 = vld [vmem:[#allocation4 + $0x98] sm:$0xff]
        %v3937 = vld [vmem:[#allocation4 + $0xa0] sm:$0xff]
        %v3938 = vld [vmem:[#allocation4 + $0xa8] sm:$0xff]
        %v3939 = vld [vmem:[#allocation4 + $0xb0] sm:$0xff]
        %v3940 = vld [vmem:[#allocation4 + $0xb8] sm:$0xff]
        %v3941 = vld [vmem:[#allocation4 + $0xc0] sm:$0xff]
        %v3942 = vld [vmem:[#allocation4 + $0xc8] sm:$0xff]
        %v3943 = vld [vmem:[#allocation4 + $0xd0] sm:$0xff]
        %v3944 = vld [vmem:[#allocation4 + $0xd8] sm:$0xff]
        %v3945 = vld [vmem:[#allocation4 + $0xe0] sm:$0xff]
        %v3946 = vld [vmem:[#allocation4 + $0xe8] sm:$0xff]
        %v3947 = vld [vmem:[#allocation4 + $0xf0] sm:$0xff]
        %v3948 = vld [vmem:[#allocation4 + $0xf8] sm:$0xff]
        %v3949 = vld [vmem:[#allocation4 + $0x100] sm:$0xff]
        %v3950 = vld [vmem:[#allocation4 + $0x108] sm:$0xff]
        %v3951 = vld [vmem:[#allocation4 + $0x110] sm:$0xff]
        %v3952 = vld [vmem:[#allocation4 + $0x118] sm:$0xff]
        %v3953 = vld [vmem:[#allocation4 + $0x120] sm:$0xff]
        %v3954 = vld [vmem:[#allocation4 + $0x128] sm:$0xff]
        %v3955 = vld [vmem:[#allocation4 + $0x130] sm:$0xff]
        %v3956 = vld [vmem:[#allocation4 + $0x138] sm:$0xff]
        %v3957 = vld [vmem:[#allocation4 + $0x140] sm:$0xff]
        %v3958 = vld [vmem:[#allocation4 + $0x148] sm:$0xff]
        %v3959 = vld [vmem:[#allocation4 + $0x150] sm:$0xff]
        %v3960 = vld [vmem:[#allocation4 + $0x158] sm:$0xff]
        %v3961 = vld [vmem:[#allocation4 + $0x160] sm:$0xff]
        %v3962 = vld [vmem:[#allocation4 + $0x168] sm:$0xff]
        %v3963 = vld [vmem:[#allocation4 + $0x170] sm:$0xff]
        %v3964 = vld [vmem:[#allocation4 + $0x178] sm:$0xff]
        %v3965 = vld [vmem:[#allocation4 + $0x180] sm:$0xff]
        %v3966 = vld [vmem:[#allocation4 + $0x188] sm:$0xff]
        %v3967 = vld [vmem:[#allocation4 + $0x190] sm:$0xff]
        %v3968 = vld [vmem:[#allocation4 + $0x198] sm:$0xff]
        %v3969 = vld [vmem:[#allocation4 + $0x1a0] sm:$0xff]
        %v3970 = vld [vmem:[#allocation4 + $0x1a8] sm:$0xff]
        %v3971 = vld [vmem:[#allocation4 + $0x1b0] sm:$0xff]
        %v3972 = vld [vmem:[#allocation4 + $0x1b8] sm:$0xff]
        %v3973 = vld [vmem:[#allocation4 + $0x1c0] sm:$0xff]
        %v3974 = vld [vmem:[#allocation4 + $0x1c8] sm:$0xff]
        %v3975 = vld [vmem:[#allocation4 + $0x1d0] sm:$0xff]
        %v3976 = vld [vmem:[#allocation4 + $0x1d8] sm:$0xff]
        %v3977 = vld [vmem:[#allocation4 + $0x1e0] sm:$0xff]
        %v3978 = vld [vmem:[#allocation4 + $0x1e8] sm:$0xff]
        %v3979 = vld [vmem:[#allocation4 + $0x1f0] sm:$0xff]
        %v3980 = vld [vmem:[#allocation4 + $0x1f8] sm:$0xff]
        %v3981 = vld [vmem:[#allocation4 + $0x200] sm:$0xff]
        %v3982 = vld [vmem:[#allocation4 + $0x208] sm:$0xff]
        %v3983 = vld [vmem:[#allocation4 + $0x210] sm:$0xff]
        %v3984 = vld [vmem:[#allocation4 + $0x218] sm:$0xff]
        %v3985 = vld [vmem:[#allocation4 + $0x220] sm:$0xff]
        %v3986 = vld [vmem:[#allocation4 + $0x228] sm:$0xff]
        %v3987 = vld [vmem:[#allocation4 + $0x230] sm:$0xff]
        %v3988 = vld [vmem:[#allocation4 + $0x238] sm:$0xff]
        %v3989 = vld [vmem:[#allocation4 + $0x240] sm:$0xff]
        %v3990 = vld [vmem:[#allocation4 + $0x248] sm:$0xff]
        %v3991 = vld [vmem:[#allocation4 + $0x250] sm:$0xff]
        %v3992 = vld [vmem:[#allocation4 + $0x258] sm:$0xff]
        %v3993 = vld [vmem:[#allocation4 + $0x260] sm:$0xff]
        %v3994 = vld [vmem:[#allocation4 + $0x268] sm:$0xff]
        %v3995 = vld [vmem:[#allocation4 + $0x270] sm:$0xff]
        %v3996 = vld [vmem:[#allocation4 + $0x278] sm:$0xff]
        %v3997 = vld [vmem:[#allocation4 + $0x280] sm:$0xff]
        %v3998 = vld [vmem:[#allocation4 + $0x288] sm:$0xff]
        %v3999 = vld [vmem:[#allocation4 + $0x290] sm:$0xff]
        %v4000 = vld [vmem:[#allocation4 + $0x298] sm:$0xff]
        %v4001 = vld [vmem:[#allocation4 + $0x2a0] sm:$0xff]
        %v4002 = vld [vmem:[#allocation4 + $0x2a8] sm:$0xff]
        %v4003 = vld [vmem:[#allocation4 + $0x2b0] sm:$0xff]
        %v4004 = vld [vmem:[#allocation4 + $0x2b8] sm:$0xff]
        %v4005 = vld [vmem:[#allocation4 + $0x2c0] sm:$0xff]
        %v4006 = vld [vmem:[#allocation4 + $0x2c8] sm:$0xff]
        %v4007 = vld [vmem:[#allocation4 + $0x2d0] sm:$0xff]
        %v4008 = vld [vmem:[#allocation4 + $0x2d8] sm:$0xff]
        %v4009 = vld [vmem:[#allocation4 + $0x2e0] sm:$0xff]
        %v4010 = vld [vmem:[#allocation4 + $0x2e8] sm:$0xff]
        %v4011 = vld [vmem:[#allocation4 + $0x2f0] sm:$0xff]
        %v4012 = vld [vmem:[#allocation4 + $0x2f8] sm:$0xff]
        %v4013 = vld [vmem:[#allocation4 + $0x300] sm:$0xff]
        %v4014 = vld [vmem:[#allocation4 + $0x308] sm:$0xff]
        %v4015 = vld [vmem:[#allocation4 + $0x310] sm:$0xff]
        %v4016 = vld [vmem:[#allocation4 + $0x318] sm:$0xff]
        %v4017 = vld [vmem:[#allocation4 + $0x320] sm:$0xff]
        %v4018 = vld [vmem:[#allocation4 + $0x328] sm:$0xff]
        %v4019 = vld [vmem:[#allocation4 + $0x330] sm:$0xff]
        %v4020 = vld [vmem:[#allocation4 + $0x338] sm:$0xff]
        %v4021 = vld [vmem:[#allocation4 + $0x340] sm:$0xff]
        %v4022 = vld [vmem:[#allocation4 + $0x348] sm:$0xff]
        %v4023 = vld [vmem:[#allocation4 + $0x350] sm:$0xff]
        %v4024 = vld [vmem:[#allocation4 + $0x358] sm:$0xff]
        %v4025 = vld [vmem:[#allocation4 + $0x360] sm:$0xff]
        %v4026 = vld [vmem:[#allocation4 + $0x368] sm:$0xff]
        %v4027 = vld [vmem:[#allocation4 + $0x370] sm:$0xff]
        %v4028 = vld [vmem:[#allocation4 + $0x378] sm:$0xff]
        %v4029 = vld [vmem:[#allocation4 + $0x380] sm:$0xff]
        %v4030 = vld [vmem:[#allocation4 + $0x388] sm:$0xff]
        %v4031 = vld [vmem:[#allocation4 + $0x390] sm:$0xff]
        %v4032 = vld [vmem:[#allocation4 + $0x398] sm:$0xff]
        %v4033 = vld [vmem:[#allocation4 + $0x3a0] sm:$0xff]
        %v4034 = vld [vmem:[#allocation4 + $0x3a8] sm:$0xff]
        %v4035 = vld [vmem:[#allocation4 + $0x3b0] sm:$0xff]
        %v4036 = vld [vmem:[#allocation4 + $0x3b8] sm:$0xff]
        %v4037 = vld [vmem:[#allocation4 + $0x3c0] sm:$0xff]
        %v4038 = vld [vmem:[#allocation4 + $0x3c8] sm:$0xff]
        %v4039 = vld [vmem:[#allocation4 + $0x3d0] sm:$0xff]
        %v4040 = vld [vmem:[#allocation4 + $0x3d8] sm:$0xff]
        %v4041 = vld [vmem:[#allocation4 + $0x3e0] sm:$0xff]
        %v4042 = vld [vmem:[#allocation4 + $0x3e8] sm:$0xff]
        %v4043 = vld [vmem:[#allocation4 + $0x3f0] sm:$0xff]
        %v4044 = vld [vmem:[#allocation4 + $0x3f8] sm:$0xff]
        %v4045 = vlaneseq
        %v4046 = vshrl.u32 %v4045, 7
        %v4047 = vsub.s32 0, %v4046
        %v4048 = vrot.slane %v932, %v4047
        %4050 = vbcast.lane.b32.xlu0 %v4048, 256
        %v4051 = vpop.permute.xlu0 %4050
        %s4053 = sor.u32 256, 8
        %4054 = vbcast.lane.b32.xlu0 %v4048, %s4053
        %v4055 = vpop.permute.xlu0 %4054
        %v4056 = vlaneseq
        %v4057 = vshrl.u32 %v4056, 7
        %v4058 = vsub.s32 1, %v4057
        %v4059 = vrot.slane %v932, %v4058
        %4061 = vbcast.lane.b32.xlu0 %v4059, 256
        %v4062 = vpop.permute.xlu0 %4061
        %s4064 = sor.u32 256, 8
        %4065 = vbcast.lane.b32.xlu0 %v4059, %s4064
        %v4066 = vpop.permute.xlu0 %4065
        %v4067 = vlaneseq
        %v4068 = vshrl.u32 %v4067, 7
        %v4069 = vsub.s32 2, %v4068
        %v4070 = vrot.slane %v932, %v4069
        %4072 = vbcast.lane.b32.xlu0 %v4070, 256
        %v4073 = vpop.permute.xlu0 %4072
        %s4075 = sor.u32 256, 8
        %4076 = vbcast.lane.b32.xlu0 %v4070, %s4075
        %v4077 = vpop.permute.xlu0 %4076
        %v4078 = vlaneseq
        %v4079 = vshrl.u32 %v4078, 7
        %v4080 = vsub.s32 3, %v4079
        %v4081 = vrot.slane %v932, %v4080
        %4083 = vbcast.lane.b32.xlu0 %v4081, 256
        %v4084 = vpop.permute.xlu0 %4083
        %s4086 = sor.u32 256, 8
        %4087 = vbcast.lane.b32.xlu0 %v4081, %s4086
        %v4088 = vpop.permute.xlu0 %4087
        %v4089 = vlaneseq
        %v4090 = vshrl.u32 %v4089, 7
        %v4091 = vsub.s32 4, %v4090
        %v4092 = vrot.slane %v932, %v4091
        %4094 = vbcast.lane.b32.xlu0 %v4092, 256
        %v4095 = vpop.permute.xlu0 %4094
        %s4097 = sor.u32 256, 8
        %4098 = vbcast.lane.b32.xlu0 %v4092, %s4097
        %v4099 = vpop.permute.xlu0 %4098
        %v4100 = vlaneseq
        %v4101 = vshrl.u32 %v4100, 7
        %v4102 = vsub.s32 5, %v4101
        %v4103 = vrot.slane %v932, %v4102
        %4105 = vbcast.lane.b32.xlu0 %v4103, 256
        %v4106 = vpop.permute.xlu0 %4105
        %s4108 = sor.u32 256, 8
        %4109 = vbcast.lane.b32.xlu0 %v4103, %s4108
        %v4110 = vpop.permute.xlu0 %4109
        %v4111 = vlaneseq
        %v4112 = vshrl.u32 %v4111, 7
        %v4113 = vsub.s32 6, %v4112
        %v4114 = vrot.slane %v932, %v4113
        %4116 = vbcast.lane.b32.xlu0 %v4114, 256
        %v4117 = vpop.permute.xlu0 %4116
        %s4119 = sor.u32 256, 8
        %4120 = vbcast.lane.b32.xlu0 %v4114, %s4119
        %v4121 = vpop.permute.xlu0 %4120
        %v4122 = vlaneseq
        %v4123 = vshrl.u32 %v4122, 7
        %v4124 = vsub.s32 7, %v4123
        %v4125 = vrot.slane %v932, %v4124
        %4127 = vbcast.lane.b32.xlu0 %v4125, 256
        %v4128 = vpop.permute.xlu0 %4127
        %s4130 = sor.u32 256, 8
        %4131 = vbcast.lane.b32.xlu0 %v4125, %s4130
        %v4132 = vpop.permute.xlu0 %4131
        %v4133 = vlaneseq
        %v4134 = vshrl.u32 %v4133, 7
        %v4135 = vsub.s32 0, %v4134
        %v4136 = vrot.slane %v937, %v4135
        %4138 = vbcast.lane.b32.xlu0 %v4136, 256
        %v4139 = vpop.permute.xlu0 %4138
        %s4141 = sor.u32 256, 8
        %4142 = vbcast.lane.b32.xlu0 %v4136, %s4141
        %v4143 = vpop.permute.xlu0 %4142
        %v4144 = vlaneseq
        %v4145 = vshrl.u32 %v4144, 7
        %v4146 = vsub.s32 1, %v4145
        %v4147 = vrot.slane %v937, %v4146
        %4149 = vbcast.lane.b32.xlu0 %v4147, 256
        %v4150 = vpop.permute.xlu0 %4149
        %s4152 = sor.u32 256, 8
        %4153 = vbcast.lane.b32.xlu0 %v4147, %s4152
        %v4154 = vpop.permute.xlu0 %4153
        %v4155 = vlaneseq
        %v4156 = vshrl.u32 %v4155, 7
        %v4157 = vsub.s32 2, %v4156
        %v4158 = vrot.slane %v937, %v4157
        %4160 = vbcast.lane.b32.xlu0 %v4158, 256
        %v4161 = vpop.permute.xlu0 %4160
        %s4163 = sor.u32 256, 8
        %4164 = vbcast.lane.b32.xlu0 %v4158, %s4163
        %v4165 = vpop.permute.xlu0 %4164
        %v4166 = vlaneseq
        %v4167 = vshrl.u32 %v4166, 7
        %v4168 = vsub.s32 3, %v4167
        %v4169 = vrot.slane %v937, %v4168
        %4171 = vbcast.lane.b32.xlu0 %v4169, 256
        %v4172 = vpop.permute.xlu0 %4171
        %s4174 = sor.u32 256, 8
        %4175 = vbcast.lane.b32.xlu0 %v4169, %s4174
        %v4176 = vpop.permute.xlu0 %4175
        %v4177 = vlaneseq
        %v4178 = vshrl.u32 %v4177, 7
        %v4179 = vsub.s32 4, %v4178
        %v4180 = vrot.slane %v937, %v4179
        %4182 = vbcast.lane.b32.xlu0 %v4180, 256
        %v4183 = vpop.permute.xlu0 %4182
        %s4185 = sor.u32 256, 8
        %4186 = vbcast.lane.b32.xlu0 %v4180, %s4185
        %v4187 = vpop.permute.xlu0 %4186
        %v4188 = vlaneseq
        %v4189 = vshrl.u32 %v4188, 7
        %v4190 = vsub.s32 5, %v4189
        %v4191 = vrot.slane %v937, %v4190
        %4193 = vbcast.lane.b32.xlu0 %v4191, 256
        %v4194 = vpop.permute.xlu0 %4193
        %s4196 = sor.u32 256, 8
        %4197 = vbcast.lane.b32.xlu0 %v4191, %s4196
        %v4198 = vpop.permute.xlu0 %4197
        %v4199 = vlaneseq
        %v4200 = vshrl.u32 %v4199, 7
        %v4201 = vsub.s32 6, %v4200
        %v4202 = vrot.slane %v937, %v4201
        %4204 = vbcast.lane.b32.xlu0 %v4202, 256
        %v4205 = vpop.permute.xlu0 %4204
        %s4207 = sor.u32 256, 8
        %4208 = vbcast.lane.b32.xlu0 %v4202, %s4207
        %v4209 = vpop.permute.xlu0 %4208
        %v4210 = vlaneseq
        %v4211 = vshrl.u32 %v4210, 7
        %v4212 = vsub.s32 7, %v4211
        %v4213 = vrot.slane %v937, %v4212
        %4215 = vbcast.lane.b32.xlu0 %v4213, 256
        %v4216 = vpop.permute.xlu0 %4215
        %s4218 = sor.u32 256, 8
        %4219 = vbcast.lane.b32.xlu0 %v4213, %s4218
        %v4220 = vpop.permute.xlu0 %4219
        %v4221 = vlaneseq
        %v4222 = vshrl.u32 %v4221, 7
        %v4223 = vsub.s32 0, %v4222
        %v4224 = vrot.slane %v942, %v4223
        %4226 = vbcast.lane.b32.xlu0 %v4224, 256
        %v4227 = vpop.permute.xlu0 %4226
        %s4229 = sor.u32 256, 8
        %4230 = vbcast.lane.b32.xlu0 %v4224, %s4229
        %v4231 = vpop.permute.xlu0 %4230
        %v4232 = vlaneseq
        %v4233 = vshrl.u32 %v4232, 7
        %v4234 = vsub.s32 1, %v4233
        %v4235 = vrot.slane %v942, %v4234
        %4237 = vbcast.lane.b32.xlu0 %v4235, 256
        %v4238 = vpop.permute.xlu0 %4237
        %s4240 = sor.u32 256, 8
        %4241 = vbcast.lane.b32.xlu0 %v4235, %s4240
        %v4242 = vpop.permute.xlu0 %4241
        %v4243 = vlaneseq
        %v4244 = vshrl.u32 %v4243, 7
        %v4245 = vsub.s32 2, %v4244
        %v4246 = vrot.slane %v942, %v4245
        %4248 = vbcast.lane.b32.xlu0 %v4246, 256
        %v4249 = vpop.permute.xlu0 %4248
        %s4251 = sor.u32 256, 8
        %4252 = vbcast.lane.b32.xlu0 %v4246, %s4251
        %v4253 = vpop.permute.xlu0 %4252
        %v4254 = vlaneseq
        %v4255 = vshrl.u32 %v4254, 7
        %v4256 = vsub.s32 3, %v4255
        %v4257 = vrot.slane %v942, %v4256
        %4259 = vbcast.lane.b32.xlu0 %v4257, 256
        %v4260 = vpop.permute.xlu0 %4259
        %s4262 = sor.u32 256, 8
        %4263 = vbcast.lane.b32.xlu0 %v4257, %s4262
        %v4264 = vpop.permute.xlu0 %4263
        %v4265 = vlaneseq
        %v4266 = vshrl.u32 %v4265, 7
        %v4267 = vsub.s32 4, %v4266
        %v4268 = vrot.slane %v942, %v4267
        %4270 = vbcast.lane.b32.xlu0 %v4268, 256
        %v4271 = vpop.permute.xlu0 %4270
        %s4273 = sor.u32 256, 8
        %4274 = vbcast.lane.b32.xlu0 %v4268, %s4273
        %v4275 = vpop.permute.xlu0 %4274
        %v4276 = vlaneseq
        %v4277 = vshrl.u32 %v4276, 7
        %v4278 = vsub.s32 5, %v4277
        %v4279 = vrot.slane %v942, %v4278
        %4281 = vbcast.lane.b32.xlu0 %v4279, 256
        %v4282 = vpop.permute.xlu0 %4281
        %s4284 = sor.u32 256, 8
        %4285 = vbcast.lane.b32.xlu0 %v4279, %s4284
        %v4286 = vpop.permute.xlu0 %4285
        %v4287 = vlaneseq
        %v4288 = vshrl.u32 %v4287, 7
        %v4289 = vsub.s32 6, %v4288
        %v4290 = vrot.slane %v942, %v4289
        %4292 = vbcast.lane.b32.xlu0 %v4290, 256
        %v4293 = vpop.permute.xlu0 %4292
        %s4295 = sor.u32 256, 8
        %4296 = vbcast.lane.b32.xlu0 %v4290, %s4295
        %v4297 = vpop.permute.xlu0 %4296
        %v4298 = vlaneseq
        %v4299 = vshrl.u32 %v4298, 7
        %v4300 = vsub.s32 7, %v4299
        %v4301 = vrot.slane %v942, %v4300
        %4303 = vbcast.lane.b32.xlu0 %v4301, 256
        %v4304 = vpop.permute.xlu0 %4303
        %s4306 = sor.u32 256, 8
        %4307 = vbcast.lane.b32.xlu0 %v4301, %s4306
        %v4308 = vpop.permute.xlu0 %4307
        %v4309 = vlaneseq
        %v4310 = vshrl.u32 %v4309, 7
        %v4311 = vsub.s32 0, %v4310
        %v4312 = vrot.slane %v947, %v4311
        %4314 = vbcast.lane.b32.xlu0 %v4312, 256
        %v4315 = vpop.permute.xlu0 %4314
        %s4317 = sor.u32 256, 8
        %4318 = vbcast.lane.b32.xlu0 %v4312, %s4317
        %v4319 = vpop.permute.xlu0 %4318
        %v4320 = vlaneseq
        %v4321 = vshrl.u32 %v4320, 7
        %v4322 = vsub.s32 1, %v4321
        %v4323 = vrot.slane %v947, %v4322
        %4325 = vbcast.lane.b32.xlu0 %v4323, 256
        %v4326 = vpop.permute.xlu0 %4325
        %s4328 = sor.u32 256, 8
        %4329 = vbcast.lane.b32.xlu0 %v4323, %s4328
        %v4330 = vpop.permute.xlu0 %4329
        %v4331 = vlaneseq
        %v4332 = vshrl.u32 %v4331, 7
        %v4333 = vsub.s32 2, %v4332
        %v4334 = vrot.slane %v947, %v4333
        %4336 = vbcast.lane.b32.xlu0 %v4334, 256
        %v4337 = vpop.permute.xlu0 %4336
        %s4339 = sor.u32 256, 8
        %4340 = vbcast.lane.b32.xlu0 %v4334, %s4339
        %v4341 = vpop.permute.xlu0 %4340
        %v4342 = vlaneseq
        %v4343 = vshrl.u32 %v4342, 7
        %v4344 = vsub.s32 3, %v4343
        %v4345 = vrot.slane %v947, %v4344
        %4347 = vbcast.lane.b32.xlu0 %v4345, 256
        %v4348 = vpop.permute.xlu0 %4347
        %s4350 = sor.u32 256, 8
        %4351 = vbcast.lane.b32.xlu0 %v4345, %s4350
        %v4352 = vpop.permute.xlu0 %4351
        %v4353 = vlaneseq
        %v4354 = vshrl.u32 %v4353, 7
        %v4355 = vsub.s32 4, %v4354
        %v4356 = vrot.slane %v947, %v4355
        %4358 = vbcast.lane.b32.xlu0 %v4356, 256
        %v4359 = vpop.permute.xlu0 %4358
        %s4361 = sor.u32 256, 8
        %4362 = vbcast.lane.b32.xlu0 %v4356, %s4361
        %v4363 = vpop.permute.xlu0 %4362
        %v4364 = vlaneseq
        %v4365 = vshrl.u32 %v4364, 7
        %v4366 = vsub.s32 5, %v4365
        %v4367 = vrot.slane %v947, %v4366
        %4369 = vbcast.lane.b32.xlu0 %v4367, 256
        %v4370 = vpop.permute.xlu0 %4369
        %s4372 = sor.u32 256, 8
        %4373 = vbcast.lane.b32.xlu0 %v4367, %s4372
        %v4374 = vpop.permute.xlu0 %4373
        %v4375 = vlaneseq
        %v4376 = vshrl.u32 %v4375, 7
        %v4377 = vsub.s32 6, %v4376
        %v4378 = vrot.slane %v947, %v4377
        %4380 = vbcast.lane.b32.xlu0 %v4378, 256
        %v4381 = vpop.permute.xlu0 %4380
        %s4383 = sor.u32 256, 8
        %4384 = vbcast.lane.b32.xlu0 %v4378, %s4383
        %v4385 = vpop.permute.xlu0 %4384
        %v4386 = vlaneseq
        %v4387 = vshrl.u32 %v4386, 7
        %v4388 = vsub.s32 7, %v4387
        %v4389 = vrot.slane %v947, %v4388
        %4391 = vbcast.lane.b32.xlu0 %v4389, 256
        %v4392 = vpop.permute.xlu0 %4391
        %s4394 = sor.u32 256, 8
        %4395 = vbcast.lane.b32.xlu0 %v4389, %s4394
        %v4396 = vpop.permute.xlu0 %4395
        %v4397 = vlaneseq
        %v4398 = vshrl.u32 %v4397, 7
        %v4399 = vsub.s32 0, %v4398
        %v4400 = vrot.slane %v952, %v4399
        %4402 = vbcast.lane.b32.xlu0 %v4400, 256
        %v4403 = vpop.permute.xlu0 %4402
        %s4405 = sor.u32 256, 8
        %4406 = vbcast.lane.b32.xlu0 %v4400, %s4405
        %v4407 = vpop.permute.xlu0 %4406
        %v4408 = vlaneseq
        %v4409 = vshrl.u32 %v4408, 7
        %v4410 = vsub.s32 1, %v4409
        %v4411 = vrot.slane %v952, %v4410
        %4413 = vbcast.lane.b32.xlu0 %v4411, 256
        %v4414 = vpop.permute.xlu0 %4413
        %s4416 = sor.u32 256, 8
        %4417 = vbcast.lane.b32.xlu0 %v4411, %s4416
        %v4418 = vpop.permute.xlu0 %4417
        %v4419 = vlaneseq
        %v4420 = vshrl.u32 %v4419, 7
        %v4421 = vsub.s32 2, %v4420
        %v4422 = vrot.slane %v952, %v4421
        %4424 = vbcast.lane.b32.xlu0 %v4422, 256
        %v4425 = vpop.permute.xlu0 %4424
        %s4427 = sor.u32 256, 8
        %4428 = vbcast.lane.b32.xlu0 %v4422, %s4427
        %v4429 = vpop.permute.xlu0 %4428
        %v4430 = vlaneseq
        %v4431 = vshrl.u32 %v4430, 7
        %v4432 = vsub.s32 3, %v4431
        %v4433 = vrot.slane %v952, %v4432
        %4435 = vbcast.lane.b32.xlu0 %v4433, 256
        %v4436 = vpop.permute.xlu0 %4435
        %s4438 = sor.u32 256, 8
        %4439 = vbcast.lane.b32.xlu0 %v4433, %s4438
        %v4440 = vpop.permute.xlu0 %4439
        %v4441 = vlaneseq
        %v4442 = vshrl.u32 %v4441, 7
        %v4443 = vsub.s32 4, %v4442
        %v4444 = vrot.slane %v952, %v4443
        %4446 = vbcast.lane.b32.xlu0 %v4444, 256
        %v4447 = vpop.permute.xlu0 %4446
        %s4449 = sor.u32 256, 8
        %4450 = vbcast.lane.b32.xlu0 %v4444, %s4449
        %v4451 = vpop.permute.xlu0 %4450
        %v4452 = vlaneseq
        %v4453 = vshrl.u32 %v4452, 7
        %v4454 = vsub.s32 5, %v4453
        %v4455 = vrot.slane %v952, %v4454
        %4457 = vbcast.lane.b32.xlu0 %v4455, 256
        %v4458 = vpop.permute.xlu0 %4457
        %s4460 = sor.u32 256, 8
        %4461 = vbcast.lane.b32.xlu0 %v4455, %s4460
        %v4462 = vpop.permute.xlu0 %4461
        %v4463 = vlaneseq
        %v4464 = vshrl.u32 %v4463, 7
        %v4465 = vsub.s32 6, %v4464
        %v4466 = vrot.slane %v952, %v4465
        %4468 = vbcast.lane.b32.xlu0 %v4466, 256
        %v4469 = vpop.permute.xlu0 %4468
        %s4471 = sor.u32 256, 8
        %4472 = vbcast.lane.b32.xlu0 %v4466, %s4471
        %v4473 = vpop.permute.xlu0 %4472
        %v4474 = vlaneseq
        %v4475 = vshrl.u32 %v4474, 7
        %v4476 = vsub.s32 7, %v4475
        %v4477 = vrot.slane %v952, %v4476
        %4479 = vbcast.lane.b32.xlu0 %v4477, 256
        %v4480 = vpop.permute.xlu0 %4479
        %s4482 = sor.u32 256, 8
        %4483 = vbcast.lane.b32.xlu0 %v4477, %s4482
        %v4484 = vpop.permute.xlu0 %4483
        %v4485 = vlaneseq
        %v4486 = vshrl.u32 %v4485, 7
        %v4487 = vsub.s32 0, %v4486
        %v4488 = vrot.slane %v957, %v4487
        %4490 = vbcast.lane.b32.xlu0 %v4488, 256
        %v4491 = vpop.permute.xlu0 %4490
        %s4493 = sor.u32 256, 8
        %4494 = vbcast.lane.b32.xlu0 %v4488, %s4493
        %v4495 = vpop.permute.xlu0 %4494
        %v4496 = vlaneseq
        %v4497 = vshrl.u32 %v4496, 7
        %v4498 = vsub.s32 1, %v4497
        %v4499 = vrot.slane %v957, %v4498
        %4501 = vbcast.lane.b32.xlu0 %v4499, 256
        %v4502 = vpop.permute.xlu0 %4501
        %s4504 = sor.u32 256, 8
        %4505 = vbcast.lane.b32.xlu0 %v4499, %s4504
        %v4506 = vpop.permute.xlu0 %4505
        %v4507 = vlaneseq
        %v4508 = vshrl.u32 %v4507, 7
        %v4509 = vsub.s32 2, %v4508
        %v4510 = vrot.slane %v957, %v4509
        %4512 = vbcast.lane.b32.xlu0 %v4510, 256
        %v4513 = vpop.permute.xlu0 %4512
        %s4515 = sor.u32 256, 8
        %4516 = vbcast.lane.b32.xlu0 %v4510, %s4515
        %v4517 = vpop.permute.xlu0 %4516
        %v4518 = vlaneseq
        %v4519 = vshrl.u32 %v4518, 7
        %v4520 = vsub.s32 3, %v4519
        %v4521 = vrot.slane %v957, %v4520
        %4523 = vbcast.lane.b32.xlu0 %v4521, 256
        %v4524 = vpop.permute.xlu0 %4523
        %s4526 = sor.u32 256, 8
        %4527 = vbcast.lane.b32.xlu0 %v4521, %s4526
        %v4528 = vpop.permute.xlu0 %4527
        %v4529 = vlaneseq
        %v4530 = vshrl.u32 %v4529, 7
        %v4531 = vsub.s32 4, %v4530
        %v4532 = vrot.slane %v957, %v4531
        %4534 = vbcast.lane.b32.xlu0 %v4532, 256
        %v4535 = vpop.permute.xlu0 %4534
        %s4537 = sor.u32 256, 8
        %4538 = vbcast.lane.b32.xlu0 %v4532, %s4537
        %v4539 = vpop.permute.xlu0 %4538
        %v4540 = vlaneseq
        %v4541 = vshrl.u32 %v4540, 7
        %v4542 = vsub.s32 5, %v4541
        %v4543 = vrot.slane %v957, %v4542
        %4545 = vbcast.lane.b32.xlu0 %v4543, 256
        %v4546 = vpop.permute.xlu0 %4545
        %s4548 = sor.u32 256, 8
        %4549 = vbcast.lane.b32.xlu0 %v4543, %s4548
        %v4550 = vpop.permute.xlu0 %4549
        %v4551 = vlaneseq
        %v4552 = vshrl.u32 %v4551, 7
        %v4553 = vsub.s32 6, %v4552
        %v4554 = vrot.slane %v957, %v4553
        %4556 = vbcast.lane.b32.xlu0 %v4554, 256
        %v4557 = vpop.permute.xlu0 %4556
        %s4559 = sor.u32 256, 8
        %4560 = vbcast.lane.b32.xlu0 %v4554, %s4559
        %v4561 = vpop.permute.xlu0 %4560
        %v4562 = vlaneseq
        %v4563 = vshrl.u32 %v4562, 7
        %v4564 = vsub.s32 7, %v4563
        %v4565 = vrot.slane %v957, %v4564
        %4567 = vbcast.lane.b32.xlu0 %v4565, 256
        %v4568 = vpop.permute.xlu0 %4567
        %s4570 = sor.u32 256, 8
        %4571 = vbcast.lane.b32.xlu0 %v4565, %s4570
        %v4572 = vpop.permute.xlu0 %4571
        %v4573 = vlaneseq
        %v4574 = vshrl.u32 %v4573, 7
        %v4575 = vsub.s32 0, %v4574
        %v4576 = vrot.slane %v962, %v4575
        %4578 = vbcast.lane.b32.xlu0 %v4576, 256
        %v4579 = vpop.permute.xlu0 %4578
        %s4581 = sor.u32 256, 8
        %4582 = vbcast.lane.b32.xlu0 %v4576, %s4581
        %v4583 = vpop.permute.xlu0 %4582
        %v4584 = vlaneseq
        %v4585 = vshrl.u32 %v4584, 7
        %v4586 = vsub.s32 1, %v4585
        %v4587 = vrot.slane %v962, %v4586
        %4589 = vbcast.lane.b32.xlu0 %v4587, 256
        %v4590 = vpop.permute.xlu0 %4589
        %s4592 = sor.u32 256, 8
        %4593 = vbcast.lane.b32.xlu0 %v4587, %s4592
        %v4594 = vpop.permute.xlu0 %4593
        %v4595 = vlaneseq
        %v4596 = vshrl.u32 %v4595, 7
        %v4597 = vsub.s32 2, %v4596
        %v4598 = vrot.slane %v962, %v4597
        %4600 = vbcast.lane.b32.xlu0 %v4598, 256
        %v4601 = vpop.permute.xlu0 %4600
        %s4603 = sor.u32 256, 8
        %4604 = vbcast.lane.b32.xlu0 %v4598, %s4603
        %v4605 = vpop.permute.xlu0 %4604
        %v4606 = vlaneseq
        %v4607 = vshrl.u32 %v4606, 7
        %v4608 = vsub.s32 3, %v4607
        %v4609 = vrot.slane %v962, %v4608
        %4611 = vbcast.lane.b32.xlu0 %v4609, 256
        %v4612 = vpop.permute.xlu0 %4611
        %s4614 = sor.u32 256, 8
        %4615 = vbcast.lane.b32.xlu0 %v4609, %s4614
        %v4616 = vpop.permute.xlu0 %4615
        %v4617 = vlaneseq
        %v4618 = vshrl.u32 %v4617, 7
        %v4619 = vsub.s32 4, %v4618
        %v4620 = vrot.slane %v962, %v4619
        %4622 = vbcast.lane.b32.xlu0 %v4620, 256
        %v4623 = vpop.permute.xlu0 %4622
        %s4625 = sor.u32 256, 8
        %4626 = vbcast.lane.b32.xlu0 %v4620, %s4625
        %v4627 = vpop.permute.xlu0 %4626
        %v4628 = vlaneseq
        %v4629 = vshrl.u32 %v4628, 7
        %v4630 = vsub.s32 5, %v4629
        %v4631 = vrot.slane %v962, %v4630
        %4633 = vbcast.lane.b32.xlu0 %v4631, 256
        %v4634 = vpop.permute.xlu0 %4633
        %s4636 = sor.u32 256, 8
        %4637 = vbcast.lane.b32.xlu0 %v4631, %s4636
        %v4638 = vpop.permute.xlu0 %4637
        %v4639 = vlaneseq
        %v4640 = vshrl.u32 %v4639, 7
        %v4641 = vsub.s32 6, %v4640
        %v4642 = vrot.slane %v962, %v4641
        %4644 = vbcast.lane.b32.xlu0 %v4642, 256
        %v4645 = vpop.permute.xlu0 %4644
        %s4647 = sor.u32 256, 8
        %4648 = vbcast.lane.b32.xlu0 %v4642, %s4647
        %v4649 = vpop.permute.xlu0 %4648
        %v4650 = vlaneseq
        %v4651 = vshrl.u32 %v4650, 7
        %v4652 = vsub.s32 7, %v4651
        %v4653 = vrot.slane %v962, %v4652
        %4655 = vbcast.lane.b32.xlu0 %v4653, 256
        %v4656 = vpop.permute.xlu0 %4655
        %s4658 = sor.u32 256, 8
        %4659 = vbcast.lane.b32.xlu0 %v4653, %s4658
        %v4660 = vpop.permute.xlu0 %4659
        %v4661 = vlaneseq
        %v4662 = vshrl.u32 %v4661, 7
        %v4663 = vsub.s32 0, %v4662
        %v4664 = vrot.slane %v967, %v4663
        %4666 = vbcast.lane.b32.xlu0 %v4664, 256
        %v4667 = vpop.permute.xlu0 %4666
        %s4669 = sor.u32 256, 8
        %4670 = vbcast.lane.b32.xlu0 %v4664, %s4669
        %v4671 = vpop.permute.xlu0 %4670
        %v4672 = vlaneseq
        %v4673 = vshrl.u32 %v4672, 7
        %v4674 = vsub.s32 1, %v4673
        %v4675 = vrot.slane %v967, %v4674
        %4677 = vbcast.lane.b32.xlu0 %v4675, 256
        %v4678 = vpop.permute.xlu0 %4677
        %s4680 = sor.u32 256, 8
        %4681 = vbcast.lane.b32.xlu0 %v4675, %s4680
        %v4682 = vpop.permute.xlu0 %4681
        %v4683 = vlaneseq
        %v4684 = vshrl.u32 %v4683, 7
        %v4685 = vsub.s32 2, %v4684
        %v4686 = vrot.slane %v967, %v4685
        %4688 = vbcast.lane.b32.xlu0 %v4686, 256
        %v4689 = vpop.permute.xlu0 %4688
        %s4691 = sor.u32 256, 8
        %4692 = vbcast.lane.b32.xlu0 %v4686, %s4691
        %v4693 = vpop.permute.xlu0 %4692
        %v4694 = vlaneseq
        %v4695 = vshrl.u32 %v4694, 7
        %v4696 = vsub.s32 3, %v4695
        %v4697 = vrot.slane %v967, %v4696
        %4699 = vbcast.lane.b32.xlu0 %v4697, 256
        %v4700 = vpop.permute.xlu0 %4699
        %s4702 = sor.u32 256, 8
        %4703 = vbcast.lane.b32.xlu0 %v4697, %s4702
        %v4704 = vpop.permute.xlu0 %4703
        %v4705 = vlaneseq
        %v4706 = vshrl.u32 %v4705, 7
        %v4707 = vsub.s32 4, %v4706
        %v4708 = vrot.slane %v967, %v4707
        %4710 = vbcast.lane.b32.xlu0 %v4708, 256
        %v4711 = vpop.permute.xlu0 %4710
        %s4713 = sor.u32 256, 8
        %4714 = vbcast.lane.b32.xlu0 %v4708, %s4713
        %v4715 = vpop.permute.xlu0 %4714
        %v4716 = vlaneseq
        %v4717 = vshrl.u32 %v4716, 7
        %v4718 = vsub.s32 5, %v4717
        %v4719 = vrot.slane %v967, %v4718
        %4721 = vbcast.lane.b32.xlu0 %v4719, 256
        %v4722 = vpop.permute.xlu0 %4721
        %s4724 = sor.u32 256, 8
        %4725 = vbcast.lane.b32.xlu0 %v4719, %s4724
        %v4726 = vpop.permute.xlu0 %4725
        %v4727 = vlaneseq
        %v4728 = vshrl.u32 %v4727, 7
        %v4729 = vsub.s32 6, %v4728
        %v4730 = vrot.slane %v967, %v4729
        %4732 = vbcast.lane.b32.xlu0 %v4730, 256
        %v4733 = vpop.permute.xlu0 %4732
        %s4735 = sor.u32 256, 8
        %4736 = vbcast.lane.b32.xlu0 %v4730, %s4735
        %v4737 = vpop.permute.xlu0 %4736
        %v4738 = vlaneseq
        %v4739 = vshrl.u32 %v4738, 7
        %v4740 = vsub.s32 7, %v4739
        %v4741 = vrot.slane %v967, %v4740
        %4743 = vbcast.lane.b32.xlu0 %v4741, 256
        %v4744 = vpop.permute.xlu0 %4743
        %s4746 = sor.u32 256, 8
        %4747 = vbcast.lane.b32.xlu0 %v4741, %s4746
        %v4748 = vpop.permute.xlu0 %4747
        %v4749 = vmul.f32 %v3917, %v4051
        %v4750 = vmul.f32 %v3918, %v4055
        %v4751 = vmul.f32 %v3919, %v4062
        %v4752 = vmul.f32 %v3920, %v4066
        %v4753 = vmul.f32 %v3921, %v4073
        %v4754 = vmul.f32 %v3922, %v4077
        %v4755 = vmul.f32 %v3923, %v4084
        %v4756 = vmul.f32 %v3924, %v4088
        %v4757 = vmul.f32 %v3925, %v4095
        %v4758 = vmul.f32 %v3926, %v4099
        %v4759 = vmul.f32 %v3927, %v4106
        %v4760 = vmul.f32 %v3928, %v4110
        %v4761 = vmul.f32 %v3929, %v4117
        %v4762 = vmul.f32 %v3930, %v4121
        %v4763 = vmul.f32 %v3931, %v4128
        %v4764 = vmul.f32 %v3932, %v4132
        %v4765 = vmul.f32 %v3933, %v4139
        %v4766 = vmul.f32 %v3934, %v4143
        %v4767 = vmul.f32 %v3935, %v4150
        %v4768 = vmul.f32 %v3936, %v4154
        %v4769 = vmul.f32 %v3937, %v4161
        %v4770 = vmul.f32 %v3938, %v4165
        %v4771 = vmul.f32 %v3939, %v4172
        %v4772 = vmul.f32 %v3940, %v4176
        %v4773 = vmul.f32 %v3941, %v4183
        %v4774 = vmul.f32 %v3942, %v4187
        %v4775 = vmul.f32 %v3943, %v4194
        %v4776 = vmul.f32 %v3944, %v4198
        %v4777 = vmul.f32 %v3945, %v4205
        %v4778 = vmul.f32 %v3946, %v4209
        %v4779 = vmul.f32 %v3947, %v4216
        %v4780 = vmul.f32 %v3948, %v4220
        %v4781 = vmul.f32 %v3949, %v4227
        %v4782 = vmul.f32 %v3950, %v4231
        %v4783 = vmul.f32 %v3951, %v4238
        %v4784 = vmul.f32 %v3952, %v4242
        %v4785 = vmul.f32 %v3953, %v4249
        %v4786 = vmul.f32 %v3954, %v4253
        %v4787 = vmul.f32 %v3955, %v4260
        %v4788 = vmul.f32 %v3956, %v4264
        %v4789 = vmul.f32 %v3957, %v4271
        %v4790 = vmul.f32 %v3958, %v4275
        %v4791 = vmul.f32 %v3959, %v4282
        %v4792 = vmul.f32 %v3960, %v4286
        %v4793 = vmul.f32 %v3961, %v4293
        %v4794 = vmul.f32 %v3962, %v4297
        %v4795 = vmul.f32 %v3963, %v4304
        %v4796 = vmul.f32 %v3964, %v4308
        %v4797 = vmul.f32 %v3965, %v4315
        %v4798 = vmul.f32 %v3966, %v4319
        %v4799 = vmul.f32 %v3967, %v4326
        %v4800 = vmul.f32 %v3968, %v4330
        %v4801 = vmul.f32 %v3969, %v4337
        %v4802 = vmul.f32 %v3970, %v4341
        %v4803 = vmul.f32 %v3971, %v4348
        %v4804 = vmul.f32 %v3972, %v4352
        %v4805 = vmul.f32 %v3973, %v4359
        %v4806 = vmul.f32 %v3974, %v4363
        %v4807 = vmul.f32 %v3975, %v4370
        %v4808 = vmul.f32 %v3976, %v4374
        %v4809 = vmul.f32 %v3977, %v4381
        %v4810 = vmul.f32 %v3978, %v4385
        %v4811 = vmul.f32 %v3979, %v4392
        %v4812 = vmul.f32 %v3980, %v4396
        %v4813 = vmul.f32 %v3981, %v4403
        %v4814 = vmul.f32 %v3982, %v4407
        %v4815 = vmul.f32 %v3983, %v4414
        %v4816 = vmul.f32 %v3984, %v4418
        %v4817 = vmul.f32 %v3985, %v4425
        %v4818 = vmul.f32 %v3986, %v4429
        %v4819 = vmul.f32 %v3987, %v4436
        %v4820 = vmul.f32 %v3988, %v4440
        %v4821 = vmul.f32 %v3989, %v4447
        %v4822 = vmul.f32 %v3990, %v4451
        %v4823 = vmul.f32 %v3991, %v4458
        %v4824 = vmul.f32 %v3992, %v4462
        %v4825 = vmul.f32 %v3993, %v4469
        %v4826 = vmul.f32 %v3994, %v4473
        %v4827 = vmul.f32 %v3995, %v4480
        %v4828 = vmul.f32 %v3996, %v4484
        %v4829 = vmul.f32 %v3997, %v4491
        %v4830 = vmul.f32 %v3998, %v4495
        %v4831 = vmul.f32 %v3999, %v4502
        %v4832 = vmul.f32 %v4000, %v4506
        %v4833 = vmul.f32 %v4001, %v4513
        %v4834 = vmul.f32 %v4002, %v4517
        %v4835 = vmul.f32 %v4003, %v4524
        %v4836 = vmul.f32 %v4004, %v4528
        %v4837 = vmul.f32 %v4005, %v4535
        %v4838 = vmul.f32 %v4006, %v4539
        %v4839 = vmul.f32 %v4007, %v4546
        %v4840 = vmul.f32 %v4008, %v4550
        %v4841 = vmul.f32 %v4009, %v4557
        %v4842 = vmul.f32 %v4010, %v4561
        %v4843 = vmul.f32 %v4011, %v4568
        %v4844 = vmul.f32 %v4012, %v4572
        %v4845 = vmul.f32 %v4013, %v4579
        %v4846 = vmul.f32 %v4014, %v4583
        %v4847 = vmul.f32 %v4015, %v4590
        %v4848 = vmul.f32 %v4016, %v4594
        %v4849 = vmul.f32 %v4017, %v4601
        %v4850 = vmul.f32 %v4018, %v4605
        %v4851 = vmul.f32 %v4019, %v4612
        %v4852 = vmul.f32 %v4020, %v4616
        %v4853 = vmul.f32 %v4021, %v4623
        %v4854 = vmul.f32 %v4022, %v4627
        %v4855 = vmul.f32 %v4023, %v4634
        %v4856 = vmul.f32 %v4024, %v4638
        %v4857 = vmul.f32 %v4025, %v4645
        %v4858 = vmul.f32 %v4026, %v4649
        %v4859 = vmul.f32 %v4027, %v4656
        %v4860 = vmul.f32 %v4028, %v4660
        %v4861 = vmul.f32 %v4029, %v4667
        %v4862 = vmul.f32 %v4030, %v4671
        %v4863 = vmul.f32 %v4031, %v4678
        %v4864 = vmul.f32 %v4032, %v4682
        %v4865 = vmul.f32 %v4033, %v4689
        %v4866 = vmul.f32 %v4034, %v4693
        %v4867 = vmul.f32 %v4035, %v4700
        %v4868 = vmul.f32 %v4036, %v4704
        %v4869 = vmul.f32 %v4037, %v4711
        %v4870 = vmul.f32 %v4038, %v4715
        %v4871 = vmul.f32 %v4039, %v4722
        %v4872 = vmul.f32 %v4040, %v4726
        %v4873 = vmul.f32 %v4041, %v4733
        %v4874 = vmul.f32 %v4042, %v4737
        %v4875 = vmul.f32 %v4043, %v4744
        %v4876 = vmul.f32 %v4044, %v4748
        %v4877 = vsel %vm506, %v4749, 0.0
        %v4878 = vsel %vm506, %v4750, 0.0
        %v4879 = vadd.f32 %v4877, %v4878
        %v4880 = vrot.slane %v4879, 4
        %v4881 = vadd.f32 %v4879, %v4880
        %v4882 = vrot.slane %v4881, 2
        %v4883 = vadd.f32 %v4881, %v4882
        %v4884 = vrot.slane %v4883, 1
        %v4885 = vadd.f32 %v4883, %v4884
        %v4886 = vsel %vm506, %v4751, 0.0
        %v4887 = vsel %vm506, %v4752, 0.0
        %v4888 = vadd.f32 %v4886, %v4887
        %v4889 = vrot.slane %v4888, 4
        %v4890 = vadd.f32 %v4888, %v4889
        %v4891 = vrot.slane %v4890, 2
        %v4892 = vadd.f32 %v4890, %v4891
        %v4893 = vrot.slane %v4892, 1
        %v4894 = vadd.f32 %v4892, %v4893
        %v4895 = vsel %vm506, %v4753, 0.0
        %v4896 = vsel %vm506, %v4754, 0.0
        %v4897 = vadd.f32 %v4895, %v4896
        %v4898 = vrot.slane %v4897, 4
        %v4899 = vadd.f32 %v4897, %v4898
        %v4900 = vrot.slane %v4899, 2
        %v4901 = vadd.f32 %v4899, %v4900
        %v4902 = vrot.slane %v4901, 1
        %v4903 = vadd.f32 %v4901, %v4902
        %v4904 = vsel %vm506, %v4755, 0.0
        %v4905 = vsel %vm506, %v4756, 0.0
        %v4906 = vadd.f32 %v4904, %v4905
        %v4907 = vrot.slane %v4906, 4
        %v4908 = vadd.f32 %v4906, %v4907
        %v4909 = vrot.slane %v4908, 2
        %v4910 = vadd.f32 %v4908, %v4909
        %v4911 = vrot.slane %v4910, 1
        %v4912 = vadd.f32 %v4910, %v4911
        %v4913 = vsel %vm506, %v4757, 0.0
        %v4914 = vsel %vm506, %v4758, 0.0
        %v4915 = vadd.f32 %v4913, %v4914
        %v4916 = vrot.slane %v4915, 4
        %v4917 = vadd.f32 %v4915, %v4916
        %v4918 = vrot.slane %v4917, 2
        %v4919 = vadd.f32 %v4917, %v4918
        %v4920 = vrot.slane %v4919, 1
        %v4921 = vadd.f32 %v4919, %v4920
        %v4922 = vsel %vm506, %v4759, 0.0
        %v4923 = vsel %vm506, %v4760, 0.0
        %v4924 = vadd.f32 %v4922, %v4923
        %v4925 = vrot.slane %v4924, 4
        %v4926 = vadd.f32 %v4924, %v4925
        %v4927 = vrot.slane %v4926, 2
        %v4928 = vadd.f32 %v4926, %v4927
        %v4929 = vrot.slane %v4928, 1
        %v4930 = vadd.f32 %v4928, %v4929
        %v4931 = vsel %vm506, %v4761, 0.0
        %v4932 = vsel %vm506, %v4762, 0.0
        %v4933 = vadd.f32 %v4931, %v4932
        %v4934 = vrot.slane %v4933, 4
        %v4935 = vadd.f32 %v4933, %v4934
        %v4936 = vrot.slane %v4935, 2
        %v4937 = vadd.f32 %v4935, %v4936
        %v4938 = vrot.slane %v4937, 1
        %v4939 = vadd.f32 %v4937, %v4938
        %v4940 = vsel %vm506, %v4763, 0.0
        %v4941 = vsel %vm506, %v4764, 0.0
        %v4942 = vadd.f32 %v4940, %v4941
        %v4943 = vrot.slane %v4942, 4
        %v4944 = vadd.f32 %v4942, %v4943
        %v4945 = vrot.slane %v4944, 2
        %v4946 = vadd.f32 %v4944, %v4945
        %v4947 = vrot.slane %v4946, 1
        %v4948 = vadd.f32 %v4946, %v4947
        %v4949 = vsel %vm506, %v4765, 0.0
        %v4950 = vsel %vm506, %v4766, 0.0
        %v4951 = vadd.f32 %v4949, %v4950
        %v4952 = vrot.slane %v4951, 4
        %v4953 = vadd.f32 %v4951, %v4952
        %v4954 = vrot.slane %v4953, 2
        %v4955 = vadd.f32 %v4953, %v4954
        %v4956 = vrot.slane %v4955, 1
        %v4957 = vadd.f32 %v4955, %v4956
        %v4958 = vsel %vm506, %v4767, 0.0
        %v4959 = vsel %vm506, %v4768, 0.0
        %v4960 = vadd.f32 %v4958, %v4959
        %v4961 = vrot.slane %v4960, 4
        %v4962 = vadd.f32 %v4960, %v4961
        %v4963 = vrot.slane %v4962, 2
        %v4964 = vadd.f32 %v4962, %v4963
        %v4965 = vrot.slane %v4964, 1
        %v4966 = vadd.f32 %v4964, %v4965
        %v4967 = vsel %vm506, %v4769, 0.0
        %v4968 = vsel %vm506, %v4770, 0.0
        %v4969 = vadd.f32 %v4967, %v4968
        %v4970 = vrot.slane %v4969, 4
        %v4971 = vadd.f32 %v4969, %v4970
        %v4972 = vrot.slane %v4971, 2
        %v4973 = vadd.f32 %v4971, %v4972
        %v4974 = vrot.slane %v4973, 1
        %v4975 = vadd.f32 %v4973, %v4974
        %v4976 = vsel %vm506, %v4771, 0.0
        %v4977 = vsel %vm506, %v4772, 0.0
        %v4978 = vadd.f32 %v4976, %v4977
        %v4979 = vrot.slane %v4978, 4
        %v4980 = vadd.f32 %v4978, %v4979
        %v4981 = vrot.slane %v4980, 2
        %v4982 = vadd.f32 %v4980, %v4981
        %v4983 = vrot.slane %v4982, 1
        %v4984 = vadd.f32 %v4982, %v4983
        %v4985 = vsel %vm506, %v4773, 0.0
        %v4986 = vsel %vm506, %v4774, 0.0
        %v4987 = vadd.f32 %v4985, %v4986
        %v4988 = vrot.slane %v4987, 4
        %v4989 = vadd.f32 %v4987, %v4988
        %v4990 = vrot.slane %v4989, 2
        %v4991 = vadd.f32 %v4989, %v4990
        %v4992 = vrot.slane %v4991, 1
        %v4993 = vadd.f32 %v4991, %v4992
        %v4994 = vsel %vm506, %v4775, 0.0
        %v4995 = vsel %vm506, %v4776, 0.0
        %v4996 = vadd.f32 %v4994, %v4995
        %v4997 = vrot.slane %v4996, 4
        %v4998 = vadd.f32 %v4996, %v4997
        %v4999 = vrot.slane %v4998, 2
        %v5000 = vadd.f32 %v4998, %v4999
        %v5001 = vrot.slane %v5000, 1
        %v5002 = vadd.f32 %v5000, %v5001
        %v5003 = vsel %vm506, %v4777, 0.0
        %v5004 = vsel %vm506, %v4778, 0.0
        %v5005 = vadd.f32 %v5003, %v5004
        %v5006 = vrot.slane %v5005, 4
        %v5007 = vadd.f32 %v5005, %v5006
        %v5008 = vrot.slane %v5007, 2
        %v5009 = vadd.f32 %v5007, %v5008
        %v5010 = vrot.slane %v5009, 1
        %v5011 = vadd.f32 %v5009, %v5010
        %v5012 = vsel %vm506, %v4779, 0.0
        %v5013 = vsel %vm506, %v4780, 0.0
        %v5014 = vadd.f32 %v5012, %v5013
        %v5015 = vrot.slane %v5014, 4
        %v5016 = vadd.f32 %v5014, %v5015
        %v5017 = vrot.slane %v5016, 2
        %v5018 = vadd.f32 %v5016, %v5017
        %v5019 = vrot.slane %v5018, 1
        %v5020 = vadd.f32 %v5018, %v5019
        %v5021 = vsel %vm506, %v4781, 0.0
        %v5022 = vsel %vm506, %v4782, 0.0
        %v5023 = vadd.f32 %v5021, %v5022
        %v5024 = vrot.slane %v5023, 4
        %v5025 = vadd.f32 %v5023, %v5024
        %v5026 = vrot.slane %v5025, 2
        %v5027 = vadd.f32 %v5025, %v5026
        %v5028 = vrot.slane %v5027, 1
        %v5029 = vadd.f32 %v5027, %v5028
        %v5030 = vsel %vm506, %v4783, 0.0
        %v5031 = vsel %vm506, %v4784, 0.0
        %v5032 = vadd.f32 %v5030, %v5031
        %v5033 = vrot.slane %v5032, 4
        %v5034 = vadd.f32 %v5032, %v5033
        %v5035 = vrot.slane %v5034, 2
        %v5036 = vadd.f32 %v5034, %v5035
        %v5037 = vrot.slane %v5036, 1
        %v5038 = vadd.f32 %v5036, %v5037
        %v5039 = vsel %vm506, %v4785, 0.0
        %v5040 = vsel %vm506, %v4786, 0.0
        %v5041 = vadd.f32 %v5039, %v5040
        %v5042 = vrot.slane %v5041, 4
        %v5043 = vadd.f32 %v5041, %v5042
        %v5044 = vrot.slane %v5043, 2
        %v5045 = vadd.f32 %v5043, %v5044
        %v5046 = vrot.slane %v5045, 1
        %v5047 = vadd.f32 %v5045, %v5046
        %v5048 = vsel %vm506, %v4787, 0.0
        %v5049 = vsel %vm506, %v4788, 0.0
        %v5050 = vadd.f32 %v5048, %v5049
        %v5051 = vrot.slane %v5050, 4
        %v5052 = vadd.f32 %v5050, %v5051
        %v5053 = vrot.slane %v5052, 2
        %v5054 = vadd.f32 %v5052, %v5053
        %v5055 = vrot.slane %v5054, 1
        %v5056 = vadd.f32 %v5054, %v5055
        %v5057 = vsel %vm506, %v4789, 0.0
        %v5058 = vsel %vm506, %v4790, 0.0
        %v5059 = vadd.f32 %v5057, %v5058
        %v5060 = vrot.slane %v5059, 4
        %v5061 = vadd.f32 %v5059, %v5060
        %v5062 = vrot.slane %v5061, 2
        %v5063 = vadd.f32 %v5061, %v5062
        %v5064 = vrot.slane %v5063, 1
        %v5065 = vadd.f32 %v5063, %v5064
        %v5066 = vsel %vm506, %v4791, 0.0
        %v5067 = vsel %vm506, %v4792, 0.0
        %v5068 = vadd.f32 %v5066, %v5067
        %v5069 = vrot.slane %v5068, 4
        %v5070 = vadd.f32 %v5068, %v5069
        %v5071 = vrot.slane %v5070, 2
        %v5072 = vadd.f32 %v5070, %v5071
        %v5073 = vrot.slane %v5072, 1
        %v5074 = vadd.f32 %v5072, %v5073
        %v5075 = vsel %vm506, %v4793, 0.0
        %v5076 = vsel %vm506, %v4794, 0.0
        %v5077 = vadd.f32 %v5075, %v5076
        %v5078 = vrot.slane %v5077, 4
        %v5079 = vadd.f32 %v5077, %v5078
        %v5080 = vrot.slane %v5079, 2
        %v5081 = vadd.f32 %v5079, %v5080
        %v5082 = vrot.slane %v5081, 1
        %v5083 = vadd.f32 %v5081, %v5082
        %v5084 = vsel %vm506, %v4795, 0.0
        %v5085 = vsel %vm506, %v4796, 0.0
        %v5086 = vadd.f32 %v5084, %v5085
        %v5087 = vrot.slane %v5086, 4
        %v5088 = vadd.f32 %v5086, %v5087
        %v5089 = vrot.slane %v5088, 2
        %v5090 = vadd.f32 %v5088, %v5089
        %v5091 = vrot.slane %v5090, 1
        %v5092 = vadd.f32 %v5090, %v5091
        %v5093 = vsel %vm506, %v4797, 0.0
        %v5094 = vsel %vm506, %v4798, 0.0
        %v5095 = vadd.f32 %v5093, %v5094
        %v5096 = vrot.slane %v5095, 4
        %v5097 = vadd.f32 %v5095, %v5096
        %v5098 = vrot.slane %v5097, 2
        %v5099 = vadd.f32 %v5097, %v5098
        %v5100 = vrot.slane %v5099, 1
        %v5101 = vadd.f32 %v5099, %v5100
        %v5102 = vsel %vm506, %v4799, 0.0
        %v5103 = vsel %vm506, %v4800, 0.0
        %v5104 = vadd.f32 %v5102, %v5103
        %v5105 = vrot.slane %v5104, 4
        %v5106 = vadd.f32 %v5104, %v5105
        %v5107 = vrot.slane %v5106, 2
        %v5108 = vadd.f32 %v5106, %v5107
        %v5109 = vrot.slane %v5108, 1
        %v5110 = vadd.f32 %v5108, %v5109
        %v5111 = vsel %vm506, %v4801, 0.0
        %v5112 = vsel %vm506, %v4802, 0.0
        %v5113 = vadd.f32 %v5111, %v5112
        %v5114 = vrot.slane %v5113, 4
        %v5115 = vadd.f32 %v5113, %v5114
        %v5116 = vrot.slane %v5115, 2
        %v5117 = vadd.f32 %v5115, %v5116
        %v5118 = vrot.slane %v5117, 1
        %v5119 = vadd.f32 %v5117, %v5118
        %v5120 = vsel %vm506, %v4803, 0.0
        %v5121 = vsel %vm506, %v4804, 0.0
        %v5122 = vadd.f32 %v5120, %v5121
        %v5123 = vrot.slane %v5122, 4
        %v5124 = vadd.f32 %v5122, %v5123
        %v5125 = vrot.slane %v5124, 2
        %v5126 = vadd.f32 %v5124, %v5125
        %v5127 = vrot.slane %v5126, 1
        %v5128 = vadd.f32 %v5126, %v5127
        %v5129 = vsel %vm506, %v4805, 0.0
        %v5130 = vsel %vm506, %v4806, 0.0
        %v5131 = vadd.f32 %v5129, %v5130
        %v5132 = vrot.slane %v5131, 4
        %v5133 = vadd.f32 %v5131, %v5132
        %v5134 = vrot.slane %v5133, 2
        %v5135 = vadd.f32 %v5133, %v5134
        %v5136 = vrot.slane %v5135, 1
        %v5137 = vadd.f32 %v5135, %v5136
        %v5138 = vsel %vm506, %v4807, 0.0
        %v5139 = vsel %vm506, %v4808, 0.0
        %v5140 = vadd.f32 %v5138, %v5139
        %v5141 = vrot.slane %v5140, 4
        %v5142 = vadd.f32 %v5140, %v5141
        %v5143 = vrot.slane %v5142, 2
        %v5144 = vadd.f32 %v5142, %v5143
        %v5145 = vrot.slane %v5144, 1
        %v5146 = vadd.f32 %v5144, %v5145
        %v5147 = vsel %vm506, %v4809, 0.0
        %v5148 = vsel %vm506, %v4810, 0.0
        %v5149 = vadd.f32 %v5147, %v5148
        %v5150 = vrot.slane %v5149, 4
        %v5151 = vadd.f32 %v5149, %v5150
        %v5152 = vrot.slane %v5151, 2
        %v5153 = vadd.f32 %v5151, %v5152
        %v5154 = vrot.slane %v5153, 1
        %v5155 = vadd.f32 %v5153, %v5154
        %v5156 = vsel %vm506, %v4811, 0.0
        %v5157 = vsel %vm506, %v4812, 0.0
        %v5158 = vadd.f32 %v5156, %v5157
        %v5159 = vrot.slane %v5158, 4
        %v5160 = vadd.f32 %v5158, %v5159
        %v5161 = vrot.slane %v5160, 2
        %v5162 = vadd.f32 %v5160, %v5161
        %v5163 = vrot.slane %v5162, 1
        %v5164 = vadd.f32 %v5162, %v5163
        %v5165 = vsel %vm506, %v4813, 0.0
        %v5166 = vsel %vm506, %v4814, 0.0
        %v5167 = vadd.f32 %v5165, %v5166
        %v5168 = vrot.slane %v5167, 4
        %v5169 = vadd.f32 %v5167, %v5168
        %v5170 = vrot.slane %v5169, 2
        %v5171 = vadd.f32 %v5169, %v5170
        %v5172 = vrot.slane %v5171, 1
        %v5173 = vadd.f32 %v5171, %v5172
        %v5174 = vsel %vm506, %v4815, 0.0
        %v5175 = vsel %vm506, %v4816, 0.0
        %v5176 = vadd.f32 %v5174, %v5175
        %v5177 = vrot.slane %v5176, 4
        %v5178 = vadd.f32 %v5176, %v5177
        %v5179 = vrot.slane %v5178, 2
        %v5180 = vadd.f32 %v5178, %v5179
        %v5181 = vrot.slane %v5180, 1
        %v5182 = vadd.f32 %v5180, %v5181
        %v5183 = vsel %vm506, %v4817, 0.0
        %v5184 = vsel %vm506, %v4818, 0.0
        %v5185 = vadd.f32 %v5183, %v5184
        %v5186 = vrot.slane %v5185, 4
        %v5187 = vadd.f32 %v5185, %v5186
        %v5188 = vrot.slane %v5187, 2
        %v5189 = vadd.f32 %v5187, %v5188
        %v5190 = vrot.slane %v5189, 1
        %v5191 = vadd.f32 %v5189, %v5190
        %v5192 = vsel %vm506, %v4819, 0.0
        %v5193 = vsel %vm506, %v4820, 0.0
        %v5194 = vadd.f32 %v5192, %v5193
        %v5195 = vrot.slane %v5194, 4
        %v5196 = vadd.f32 %v5194, %v5195
        %v5197 = vrot.slane %v5196, 2
        %v5198 = vadd.f32 %v5196, %v5197
        %v5199 = vrot.slane %v5198, 1
        %v5200 = vadd.f32 %v5198, %v5199
        %v5201 = vsel %vm506, %v4821, 0.0
        %v5202 = vsel %vm506, %v4822, 0.0
        %v5203 = vadd.f32 %v5201, %v5202
        %v5204 = vrot.slane %v5203, 4
        %v5205 = vadd.f32 %v5203, %v5204
        %v5206 = vrot.slane %v5205, 2
        %v5207 = vadd.f32 %v5205, %v5206
        %v5208 = vrot.slane %v5207, 1
        %v5209 = vadd.f32 %v5207, %v5208
        %v5210 = vsel %vm506, %v4823, 0.0
        %v5211 = vsel %vm506, %v4824, 0.0
        %v5212 = vadd.f32 %v5210, %v5211
        %v5213 = vrot.slane %v5212, 4
        %v5214 = vadd.f32 %v5212, %v5213
        %v5215 = vrot.slane %v5214, 2
        %v5216 = vadd.f32 %v5214, %v5215
        %v5217 = vrot.slane %v5216, 1
        %v5218 = vadd.f32 %v5216, %v5217
        %v5219 = vsel %vm506, %v4825, 0.0
        %v5220 = vsel %vm506, %v4826, 0.0
        %v5221 = vadd.f32 %v5219, %v5220
        %v5222 = vrot.slane %v5221, 4
        %v5223 = vadd.f32 %v5221, %v5222
        %v5224 = vrot.slane %v5223, 2
        %v5225 = vadd.f32 %v5223, %v5224
        %v5226 = vrot.slane %v5225, 1
        %v5227 = vadd.f32 %v5225, %v5226
        %v5228 = vsel %vm506, %v4827, 0.0
        %v5229 = vsel %vm506, %v4828, 0.0
        %v5230 = vadd.f32 %v5228, %v5229
        %v5231 = vrot.slane %v5230, 4
        %v5232 = vadd.f32 %v5230, %v5231
        %v5233 = vrot.slane %v5232, 2
        %v5234 = vadd.f32 %v5232, %v5233
        %v5235 = vrot.slane %v5234, 1
        %v5236 = vadd.f32 %v5234, %v5235
        %v5237 = vsel %vm506, %v4829, 0.0
        %v5238 = vsel %vm506, %v4830, 0.0
        %v5239 = vadd.f32 %v5237, %v5238
        %v5240 = vrot.slane %v5239, 4
        %v5241 = vadd.f32 %v5239, %v5240
        %v5242 = vrot.slane %v5241, 2
        %v5243 = vadd.f32 %v5241, %v5242
        %v5244 = vrot.slane %v5243, 1
        %v5245 = vadd.f32 %v5243, %v5244
        %v5246 = vsel %vm506, %v4831, 0.0
        %v5247 = vsel %vm506, %v4832, 0.0
        %v5248 = vadd.f32 %v5246, %v5247
        %v5249 = vrot.slane %v5248, 4
        %v5250 = vadd.f32 %v5248, %v5249
        %v5251 = vrot.slane %v5250, 2
        %v5252 = vadd.f32 %v5250, %v5251
        %v5253 = vrot.slane %v5252, 1
        %v5254 = vadd.f32 %v5252, %v5253
        %v5255 = vsel %vm506, %v4833, 0.0
        %v5256 = vsel %vm506, %v4834, 0.0
        %v5257 = vadd.f32 %v5255, %v5256
        %v5258 = vrot.slane %v5257, 4
        %v5259 = vadd.f32 %v5257, %v5258
        %v5260 = vrot.slane %v5259, 2
        %v5261 = vadd.f32 %v5259, %v5260
        %v5262 = vrot.slane %v5261, 1
        %v5263 = vadd.f32 %v5261, %v5262
        %v5264 = vsel %vm506, %v4835, 0.0
        %v5265 = vsel %vm506, %v4836, 0.0
        %v5266 = vadd.f32 %v5264, %v5265
        %v5267 = vrot.slane %v5266, 4
        %v5268 = vadd.f32 %v5266, %v5267
        %v5269 = vrot.slane %v5268, 2
        %v5270 = vadd.f32 %v5268, %v5269
        %v5271 = vrot.slane %v5270, 1
        %v5272 = vadd.f32 %v5270, %v5271
        %v5273 = vsel %vm506, %v4837, 0.0
        %v5274 = vsel %vm506, %v4838, 0.0
        %v5275 = vadd.f32 %v5273, %v5274
        %v5276 = vrot.slane %v5275, 4
        %v5277 = vadd.f32 %v5275, %v5276
        %v5278 = vrot.slane %v5277, 2
        %v5279 = vadd.f32 %v5277, %v5278
        %v5280 = vrot.slane %v5279, 1
        %v5281 = vadd.f32 %v5279, %v5280
        %v5282 = vsel %vm506, %v4839, 0.0
        %v5283 = vsel %vm506, %v4840, 0.0
        %v5284 = vadd.f32 %v5282, %v5283
        %v5285 = vrot.slane %v5284, 4
        %v5286 = vadd.f32 %v5284, %v5285
        %v5287 = vrot.slane %v5286, 2
        %v5288 = vadd.f32 %v5286, %v5287
        %v5289 = vrot.slane %v5288, 1
        %v5290 = vadd.f32 %v5288, %v5289
        %v5291 = vsel %vm506, %v4841, 0.0
        %v5292 = vsel %vm506, %v4842, 0.0
        %v5293 = vadd.f32 %v5291, %v5292
        %v5294 = vrot.slane %v5293, 4
        %v5295 = vadd.f32 %v5293, %v5294
        %v5296 = vrot.slane %v5295, 2
        %v5297 = vadd.f32 %v5295, %v5296
        %v5298 = vrot.slane %v5297, 1
        %v5299 = vadd.f32 %v5297, %v5298
        %v5300 = vsel %vm506, %v4843, 0.0
        %v5301 = vsel %vm506, %v4844, 0.0
        %v5302 = vadd.f32 %v5300, %v5301
        %v5303 = vrot.slane %v5302, 4
        %v5304 = vadd.f32 %v5302, %v5303
        %v5305 = vrot.slane %v5304, 2
        %v5306 = vadd.f32 %v5304, %v5305
        %v5307 = vrot.slane %v5306, 1
        %v5308 = vadd.f32 %v5306, %v5307
        %v5309 = vsel %vm506, %v4845, 0.0
        %v5310 = vsel %vm506, %v4846, 0.0
        %v5311 = vadd.f32 %v5309, %v5310
        %v5312 = vrot.slane %v5311, 4
        %v5313 = vadd.f32 %v5311, %v5312
        %v5314 = vrot.slane %v5313, 2
        %v5315 = vadd.f32 %v5313, %v5314
        %v5316 = vrot.slane %v5315, 1
        %v5317 = vadd.f32 %v5315, %v5316
        %v5318 = vsel %vm506, %v4847, 0.0
        %v5319 = vsel %vm506, %v4848, 0.0
        %v5320 = vadd.f32 %v5318, %v5319
        %v5321 = vrot.slane %v5320, 4
        %v5322 = vadd.f32 %v5320, %v5321
        %v5323 = vrot.slane %v5322, 2
        %v5324 = vadd.f32 %v5322, %v5323
        %v5325 = vrot.slane %v5324, 1
        %v5326 = vadd.f32 %v5324, %v5325
        %v5327 = vsel %vm506, %v4849, 0.0
        %v5328 = vsel %vm506, %v4850, 0.0
        %v5329 = vadd.f32 %v5327, %v5328
        %v5330 = vrot.slane %v5329, 4
        %v5331 = vadd.f32 %v5329, %v5330
        %v5332 = vrot.slane %v5331, 2
        %v5333 = vadd.f32 %v5331, %v5332
        %v5334 = vrot.slane %v5333, 1
        %v5335 = vadd.f32 %v5333, %v5334
        %v5336 = vsel %vm506, %v4851, 0.0
        %v5337 = vsel %vm506, %v4852, 0.0
        %v5338 = vadd.f32 %v5336, %v5337
        %v5339 = vrot.slane %v5338, 4
        %v5340 = vadd.f32 %v5338, %v5339
        %v5341 = vrot.slane %v5340, 2
        %v5342 = vadd.f32 %v5340, %v5341
        %v5343 = vrot.slane %v5342, 1
        %v5344 = vadd.f32 %v5342, %v5343
        %v5345 = vsel %vm506, %v4853, 0.0
        %v5346 = vsel %vm506, %v4854, 0.0
        %v5347 = vadd.f32 %v5345, %v5346
        %v5348 = vrot.slane %v5347, 4
        %v5349 = vadd.f32 %v5347, %v5348
        %v5350 = vrot.slane %v5349, 2
        %v5351 = vadd.f32 %v5349, %v5350
        %v5352 = vrot.slane %v5351, 1
        %v5353 = vadd.f32 %v5351, %v5352
        %v5354 = vsel %vm506, %v4855, 0.0
        %v5355 = vsel %vm506, %v4856, 0.0
        %v5356 = vadd.f32 %v5354, %v5355
        %v5357 = vrot.slane %v5356, 4
        %v5358 = vadd.f32 %v5356, %v5357
        %v5359 = vrot.slane %v5358, 2
        %v5360 = vadd.f32 %v5358, %v5359
        %v5361 = vrot.slane %v5360, 1
        %v5362 = vadd.f32 %v5360, %v5361
        %v5363 = vsel %vm506, %v4857, 0.0
        %v5364 = vsel %vm506, %v4858, 0.0
        %v5365 = vadd.f32 %v5363, %v5364
        %v5366 = vrot.slane %v5365, 4
        %v5367 = vadd.f32 %v5365, %v5366
        %v5368 = vrot.slane %v5367, 2
        %v5369 = vadd.f32 %v5367, %v5368
        %v5370 = vrot.slane %v5369, 1
        %v5371 = vadd.f32 %v5369, %v5370
        %v5372 = vsel %vm506, %v4859, 0.0
        %v5373 = vsel %vm506, %v4860, 0.0
        %v5374 = vadd.f32 %v5372, %v5373
        %v5375 = vrot.slane %v5374, 4
        %v5376 = vadd.f32 %v5374, %v5375
        %v5377 = vrot.slane %v5376, 2
        %v5378 = vadd.f32 %v5376, %v5377
        %v5379 = vrot.slane %v5378, 1
        %v5380 = vadd.f32 %v5378, %v5379
        %v5381 = vsel %vm506, %v4861, 0.0
        %v5382 = vsel %vm506, %v4862, 0.0
        %v5383 = vadd.f32 %v5381, %v5382
        %v5384 = vrot.slane %v5383, 4
        %v5385 = vadd.f32 %v5383, %v5384
        %v5386 = vrot.slane %v5385, 2
        %v5387 = vadd.f32 %v5385, %v5386
        %v5388 = vrot.slane %v5387, 1
        %v5389 = vadd.f32 %v5387, %v5388
        %v5390 = vsel %vm506, %v4863, 0.0
        %v5391 = vsel %vm506, %v4864, 0.0
        %v5392 = vadd.f32 %v5390, %v5391
        %v5393 = vrot.slane %v5392, 4
        %v5394 = vadd.f32 %v5392, %v5393
        %v5395 = vrot.slane %v5394, 2
        %v5396 = vadd.f32 %v5394, %v5395
        %v5397 = vrot.slane %v5396, 1
        %v5398 = vadd.f32 %v5396, %v5397
        %v5399 = vsel %vm506, %v4865, 0.0
        %v5400 = vsel %vm506, %v4866, 0.0
        %v5401 = vadd.f32 %v5399, %v5400
        %v5402 = vrot.slane %v5401, 4
        %v5403 = vadd.f32 %v5401, %v5402
        %v5404 = vrot.slane %v5403, 2
        %v5405 = vadd.f32 %v5403, %v5404
        %v5406 = vrot.slane %v5405, 1
        %v5407 = vadd.f32 %v5405, %v5406
        %v5408 = vsel %vm506, %v4867, 0.0
        %v5409 = vsel %vm506, %v4868, 0.0
        %v5410 = vadd.f32 %v5408, %v5409
        %v5411 = vrot.slane %v5410, 4
        %v5412 = vadd.f32 %v5410, %v5411
        %v5413 = vrot.slane %v5412, 2
        %v5414 = vadd.f32 %v5412, %v5413
        %v5415 = vrot.slane %v5414, 1
        %v5416 = vadd.f32 %v5414, %v5415
        %v5417 = vsel %vm506, %v4869, 0.0
        %v5418 = vsel %vm506, %v4870, 0.0
        %v5419 = vadd.f32 %v5417, %v5418
        %v5420 = vrot.slane %v5419, 4
        %v5421 = vadd.f32 %v5419, %v5420
        %v5422 = vrot.slane %v5421, 2
        %v5423 = vadd.f32 %v5421, %v5422
        %v5424 = vrot.slane %v5423, 1
        %v5425 = vadd.f32 %v5423, %v5424
        %v5426 = vsel %vm506, %v4871, 0.0
        %v5427 = vsel %vm506, %v4872, 0.0
        %v5428 = vadd.f32 %v5426, %v5427
        %v5429 = vrot.slane %v5428, 4
        %v5430 = vadd.f32 %v5428, %v5429
        %v5431 = vrot.slane %v5430, 2
        %v5432 = vadd.f32 %v5430, %v5431
        %v5433 = vrot.slane %v5432, 1
        %v5434 = vadd.f32 %v5432, %v5433
        %v5435 = vsel %vm506, %v4873, 0.0
        %v5436 = vsel %vm506, %v4874, 0.0
        %v5437 = vadd.f32 %v5435, %v5436
        %v5438 = vrot.slane %v5437, 4
        %v5439 = vadd.f32 %v5437, %v5438
        %v5440 = vrot.slane %v5439, 2
        %v5441 = vadd.f32 %v5439, %v5440
        %v5442 = vrot.slane %v5441, 1
        %v5443 = vadd.f32 %v5441, %v5442
        %v5444 = vsel %vm506, %v4875, 0.0
        %v5445 = vsel %vm506, %v4876, 0.0
        %v5446 = vadd.f32 %v5444, %v5445
        %v5447 = vrot.slane %v5446, 4
        %v5448 = vadd.f32 %v5446, %v5447
        %v5449 = vrot.slane %v5448, 2
        %v5450 = vadd.f32 %v5448, %v5449
        %v5451 = vrot.slane %v5450, 1
        %v5452 = vadd.f32 %v5450, %v5451
        %v5453 = vld [vmem:[%s7] sm:$0x1]
        %v5455 = vlaneseq
        %v5456 = vshrl.u32 %v5455, 7
        %v5457 = vsub.s32 0, %v5456
        %v5458 = vrot.slane %v5453, %v5457
        %v5460 = vmul.f32 %v5458, %v486
        %v5461 = vmul.f32 %v5458, %v487
        %v5462 = vmul.f32 %v5458, %v488
        %v5463 = vmul.f32 %v5458, %v489
        %v5464 = vmul.f32 %v5458, %v490
        %v5465 = vmul.f32 %v5458, %v491
        %v5466 = vmul.f32 %v5458, %v492
        %v5467 = vmul.f32 %v5458, %v493
        %v5476 = vrot.slane %v5460, 1
        %v5477 = vrot.slane %v5460, 2
        %v5478 = vrot.slane %v5460, 3
        %v5479 = vrot.slane %v5460, 4
        %v5480 = vrot.slane %v5460, 5
        %v5481 = vrot.slane %v5460, 6
        %v5482 = vrot.slane %v5460, 7
        %v5483 = vrot.slane %v5461, 1
        %v5484 = vrot.slane %v5461, 2
        %v5485 = vrot.slane %v5461, 3
        %v5486 = vrot.slane %v5461, 4
        %v5487 = vrot.slane %v5461, 5
        %v5488 = vrot.slane %v5461, 6
        %v5489 = vrot.slane %v5461, 7
        %v5490 = vrot.slane %v5462, 1
        %v5491 = vrot.slane %v5462, 2
        %v5492 = vrot.slane %v5462, 3
        %v5493 = vrot.slane %v5462, 4
        %v5494 = vrot.slane %v5462, 5
        %v5495 = vrot.slane %v5462, 6
        %v5496 = vrot.slane %v5462, 7
        %v5497 = vrot.slane %v5463, 1
        %v5498 = vrot.slane %v5463, 2
        %v5499 = vrot.slane %v5463, 3
        %v5500 = vrot.slane %v5463, 4
        %v5501 = vrot.slane %v5463, 5
        %v5502 = vrot.slane %v5463, 6
        %v5503 = vrot.slane %v5463, 7
        %v5504 = vrot.slane %v5464, 1
        %v5505 = vrot.slane %v5464, 2
        %v5506 = vrot.slane %v5464, 3
        %v5507 = vrot.slane %v5464, 4
        %v5508 = vrot.slane %v5464, 5
        %v5509 = vrot.slane %v5464, 6
        %v5510 = vrot.slane %v5464, 7
        %v5511 = vrot.slane %v5465, 1
        %v5512 = vrot.slane %v5465, 2
        %v5513 = vrot.slane %v5465, 3
        %v5514 = vrot.slane %v5465, 4
        %v5515 = vrot.slane %v5465, 5
        %v5516 = vrot.slane %v5465, 6
        %v5517 = vrot.slane %v5465, 7
        %v5518 = vrot.slane %v5466, 1
        %v5519 = vrot.slane %v5466, 2
        %v5520 = vrot.slane %v5466, 3
        %v5521 = vrot.slane %v5466, 4
        %v5522 = vrot.slane %v5466, 5
        %v5523 = vrot.slane %v5466, 6
        %v5524 = vrot.slane %v5466, 7
        %v5525 = vrot.slane %v5467, 1
        %v5526 = vrot.slane %v5467, 2
        %v5527 = vrot.slane %v5467, 3
        %v5528 = vrot.slane %v5467, 4
        %v5529 = vrot.slane %v5467, 5
        %v5530 = vrot.slane %v5467, 6
        %v5531 = vrot.slane %v5467, 7
        %v5596 = vadd.f32 %v4885, %v5460
        %v5597 = vadd.f32 %v4894, %v5476
        %v5598 = vadd.f32 %v4903, %v5477
        %v5599 = vadd.f32 %v4912, %v5478
        %v5600 = vadd.f32 %v4921, %v5479
        %v5601 = vadd.f32 %v4930, %v5480
        %v5602 = vadd.f32 %v4939, %v5481
        %v5603 = vadd.f32 %v4948, %v5482
        %v5604 = vadd.f32 %v4957, %v5461
        %v5605 = vadd.f32 %v4966, %v5483
        %v5606 = vadd.f32 %v4975, %v5484
        %v5607 = vadd.f32 %v4984, %v5485
        %v5608 = vadd.f32 %v4993, %v5486
        %v5609 = vadd.f32 %v5002, %v5487
        %v5610 = vadd.f32 %v5011, %v5488
        %v5611 = vadd.f32 %v5020, %v5489
        %v5612 = vadd.f32 %v5029, %v5462
        %v5613 = vadd.f32 %v5038, %v5490
        %v5614 = vadd.f32 %v5047, %v5491
        %v5615 = vadd.f32 %v5056, %v5492
        %v5616 = vadd.f32 %v5065, %v5493
        %v5617 = vadd.f32 %v5074, %v5494
        %v5618 = vadd.f32 %v5083, %v5495
        %v5619 = vadd.f32 %v5092, %v5496
        %v5620 = vadd.f32 %v5101, %v5463
        %v5621 = vadd.f32 %v5110, %v5497
        %v5622 = vadd.f32 %v5119, %v5498
        %v5623 = vadd.f32 %v5128, %v5499
        %v5624 = vadd.f32 %v5137, %v5500
        %v5625 = vadd.f32 %v5146, %v5501
        %v5626 = vadd.f32 %v5155, %v5502
        %v5627 = vadd.f32 %v5164, %v5503
        %v5628 = vadd.f32 %v5173, %v5464
        %v5629 = vadd.f32 %v5182, %v5504
        %v5630 = vadd.f32 %v5191, %v5505
        %v5631 = vadd.f32 %v5200, %v5506
        %v5632 = vadd.f32 %v5209, %v5507
        %v5633 = vadd.f32 %v5218, %v5508
        %v5634 = vadd.f32 %v5227, %v5509
        %v5635 = vadd.f32 %v5236, %v5510
        %v5636 = vadd.f32 %v5245, %v5465
        %v5637 = vadd.f32 %v5254, %v5511
        %v5638 = vadd.f32 %v5263, %v5512
        %v5639 = vadd.f32 %v5272, %v5513
        %v5640 = vadd.f32 %v5281, %v5514
        %v5641 = vadd.f32 %v5290, %v5515
        %v5642 = vadd.f32 %v5299, %v5516
        %v5643 = vadd.f32 %v5308, %v5517
        %v5644 = vadd.f32 %v5317, %v5466
        %v5645 = vadd.f32 %v5326, %v5518
        %v5646 = vadd.f32 %v5335, %v5519
        %v5647 = vadd.f32 %v5344, %v5520
        %v5648 = vadd.f32 %v5353, %v5521
        %v5649 = vadd.f32 %v5362, %v5522
        %v5650 = vadd.f32 %v5371, %v5523
        %v5651 = vadd.f32 %v5380, %v5524
        %v5652 = vadd.f32 %v5389, %v5467
        %v5653 = vadd.f32 %v5398, %v5525
        %v5654 = vadd.f32 %v5407, %v5526
        %v5655 = vadd.f32 %v5416, %v5527
        %v5656 = vadd.f32 %v5425, %v5528
        %v5657 = vadd.f32 %v5434, %v5529
        %v5658 = vadd.f32 %v5443, %v5530
        %v5659 = vadd.f32 %v5452, %v5531
        %v5660 = vld [vmem:[%s8] sm:$0xff]
        %v5661 = vld [vmem:[%s8 + $0x8] sm:$0xff]
        %v5662 = vld [vmem:[%s8 + $0x10] sm:$0xff]
        %v5663 = vld [vmem:[%s8 + $0x18] sm:$0xff]
        %v5664 = vld [vmem:[%s8 + $0x20] sm:$0xf]
        %v5729 = vrot.slane %v5597, 7
        %vm5730 = vcmask 1041409
        %v5731 = vsel %vm5730, %v5729, %v5596
        %v5732 = vrot.slane %v5598, 6
        %vm5733 = vcmask 1042434
        %v5734 = vsel %vm5733, %v5732, %v5731
        %v5735 = vrot.slane %v5599, 5
        %vm5736 = vcmask 1043459
        %v5737 = vsel %vm5736, %v5735, %v5734
        %v5738 = vrot.slane %v5600, 4
        %vm5739 = vcmask 1044484
        %v5740 = vsel %vm5739, %v5738, %v5737
        %v5741 = vrot.slane %v5601, 3
        %vm5742 = vcmask 1045509
        %v5743 = vsel %vm5742, %v5741, %v5740
        %v5744 = vrot.slane %v5602, 2
        %vm5745 = vcmask 1046534
        %v5746 = vsel %vm5745, %v5744, %v5743
        %v5747 = vrot.slane %v5603, 1
        %vm5748 = vcmask 1047559
        %v5749 = vsel %vm5748, %v5747, %v5746
        %v5750 = vrot.slane %v5605, 7
        %v5751 = vsel %vm5730, %v5750, %v5604
        %v5752 = vrot.slane %v5606, 6
        %v5753 = vsel %vm5733, %v5752, %v5751
        %v5754 = vrot.slane %v5607, 5
        %v5755 = vsel %vm5736, %v5754, %v5753
        %v5756 = vrot.slane %v5608, 4
        %v5757 = vsel %vm5739, %v5756, %v5755
        %v5758 = vrot.slane %v5609, 3
        %v5759 = vsel %vm5742, %v5758, %v5757
        %v5760 = vrot.slane %v5610, 2
        %v5761 = vsel %vm5745, %v5760, %v5759
        %v5762 = vrot.slane %v5611, 1
        %v5763 = vsel %vm5748, %v5762, %v5761
        %v5764 = vrot.slane %v5613, 7
        %v5765 = vsel %vm5730, %v5764, %v5612
        %v5766 = vrot.slane %v5614, 6
        %v5767 = vsel %vm5733, %v5766, %v5765
        %v5768 = vrot.slane %v5615, 5
        %v5769 = vsel %vm5736, %v5768, %v5767
        %v5770 = vrot.slane %v5616, 4
        %v5771 = vsel %vm5739, %v5770, %v5769
        %v5772 = vrot.slane %v5617, 3
        %v5773 = vsel %vm5742, %v5772, %v5771
        %v5774 = vrot.slane %v5618, 2
        %v5775 = vsel %vm5745, %v5774, %v5773
        %v5776 = vrot.slane %v5619, 1
        %v5777 = vsel %vm5748, %v5776, %v5775
        %v5778 = vrot.slane %v5621, 7
        %v5779 = vsel %vm5730, %v5778, %v5620
        %v5780 = vrot.slane %v5622, 6
        %v5781 = vsel %vm5733, %v5780, %v5779
        %v5782 = vrot.slane %v5623, 5
        %v5783 = vsel %vm5736, %v5782, %v5781
        %v5784 = vrot.slane %v5624, 4
        %v5785 = vsel %vm5739, %v5784, %v5783
        %v5786 = vrot.slane %v5625, 3
        %v5787 = vsel %vm5742, %v5786, %v5785
        %v5788 = vrot.slane %v5626, 2
        %v5789 = vsel %vm5745, %v5788, %v5787
        %v5790 = vrot.slane %v5627, 1
        %v5791 = vsel %vm5748, %v5790, %v5789
        %v5792 = vrot.slane %v5629, 7
        %v5793 = vsel %vm5730, %v5792, %v5628
        %v5794 = vrot.slane %v5630, 6
        %v5795 = vsel %vm5733, %v5794, %v5793
        %v5796 = vrot.slane %v5631, 5
        %v5797 = vsel %vm5736, %v5796, %v5795
        %v5798 = vrot.slane %v5632, 4
        %v5799 = vsel %vm5739, %v5798, %v5797
        %v5800 = vrot.slane %v5633, 3
        %v5801 = vsel %vm5742, %v5800, %v5799
        %v5802 = vrot.slane %v5634, 2
        %v5803 = vsel %vm5745, %v5802, %v5801
        %v5804 = vrot.slane %v5635, 1
        %v5805 = vsel %vm5748, %v5804, %v5803
        %v5806 = vrot.slane %v5637, 7
        %v5807 = vsel %vm5730, %v5806, %v5636
        %v5808 = vrot.slane %v5638, 6
        %v5809 = vsel %vm5733, %v5808, %v5807
        %v5810 = vrot.slane %v5639, 5
        %v5811 = vsel %vm5736, %v5810, %v5809
        %v5812 = vrot.slane %v5640, 4
        %v5813 = vsel %vm5739, %v5812, %v5811
        %v5814 = vrot.slane %v5641, 3
        %v5815 = vsel %vm5742, %v5814, %v5813
        %v5816 = vrot.slane %v5642, 2
        %v5817 = vsel %vm5745, %v5816, %v5815
        %v5818 = vrot.slane %v5643, 1
        %v5819 = vsel %vm5748, %v5818, %v5817
        %v5820 = vrot.slane %v5645, 7
        %v5821 = vsel %vm5730, %v5820, %v5644
        %v5822 = vrot.slane %v5646, 6
        %v5823 = vsel %vm5733, %v5822, %v5821
        %v5824 = vrot.slane %v5647, 5
        %v5825 = vsel %vm5736, %v5824, %v5823
        %v5826 = vrot.slane %v5648, 4
        %v5827 = vsel %vm5739, %v5826, %v5825
        %v5828 = vrot.slane %v5649, 3
        %v5829 = vsel %vm5742, %v5828, %v5827
        %v5830 = vrot.slane %v5650, 2
        %v5831 = vsel %vm5745, %v5830, %v5829
        %v5832 = vrot.slane %v5651, 1
        %v5833 = vsel %vm5748, %v5832, %v5831
        %v5834 = vrot.slane %v5653, 7
        %v5835 = vsel %vm5730, %v5834, %v5652
        %v5836 = vrot.slane %v5654, 6
        %v5837 = vsel %vm5733, %v5836, %v5835
        %v5838 = vrot.slane %v5655, 5
        %v5839 = vsel %vm5736, %v5838, %v5837
        %v5840 = vrot.slane %v5656, 4
        %v5841 = vsel %vm5739, %v5840, %v5839
        %v5842 = vrot.slane %v5657, 3
        %v5843 = vsel %vm5742, %v5842, %v5841
        %v5844 = vrot.slane %v5658, 2
        %v5845 = vsel %vm5745, %v5844, %v5843
        %v5846 = vrot.slane %v5659, 1
        %v5847 = vsel %vm5748, %v5846, %v5845
        %v5848 = vsel %vm506, %v5749, 0
        %v5850 = vsel %vm506, %v5763, 0
        %v5852 = vsel %vm506, %v5777, 0
        %v5854 = vsel %vm506, %v5791, 0
        %v5856 = vsel %vm506, %v5805, 0
        %v5858 = vsel %vm506, %v5819, 0
        %v5860 = vsel %vm506, %v5833, 0
        %v5862 = vsel %vm506, %v5847, 0
        %v5865 = vsel %vm531, %v5664, 0
        %5867 = vmatprep.subr.mxu0 0.0
        %5868 = vmatpush1.msra.mxu0 %v5660
        %5869 = vmatprep.subr.mxu0 0.0
        %5870 = vmatpush1.msra.mxu0 %v5661
        %5871 = vmatprep.subr.mxu0 0.0
        %5872 = vmatpush1.msra.mxu0 %v5662
        %5873 = vmatprep.subr.mxu0 0.0
        %5874 = vmatpush1.msra.mxu0 %v5663
        %5875 = vmatprep.subr.mxu0 0.0
        %5876 = vmatpush1.msra.mxu0 %v5865
        %5877 = vmatprep.subr.mxu0 0.0
        %5878 = vmatpush1.msra.mxu0 0.0
        %5879 = vmatprep.subr.mxu0 0.0
        %5880 = vmatpush1.msra.mxu0 0.0
        %5881 = vmatprep.subr.mxu0 0.0
        %5882 = vmatpush1.msra.mxu0 0.0
        %5883 = vmatprep.subr.mxu0 0.0
        %5884 = vmatpush1.msra.mxu0 0.0
        %5885 = vmatprep.subr.mxu0 0.0
        %5886 = vmatpush1.msra.mxu0 0.0
        %5887 = vmatprep.subr.mxu0 0.0
        %5888 = vmatpush1.msra.mxu0 0.0
        %5889 = vmatprep.subr.mxu0 0.0
        %5890 = vmatpush1.msra.mxu0 0.0
        %5891 = vmatprep.subr.mxu0 0.0
        %5892 = vmatpush1.msra.mxu0 0.0
        %5893 = vmatprep.subr.mxu0 0.0
        %5894 = vmatpush1.msra.mxu0 0.0
        %5895 = vmatprep.subr.mxu0 0.0
        %5896 = vmatpush1.msra.mxu0 0.0
        %5897 = vmatprep.subr.mxu0 0.0
        %5898 = vmatpush1.msra.mxu0 0.0
        %5899 = vmatprep.subr.mxu0 0.0
        %5900 = vmatpush1.msra.mxu0 0.0
        %5901 = vmatprep.subr.mxu0 0.0
        %5902 = vmatpush1.msra.mxu0 0.0
        %5903 = vmatprep.subr.mxu0 0.0
        %5904 = vmatpush1.msra.mxu0 0.0
        %5905 = vmatprep.subr.mxu0 0.0
        %5906 = vmatpush1.msra.mxu0 0.0
        %5907 = vmatprep.subr.mxu0 0.0
        %5908 = vmatpush1.msra.mxu0 0.0
        %5909 = vmatprep.subr.mxu0 0.0
        %5910 = vmatpush1.msra.mxu0 0.0
        %5911 = vmatprep.subr.mxu0 0.0
        %5912 = vmatpush1.msra.mxu0 0.0
        %5913 = vmatprep.subr.mxu0 0.0
        %5914 = vmatpush1.msra.mxu0 0.0
        %5915 = vmatprep.subr.mxu0 0.0
        %5916 = vmatpush1.msra.mxu0 0.0
        %5917 = vmatprep.subr.mxu0 0.0
        %5918 = vmatpush1.msra.mxu0 0.0
        %5919 = vmatprep.subr.mxu0 0.0
        %5920 = vmatpush1.msra.mxu0 0.0
        %5921 = vmatprep.subr.mxu0 0.0
        %5922 = vmatpush1.msra.mxu0 0.0
        %5923 = vmatprep.subr.mxu0 0.0
        %5924 = vmatpush1.msra.mxu0 0.0
        %5925 = vmatprep.subr.mxu0 0.0
        %5926 = vmatpush1.msra.mxu0 0.0
        %5927 = vmatprep.subr.mxu0 0.0
        %5928 = vmatpush1.msra.mxu0 0.0
        %5929 = vmatprep.subr.mxu0 0.0
        %5930 = vmatpush1.msra.mxu0 0.0
        %5931 = vmatprep.mubr.f32.mxu0 0.0
        %5932 = vmatmul.mubr.f32.gmra.mrb[0].mxu0 %v5848
        %v5933 = vpop.f32.mrb[0].mxu0
        %v5934 = vadd.f32 0.0, %v5933
        %v5935 = vpop.f32.mrb[0].mxu0
        %5936 = vmatprep.mubr.f32.mxu0 0.0
        %5937 = vmatmul.mubr.f32.gmra.mrb[0].mxu0 %v5850
        %v5938 = vpop.f32.mrb[0].mxu0
        %v5939 = vadd.f32 0.0, %v5938
        %v5940 = vpop.f32.mrb[0].mxu0
        %5941 = vmatprep.mubr.f32.mxu0 0.0
        %5942 = vmatmul.mubr.f32.gmra.mrb[0].mxu0 %v5852
        %v5943 = vpop.f32.mrb[0].mxu0
        %v5944 = vadd.f32 0.0, %v5943
        %v5945 = vpop.f32.mrb[0].mxu0
        %5946 = vmatprep.mubr.f32.mxu0 0.0
        %5947 = vmatmul.mubr.f32.gmra.mrb[0].mxu0 %v5854
        %v5948 = vpop.f32.mrb[0].mxu0
        %v5949 = vadd.f32 0.0, %v5948
        %v5950 = vpop.f32.mrb[0].mxu0
        %5951 = vmatprep.mubr.f32.mxu0 0.0
        %5952 = vmatmul.mubr.f32.gmra.mrb[0].mxu0 %v5856
        %v5953 = vpop.f32.mrb[0].mxu0
        %v5954 = vadd.f32 0.0, %v5953
        %v5955 = vpop.f32.mrb[0].mxu0
        %5956 = vmatprep.mubr.f32.mxu0 0.0
        %5957 = vmatmul.mubr.f32.gmra.mrb[0].mxu0 %v5858
        %v5958 = vpop.f32.mrb[0].mxu0
        %v5959 = vadd.f32 0.0, %v5958
        %v5960 = vpop.f32.mrb[0].mxu0
        %5961 = vmatprep.mubr.f32.mxu0 0.0
        %5962 = vmatmul.mubr.f32.gmra.mrb[0].mxu0 %v5860
        %v5963 = vpop.f32.mrb[0].mxu0
        %v5964 = vadd.f32 0.0, %v5963
        %v5965 = vpop.f32.mrb[0].mxu0
        %5966 = vmatprep.mubr.f32.mxu0 0.0
        %5967 = vmatmul.mubr.f32.gmra.mrb[0].mxu0 %v5862
        %v5968 = vpop.f32.mrb[0].mxu0
        %v5969 = vadd.f32 0.0, %v5968
        %v5970 = vpop.f32.mrb[0].mxu0
        %5971 = vdwg.mxu0
        %vm5972 = vcmask 31744
        %v5973 = vsel %vm5972, %v5934, 0.0
        %5974 = vadd.xlane.f32.xlu0 %v5973
        %v5975 = vpop.xlane.xlu0 %5974
        %v5976 = vsel %vm5972, %v5939, 0.0
        %5977 = vadd.xlane.f32.xlu0 %v5976
        %v5978 = vpop.xlane.xlu0 %5977
        %v5979 = vsel %vm5972, %v5944, 0.0
        %5980 = vadd.xlane.f32.xlu0 %v5979
        %v5981 = vpop.xlane.xlu0 %5980
        %v5982 = vsel %vm5972, %v5949, 0.0
        %5983 = vadd.xlane.f32.xlu0 %v5982
        %v5984 = vpop.xlane.xlu0 %5983
        %v5985 = vsel %vm5972, %v5954, 0.0
        %5986 = vadd.xlane.f32.xlu0 %v5985
        %v5987 = vpop.xlane.xlu0 %5986
        %v5988 = vsel %vm5972, %v5959, 0.0
        %5989 = vadd.xlane.f32.xlu0 %v5988
        %v5990 = vpop.xlane.xlu0 %5989
        %v5991 = vsel %vm5972, %v5964, 0.0
        %5992 = vadd.xlane.f32.xlu0 %v5991
        %v5993 = vpop.xlane.xlu0 %5992
        %v5994 = vsel %vm5972, %v5969, 0.0
        %5995 = vadd.xlane.f32.xlu0 %v5994
        %v5996 = vpop.xlane.xlu0 %5995
        %v5997 = vrcp.pop 4.0
        %v5998 = vmul.f32 %v5975, %v5997
        %v5999 = vmul.f32 %v5978, %v5997
        %v6000 = vmul.f32 %v5981, %v5997
        %v6001 = vmul.f32 %v5984, %v5997
        %v6002 = vmul.f32 %v5987, %v5997
        %v6003 = vmul.f32 %v5990, %v5997
        %v6004 = vmul.f32 %v5993, %v5997
        %v6005 = vmul.f32 %v5996, %v5997
        %v6006 = vsub.f32 %v5934, %v5998
        %v6007 = vsub.f32 %v5939, %v5999
        %v6008 = vsub.f32 %v5944, %v6000
        %v6009 = vsub.f32 %v5949, %v6001
        %v6010 = vsub.f32 %v5954, %v6002
        %v6011 = vsub.f32 %v5959, %v6003
        %v6012 = vsub.f32 %v5964, %v6004
        %v6013 = vsub.f32 %v5969, %v6005
        %v6014 = vmul.f32 %v6006, %v6006
        %v6015 = vmul.f32 %v6007, %v6007
        %v6016 = vmul.f32 %v6008, %v6008
        %v6017 = vmul.f32 %v6009, %v6009
        %v6018 = vmul.f32 %v6010, %v6010
        %v6019 = vmul.f32 %v6011, %v6011
        %v6020 = vmul.f32 %v6012, %v6012
        %v6021 = vmul.f32 %v6013, %v6013
        %v6022 = vsel %vm5972, %v6014, 0.0
        %6023 = vadd.xlane.f32.xlu0 %v6022
        %v6024 = vpop.xlane.xlu0 %6023
        %v6025 = vsel %vm5972, %v6015, 0.0
        %6026 = vadd.xlane.f32.xlu0 %v6025
        %v6027 = vpop.xlane.xlu0 %6026
        %v6028 = vsel %vm5972, %v6016, 0.0
        %6029 = vadd.xlane.f32.xlu0 %v6028
        %v6030 = vpop.xlane.xlu0 %6029
        %v6031 = vsel %vm5972, %v6017, 0.0
        %6032 = vadd.xlane.f32.xlu0 %v6031
        %v6033 = vpop.xlane.xlu0 %6032
        %v6034 = vsel %vm5972, %v6018, 0.0
        %6035 = vadd.xlane.f32.xlu0 %v6034
        %v6036 = vpop.xlane.xlu0 %6035
        %v6037 = vsel %vm5972, %v6019, 0.0
        %6038 = vadd.xlane.f32.xlu0 %v6037
        %v6039 = vpop.xlane.xlu0 %6038
        %v6040 = vsel %vm5972, %v6020, 0.0
        %6041 = vadd.xlane.f32.xlu0 %v6040
        %v6042 = vpop.xlane.xlu0 %6041
        %v6043 = vsel %vm5972, %v6021, 0.0
        %6044 = vadd.xlane.f32.xlu0 %v6043
        %v6045 = vpop.xlane.xlu0 %6044
        %v6046 = vmul.f32 %v6024, %v5997
        %v6047 = vmul.f32 %v6027, %v5997
        %v6048 = vmul.f32 %v6030, %v5997
        %v6049 = vmul.f32 %v6033, %v5997
        %v6050 = vmul.f32 %v6036, %v5997
        %v6051 = vmul.f32 %v6039, %v5997
        %v6052 = vmul.f32 %v6042, %v5997
        %v6053 = vmul.f32 %v6045, %v5997
        %v6054 = vadd.f32 %v6046, 1e-05
        %v6055 = vadd.f32 %v6047, 1e-05
        %v6056 = vadd.f32 %v6048, 1e-05
        %v6057 = vadd.f32 %v6049, 1e-05
        %v6058 = vadd.f32 %v6050, 1e-05
        %v6059 = vadd.f32 %v6051, 1e-05
        %v6060 = vadd.f32 %v6052, 1e-05
        %v6061 = vadd.f32 %v6053, 1e-05
        %v6062 = vrsqrt.pop %v6054
        %v6063 = vrsqrt.pop %v6055
        %v6064 = vrsqrt.pop %v6056
        %v6065 = vrsqrt.pop %v6057
        %v6066 = vrsqrt.pop %v6058
        %v6067 = vrsqrt.pop %v6059
        %v6068 = vrsqrt.pop %v6060
        %v6069 = vrsqrt.pop %v6061
        %v6070 = vmul.f32 %v6006, %v6062
        %v6071 = vmul.f32 %v6007, %v6063
        %v6072 = vmul.f32 %v6008, %v6064
        %v6073 = vmul.f32 %v6009, %v6065
        %v6074 = vmul.f32 %v6010, %v6066
        %v6075 = vmul.f32 %v6011, %v6067
        %v6076 = vmul.f32 %v6012, %v6068
        %v6077 = vmul.f32 %v6013, %v6069
        %v6078 = vld [vmem:[%s9] sm:$0x1]
        %v6080 = vlaneseq
        %v6081 = vshrl.u32 %v6080, 7
        %v6082 = vsub.s32 0, %v6081
        %v6083 = vrot.slane %v6078, %v6082
        %v6085 = vmul.f32 %v6070, %v6083
        %v6086 = vmul.f32 %v6071, %v6083
        %v6087 = vmul.f32 %v6072, %v6083
        %v6088 = vmul.f32 %v6073, %v6083
        %v6089 = vmul.f32 %v6074, %v6083
        %v6090 = vmul.f32 %v6075, %v6083
        %v6091 = vmul.f32 %v6076, %v6083
        %v6092 = vmul.f32 %v6077, %v6083
        %v6093 = vld [vmem:[%s10] sm:$0x1]
        %v6095 = vlaneseq
        %v6096 = vshrl.u32 %v6095, 7
        %v6097 = vsub.s32 0, %v6096
        %v6098 = vrot.slane %v6093, %v6097
        %v6100 = vadd.f32 %v6085, %v6098
        %v6101 = vadd.f32 %v6086, %v6098
        %v6102 = vadd.f32 %v6087, %v6098
        %v6103 = vadd.f32 %v6088, %v6098
        %v6104 = vadd.f32 %v6089, %v6098
        %v6105 = vadd.f32 %v6090, %v6098
        %v6106 = vadd.f32 %v6091, %v6098
        %v6107 = vadd.f32 %v6092, %v6098
        %v6108 = vld [vmem:[%s476] sm:$0xff]
        %v6109 = vld [vmem:[%s476 + $0x8] sm:$0xff]
        %v6110 = vld [vmem:[%s476 + $0x10] sm:$0xff]
        %v6111 = vld [vmem:[%s476 + $0x18] sm:$0xff]
        %v6112 = vld [vmem:[%s476 + $0x20] sm:$0xff]
        %v6113 = vld [vmem:[%s476 + $0x28] sm:$0xff]
        %v6114 = vld [vmem:[%s476 + $0x30] sm:$0xff]
        %v6115 = vld [vmem:[%s476 + $0x38] sm:$0xff]
        %v6116 = vxor.u32 %v6108, 2147483648
        %v6117 = vxor.u32 %v6109, 2147483648
        %v6118 = vxor.u32 %v6110, 2147483648
        %v6119 = vxor.u32 %v6111, 2147483648
        %v6120 = vxor.u32 %v6112, 2147483648
        %v6121 = vxor.u32 %v6113, 2147483648
        %v6122 = vxor.u32 %v6114, 2147483648
        %v6123 = vxor.u32 %v6115, 2147483648
        %v6124 = vmul.f32 %v6116, 1.442695
        %v6125 = vpow.pop %v6124
        %v6126 = vmul.f32 %v6117, 1.442695
        %v6127 = vpow.pop %v6126
        %v6128 = vmul.f32 %v6118, 1.442695
        %v6129 = vpow.pop %v6128
        %v6130 = vmul.f32 %v6119, 1.442695
        %v6131 = vpow.pop %v6130
        %v6132 = vmul.f32 %v6120, 1.442695
        %v6133 = vpow.pop %v6132
        %v6134 = vmul.f32 %v6121, 1.442695
        %v6135 = vpow.pop %v6134
        %v6136 = vmul.f32 %v6122, 1.442695
        %v6137 = vpow.pop %v6136
        %v6138 = vmul.f32 %v6123, 1.442695
        %v6139 = vpow.pop %v6138
        %v6140 = vadd.f32 %v6125, 1.0
        %v6141 = vadd.f32 %v6127, 1.0
        %v6142 = vadd.f32 %v6129, 1.0
        %v6143 = vadd.f32 %v6131, 1.0
        %v6144 = vadd.f32 %v6133, 1.0
        %v6145 = vadd.f32 %v6135, 1.0
        %v6146 = vadd.f32 %v6137, 1.0
        %v6147 = vadd.f32 %v6139, 1.0
        %v6148 = vrcp.pop %v6140
        %v6149 = vmul.f32 1.0, %v6148
        %v6150 = vrcp.pop %v6141
        %v6151 = vmul.f32 1.0, %v6150
        %v6152 = vrcp.pop %v6142
        %v6153 = vmul.f32 1.0, %v6152
        %v6154 = vrcp.pop %v6143
        %v6155 = vmul.f32 1.0, %v6154
        %v6156 = vrcp.pop %v6144
        %v6157 = vmul.f32 1.0, %v6156
        %v6158 = vrcp.pop %v6145
        %v6159 = vmul.f32 1.0, %v6158
        %v6160 = vrcp.pop %v6146
        %v6161 = vmul.f32 1.0, %v6160
        %v6162 = vrcp.pop %v6147
        %v6163 = vmul.f32 1.0, %v6162
        %v6164 = vmul.f32 %v6108, %v6149
        %v6165 = vmul.f32 %v6109, %v6151
        %v6166 = vmul.f32 %v6110, %v6153
        %v6167 = vmul.f32 %v6111, %v6155
        %v6168 = vmul.f32 %v6112, %v6157
        %v6169 = vmul.f32 %v6113, %v6159
        %v6170 = vmul.f32 %v6114, %v6161
        %v6171 = vmul.f32 %v6115, %v6163
        %v6172 = vmul.f32 %v6100, %v6164
        %v6173 = vmul.f32 %v6101, %v6165
        %v6174 = vmul.f32 %v6102, %v6166
        %v6175 = vmul.f32 %v6103, %v6167
        %v6176 = vmul.f32 %v6104, %v6168
        %v6177 = vmul.f32 %v6105, %v6169
        %v6178 = vmul.f32 %v6106, %v6170
        %v6179 = vmul.f32 %v6107, %v6171
        %v6180 = vld [vmem:[%s11] sm:$0xf]
        %v6182 = vsel %vm5972, %v6172, 0
        %v6185 = vsel %vm5972, %v6173, 0
        %v6188 = vsel %vm5972, %v6174, 0
        %v6191 = vsel %vm5972, %v6175, 0
        %v6194 = vsel %vm5972, %v6176, 0
        %v6197 = vsel %vm5972, %v6177, 0
        %v6200 = vsel %vm5972, %v6178, 0
        %v6203 = vsel %vm5972, %v6179, 0
        %v6206 = vsel %vm531, %v6180, 0
        %6208 = vmatprep.subr.mxu0 0.0
        %6209 = vmatpush1.msra.mxu0 %v6206
        %6210 = vmatprep.subr.mxu0 0.0
        %6211 = vmatpush1.msra.mxu0 0.0
        %6212 = vmatprep.subr.mxu0 0.0
        %6213 = vmatpush1.msra.mxu0 0.0
        %6214 = vmatprep.subr.mxu0 0.0
        %6215 = vmatpush1.msra.mxu0 0.0
        %6216 = vmatprep.subr.mxu0 0.0
        %6217 = vmatpush1.msra.mxu0 0.0
        %6218 = vmatprep.subr.mxu0 0.0
        %6219 = vmatpush1.msra.mxu0 0.0
        %6220 = vmatprep.subr.mxu0 0.0
        %6221 = vmatpush1.msra.mxu0 0.0
        %6222 = vmatprep.subr.mxu0 0.0
        %6223 = vmatpush1.msra.mxu0 0.0
        %6224 = vmatprep.subr.mxu0 0.0
        %6225 = vmatpush1.msra.mxu0 0.0
        %6226 = vmatprep.subr.mxu0 0.0
        %6227 = vmatpush1.msra.mxu0 0.0
        %6228 = vmatprep.subr.mxu0 0.0
        %6229 = vmatpush1.msra.mxu0 0.0
        %6230 = vmatprep.subr.mxu0 0.0
        %6231 = vmatpush1.msra.mxu0 0.0
        %6232 = vmatprep.subr.mxu0 0.0
        %6233 = vmatpush1.msra.mxu0 0.0
        %6234 = vmatprep.subr.mxu0 0.0
        %6235 = vmatpush1.msra.mxu0 0.0
        %6236 = vmatprep.subr.mxu0 0.0
        %6237 = vmatpush1.msra.mxu0 0.0
        %6238 = vmatprep.subr.mxu0 0.0
        %6239 = vmatpush1.msra.mxu0 0.0
        %6240 = vmatprep.subr.mxu0 0.0
        %6241 = vmatpush1.msra.mxu0 0.0
        %6242 = vmatprep.subr.mxu0 0.0
        %6243 = vmatpush1.msra.mxu0 0.0
        %6244 = vmatprep.subr.mxu0 0.0
        %6245 = vmatpush1.msra.mxu0 0.0
        %6246 = vmatprep.subr.mxu0 0.0
        %6247 = vmatpush1.msra.mxu0 0.0
        %6248 = vmatprep.subr.mxu0 0.0
        %6249 = vmatpush1.msra.mxu0 0.0
        %6250 = vmatprep.subr.mxu0 0.0
        %6251 = vmatpush1.msra.mxu0 0.0
        %6252 = vmatprep.subr.mxu0 0.0
        %6253 = vmatpush1.msra.mxu0 0.0
        %6254 = vmatprep.subr.mxu0 0.0
        %6255 = vmatpush1.msra.mxu0 0.0
        %6256 = vmatprep.subr.mxu0 0.0
        %6257 = vmatpush1.msra.mxu0 0.0
        %6258 = vmatprep.subr.mxu0 0.0
        %6259 = vmatpush1.msra.mxu0 0.0
        %6260 = vmatprep.subr.mxu0 0.0
        %6261 = vmatpush1.msra.mxu0 0.0
        %6262 = vmatprep.subr.mxu0 0.0
        %6263 = vmatpush1.msra.mxu0 0.0
        %6264 = vmatprep.subr.mxu0 0.0
        %6265 = vmatpush1.msra.mxu0 0.0
        %6266 = vmatprep.subr.mxu0 0.0
        %6267 = vmatpush1.msra.mxu0 0.0
        %6268 = vmatprep.subr.mxu0 0.0
        %6269 = vmatpush1.msra.mxu0 0.0
        %6270 = vmatprep.subr.mxu0 0.0
        %6271 = vmatpush1.msra.mxu0 0.0
        %6272 = vmatprep.mubr.f32.mxu0 0.0
        %6273 = vmatmul.mubr.f32.gmra.mrb[0].mxu0 %v6182
        %v6274 = vpop.f32.mrb[0].mxu0
        %v6275 = vadd.f32 0.0, %v6274
        %v6276 = vpop.f32.mrb[0].mxu0
        %6277 = vmatprep.mubr.f32.mxu0 0.0
        %6278 = vmatmul.mubr.f32.gmra.mrb[0].mxu0 %v6185
        %v6279 = vpop.f32.mrb[0].mxu0
        %v6280 = vadd.f32 0.0, %v6279
        %v6281 = vpop.f32.mrb[0].mxu0
        %6282 = vmatprep.mubr.f32.mxu0 0.0
        %6283 = vmatmul.mubr.f32.gmra.mrb[0].mxu0 %v6188
        %v6284 = vpop.f32.mrb[0].mxu0
        %v6285 = vadd.f32 0.0, %v6284
        %v6286 = vpop.f32.mrb[0].mxu0
        %6287 = vmatprep.mubr.f32.mxu0 0.0
        %6288 = vmatmul.mubr.f32.gmra.mrb[0].mxu0 %v6191
        %v6289 = vpop.f32.mrb[0].mxu0
        %v6290 = vadd.f32 0.0, %v6289
        %v6291 = vpop.f32.mrb[0].mxu0
        %6292 = vmatprep.mubr.f32.mxu0 0.0
        %6293 = vmatmul.mubr.f32.gmra.mrb[0].mxu0 %v6194
        %v6294 = vpop.f32.mrb[0].mxu0
        %v6295 = vadd.f32 0.0, %v6294
        %v6296 = vpop.f32.mrb[0].mxu0
        %6297 = vmatprep.mubr.f32.mxu0 0.0
        %6298 = vmatmul.mubr.f32.gmra.mrb[0].mxu0 %v6197
        %v6299 = vpop.f32.mrb[0].mxu0
        %v6300 = vadd.f32 0.0, %v6299
        %v6301 = vpop.f32.mrb[0].mxu0
        %6302 = vmatprep.mubr.f32.mxu0 0.0
        %6303 = vmatmul.mubr.f32.gmra.mrb[0].mxu0 %v6200
        %v6304 = vpop.f32.mrb[0].mxu0
        %v6305 = vadd.f32 0.0, %v6304
        %v6306 = vpop.f32.mrb[0].mxu0
        %6307 = vmatprep.mubr.f32.mxu0 0.0
        %6308 = vmatmul.mubr.f32.gmra.mrb[0].mxu0 %v6203
        %v6309 = vpop.f32.mrb[0].mxu0
        %v6310 = vadd.f32 0.0, %v6309
        %v6311 = vpop.f32.mrb[0].mxu0
        %6312 = vdwg.mxu0
        %vm6313 = vcmask 261120
        %6314 = vst.msk [vmem:[%s457] sm:$0xff] %vm6313, %v6275
        %6315 = vst.msk [vmem:[%s457 + $0x8] sm:$0xff] %vm6313, %v6280
        %6316 = vst.msk [vmem:[%s457 + $0x10] sm:$0xff] %vm6313, %v6285
        %6317 = vst.msk [vmem:[%s457 + $0x18] sm:$0xff] %vm6313, %v6290
        %6318 = vst.msk [vmem:[%s457 + $0x20] sm:$0xff] %vm6313, %v6295
        %6319 = vst.msk [vmem:[%s457 + $0x28] sm:$0xff] %vm6313, %v6300
        %6320 = vst.msk [vmem:[%s457 + $0x30] sm:$0xff] %vm6313, %v6305
        %6321 = vst.msk [vmem:[%s457 + $0x38] sm:$0xff] %vm6313, %v6310
        %s6322 = sand.u32 %s314, 1
        %s6323 = scalar_lea.sflag [#allocation6], %s6322
        %s6324 = sand.u32 %s314, 1
        %s6325 = smul.addr %s6324, 64
        %s6326 = scalar_lea.vmem [#allocation5], %s6325
        // Predicated region
        $region80: #{ss2dconv_k1_forward.5} parent=67 // pred_check
          %p6327 = pneg %p324
        $region81: #{ss2dconv_k1_forward.5} parent=67 // pred_check_branch
          %6329 = sbr.rel (%p6327) target = $region83
        $region82: #{ss2dconv_k1_forward.5} parent=67 // pred_region
          %s6330 = smul.u32 8, %s31
          %s6332 = ssub.s32 1024, 1024
          %6333 = vsyncadd %s6323, %s6332
          %s6334 = smul.addr %s30, 8
          %s6335 = sadd.s32 %s6330, %s6334
          %s6336 = smul.addr %s6335, 128
          %s6337 = scalar_lea.hbm %s12, %s6336
          %s6338 = sshll.u32 %s6326, 4
          %s6339 = int_to_ptr.vmem [resolvable:$true] %s6338
          %6344 = dma.vmem_to_hbm [thread:$0]  %s6339, 1024, %s6337, %s6323, 128, 128, 8
        $region83: #{ss2dconv_k1_forward.5} parent=67 // pred_fallthru
          _
      $region68: #{ss2dconv_k1_forward.5} parent=5 // pred_fallthru
        _
      %p6345 = scmp.le.s32.totalorder 2, %s21
      // Predicated region
      $region84: #{ss2dconv_k1_forward.5} parent=5 // pred_check
        %p6346 = pneg %p6345
      $region85: #{ss2dconv_k1_forward.5} parent=5 // pred_check_branch
        %6348 = sbr.rel (%p6346) target = $region87
      $region86: #{ss2dconv_k1_forward.5} parent=5 // pred_region
        %s6349 = ssub.s32 %s21, 2
        // Predicated region
        $region88: #{ss2dconv_k1_forward.5} parent=86 // pred_check
          %p6350 = pneg %p330
        $region89: #{ss2dconv_k1_forward.5} parent=86 // pred_check_branch
          %6352 = sbr.rel (%p6350) target = $region91
        $region90: #{ss2dconv_k1_forward.5} parent=86 // pred_region
          %s6353 = sand.u32 %s315, 1
          %s6354 = scalar_lea.sflag [#allocation6], %s6353
          %s6355 = sand.u32 %s315, 1
          %s6356 = smul.addr %s6355, 64
          %s6357 = scalar_lea.vmem [#allocation5], %s6356
          %6358 = dma.done %s6354, 1024
        $region91: #{ss2dconv_k1_forward.5} parent=86 // pred_fallthru
          _
      $region87: #{ss2dconv_k1_forward.5} parent=5 // pred_fallthru
        _
    $region6: #{ss2dconv_k1_forward.5} parent=1 // loop_footer
      %s25 = sadd.s32 1, %s21
    $region7: #{ss2dconv_k1_forward.5} parent=1 // loop_footer_branch
      %20 = sbr.rel target = $region3
    $region8: #{ss2dconv_k1_forward.5} parent=1 // loop_exit
      _
    %6359 = vsyncpa [#allocation6], 1
    %s6360 = scalar_lea.sflag [#allocation6], 1
    %6361 = vsyncpa %s6360, 1

</llo_original>
